<compile_context>
chip_gen: v7x
topology: tpu7x:2x2x1
jax: 0.10.0
libtpu: 0.0.40
codegen_flags: <defaults>
</compile_context>

<pallas_src>
import math

import jax
import jax.numpy as jnp
from jax import lax
from jax.experimental import pallas as pl
from jax.experimental.pallas import tpu as pltpu

EPS = 1e-5                      # PyTorch GroupNorm default eps
LANES = 128                     # pad Cout to a multiple of this (lane-dense)
_MAX_TM = 256                   # conv output-row tile (accumulator fits vregs)
_GN_MAX_TH = 1024               # GroupNorm HW tile
_MM_DTYPE = jnp.bfloat16        # MXU input dtype (f32 accumulation kept)


def _round_up(x, m):
    return (x + m - 1) // m * m


def _vmem_limit_bytes():
    # Per-generation scoped-VMEM limit: 75% of physical, capped at 96 MiB.
    try:
        cap = int(pltpu.get_tpu_info().vmem_capacity_bytes)
        return int(min(cap * 3 // 4, 96 * 1024 * 1024))
    except Exception:
        return 48 * 1024 * 1024


_VMEM_LIMIT = _vmem_limit_bytes()


# ----------------------------- Pallas kernels ------------------------------

def _gn_stats_kernel(x_ref, sum_ref, sq_ref, sum_sc, sq_sc):
    """Accumulate per-channel sum / sum-of-squares over HW tiles."""
    t = pl.program_id(1)

    @pl.when(t == 0)
    def _():
        sum_sc[...] = jnp.zeros_like(sum_sc)
        sq_sc[...] = jnp.zeros_like(sq_sc)

    x = x_ref[0].astype(jnp.float32)                       # (TH, C)
    sum_sc[...] += jnp.sum(x, axis=0, keepdims=True)       # (1, C)
    sq_sc[...] += jnp.sum(x * x, axis=0, keepdims=True)

    @pl.when(t == pl.num_programs(1) - 1)
    def _():
        sum_ref[0] = sum_sc[...]
        sq_ref[0] = sq_sc[...]


def _gn_apply_silu_kernel(x_ref, scale_ref, shift_ref, o_ref):
    """y = silu(x * scale + shift), per (sample, HW-tile)."""
    x = x_ref[0].astype(jnp.float32)                       # (TH, C)
    y = x * scale_ref[0] + shift_ref[0]                    # broadcast (1, C)
    o_ref[0] = (y * jax.nn.sigmoid(y)).astype(o_ref.dtype)


def _make_conv_kernel(has_residual):
    """Tap-packed conv = one matmul per tile + f32 bias/residual epilogue."""

    def kernel(x_ref, w_ref, b_ref, *rest):
        if has_residual:
            r_ref, o_ref = rest
        else:
            (o_ref,) = rest
        acc = jnp.dot(x_ref[0], w_ref[...],
                      preferred_element_type=jnp.float32)  # (TM, Coutp) f32
        acc = acc + b_ref[...]
        if has_residual:
            acc = acc + r_ref[0].astype(jnp.float32)
        o_ref[0] = acc.astype(o_ref.dtype)

    return kernel


# ------------------------------ op wrappers --------------------------------

def groupnorm_silu(x, gamma, beta, num_groups, out_dtype=_MM_DTYPE):
    """GroupNorm (affine, biased var, eps=1e-5) + SiLU on NHWC input."""
    N, H, W, C = x.shape
    G = num_groups
    Cg = C // G
    HW = H * W
    xf = x.reshape(N, HW, C)

    TH = _round_up(HW, 8) if HW <= _GN_MAX_TH else _GN_MAX_TH
    HW_pad = _round_up(HW, TH)
    if HW_pad != HW:
        xf = jnp.pad(xf, ((0, 0), (0, HW_pad - HW), (0, 0)))
    nT = HW_pad // TH

    sums, sqs = pl.pallas_call(
        _gn_stats_kernel,
        out_shape=(jax.ShapeDtypeStruct((N, 1, C), jnp.float32),
                   jax.ShapeDtypeStruct((N, 1, C), jnp.float32)),
        grid=(N, nT),
        in_specs=[pl.BlockSpec((1, TH, C), lambda n, t: (n, t, 0))],
        out_specs=(pl.BlockSpec((1, 1, C), lambda n, t: (n, 0, 0)),
                   pl.BlockSpec((1, 1, C), lambda n, t: (n, 0, 0))),
        scratch_shapes=[pltpu.VMEM((1, C), jnp.float32),
                        pltpu.VMEM((1, C), jnp.float32)],
        compiler_params=pltpu.CompilerParams(
            dimension_semantics=("parallel", "arbitrary"),
            vmem_limit_bytes=_VMEM_LIMIT),
        cost_estimate=pl.CostEstimate(
            flops=3 * N * HW_pad * C, transcendentals=0,
            bytes_accessed=4 * N * (HW_pad * C + 2 * C)),
    )(xf)

    # Tiny per-(N, C) math: group-reduce the channel stats and build the
    # per-channel affine scale/shift that the apply kernel consumes.
    count = float(HW * Cg)                      # padded rows contribute zeros
    gsum = jnp.sum(sums.reshape(N, G, Cg), axis=-1, keepdims=True)
    gsq = jnp.sum(sqs.reshape(N, G, Cg), axis=-1, keepdims=True)
    mean = gsum / count
    var = gsq / count - mean * mean             # biased variance (PyTorch GN)
    inv = lax.rsqrt(var + EPS)
    inv = jnp.broadcast_to(inv, (N, G, Cg)).reshape(N, 1, C)
    mean = jnp.broadcast_to(mean, (N, G, Cg)).reshape(N, 1, C)
    scale = (inv * gamma.reshape(1, 1, C)).astype(jnp.float32)
    shift = (beta.reshape(1, 1, C) - mean * scale).astype(jnp.float32)

    out = pl.pallas_call(
        _gn_apply_silu_kernel,
        out_shape=jax.ShapeDtypeStruct((N, HW_pad, C), out_dtype),
        grid=(N, nT),
        in_specs=[pl.BlockSpec((1, TH, C), lambda n, t: (n, t, 0)),
                  pl.BlockSpec((1, 1, C), lambda n, t: (n, 0, 0)),
                  pl.BlockSpec((1, 1, C), lambda n, t: (n, 0, 0))],
        out_specs=pl.BlockSpec((1, TH, C), lambda n, t: (n, t, 0)),
        compiler_params=pltpu.CompilerParams(
            dimension_semantics=("parallel", "parallel"),
            vmem_limit_bytes=_VMEM_LIMIT),
        cost_estimate=pl.CostEstimate(
            flops=4 * N * HW_pad * C, transcendentals=N * HW_pad * C,
            bytes_accessed=4 * N * (2 * HW_pad * C + 2 * C)),
    )(xf, scale, shift)

    if HW_pad != HW:
        out = out[:, :HW, :]
    return out.reshape(N, H, W, C)


def _im2col(x, k, stride, pad):
    """x: (N, H, W, C) -> ((N, Ho*Wo, k*k*C), (Ho, Wo)). Tap order (dy, dx)."""
    N, H, W, C = x.shape
    Ho = (H + 2 * pad - k) // stride + 1
    Wo = (W + 2 * pad - k) // stride + 1
    if pad:
        x = jnp.pad(x, ((0, 0), (pad, pad), (pad, pad), (0, 0)))
    if k == 1 and stride == 1:
        patches = x
    else:
        patches = jnp.concatenate(
            [x[:, dy:dy + stride * Ho:stride, dx:dx + stride * Wo:stride, :]
             for dy in range(k) for dx in range(k)], axis=-1)
    return patches.reshape(N, Ho * Wo, k * k * C), (Ho, Wo)


def conv2d(x, W, b, *, stride=1, pad=0, residual=None):
    """PyTorch-semantics Conv2d (cross-correlation). W: (Cout, Cin, k, k).
    x: (N, H, W, Cin) NHWC. Optional fused residual add (same shape as out)."""
    Cout, Cin, k, _ = W.shape
    N = x.shape[0]

    # Tap-packed LHS: (N, Ho*Wo, k*k*Cin) so each MXU matmul gets K=k*k*Cin.
    x_flat, (Ho, Wo) = _im2col(x, k, stride, pad)
    M = Ho * Wo
    K = k * k * Cin

    TM = min(_MAX_TM, _round_up(M, 8))
    M_pad = _round_up(M, TM)
    if M_pad != M:
        x_flat = jnp.pad(x_flat, ((0, 0), (0, M_pad - M), (0, 0)))
    x_flat = x_flat.astype(_MM_DTYPE)
    num_m = M_pad // TM

    Coutp = _round_up(Cout, LANES)               # lane-dense output stores
    w_mat = jnp.transpose(W, (2, 3, 1, 0)).reshape(K, Cout)
    w_mat = jnp.pad(w_mat, ((0, 0), (0, Coutp - Cout))).astype(_MM_DTYPE)
    b_pad = jnp.pad(b, (0, Coutp - Cout)).reshape(1, Coutp).astype(jnp.float32)

    in_specs = [
        pl.BlockSpec((1, TM, K), lambda n, m: (n, m, 0)),
        pl.BlockSpec((K, Coutp), lambda n, m: (0, 0)),
        pl.BlockSpec((1, Coutp), lambda n, m: (0, 0)),
    ]
    args = [x_flat, w_mat, b_pad]
    has_res = residual is not None
    if has_res:
        r_flat = residual.reshape(N, M, Cout)
        r_flat = jnp.pad(r_flat, ((0, 0), (0, M_pad - M), (0, Coutp - Cout)))
        in_specs.append(pl.BlockSpec((1, TM, Coutp), lambda n, m: (n, m, 0)))
        args.append(r_flat)

    itm = jnp.dtype(_MM_DTYPE).itemsize
    flops = 2 * N * M_pad * Coutp * K
    bytes_accessed = (N * M_pad * K * itm + K * Coutp * itm + Coutp * 4
                      + N * M_pad * Coutp * 4 * (2 if has_res else 1))

    out = pl.pallas_call(
        _make_conv_kernel(has_res),
        out_shape=jax.ShapeDtypeStruct((N, M_pad, Coutp), jnp.float32),
        grid=(N, num_m),
        in_specs=in_specs,
        out_specs=pl.BlockSpec((1, TM, Coutp), lambda n, m: (n, m, 0)),
        compiler_params=pltpu.CompilerParams(
            dimension_semantics=("parallel", "parallel"),
            vmem_limit_bytes=_VMEM_LIMIT),
        cost_estimate=pl.CostEstimate(flops=flops, transcendentals=0,
                                      bytes_accessed=bytes_accessed),
    )(*args)

    return out[:, :M, :Cout].reshape(N, Ho, Wo, Cout)


# --------------------------- parameter creation -----------------------------

def _init_conv(key, cin, cout, k):
    kw, kb = jax.random.split(key)
    bound = 1.0 / math.sqrt(cin * k * k)
    return {"W": jax.random.uniform(kw, (cout, cin, k, k), jnp.float32, -bound, bound),
            "b": jax.random.uniform(kb, (cout,), jnp.float32, -bound, bound)}


def _init_gsc(key, cin, cout, k):
    p = _init_conv(key, cin, cout, k)
    p["gamma"] = jnp.ones((cin,), jnp.float32)   # GroupNorm affine defaults
    p["beta"] = jnp.zeros((cin,), jnp.float32)
    return p


def _init_resblock(key, cin, cout):
    k1, k2, k3 = jax.random.split(key, 3)
    p = {"gsc1": _init_gsc(k1, cin, cout, 3),
         "gsc2": _init_gsc(k2, cout, cout, 3)}
    if cin != cout:
        p["res"] = _init_conv(k3, cin, cout, 1)
    return p


def _init_downsample(key, cin, cout):
    k1, k2, k3 = jax.random.split(key, 3)
    return {"conv": _init_conv(k1, cin, cin, 3),
            "rb1": _init_resblock(k2, cin, cout),
            "rb2": _init_resblock(k3, cout, cout)}


def init_encoder(key, channels):
    keys = jax.random.split(key, len(channels) + 1)
    return {
        "conv0": _init_conv(keys[0], channels[0], channels[1], 3),
        "rb0": _init_resblock(keys[1], channels[1], channels[1]),
        "downs": [_init_downsample(keys[1 + i], channels[i], channels[i + 1])
                  for i in range(1, len(channels) - 1)],
    }


# ------------------------------ forward pass --------------------------------

def gsc_forward(x, p, num_groups, residual=None):
    h = groupnorm_silu(x, p["gamma"], p["beta"], num_groups)
    return conv2d(h, p["W"], p["b"], stride=1, pad=1, residual=residual)


def resblock_forward(x, p, num_groups):
    if "res" in p:
        r = conv2d(x, p["res"]["W"], p["res"]["b"], stride=1, pad=0)   # 1x1 conv
    else:
        r = x                                                          # identity
    h = gsc_forward(x, p["gsc1"], num_groups)
    # residual add fused into the second conv's epilogue
    return gsc_forward(h, p["gsc2"], num_groups, residual=r)


def downsample_forward(x, p, num_groups):
    h = conv2d(x, p["conv"]["W"], p["conv"]["b"], stride=2, pad=1)
    h = resblock_forward(h, p["rb1"], num_groups)
    return resblock_forward(h, p["rb2"], num_groups)


def encoder_forward(x_nchw, params, num_groups):
    x = jnp.transpose(x_nchw, (0, 2, 3, 1))      # NCHW -> NHWC
    h = conv2d(x, params["conv0"]["W"], params["conv0"]["b"], stride=1, pad=1)
    h = resblock_forward(h, params["rb0"], num_groups)
    for dp in params["downs"]:
        h = downsample_forward(h, dp, num_groups)
    return jnp.transpose(h, (0, 3, 1, 2))        # NHWC -> NCHW


# ---------------------------------- main ------------------------------------

if __name__ == "__main__":
    channels = (3, 8, 16)      # Encoder(channels=[3, 8, 16], num_groups=4)
    num_groups = 4
    key = jax.random.PRNGKey(0)
    kx, kp = jax.random.split(key)

    x = jax.random.normal(kx, (2, 3, 16, 16), jnp.float32)   # NCHW like PyTorch
    params = init_encoder(kp, channels)

    fwd = jax.jit(lambda inp: encoder_forward(inp, params, num_groups))
    y = fwd(x)
    jax.block_until_ready(y)

    # 16x16 -> conv/resblock (8 ch, 16x16) -> one Downsample -> (16 ch, 8x8)
    assert y.shape == (2, 16, 8, 8), y.shape
    assert bool(jnp.all(jnp.isfinite(y)))
    print("KERNEL_OK")
</pallas_src>

<mosaic_0001>
module attributes {stable_mosaic.version = 11 : i64} {
  func.func @kernel(%arg0: i32, %arg1: i32, %arg2: memref<1x256x27xbf16, #tpu.memory_space<vmem>>, %arg3: memref<27x128xbf16, #tpu.memory_space<vmem>>, %arg4: memref<1x128xf32, #tpu.memory_space<vmem>>, %arg5: memref<1x256x128xf32, #tpu.memory_space<vmem>>) attributes {dimension_semantics = [#tpu.dimension_semantics<parallel>, #tpu.dimension_semantics<parallel>], iteration_bounds = array<i64: 2, 1>, scalar_prefetch = 0 : i64, scratch_operands = 0 : i64, tpu.core_type = #tpu.core_type<tc>, window_params = [{transform_indices = @transform_0, window_bounds = array<i64: 1, 256, 27>}, {pipeline_mode = #tpu.pipeline_mode<synchronous>, transform_indices = @transform_1, window_bounds = array<i64: 27, 128>}, {pipeline_mode = #tpu.pipeline_mode<synchronous>, transform_indices = @transform_2, window_bounds = array<i64: 1, 128>}, {transform_indices = @transform_3, window_bounds = array<i64: 1, 256, 128>}]} {
    %c0 = arith.constant 0 : index
    %c0_0 = arith.constant 0 : index
    %c0_1 = arith.constant 0 : index
    %0 = vector.load %arg2[%c0, %c0_0, %c0_1] : memref<1x256x27xbf16, #tpu.memory_space<vmem>>, vector<1x256x27xbf16>
    %1 = vector.shape_cast %0 : vector<1x256x27xbf16> to vector<256x27xbf16>
    %c0_2 = arith.constant 0 : index
    %c0_3 = arith.constant 0 : index
    %2 = vector.load %arg3[%c0_2, %c0_3] : memref<27x128xbf16, #tpu.memory_space<vmem>>, vector<27x128xbf16>
    %cst = arith.constant dense<0.000000e+00> : vector<256x128xf32>
    %3 = tpu.matmul %1, %2, %cst {dimension_numbers = #tpu.dot_dimension_numbers<[1], [0], [0], [1], [0, 0, 1, 1], [], []>} : vector<256x27xbf16>, vector<27x128xbf16>, vector<256x128xf32> -> vector<256x128xf32>
    %c0_4 = arith.constant 0 : index
    %c0_5 = arith.constant 0 : index
    %4 = vector.load %arg4[%c0_4, %c0_5] : memref<1x128xf32, #tpu.memory_space<vmem>>, vector<1x128xf32>
    %5 = vector.broadcast %4 : vector<1x128xf32> to vector<256x128xf32>
    %6 = arith.addf %3, %5 : vector<256x128xf32>
    %c0_6 = arith.constant 0 : index
    %c0_7 = arith.constant 0 : index
    %c0_8 = arith.constant 0 : index
    %7 = vector.load %arg5[%c0_6, %c0_7, %c0_8] : memref<1x256x128xf32, #tpu.memory_space<vmem>>, vector<1x256x128xf32>
    %8 = vector.shape_cast %7 : vector<1x256x128xf32> to vector<256x128xf32>
    %9 = vector.shape_cast %6 : vector<256x128xf32> to vector<1x256x128xf32>
    tpu.vector_store %arg5[%c0_6, %c0_7, %c0_8], %9 {strides = array<i32>} : memref<1x256x128xf32, #tpu.memory_space<vmem>>, vector<1x256x128xf32>,
    return
  }
  func.func @transform_0(%arg0: i32, %arg1: i32) -> (i32, i32, i32) {
    %c0_i32 = arith.constant 0 : i32
    %c0_i32_0 = arith.constant 0 : i32
    return %arg0, %arg1, %c0_i32 : i32, i32, i32
  }
  func.func @transform_1(%arg0: i32, %arg1: i32) -> (i32, i32) {
    %c0_i32 = arith.constant 0 : i32
    %c0_i32_0 = arith.constant 0 : i32
    %c0_i32_1 = arith.constant 0 : i32
    return %c0_i32, %c0_i32_0 : i32, i32
  }
  func.func @transform_2(%arg0: i32, %arg1: i32) -> (i32, i32) {
    %c0_i32 = arith.constant 0 : i32
    %c0_i32_0 = arith.constant 0 : i32
    %c0_i32_1 = arith.constant 0 : i32
    return %c0_i32, %c0_i32_0 : i32, i32
  }
  func.func @transform_3(%arg0: i32, %arg1: i32) -> (i32, i32, i32) {
    %c0_i32 = arith.constant 0 : i32
    %c0_i32_0 = arith.constant 0 : i32
    return %arg0, %arg1, %c0_i32 : i32, i32, i32
  }
}

module attributes {stable_mosaic.version = 11 : i64} {
  func.func @_gn_stats_kernel(%arg0: i32, %arg1: i32, %arg2: memref<1x256x8xf32, #tpu.memory_space<vmem>>, %arg3: memref<1x1x8xf32, #tpu.memory_space<vmem>>, %arg4: memref<1x1x8xf32, #tpu.memory_space<vmem>>, %arg5: memref<1x8xf32, #tpu.memory_space<vmem>>, %arg6: memref<1x8xf32, #tpu.memory_space<vmem>>) attributes {dimension_semantics = [#tpu.dimension_semantics<parallel>, #tpu.dimension_semantics<arbitrary>], iteration_bounds = array<i64: 2, 1>, scalar_prefetch = 0 : i64, scratch_operands = 2 : i64, tpu.core_type = #tpu.core_type<tc>, window_params = [{transform_indices = @transform_0, window_bounds = array<i64: 1, 256, 8>}, {transform_indices = @transform_1, window_bounds = array<i64: 1, 1, 8>}, {transform_indices = @transform_2, window_bounds = array<i64: 1, 1, 8>}]} {
    %c0_i32 = arith.constant 0 : i32
    %0 = arith.cmpi eq, %arg1, %c0_i32 : i32
    %1 = arith.extui %0 : i1 to i32
    %c0_i32_0 = arith.constant 0 : i32
    %2 = arith.cmpi ne, %1, %c0_i32_0 : i32
    scf.if %2 {
      %cst_14 = arith.constant 0.000000e+00 : f32
      %19 = vector.broadcast %cst_14 : f32 to vector<1x8xf32>
      %c0_15 = arith.constant 0 : index
      %c0_16 = arith.constant 0 : index
      %20 = vector.load %arg5[%c0_15, %c0_16] : memref<1x8xf32, #tpu.memory_space<vmem>>, vector<1x8xf32>
      tpu.vector_store %arg5[%c0_15, %c0_16], %19 {strides = array<i32>} : memref<1x8xf32, #tpu.memory_space<vmem>>, vector<1x8xf32>,
      %cst_17 = arith.constant 0.000000e+00 : f32
      %21 = vector.broadcast %cst_17 : f32 to vector<1x8xf32>
      %c0_18 = arith.constant 0 : index
      %c0_19 = arith.constant 0 : index
      %22 = vector.load %arg6[%c0_18, %c0_19] : memref<1x8xf32, #tpu.memory_space<vmem>>, vector<1x8xf32>
      tpu.vector_store %arg6[%c0_18, %c0_19], %21 {strides = array<i32>} : memref<1x8xf32, #tpu.memory_space<vmem>>, vector<1x8xf32>,
    } else {
    }
    %c0 = arith.constant 0 : index
    %c0_1 = arith.constant 0 : index
    %c0_2 = arith.constant 0 : index
    %3 = vector.load %arg2[%c0, %c0_1, %c0_2] : memref<1x256x8xf32, #tpu.memory_space<vmem>>, vector<1x256x8xf32>
    %4 = vector.shape_cast %3 : vector<1x256x8xf32> to vector<256x8xf32>
    %c0_3 = arith.constant 0 : index
    %c0_4 = arith.constant 0 : index
    %5 = vector.load %arg5[%c0_3, %c0_4] : memref<1x8xf32, #tpu.memory_space<vmem>>, vector<1x8xf32>
    %cst = arith.constant dense<0.000000e+00> : vector<8xf32>
    %6 = vector.multi_reduction <add>, %4, %cst [0] : vector<256x8xf32> to vector<8xf32>
    %7 = vector.shape_cast %6 : vector<8xf32> to vector<1x8xf32>
    %8 = arith.addf %5, %7 : vector<1x8xf32>
    %c0_5 = arith.constant 0 : index
    %c0_6 = arith.constant 0 : index
    %9 = vector.load %arg5[%c0_5, %c0_6] : memref<1x8xf32, #tpu.memory_space<vmem>>, vector<1x8xf32>
    tpu.vector_store %arg5[%c0_5, %c0_6], %8 {strides = array<i32>} : memref<1x8xf32, #tpu.memory_space<vmem>>, vector<1x8xf32>,
    %c0_7 = arith.constant 0 : index
    %c0_8 = arith.constant 0 : index
    %10 = vector.load %arg6[%c0_7, %c0_8] : memref<1x8xf32, #tpu.memory_space<vmem>>, vector<1x8xf32>
    %11 = arith.mulf %4, %4 : vector<256x8xf32>
    %cst_9 = arith.constant dense<0.000000e+00> : vector<8xf32>
    %12 = vector.multi_reduction <add>, %11, %cst_9 [0] : vector<256x8xf32> to vector<8xf32>
    %13 = vector.shape_cast %12 : vector<8xf32> to vector<1x8xf32>
    %14 = arith.addf %10, %13 : vector<1x8xf32>
    %c0_10 = arith.constant 0 : index
    %c0_11 = arith.constant 0 : index
    %15 = vector.load %arg6[%c0_10, %c0_11] : memref<1x8xf32, #tpu.memory_space<vmem>>, vector<1x8xf32>
    tpu.vector_store %arg6[%c0_10, %c0_11], %14 {strides = array<i32>} : memref<1x8xf32, #tpu.memory_space<vmem>>, vector<1x8xf32>,
    %c0_i32_12 = arith.constant 0 : i32
    %16 = arith.cmpi eq, %arg1, %c0_i32_12 : i32
    %17 = arith.extui %16 : i1 to i32
    %c0_i32_13 = arith.constant 0 : i32
    %18 = arith.cmpi ne, %17, %c0_i32_13 : i32
    scf.if %18 {
      %c0_14 = arith.constant 0 : index
      %c0_15 = arith.constant 0 : index
      %19 = vector.load %arg5[%c0_14, %c0_15] : memref<1x8xf32, #tpu.memory_space<vmem>>, vector<1x8xf32>
      %c0_16 = arith.constant 0 : index
      %c0_17 = arith.constant 0 : index
      %c0_18 = arith.constant 0 : index
      %20 = vector.load %arg3[%c0_16, %c0_17, %c0_18] : memref<1x1x8xf32, #tpu.memory_space<vmem>>, vector<1x1x8xf32>
      %21 = vector.shape_cast %20 : vector<1x1x8xf32> to vector<1x8xf32>
      %22 = vector.shape_cast %19 : vector<1x8xf32> to vector<1x1x8xf32>
      tpu.vector_store %arg3[%c0_16, %c0_17, %c0_18], %22 {strides = array<i32>} : memref<1x1x8xf32, #tpu.memory_space<vmem>>, vector<1x1x8xf32>,
      %c0_19 = arith.constant 0 : index
      %c0_20 = arith.constant 0 : index
      %23 = vector.load %arg6[%c0_19, %c0_20] : memref<1x8xf32, #tpu.memory_space<vmem>>, vector<1x8xf32>
      %c0_21 = arith.constant 0 : index
      %c0_22 = arith.constant 0 : index
      %c0_23 = arith.constant 0 : index
      %24 = vector.load %arg4[%c0_21, %c0_22, %c0_23] : memref<1x1x8xf32, #tpu.memory_space<vmem>>, vector<1x1x8xf32>
      %25 = vector.shape_cast %24 : vector<1x1x8xf32> to vector<1x8xf32>
      %26 = vector.shape_cast %23 : vector<1x8xf32> to vector<1x1x8xf32>
      tpu.vector_store %arg4[%c0_21, %c0_22, %c0_23], %26 {strides = array<i32>} : memref<1x1x8xf32, #tpu.memory_space<vmem>>, vector<1x1x8xf32>,
    } else {
    }
    return
  }
  func.func @transform_0(%arg0: i32, %arg1: i32) -> (i32, i32, i32) {
    %c0_i32 = arith.constant 0 : i32
    %c0_i32_0 = arith.constant 0 : i32
    return %arg0, %arg1, %c0_i32 : i32, i32, i32
  }
  func.func @transform_1(%arg0: i32, %arg1: i32) -> (i32, i32, i32) {
    %c0_i32 = arith.constant 0 : i32
    %c0_i32_0 = arith.constant 0 : i32
    %c0_i32_1 = arith.constant 0 : i32
    return %arg0, %c0_i32, %c0_i32_0 : i32, i32, i32
  }
  func.func @transform_2(%arg0: i32, %arg1: i32) -> (i32, i32, i32) {
    %c0_i32 = arith.constant 0 : i32
    %c0_i32_0 = arith.constant 0 : i32
    %c0_i32_1 = arith.constant 0 : i32
    return %arg0, %c0_i32, %c0_i32_0 : i32, i32, i32
  }
}

module attributes {stable_mosaic.version = 11 : i64} {
  func.func @_gn_apply_silu_kernel(%arg0: i32, %arg1: i32, %arg2: memref<1x256x8xf32, #tpu.memory_space<vmem>>, %arg3: memref<1x1x8xf32, #tpu.memory_space<vmem>>, %arg4: memref<1x1x8xf32, #tpu.memory_space<vmem>>, %arg5: memref<1x256x8xbf16, #tpu.memory_space<vmem>>) attributes {dimension_semantics = [#tpu.dimension_semantics<parallel>, #tpu.dimension_semantics<parallel>], iteration_bounds = array<i64: 2, 1>, scalar_prefetch = 0 : i64, scratch_operands = 0 : i64, tpu.core_type = #tpu.core_type<tc>, window_params = [{transform_indices = @transform_0, window_bounds = array<i64: 1, 256, 8>}, {transform_indices = @transform_1, window_bounds = array<i64: 1, 1, 8>}, {transform_indices = @transform_2, window_bounds = array<i64: 1, 1, 8>}, {transform_indices = @transform_3, window_bounds = array<i64: 1, 256, 8>}]} {
    %c0 = arith.constant 0 : index
    %c0_0 = arith.constant 0 : index
    %c0_1 = arith.constant 0 : index
    %0 = vector.load %arg2[%c0, %c0_0, %c0_1] : memref<1x256x8xf32, #tpu.memory_space<vmem>>, vector<1x256x8xf32>
    %1 = vector.shape_cast %0 : vector<1x256x8xf32> to vector<256x8xf32>
    %c0_2 = arith.constant 0 : index
    %c0_3 = arith.constant 0 : index
    %c0_4 = arith.constant 0 : index
    %2 = vector.load %arg3[%c0_2, %c0_3, %c0_4] : memref<1x1x8xf32, #tpu.memory_space<vmem>>, vector<1x1x8xf32>
    %3 = vector.shape_cast %2 : vector<1x1x8xf32> to vector<1x8xf32>
    %4 = vector.broadcast %3 : vector<1x8xf32> to vector<256x8xf32>
    %5 = arith.mulf %1, %4 : vector<256x8xf32>
    %c0_5 = arith.constant 0 : index
    %c0_6 = arith.constant 0 : index
    %c0_7 = arith.constant 0 : index
    %6 = vector.load %arg4[%c0_5, %c0_6, %c0_7] : memref<1x1x8xf32, #tpu.memory_space<vmem>>, vector<1x1x8xf32>
    %7 = vector.shape_cast %6 : vector<1x1x8xf32> to vector<1x8xf32>
    %8 = vector.broadcast %7 : vector<1x8xf32> to vector<256x8xf32>
    %9 = arith.addf %5, %8 : vector<256x8xf32>
    %10 = arith.negf %9 : vector<256x8xf32>
    %11 = math.exp %10 : vector<256x8xf32>
    %cst = arith.constant 1.000000e+00 : f32
    %12 = vector.broadcast %cst : f32 to vector<256x8xf32>
    %13 = arith.addf %12, %11 : vector<256x8xf32>
    %14 = arith.divf %12, %13 : vector<256x8xf32>
    %15 = arith.mulf %9, %14 : vector<256x8xf32>
    %16 = arith.truncf %15 : vector<256x8xf32> to vector<256x8xbf16>
    %c0_8 = arith.constant 0 : index
    %c0_9 = arith.constant 0 : index
    %c0_10 = arith.constant 0 : index
    %17 = vector.load %arg5[%c0_8, %c0_9, %c0_10] : memref<1x256x8xbf16, #tpu.memory_space<vmem>>, vector<1x256x8xbf16>
    %18 = vector.shape_cast %17 : vector<1x256x8xbf16> to vector<256x8xbf16>
    %19 = vector.shape_cast %16 : vector<256x8xbf16> to vector<1x256x8xbf16>
    tpu.vector_store %arg5[%c0_8, %c0_9, %c0_10], %19 {strides = array<i32>} : memref<1x256x8xbf16, #tpu.memory_space<vmem>>, vector<1x256x8xbf16>,
    return
  }
  func.func @transform_0(%arg0: i32, %arg1: i32) -> (i32, i32, i32) {
    %c0_i32 = arith.constant 0 : i32
    %c0_i32_0 = arith.constant 0 : i32
    return %arg0, %arg1, %c0_i32 : i32, i32, i32
  }
  func.func @transform_1(%arg0: i32, %arg1: i32) -> (i32, i32, i32) {
    %c0_i32 = arith.constant 0 : i32
    %c0_i32_0 = arith.constant 0 : i32
    %c0_i32_1 = arith.constant 0 : i32
    return %arg0, %c0_i32, %c0_i32_0 : i32, i32, i32
  }
  func.func @transform_2(%arg0: i32, %arg1: i32) -> (i32, i32, i32) {
    %c0_i32 = arith.constant 0 : i32
    %c0_i32_0 = arith.constant 0 : i32
    %c0_i32_1 = arith.constant 0 : i32
    return %arg0, %c0_i32, %c0_i32_0 : i32, i32, i32
  }
  func.func @transform_3(%arg0: i32, %arg1: i32) -> (i32, i32, i32) {
    %c0_i32 = arith.constant 0 : i32
    %c0_i32_0 = arith.constant 0 : i32
    return %arg0, %arg1, %c0_i32 : i32, i32, i32
  }
}

module attributes {stable_mosaic.version = 11 : i64} {
  func.func @kernel(%arg0: i32, %arg1: i32, %arg2: memref<1x256x72xbf16, #tpu.memory_space<vmem>>, %arg3: memref<72x128xbf16, #tpu.memory_space<vmem>>, %arg4: memref<1x128xf32, #tpu.memory_space<vmem>>, %arg5: memref<1x256x128xf32, #tpu.memory_space<vmem>>) attributes {dimension_semantics = [#tpu.dimension_semantics<parallel>, #tpu.dimension_semantics<parallel>], iteration_bounds = array<i64: 2, 1>, scalar_prefetch = 0 : i64, scratch_operands = 0 : i64, tpu.core_type = #tpu.core_type<tc>, window_params = [{transform_indices = @transform_0, window_bounds = array<i64: 1, 256, 72>}, {pipeline_mode = #tpu.pipeline_mode<synchronous>, transform_indices = @transform_1, window_bounds = array<i64: 72, 128>}, {pipeline_mode = #tpu.pipeline_mode<synchronous>, transform_indices = @transform_2, window_bounds = array<i64: 1, 128>}, {transform_indices = @transform_3, window_bounds = array<i64: 1, 256, 128>}]} {
    %c0 = arith.constant 0 : index
    %c0_0 = arith.constant 0 : index
    %c0_1 = arith.constant 0 : index
    %0 = vector.load %arg2[%c0, %c0_0, %c0_1] : memref<1x256x72xbf16, #tpu.memory_space<vmem>>, vector<1x256x72xbf16>
    %1 = vector.shape_cast %0 : vector<1x256x72xbf16> to vector<256x72xbf16>
    %c0_2 = arith.constant 0 : index
    %c0_3 = arith.constant 0 : index
    %2 = vector.load %arg3[%c0_2, %c0_3] : memref<72x128xbf16, #tpu.memory_space<vmem>>, vector<72x128xbf16>
    %cst = arith.constant dense<0.000000e+00> : vector<256x128xf32>
    %3 = tpu.matmul %1, %2, %cst {dimension_numbers = #tpu.dot_dimension_numbers<[1], [0], [0], [1], [0, 0, 1, 1], [], []>} : vector<256x72xbf16>, vector<72x128xbf16>, vector<256x128xf32> -> vector<256x128xf32>
    %c0_4 = arith.constant 0 : index
    %c0_5 = arith.constant 0 : index
    %4 = vector.load %arg4[%c0_4, %c0_5] : memref<1x128xf32, #tpu.memory_space<vmem>>, vector<1x128xf32>
    %5 = vector.broadcast %4 : vector<1x128xf32> to vector<256x128xf32>
    %6 = arith.addf %3, %5 : vector<256x128xf32>
    %c0_6 = arith.constant 0 : index
    %c0_7 = arith.constant 0 : index
    %c0_8 = arith.constant 0 : index
    %7 = vector.load %arg5[%c0_6, %c0_7, %c0_8] : memref<1x256x128xf32, #tpu.memory_space<vmem>>, vector<1x256x128xf32>
    %8 = vector.shape_cast %7 : vector<1x256x128xf32> to vector<256x128xf32>
    %9 = vector.shape_cast %6 : vector<256x128xf32> to vector<1x256x128xf32>
    tpu.vector_store %arg5[%c0_6, %c0_7, %c0_8], %9 {strides = array<i32>} : memref<1x256x128xf32, #tpu.memory_space<vmem>>, vector<1x256x128xf32>,
    return
  }
  func.func @transform_0(%arg0: i32, %arg1: i32) -> (i32, i32, i32) {
    %c0_i32 = arith.constant 0 : i32
    %c0_i32_0 = arith.constant 0 : i32
    return %arg0, %arg1, %c0_i32 : i32, i32, i32
  }
  func.func @transform_1(%arg0: i32, %arg1: i32) -> (i32, i32) {
    %c0_i32 = arith.constant 0 : i32
    %c0_i32_0 = arith.constant 0 : i32
    %c0_i32_1 = arith.constant 0 : i32
    return %c0_i32, %c0_i32_0 : i32, i32
  }
  func.func @transform_2(%arg0: i32, %arg1: i32) -> (i32, i32) {
    %c0_i32 = arith.constant 0 : i32
    %c0_i32_0 = arith.constant 0 : i32
    %c0_i32_1 = arith.constant 0 : i32
    return %c0_i32, %c0_i32_0 : i32, i32
  }
  func.func @transform_3(%arg0: i32, %arg1: i32) -> (i32, i32, i32) {
    %c0_i32 = arith.constant 0 : i32
    %c0_i32_0 = arith.constant 0 : i32
    return %arg0, %arg1, %c0_i32 : i32, i32, i32
  }
}

module attributes {stable_mosaic.version = 11 : i64} {
  func.func @kernel(%arg0: i32, %arg1: i32, %arg2: memref<1x256x72xbf16, #tpu.memory_space<vmem>>, %arg3: memref<72x128xbf16, #tpu.memory_space<vmem>>, %arg4: memref<1x128xf32, #tpu.memory_space<vmem>>, %arg5: memref<1x256x128xf32, #tpu.memory_space<vmem>>, %arg6: memref<1x256x128xf32, #tpu.memory_space<vmem>>) attributes {dimension_semantics = [#tpu.dimension_semantics<parallel>, #tpu.dimension_semantics<parallel>], iteration_bounds = array<i64: 2, 1>, scalar_prefetch = 0 : i64, scratch_operands = 0 : i64, tpu.core_type = #tpu.core_type<tc>, window_params = [{transform_indices = @transform_0, window_bounds = array<i64: 1, 256, 72>}, {pipeline_mode = #tpu.pipeline_mode<synchronous>, transform_indices = @transform_1, window_bounds = array<i64: 72, 128>}, {pipeline_mode = #tpu.pipeline_mode<synchronous>, transform_indices = @transform_2, window_bounds = array<i64: 1, 128>}, {transform_indices = @transform_3, window_bounds = array<i64: 1, 256, 128>}, {transform_indices = @transform_4, window_bounds = array<i64: 1, 256, 128>}]} {
    %c0 = arith.constant 0 : index
    %c0_0 = arith.constant 0 : index
    %c0_1 = arith.constant 0 : index
    %0 = vector.load %arg2[%c0, %c0_0, %c0_1] : memref<1x256x72xbf16, #tpu.memory_space<vmem>>, vector<1x256x72xbf16>
    %1 = vector.shape_cast %0 : vector<1x256x72xbf16> to vector<256x72xbf16>
    %c0_2 = arith.constant 0 : index
    %c0_3 = arith.constant 0 : index
    %2 = vector.load %arg3[%c0_2, %c0_3] : memref<72x128xbf16, #tpu.memory_space<vmem>>, vector<72x128xbf16>
    %cst = arith.constant dense<0.000000e+00> : vector<256x128xf32>
    %3 = tpu.matmul %1, %2, %cst {dimension_numbers = #tpu.dot_dimension_numbers<[1], [0], [0], [1], [0, 0, 1, 1], [], []>} : vector<256x72xbf16>, vector<72x128xbf16>, vector<256x128xf32> -> vector<256x128xf32>
    %c0_4 = arith.constant 0 : index
    %c0_5 = arith.constant 0 : index
    %4 = vector.load %arg4[%c0_4, %c0_5] : memref<1x128xf32, #tpu.memory_space<vmem>>, vector<1x128xf32>
    %5 = vector.broadcast %4 : vector<1x128xf32> to vector<256x128xf32>
    %6 = arith.addf %3, %5 : vector<256x128xf32>
    %c0_6 = arith.constant 0 : index
    %c0_7 = arith.constant 0 : index
    %c0_8 = arith.constant 0 : index
    %7 = vector.load %arg5[%c0_6, %c0_7, %c0_8] : memref<1x256x128xf32, #tpu.memory_space<vmem>>, vector<1x256x128xf32>
    %8 = vector.shape_cast %7 : vector<1x256x128xf32> to vector<256x128xf32>
    %9 = arith.addf %6, %8 : vector<256x128xf32>
    %c0_9 = arith.constant 0 : index
    %c0_10 = arith.constant 0 : index
    %c0_11 = arith.constant 0 : index
    %10 = vector.load %arg6[%c0_9, %c0_10, %c0_11] : memref<1x256x128xf32, #tpu.memory_space<vmem>>, vector<1x256x128xf32>
    %11 = vector.shape_cast %10 : vector<1x256x128xf32> to vector<256x128xf32>
    %12 = vector.shape_cast %9 : vector<256x128xf32> to vector<1x256x128xf32>
    tpu.vector_store %arg6[%c0_9, %c0_10, %c0_11], %12 {strides = array<i32>} : memref<1x256x128xf32, #tpu.memory_space<vmem>>, vector<1x256x128xf32>,
    return
  }
  func.func @transform_0(%arg0: i32, %arg1: i32) -> (i32, i32, i32) {
    %c0_i32 = arith.constant 0 : i32
    %c0_i32_0 = arith.constant 0 : i32
    return %arg0, %arg1, %c0_i32 : i32, i32, i32
  }
  func.func @transform_1(%arg0: i32, %arg1: i32) -> (i32, i32) {
    %c0_i32 = arith.constant 0 : i32
    %c0_i32_0 = arith.constant 0 : i32
    %c0_i32_1 = arith.constant 0 : i32
    return %c0_i32, %c0_i32_0 : i32, i32
  }
  func.func @transform_2(%arg0: i32, %arg1: i32) -> (i32, i32) {
    %c0_i32 = arith.constant 0 : i32
    %c0_i32_0 = arith.constant 0 : i32
    %c0_i32_1 = arith.constant 0 : i32
    return %c0_i32, %c0_i32_0 : i32, i32
  }
  func.func @transform_3(%arg0: i32, %arg1: i32) -> (i32, i32, i32) {
    %c0_i32 = arith.constant 0 : i32
    %c0_i32_0 = arith.constant 0 : i32
    return %arg0, %arg1, %c0_i32 : i32, i32, i32
  }
  func.func @transform_4(%arg0: i32, %arg1: i32) -> (i32, i32, i32) {
    %c0_i32 = arith.constant 0 : i32
    %c0_i32_0 = arith.constant 0 : i32
    return %arg0, %arg1, %c0_i32 : i32, i32, i32
  }
}

module attributes {stable_mosaic.version = 11 : i64} {
  func.func @kernel(%arg0: i32, %arg1: i32, %arg2: memref<1x64x72xbf16, #tpu.memory_space<vmem>>, %arg3: memref<72x128xbf16, #tpu.memory_space<vmem>>, %arg4: memref<1x128xf32, #tpu.memory_space<vmem>>, %arg5: memref<1x64x128xf32, #tpu.memory_space<vmem>>) attributes {dimension_semantics = [#tpu.dimension_semantics<parallel>, #tpu.dimension_semantics<parallel>], iteration_bounds = array<i64: 2, 1>, scalar_prefetch = 0 : i64, scratch_operands = 0 : i64, tpu.core_type = #tpu.core_type<tc>, window_params = [{transform_indices = @transform_0, window_bounds = array<i64: 1, 64, 72>}, {pipeline_mode = #tpu.pipeline_mode<synchronous>, transform_indices = @transform_1, window_bounds = array<i64: 72, 128>}, {pipeline_mode = #tpu.pipeline_mode<synchronous>, transform_indices = @transform_2, window_bounds = array<i64: 1, 128>}, {transform_indices = @transform_3, window_bounds = array<i64: 1, 64, 128>}]} {
    %c0 = arith.constant 0 : index
    %c0_0 = arith.constant 0 : index
    %c0_1 = arith.constant 0 : index
    %0 = vector.load %arg2[%c0, %c0_0, %c0_1] : memref<1x64x72xbf16, #tpu.memory_space<vmem>>, vector<1x64x72xbf16>
    %1 = vector.shape_cast %0 : vector<1x64x72xbf16> to vector<64x72xbf16>
    %c0_2 = arith.constant 0 : index
    %c0_3 = arith.constant 0 : index
    %2 = vector.load %arg3[%c0_2, %c0_3] : memref<72x128xbf16, #tpu.memory_space<vmem>>, vector<72x128xbf16>
    %cst = arith.constant dense<0.000000e+00> : vector<64x128xf32>
    %3 = tpu.matmul %1, %2, %cst {dimension_numbers = #tpu.dot_dimension_numbers<[1], [0], [0], [1], [0, 0, 1, 1], [], []>} : vector<64x72xbf16>, vector<72x128xbf16>, vector<64x128xf32> -> vector<64x128xf32>
    %c0_4 = arith.constant 0 : index
    %c0_5 = arith.constant 0 : index
    %4 = vector.load %arg4[%c0_4, %c0_5] : memref<1x128xf32, #tpu.memory_space<vmem>>, vector<1x128xf32>
    %5 = vector.broadcast %4 : vector<1x128xf32> to vector<64x128xf32>
    %6 = arith.addf %3, %5 : vector<64x128xf32>
    %c0_6 = arith.constant 0 : index
    %c0_7 = arith.constant 0 : index
    %c0_8 = arith.constant 0 : index
    %7 = vector.load %arg5[%c0_6, %c0_7, %c0_8] : memref<1x64x128xf32, #tpu.memory_space<vmem>>, vector<1x64x128xf32>
    %8 = vector.shape_cast %7 : vector<1x64x128xf32> to vector<64x128xf32>
    %9 = vector.shape_cast %6 : vector<64x128xf32> to vector<1x64x128xf32>
    tpu.vector_store %arg5[%c0_6, %c0_7, %c0_8], %9 {strides = array<i32>} : memref<1x64x128xf32, #tpu.memory_space<vmem>>, vector<1x64x128xf32>,
    return
  }
  func.func @transform_0(%arg0: i32, %arg1: i32) -> (i32, i32, i32) {
    %c0_i32 = arith.constant 0 : i32
    %c0_i32_0 = arith.constant 0 : i32
    return %arg0, %arg1, %c0_i32 : i32, i32, i32
  }
  func.func @transform_1(%arg0: i32, %arg1: i32) -> (i32, i32) {
    %c0_i32 = arith.constant 0 : i32
    %c0_i32_0 = arith.constant 0 : i32
    %c0_i32_1 = arith.constant 0 : i32
    return %c0_i32, %c0_i32_0 : i32, i32
  }
  func.func @transform_2(%arg0: i32, %arg1: i32) -> (i32, i32) {
    %c0_i32 = arith.constant 0 : i32
    %c0_i32_0 = arith.constant 0 : i32
    %c0_i32_1 = arith.constant 0 : i32
    return %c0_i32, %c0_i32_0 : i32, i32
  }
  func.func @transform_3(%arg0: i32, %arg1: i32) -> (i32, i32, i32) {
    %c0_i32 = arith.constant 0 : i32
    %c0_i32_0 = arith.constant 0 : i32
    return %arg0, %arg1, %c0_i32 : i32, i32, i32
  }
}

module attributes {stable_mosaic.version = 11 : i64} {
  func.func @_gn_stats_kernel(%arg0: i32, %arg1: i32, %arg2: memref<1x64x8xf32, #tpu.memory_space<vmem>>, %arg3: memref<1x1x8xf32, #tpu.memory_space<vmem>>, %arg4: memref<1x1x8xf32, #tpu.memory_space<vmem>>, %arg5: memref<1x8xf32, #tpu.memory_space<vmem>>, %arg6: memref<1x8xf32, #tpu.memory_space<vmem>>) attributes {dimension_semantics = [#tpu.dimension_semantics<parallel>, #tpu.dimension_semantics<arbitrary>], iteration_bounds = array<i64: 2, 1>, scalar_prefetch = 0 : i64, scratch_operands = 2 : i64, tpu.core_type = #tpu.core_type<tc>, window_params = [{transform_indices = @transform_0, window_bounds = array<i64: 1, 64, 8>}, {transform_indices = @transform_1, window_bounds = array<i64: 1, 1, 8>}, {transform_indices = @transform_2, window_bounds = array<i64: 1, 1, 8>}]} {
    %c0_i32 = arith.constant 0 : i32
    %0 = arith.cmpi eq, %arg1, %c0_i32 : i32
    %1 = arith.extui %0 : i1 to i32
    %c0_i32_0 = arith.constant 0 : i32
    %2 = arith.cmpi ne, %1, %c0_i32_0 : i32
    scf.if %2 {
      %cst_14 = arith.constant 0.000000e+00 : f32
      %19 = vector.broadcast %cst_14 : f32 to vector<1x8xf32>
      %c0_15 = arith.constant 0 : index
      %c0_16 = arith.constant 0 : index
      %20 = vector.load %arg5[%c0_15, %c0_16] : memref<1x8xf32, #tpu.memory_space<vmem>>, vector<1x8xf32>
      tpu.vector_store %arg5[%c0_15, %c0_16], %19 {strides = array<i32>} : memref<1x8xf32, #tpu.memory_space<vmem>>, vector<1x8xf32>,
      %cst_17 = arith.constant 0.000000e+00 : f32
      %21 = vector.broadcast %cst_17 : f32 to vector<1x8xf32>
      %c0_18 = arith.constant 0 : index
      %c0_19 = arith.constant 0 : index
      %22 = vector.load %arg6[%c0_18, %c0_19] : memref<1x8xf32, #tpu.memory_space<vmem>>, vector<1x8xf32>
      tpu.vector_store %arg6[%c0_18, %c0_19], %21 {strides = array<i32>} : memref<1x8xf32, #tpu.memory_space<vmem>>, vector<1x8xf32>,
    } else {
    }
    %c0 = arith.constant 0 : index
    %c0_1 = arith.constant 0 : index
    %c0_2 = arith.constant 0 : index
    %3 = vector.load %arg2[%c0, %c0_1, %c0_2] : memref<1x64x8xf32, #tpu.memory_space<vmem>>, vector<1x64x8xf32>
    %4 = vector.shape_cast %3 : vector<1x64x8xf32> to vector<64x8xf32>
    %c0_3 = arith.constant 0 : index
    %c0_4 = arith.constant 0 : index
    %5 = vector.load %arg5[%c0_3, %c0_4] : memref<1x8xf32, #tpu.memory_space<vmem>>, vector<1x8xf32>
    %cst = arith.constant dense<0.000000e+00> : vector<8xf32>
    %6 = vector.multi_reduction <add>, %4, %cst [0] : vector<64x8xf32> to vector<8xf32>
    %7 = vector.shape_cast %6 : vector<8xf32> to vector<1x8xf32>
    %8 = arith.addf %5, %7 : vector<1x8xf32>
    %c0_5 = arith.constant 0 : index
    %c0_6 = arith.constant 0 : index
    %9 = vector.load %arg5[%c0_5, %c0_6] : memref<1x8xf32, #tpu.memory_space<vmem>>, vector<1x8xf32>
    tpu.vector_store %arg5[%c0_5, %c0_6], %8 {strides = array<i32>} : memref<1x8xf32, #tpu.memory_space<vmem>>, vector<1x8xf32>,
    %c0_7 = arith.constant 0 : index
    %c0_8 = arith.constant 0 : index
    %10 = vector.load %arg6[%c0_7, %c0_8] : memref<1x8xf32, #tpu.memory_space<vmem>>, vector<1x8xf32>
    %11 = arith.mulf %4, %4 : vector<64x8xf32>
    %cst_9 = arith.constant dense<0.000000e+00> : vector<8xf32>
    %12 = vector.multi_reduction <add>, %11, %cst_9 [0] : vector<64x8xf32> to vector<8xf32>
    %13 = vector.shape_cast %12 : vector<8xf32> to vector<1x8xf32>
    %14 = arith.addf %10, %13 : vector<1x8xf32>
    %c0_10 = arith.constant 0 : index
    %c0_11 = arith.constant 0 : index
    %15 = vector.load %arg6[%c0_10, %c0_11] : memref<1x8xf32, #tpu.memory_space<vmem>>, vector<1x8xf32>
    tpu.vector_store %arg6[%c0_10, %c0_11], %14 {strides = array<i32>} : memref<1x8xf32, #tpu.memory_space<vmem>>, vector<1x8xf32>,
    %c0_i32_12 = arith.constant 0 : i32
    %16 = arith.cmpi eq, %arg1, %c0_i32_12 : i32
    %17 = arith.extui %16 : i1 to i32
    %c0_i32_13 = arith.constant 0 : i32
    %18 = arith.cmpi ne, %17, %c0_i32_13 : i32
    scf.if %18 {
      %c0_14 = arith.constant 0 : index
      %c0_15 = arith.constant 0 : index
      %19 = vector.load %arg5[%c0_14, %c0_15] : memref<1x8xf32, #tpu.memory_space<vmem>>, vector<1x8xf32>
      %c0_16 = arith.constant 0 : index
      %c0_17 = arith.constant 0 : index
      %c0_18 = arith.constant 0 : index
      %20 = vector.load %arg3[%c0_16, %c0_17, %c0_18] : memref<1x1x8xf32, #tpu.memory_space<vmem>>, vector<1x1x8xf32>
      %21 = vector.shape_cast %20 : vector<1x1x8xf32> to vector<1x8xf32>
      %22 = vector.shape_cast %19 : vector<1x8xf32> to vector<1x1x8xf32>
      tpu.vector_store %arg3[%c0_16, %c0_17, %c0_18], %22 {strides = array<i32>} : memref<1x1x8xf32, #tpu.memory_space<vmem>>, vector<1x1x8xf32>,
      %c0_19 = arith.constant 0 : index
      %c0_20 = arith.constant 0 : index
      %23 = vector.load %arg6[%c0_19, %c0_20] : memref<1x8xf32, #tpu.memory_space<vmem>>, vector<1x8xf32>
      %c0_21 = arith.constant 0 : index
      %c0_22 = arith.constant 0 : index
      %c0_23 = arith.constant 0 : index
      %24 = vector.load %arg4[%c0_21, %c0_22, %c0_23] : memref<1x1x8xf32, #tpu.memory_space<vmem>>, vector<1x1x8xf32>
      %25 = vector.shape_cast %24 : vector<1x1x8xf32> to vector<1x8xf32>
      %26 = vector.shape_cast %23 : vector<1x8xf32> to vector<1x1x8xf32>
      tpu.vector_store %arg4[%c0_21, %c0_22, %c0_23], %26 {strides = array<i32>} : memref<1x1x8xf32, #tpu.memory_space<vmem>>, vector<1x1x8xf32>,
    } else {
    }
    return
  }
  func.func @transform_0(%arg0: i32, %arg1: i32) -> (i32, i32, i32) {
    %c0_i32 = arith.constant 0 : i32
    %c0_i32_0 = arith.constant 0 : i32
    return %arg0, %arg1, %c0_i32 : i32, i32, i32
  }
  func.func @transform_1(%arg0: i32, %arg1: i32) -> (i32, i32, i32) {
    %c0_i32 = arith.constant 0 : i32
    %c0_i32_0 = arith.constant 0 : i32
    %c0_i32_1 = arith.constant 0 : i32
    return %arg0, %c0_i32, %c0_i32_0 : i32, i32, i32
  }
  func.func @transform_2(%arg0: i32, %arg1: i32) -> (i32, i32, i32) {
    %c0_i32 = arith.constant 0 : i32
    %c0_i32_0 = arith.constant 0 : i32
    %c0_i32_1 = arith.constant 0 : i32
    return %arg0, %c0_i32, %c0_i32_0 : i32, i32, i32
  }
}

module attributes {stable_mosaic.version = 11 : i64} {
  func.func @_gn_apply_silu_kernel(%arg0: i32, %arg1: i32, %arg2: memref<1x64x8xf32, #tpu.memory_space<vmem>>, %arg3: memref<1x1x8xf32, #tpu.memory_space<vmem>>, %arg4: memref<1x1x8xf32, #tpu.memory_space<vmem>>, %arg5: memref<1x64x8xbf16, #tpu.memory_space<vmem>>) attributes {dimension_semantics = [#tpu.dimension_semantics<parallel>, #tpu.dimension_semantics<parallel>], iteration_bounds = array<i64: 2, 1>, scalar_prefetch = 0 : i64, scratch_operands = 0 : i64, tpu.core_type = #tpu.core_type<tc>, window_params = [{transform_indices = @transform_0, window_bounds = array<i64: 1, 64, 8>}, {transform_indices = @transform_1, window_bounds = array<i64: 1, 1, 8>}, {transform_indices = @transform_2, window_bounds = array<i64: 1, 1, 8>}, {transform_indices = @transform_3, window_bounds = array<i64: 1, 64, 8>}]} {
    %c0 = arith.constant 0 : index
    %c0_0 = arith.constant 0 : index
    %c0_1 = arith.constant 0 : index
    %0 = vector.load %arg2[%c0, %c0_0, %c0_1] : memref<1x64x8xf32, #tpu.memory_space<vmem>>, vector<1x64x8xf32>
    %1 = vector.shape_cast %0 : vector<1x64x8xf32> to vector<64x8xf32>
    %c0_2 = arith.constant 0 : index
    %c0_3 = arith.constant 0 : index
    %c0_4 = arith.constant 0 : index
    %2 = vector.load %arg3[%c0_2, %c0_3, %c0_4] : memref<1x1x8xf32, #tpu.memory_space<vmem>>, vector<1x1x8xf32>
    %3 = vector.shape_cast %2 : vector<1x1x8xf32> to vector<1x8xf32>
    %4 = vector.broadcast %3 : vector<1x8xf32> to vector<64x8xf32>
    %5 = arith.mulf %1, %4 : vector<64x8xf32>
    %c0_5 = arith.constant 0 : index
    %c0_6 = arith.constant 0 : index
    %c0_7 = arith.constant 0 : index
    %6 = vector.load %arg4[%c0_5, %c0_6, %c0_7] : memref<1x1x8xf32, #tpu.memory_space<vmem>>, vector<1x1x8xf32>
    %7 = vector.shape_cast %6 : vector<1x1x8xf32> to vector<1x8xf32>
    %8 = vector.broadcast %7 : vector<1x8xf32> to vector<64x8xf32>
    %9 = arith.addf %5, %8 : vector<64x8xf32>
    %10 = arith.negf %9 : vector<64x8xf32>
    %11 = math.exp %10 : vector<64x8xf32>
    %cst = arith.constant 1.000000e+00 : f32
    %12 = vector.broadcast %cst : f32 to vector<64x8xf32>
    %13 = arith.addf %12, %11 : vector<64x8xf32>
    %14 = arith.divf %12, %13 : vector<64x8xf32>
    %15 = arith.mulf %9, %14 : vector<64x8xf32>
    %16 = arith.truncf %15 : vector<64x8xf32> to vector<64x8xbf16>
    %c0_8 = arith.constant 0 : index
    %c0_9 = arith.constant 0 : index
    %c0_10 = arith.constant 0 : index
    %17 = vector.load %arg5[%c0_8, %c0_9, %c0_10] : memref<1x64x8xbf16, #tpu.memory_space<vmem>>, vector<1x64x8xbf16>
    %18 = vector.shape_cast %17 : vector<1x64x8xbf16> to vector<64x8xbf16>
    %19 = vector.shape_cast %16 : vector<64x8xbf16> to vector<1x64x8xbf16>
    tpu.vector_store %arg5[%c0_8, %c0_9, %c0_10], %19 {strides = array<i32>} : memref<1x64x8xbf16, #tpu.memory_space<vmem>>, vector<1x64x8xbf16>,
    return
  }
  func.func @transform_0(%arg0: i32, %arg1: i32) -> (i32, i32, i32) {
    %c0_i32 = arith.constant 0 : i32
    %c0_i32_0 = arith.constant 0 : i32
    return %arg0, %arg1, %c0_i32 : i32, i32, i32
  }
  func.func @transform_1(%arg0: i32, %arg1: i32) -> (i32, i32, i32) {
    %c0_i32 = arith.constant 0 : i32
    %c0_i32_0 = arith.constant 0 : i32
    %c0_i32_1 = arith.constant 0 : i32
    return %arg0, %c0_i32, %c0_i32_0 : i32, i32, i32
  }
  func.func @transform_2(%arg0: i32, %arg1: i32) -> (i32, i32, i32) {
    %c0_i32 = arith.constant 0 : i32
    %c0_i32_0 = arith.constant 0 : i32
    %c0_i32_1 = arith.constant 0 : i32
    return %arg0, %c0_i32, %c0_i32_0 : i32, i32, i32
  }
  func.func @transform_3(%arg0: i32, %arg1: i32) -> (i32, i32, i32) {
    %c0_i32 = arith.constant 0 : i32
    %c0_i32_0 = arith.constant 0 : i32
    return %arg0, %arg1, %c0_i32 : i32, i32, i32
  }
}

module attributes {stable_mosaic.version = 11 : i64} {
  func.func @_gn_stats_kernel(%arg0: i32, %arg1: i32, %arg2: memref<1x64x16xf32, #tpu.memory_space<vmem>>, %arg3: memref<1x1x16xf32, #tpu.memory_space<vmem>>, %arg4: memref<1x1x16xf32, #tpu.memory_space<vmem>>, %arg5: memref<1x16xf32, #tpu.memory_space<vmem>>, %arg6: memref<1x16xf32, #tpu.memory_space<vmem>>) attributes {dimension_semantics = [#tpu.dimension_semantics<parallel>, #tpu.dimension_semantics<arbitrary>], iteration_bounds = array<i64: 2, 1>, scalar_prefetch = 0 : i64, scratch_operands = 2 : i64, tpu.core_type = #tpu.core_type<tc>, window_params = [{transform_indices = @transform_0, window_bounds = array<i64: 1, 64, 16>}, {transform_indices = @transform_1, window_bounds = array<i64: 1, 1, 16>}, {transform_indices = @transform_2, window_bounds = array<i64: 1, 1, 16>}]} {
    %c0_i32 = arith.constant 0 : i32
    %0 = arith.cmpi eq, %arg1, %c0_i32 : i32
    %1 = arith.extui %0 : i1 to i32
    %c0_i32_0 = arith.constant 0 : i32
    %2 = arith.cmpi ne, %1, %c0_i32_0 : i32
    scf.if %2 {
      %cst_14 = arith.constant 0.000000e+00 : f32
      %19 = vector.broadcast %cst_14 : f32 to vector<1x16xf32>
      %c0_15 = arith.constant 0 : index
      %c0_16 = arith.constant 0 : index
      %20 = vector.load %arg5[%c0_15, %c0_16] : memref<1x16xf32, #tpu.memory_space<vmem>>, vector<1x16xf32>
      tpu.vector_store %arg5[%c0_15, %c0_16], %19 {strides = array<i32>} : memref<1x16xf32, #tpu.memory_space<vmem>>, vector<1x16xf32>,
      %cst_17 = arith.constant 0.000000e+00 : f32
      %21 = vector.broadcast %cst_17 : f32 to vector<1x16xf32>
      %c0_18 = arith.constant 0 : index
      %c0_19 = arith.constant 0 : index
      %22 = vector.load %arg6[%c0_18, %c0_19] : memref<1x16xf32, #tpu.memory_space<vmem>>, vector<1x16xf32>
      tpu.vector_store %arg6[%c0_18, %c0_19], %21 {strides = array<i32>} : memref<1x16xf32, #tpu.memory_space<vmem>>, vector<1x16xf32>,
    } else {
    }
    %c0 = arith.constant 0 : index
    %c0_1 = arith.constant 0 : index
    %c0_2 = arith.constant 0 : index
    %3 = vector.load %arg2[%c0, %c0_1, %c0_2] : memref<1x64x16xf32, #tpu.memory_space<vmem>>, vector<1x64x16xf32>
    %4 = vector.shape_cast %3 : vector<1x64x16xf32> to vector<64x16xf32>
    %c0_3 = arith.constant 0 : index
    %c0_4 = arith.constant 0 : index
    %5 = vector.load %arg5[%c0_3, %c0_4] : memref<1x16xf32, #tpu.memory_space<vmem>>, vector<1x16xf32>
    %cst = arith.constant dense<0.000000e+00> : vector<16xf32>
    %6 = vector.multi_reduction <add>, %4, %cst [0] : vector<64x16xf32> to vector<16xf32>
    %7 = vector.shape_cast %6 : vector<16xf32> to vector<1x16xf32>
    %8 = arith.addf %5, %7 : vector<1x16xf32>
    %c0_5 = arith.constant 0 : index
    %c0_6 = arith.constant 0 : index
    %9 = vector.load %arg5[%c0_5, %c0_6] : memref<1x16xf32, #tpu.memory_space<vmem>>, vector<1x16xf32>
    tpu.vector_store %arg5[%c0_5, %c0_6], %8 {strides = array<i32>} : memref<1x16xf32, #tpu.memory_space<vmem>>, vector<1x16xf32>,
    %c0_7 = arith.constant 0 : index
    %c0_8 = arith.constant 0 : index
    %10 = vector.load %arg6[%c0_7, %c0_8] : memref<1x16xf32, #tpu.memory_space<vmem>>, vector<1x16xf32>
    %11 = arith.mulf %4, %4 : vector<64x16xf32>
    %cst_9 = arith.constant dense<0.000000e+00> : vector<16xf32>
    %12 = vector.multi_reduction <add>, %11, %cst_9 [0] : vector<64x16xf32> to vector<16xf32>
    %13 = vector.shape_cast %12 : vector<16xf32> to vector<1x16xf32>
    %14 = arith.addf %10, %13 : vector<1x16xf32>
    %c0_10 = arith.constant 0 : index
    %c0_11 = arith.constant 0 : index
    %15 = vector.load %arg6[%c0_10, %c0_11] : memref<1x16xf32, #tpu.memory_space<vmem>>, vector<1x16xf32>
    tpu.vector_store %arg6[%c0_10, %c0_11], %14 {strides = array<i32>} : memref<1x16xf32, #tpu.memory_space<vmem>>, vector<1x16xf32>,
    %c0_i32_12 = arith.constant 0 : i32
    %16 = arith.cmpi eq, %arg1, %c0_i32_12 : i32
    %17 = arith.extui %16 : i1 to i32
    %c0_i32_13 = arith.constant 0 : i32
    %18 = arith.cmpi ne, %17, %c0_i32_13 : i32
    scf.if %18 {
      %c0_14 = arith.constant 0 : index
      %c0_15 = arith.constant 0 : index
      %19 = vector.load %arg5[%c0_14, %c0_15] : memref<1x16xf32, #tpu.memory_space<vmem>>, vector<1x16xf32>
      %c0_16 = arith.constant 0 : index
      %c0_17 = arith.constant 0 : index
      %c0_18 = arith.constant 0 : index
      %20 = vector.load %arg3[%c0_16, %c0_17, %c0_18] : memref<1x1x16xf32, #tpu.memory_space<vmem>>, vector<1x1x16xf32>
      %21 = vector.shape_cast %20 : vector<1x1x16xf32> to vector<1x16xf32>
      %22 = vector.shape_cast %19 : vector<1x16xf32> to vector<1x1x16xf32>
      tpu.vector_store %arg3[%c0_16, %c0_17, %c0_18], %22 {strides = array<i32>} : memref<1x1x16xf32, #tpu.memory_space<vmem>>, vector<1x1x16xf32>,
      %c0_19 = arith.constant 0 : index
      %c0_20 = arith.constant 0 : index
      %23 = vector.load %arg6[%c0_19, %c0_20] : memref<1x16xf32, #tpu.memory_space<vmem>>, vector<1x16xf32>
      %c0_21 = arith.constant 0 : index
      %c0_22 = arith.constant 0 : index
      %c0_23 = arith.constant 0 : index
      %24 = vector.load %arg4[%c0_21, %c0_22, %c0_23] : memref<1x1x16xf32, #tpu.memory_space<vmem>>, vector<1x1x16xf32>
      %25 = vector.shape_cast %24 : vector<1x1x16xf32> to vector<1x16xf32>
      %26 = vector.shape_cast %23 : vector<1x16xf32> to vector<1x1x16xf32>
      tpu.vector_store %arg4[%c0_21, %c0_22, %c0_23], %26 {strides = array<i32>} : memref<1x1x16xf32, #tpu.memory_space<vmem>>, vector<1x1x16xf32>,
    } else {
    }
    return
  }
  func.func @transform_0(%arg0: i32, %arg1: i32) -> (i32, i32, i32) {
    %c0_i32 = arith.constant 0 : i32
    %c0_i32_0 = arith.constant 0 : i32
    return %arg0, %arg1, %c0_i32 : i32, i32, i32
  }
  func.func @transform_1(%arg0: i32, %arg1: i32) -> (i32, i32, i32) {
    %c0_i32 = arith.constant 0 : i32
    %c0_i32_0 = arith.constant 0 : i32
    %c0_i32_1 = arith.constant 0 : i32
    return %arg0, %c0_i32, %c0_i32_0 : i32, i32, i32
  }
  func.func @transform_2(%arg0: i32, %arg1: i32) -> (i32, i32, i32) {
    %c0_i32 = arith.constant 0 : i32
    %c0_i32_0 = arith.constant 0 : i32
    %c0_i32_1 = arith.constant 0 : i32
    return %arg0, %c0_i32, %c0_i32_0 : i32, i32, i32
  }
}

module attributes {stable_mosaic.version = 11 : i64} {
  func.func @_gn_apply_silu_kernel(%arg0: i32, %arg1: i32, %arg2: memref<1x64x16xf32, #tpu.memory_space<vmem>>, %arg3: memref<1x1x16xf32, #tpu.memory_space<vmem>>, %arg4: memref<1x1x16xf32, #tpu.memory_space<vmem>>, %arg5: memref<1x64x16xbf16, #tpu.memory_space<vmem>>) attributes {dimension_semantics = [#tpu.dimension_semantics<parallel>, #tpu.dimension_semantics<parallel>], iteration_bounds = array<i64: 2, 1>, scalar_prefetch = 0 : i64, scratch_operands = 0 : i64, tpu.core_type = #tpu.core_type<tc>, window_params = [{transform_indices = @transform_0, window_bounds = array<i64: 1, 64, 16>}, {transform_indices = @transform_1, window_bounds = array<i64: 1, 1, 16>}, {transform_indices = @transform_2, window_bounds = array<i64: 1, 1, 16>}, {transform_indices = @transform_3, window_bounds = array<i64: 1, 64, 16>}]} {
    %c0 = arith.constant 0 : index
    %c0_0 = arith.constant 0 : index
    %c0_1 = arith.constant 0 : index
    %0 = vector.load %arg2[%c0, %c0_0, %c0_1] : memref<1x64x16xf32, #tpu.memory_space<vmem>>, vector<1x64x16xf32>
    %1 = vector.shape_cast %0 : vector<1x64x16xf32> to vector<64x16xf32>
    %c0_2 = arith.constant 0 : index
    %c0_3 = arith.constant 0 : index
    %c0_4 = arith.constant 0 : index
    %2 = vector.load %arg3[%c0_2, %c0_3, %c0_4] : memref<1x1x16xf32, #tpu.memory_space<vmem>>, vector<1x1x16xf32>
    %3 = vector.shape_cast %2 : vector<1x1x16xf32> to vector<1x16xf32>
    %4 = vector.broadcast %3 : vector<1x16xf32> to vector<64x16xf32>
    %5 = arith.mulf %1, %4 : vector<64x16xf32>
    %c0_5 = arith.constant 0 : index
    %c0_6 = arith.constant 0 : index
    %c0_7 = arith.constant 0 : index
    %6 = vector.load %arg4[%c0_5, %c0_6, %c0_7] : memref<1x1x16xf32, #tpu.memory_space<vmem>>, vector<1x1x16xf32>
    %7 = vector.shape_cast %6 : vector<1x1x16xf32> to vector<1x16xf32>
    %8 = vector.broadcast %7 : vector<1x16xf32> to vector<64x16xf32>
    %9 = arith.addf %5, %8 : vector<64x16xf32>
    %10 = arith.negf %9 : vector<64x16xf32>
    %11 = math.exp %10 : vector<64x16xf32>
    %cst = arith.constant 1.000000e+00 : f32
    %12 = vector.broadcast %cst : f32 to vector<64x16xf32>
    %13 = arith.addf %12, %11 : vector<64x16xf32>
    %14 = arith.divf %12, %13 : vector<64x16xf32>
    %15 = arith.mulf %9, %14 : vector<64x16xf32>
    %16 = arith.truncf %15 : vector<64x16xf32> to vector<64x16xbf16>
    %c0_8 = arith.constant 0 : index
    %c0_9 = arith.constant 0 : index
    %c0_10 = arith.constant 0 : index
    %17 = vector.load %arg5[%c0_8, %c0_9, %c0_10] : memref<1x64x16xbf16, #tpu.memory_space<vmem>>, vector<1x64x16xbf16>
    %18 = vector.shape_cast %17 : vector<1x64x16xbf16> to vector<64x16xbf16>
    %19 = vector.shape_cast %16 : vector<64x16xbf16> to vector<1x64x16xbf16>
    tpu.vector_store %arg5[%c0_8, %c0_9, %c0_10], %19 {strides = array<i32>} : memref<1x64x16xbf16, #tpu.memory_space<vmem>>, vector<1x64x16xbf16>,
    return
  }
  func.func @transform_0(%arg0: i32, %arg1: i32) -> (i32, i32, i32) {
    %c0_i32 = arith.constant 0 : i32
    %c0_i32_0 = arith.constant 0 : i32
    return %arg0, %arg1, %c0_i32 : i32, i32, i32
  }
  func.func @transform_1(%arg0: i32, %arg1: i32) -> (i32, i32, i32) {
    %c0_i32 = arith.constant 0 : i32
    %c0_i32_0 = arith.constant 0 : i32
    %c0_i32_1 = arith.constant 0 : i32
    return %arg0, %c0_i32, %c0_i32_0 : i32, i32, i32
  }
  func.func @transform_2(%arg0: i32, %arg1: i32) -> (i32, i32, i32) {
    %c0_i32 = arith.constant 0 : i32
    %c0_i32_0 = arith.constant 0 : i32
    %c0_i32_1 = arith.constant 0 : i32
    return %arg0, %c0_i32, %c0_i32_0 : i32, i32, i32
  }
  func.func @transform_3(%arg0: i32, %arg1: i32) -> (i32, i32, i32) {
    %c0_i32 = arith.constant 0 : i32
    %c0_i32_0 = arith.constant 0 : i32
    return %arg0, %arg1, %c0_i32 : i32, i32, i32
  }
}

module attributes {stable_mosaic.version = 11 : i64} {
  func.func @kernel(%arg0: i32, %arg1: i32, %arg2: memref<1x64x8xbf16, #tpu.memory_space<vmem>>, %arg3: memref<8x128xbf16, #tpu.memory_space<vmem>>, %arg4: memref<1x128xf32, #tpu.memory_space<vmem>>, %arg5: memref<1x64x128xf32, #tpu.memory_space<vmem>>) attributes {dimension_semantics = [#tpu.dimension_semantics<parallel>, #tpu.dimension_semantics<parallel>], iteration_bounds = array<i64: 2, 1>, scalar_prefetch = 0 : i64, scratch_operands = 0 : i64, tpu.core_type = #tpu.core_type<tc>, window_params = [{transform_indices = @transform_0, window_bounds = array<i64: 1, 64, 8>}, {pipeline_mode = #tpu.pipeline_mode<synchronous>, transform_indices = @transform_1, window_bounds = array<i64: 8, 128>}, {pipeline_mode = #tpu.pipeline_mode<synchronous>, transform_indices = @transform_2, window_bounds = array<i64: 1, 128>}, {transform_indices = @transform_3, window_bounds = array<i64: 1, 64, 128>}]} {
    %c0 = arith.constant 0 : index
    %c0_0 = arith.constant 0 : index
    %c0_1 = arith.constant 0 : index
    %0 = vector.load %arg2[%c0, %c0_0, %c0_1] : memref<1x64x8xbf16, #tpu.memory_space<vmem>>, vector<1x64x8xbf16>
    %1 = vector.shape_cast %0 : vector<1x64x8xbf16> to vector<64x8xbf16>
    %c0_2 = arith.constant 0 : index
    %c0_3 = arith.constant 0 : index
    %2 = vector.load %arg3[%c0_2, %c0_3] : memref<8x128xbf16, #tpu.memory_space<vmem>>, vector<8x128xbf16>
    %cst = arith.constant dense<0.000000e+00> : vector<64x128xf32>
    %3 = tpu.matmul %1, %2, %cst {dimension_numbers = #tpu.dot_dimension_numbers<[1], [0], [0], [1], [0, 0, 1, 1], [], []>} : vector<64x8xbf16>, vector<8x128xbf16>, vector<64x128xf32> -> vector<64x128xf32>
    %c0_4 = arith.constant 0 : index
    %c0_5 = arith.constant 0 : index
    %4 = vector.load %arg4[%c0_4, %c0_5] : memref<1x128xf32, #tpu.memory_space<vmem>>, vector<1x128xf32>
    %5 = vector.broadcast %4 : vector<1x128xf32> to vector<64x128xf32>
    %6 = arith.addf %3, %5 : vector<64x128xf32>
    %c0_6 = arith.constant 0 : index
    %c0_7 = arith.constant 0 : index
    %c0_8 = arith.constant 0 : index
    %7 = vector.load %arg5[%c0_6, %c0_7, %c0_8] : memref<1x64x128xf32, #tpu.memory_space<vmem>>, vector<1x64x128xf32>
    %8 = vector.shape_cast %7 : vector<1x64x128xf32> to vector<64x128xf32>
    %9 = vector.shape_cast %6 : vector<64x128xf32> to vector<1x64x128xf32>
    tpu.vector_store %arg5[%c0_6, %c0_7, %c0_8], %9 {strides = array<i32>} : memref<1x64x128xf32, #tpu.memory_space<vmem>>, vector<1x64x128xf32>,
    return
  }
  func.func @transform_0(%arg0: i32, %arg1: i32) -> (i32, i32, i32) {
    %c0_i32 = arith.constant 0 : i32
    %c0_i32_0 = arith.constant 0 : i32
    return %arg0, %arg1, %c0_i32 : i32, i32, i32
  }
  func.func @transform_1(%arg0: i32, %arg1: i32) -> (i32, i32) {
    %c0_i32 = arith.constant 0 : i32
    %c0_i32_0 = arith.constant 0 : i32
    %c0_i32_1 = arith.constant 0 : i32
    return %c0_i32, %c0_i32_0 : i32, i32
  }
  func.func @transform_2(%arg0: i32, %arg1: i32) -> (i32, i32) {
    %c0_i32 = arith.constant 0 : i32
    %c0_i32_0 = arith.constant 0 : i32
    %c0_i32_1 = arith.constant 0 : i32
    return %c0_i32, %c0_i32_0 : i32, i32
  }
  func.func @transform_3(%arg0: i32, %arg1: i32) -> (i32, i32, i32) {
    %c0_i32 = arith.constant 0 : i32
    %c0_i32_0 = arith.constant 0 : i32
    return %arg0, %arg1, %c0_i32 : i32, i32, i32
  }
}

module attributes {stable_mosaic.version = 11 : i64} {
  func.func @kernel(%arg0: i32, %arg1: i32, %arg2: memref<1x64x144xbf16, #tpu.memory_space<vmem>>, %arg3: memref<144x128xbf16, #tpu.memory_space<vmem>>, %arg4: memref<1x128xf32, #tpu.memory_space<vmem>>, %arg5: memref<1x64x128xf32, #tpu.memory_space<vmem>>, %arg6: memref<1x64x128xf32, #tpu.memory_space<vmem>>) attributes {dimension_semantics = [#tpu.dimension_semantics<parallel>, #tpu.dimension_semantics<parallel>], iteration_bounds = array<i64: 2, 1>, scalar_prefetch = 0 : i64, scratch_operands = 0 : i64, tpu.core_type = #tpu.core_type<tc>, window_params = [{transform_indices = @transform_0, window_bounds = array<i64: 1, 64, 144>}, {pipeline_mode = #tpu.pipeline_mode<synchronous>, transform_indices = @transform_1, window_bounds = array<i64: 144, 128>}, {pipeline_mode = #tpu.pipeline_mode<synchronous>, transform_indices = @transform_2, window_bounds = array<i64: 1, 128>}, {transform_indices = @transform_3, window_bounds = array<i64: 1, 64, 128>}, {transform_indices = @transform_4, window_bounds = array<i64: 1, 64, 128>}]} {
    %c0 = arith.constant 0 : index
    %c0_0 = arith.constant 0 : index
    %c0_1 = arith.constant 0 : index
    %0 = vector.load %arg2[%c0, %c0_0, %c0_1] : memref<1x64x144xbf16, #tpu.memory_space<vmem>>, vector<1x64x144xbf16>
    %1 = vector.shape_cast %0 : vector<1x64x144xbf16> to vector<64x144xbf16>
    %c0_2 = arith.constant 0 : index
    %c0_3 = arith.constant 0 : index
    %2 = vector.load %arg3[%c0_2, %c0_3] : memref<144x128xbf16, #tpu.memory_space<vmem>>, vector<144x128xbf16>
    %cst = arith.constant dense<0.000000e+00> : vector<64x128xf32>
    %3 = tpu.matmul %1, %2, %cst {dimension_numbers = #tpu.dot_dimension_numbers<[1], [0], [0], [1], [0, 0, 1, 1], [], []>} : vector<64x144xbf16>, vector<144x128xbf16>, vector<64x128xf32> -> vector<64x128xf32>
    %c0_4 = arith.constant 0 : index
    %c0_5 = arith.constant 0 : index
    %4 = vector.load %arg4[%c0_4, %c0_5] : memref<1x128xf32, #tpu.memory_space<vmem>>, vector<1x128xf32>
    %5 = vector.broadcast %4 : vector<1x128xf32> to vector<64x128xf32>
    %6 = arith.addf %3, %5 : vector<64x128xf32>
    %c0_6 = arith.constant 0 : index
    %c0_7 = arith.constant 0 : index
    %c0_8 = arith.constant 0 : index
    %7 = vector.load %arg5[%c0_6, %c0_7, %c0_8] : memref<1x64x128xf32, #tpu.memory_space<vmem>>, vector<1x64x128xf32>
    %8 = vector.shape_cast %7 : vector<1x64x128xf32> to vector<64x128xf32>
    %9 = arith.addf %6, %8 : vector<64x128xf32>
    %c0_9 = arith.constant 0 : index
    %c0_10 = arith.constant 0 : index
    %c0_11 = arith.constant 0 : index
    %10 = vector.load %arg6[%c0_9, %c0_10, %c0_11] : memref<1x64x128xf32, #tpu.memory_space<vmem>>, vector<1x64x128xf32>
    %11 = vector.shape_cast %10 : vector<1x64x128xf32> to vector<64x128xf32>
    %12 = vector.shape_cast %9 : vector<64x128xf32> to vector<1x64x128xf32>
    tpu.vector_store %arg6[%c0_9, %c0_10, %c0_11], %12 {strides = array<i32>} : memref<1x64x128xf32, #tpu.memory_space<vmem>>, vector<1x64x128xf32>,
    return
  }
  func.func @transform_0(%arg0: i32, %arg1: i32) -> (i32, i32, i32) {
    %c0_i32 = arith.constant 0 : i32
    %c0_i32_0 = arith.constant 0 : i32
    return %arg0, %arg1, %c0_i32 : i32, i32, i32
  }
  func.func @transform_1(%arg0: i32, %arg1: i32) -> (i32, i32) {
    %c0_i32 = arith.constant 0 : i32
    %c0_i32_0 = arith.constant 0 : i32
    %c0_i32_1 = arith.constant 0 : i32
    return %c0_i32, %c0_i32_0 : i32, i32
  }
  func.func @transform_2(%arg0: i32, %arg1: i32) -> (i32, i32) {
    %c0_i32 = arith.constant 0 : i32
    %c0_i32_0 = arith.constant 0 : i32
    %c0_i32_1 = arith.constant 0 : i32
    return %c0_i32, %c0_i32_0 : i32, i32
  }
  func.func @transform_3(%arg0: i32, %arg1: i32) -> (i32, i32, i32) {
    %c0_i32 = arith.constant 0 : i32
    %c0_i32_0 = arith.constant 0 : i32
    return %arg0, %arg1, %c0_i32 : i32, i32, i32
  }
  func.func @transform_4(%arg0: i32, %arg1: i32) -> (i32, i32, i32) {
    %c0_i32 = arith.constant 0 : i32
    %c0_i32_0 = arith.constant 0 : i32
    return %arg0, %arg1, %c0_i32 : i32, i32, i32
  }
}

module attributes {stable_mosaic.version = 11 : i64} {
  func.func @kernel(%arg0: i32, %arg1: i32, %arg2: memref<1x64x144xbf16, #tpu.memory_space<vmem>>, %arg3: memref<144x128xbf16, #tpu.memory_space<vmem>>, %arg4: memref<1x128xf32, #tpu.memory_space<vmem>>, %arg5: memref<1x64x128xf32, #tpu.memory_space<vmem>>) attributes {dimension_semantics = [#tpu.dimension_semantics<parallel>, #tpu.dimension_semantics<parallel>], iteration_bounds = array<i64: 2, 1>, scalar_prefetch = 0 : i64, scratch_operands = 0 : i64, tpu.core_type = #tpu.core_type<tc>, window_params = [{transform_indices = @transform_0, window_bounds = array<i64: 1, 64, 144>}, {pipeline_mode = #tpu.pipeline_mode<synchronous>, transform_indices = @transform_1, window_bounds = array<i64: 144, 128>}, {pipeline_mode = #tpu.pipeline_mode<synchronous>, transform_indices = @transform_2, window_bounds = array<i64: 1, 128>}, {transform_indices = @transform_3, window_bounds = array<i64: 1, 64, 128>}]} {
    %c0 = arith.constant 0 : index
    %c0_0 = arith.constant 0 : index
    %c0_1 = arith.constant 0 : index
    %0 = vector.load %arg2[%c0, %c0_0, %c0_1] : memref<1x64x144xbf16, #tpu.memory_space<vmem>>, vector<1x64x144xbf16>
    %1 = vector.shape_cast %0 : vector<1x64x144xbf16> to vector<64x144xbf16>
    %c0_2 = arith.constant 0 : index
    %c0_3 = arith.constant 0 : index
    %2 = vector.load %arg3[%c0_2, %c0_3] : memref<144x128xbf16, #tpu.memory_space<vmem>>, vector<144x128xbf16>
    %cst = arith.constant dense<0.000000e+00> : vector<64x128xf32>
    %3 = tpu.matmul %1, %2, %cst {dimension_numbers = #tpu.dot_dimension_numbers<[1], [0], [0], [1], [0, 0, 1, 1], [], []>} : vector<64x144xbf16>, vector<144x128xbf16>, vector<64x128xf32> -> vector<64x128xf32>
    %c0_4 = arith.constant 0 : index
    %c0_5 = arith.constant 0 : index
    %4 = vector.load %arg4[%c0_4, %c0_5] : memref<1x128xf32, #tpu.memory_space<vmem>>, vector<1x128xf32>
    %5 = vector.broadcast %4 : vector<1x128xf32> to vector<64x128xf32>
    %6 = arith.addf %3, %5 : vector<64x128xf32>
    %c0_6 = arith.constant 0 : index
    %c0_7 = arith.constant 0 : index
    %c0_8 = arith.constant 0 : index
    %7 = vector.load %arg5[%c0_6, %c0_7, %c0_8] : memref<1x64x128xf32, #tpu.memory_space<vmem>>, vector<1x64x128xf32>
    %8 = vector.shape_cast %7 : vector<1x64x128xf32> to vector<64x128xf32>
    %9 = vector.shape_cast %6 : vector<64x128xf32> to vector<1x64x128xf32>
    tpu.vector_store %arg5[%c0_6, %c0_7, %c0_8], %9 {strides = array<i32>} : memref<1x64x128xf32, #tpu.memory_space<vmem>>, vector<1x64x128xf32>,
    return
  }
  func.func @transform_0(%arg0: i32, %arg1: i32) -> (i32, i32, i32) {
    %c0_i32 = arith.constant 0 : i32
    %c0_i32_0 = arith.constant 0 : i32
    return %arg0, %arg1, %c0_i32 : i32, i32, i32
  }
  func.func @transform_1(%arg0: i32, %arg1: i32) -> (i32, i32) {
    %c0_i32 = arith.constant 0 : i32
    %c0_i32_0 = arith.constant 0 : i32
    %c0_i32_1 = arith.constant 0 : i32
    return %c0_i32, %c0_i32_0 : i32, i32
  }
  func.func @transform_2(%arg0: i32, %arg1: i32) -> (i32, i32) {
    %c0_i32 = arith.constant 0 : i32
    %c0_i32_0 = arith.constant 0 : i32
    %c0_i32_1 = arith.constant 0 : i32
    return %c0_i32, %c0_i32_0 : i32, i32
  }
  func.func @transform_3(%arg0: i32, %arg1: i32) -> (i32, i32, i32) {
    %c0_i32 = arith.constant 0 : i32
    %c0_i32_0 = arith.constant 0 : i32
    return %arg0, %arg1, %c0_i32 : i32, i32, i32
  }
}

</mosaic_0001>

<llo_original>
// kernel: _lambda_.22
$region0: #{_lambda_.22}
  #allocation0 [shape = 'u32[]', space=smem, size = 0x4, offset = 0x4, fixed_abs, tag = 'smem constant byte address 0x4 - core index']
  #allocation1 [shape = 'u32[144,128]{1,0:T(1,128)}', space=vmem, size = 0x12000, scoped, tag = 'internal scratch']
  #allocation2 [shape = 'f32[1,8]{1,0:T(1,128)}', space=vmem, size = 0x200, scoped, tag = 'scratch operand']
  #allocation3 [shape = 'f32[1,8]{1,0:T(1,128)}', space=vmem, size = 0x200, scoped, tag = 'scratch operand']
  %s0 = inlined_call_operand.vmem [shape: f32[2,256,8], index: 0, kind: input, shape index: {}]
  %s1 = inlined_call_operand.vmem [shape: f32[2,1,8], index: 1, kind: output, shape index: {0}]
  %s2 = inlined_call_operand.vmem [shape: f32[2,1,8], index: 2, kind: output, shape index: {1}]
  %3 = xla_tuple %s1, %s2
  %s4 = sld [smem:[#allocation0]]
  $region53: #{_lambda_.22} parent=0
    _
  %s6 = ssub.s32 1, %s4
  %s7 = scalar_select 0, %s6, %s4
  loop: start=0, step=1, limit=4
  $region2: #{_lambda_.22} parent=0 // loop_pre_header
    _
  $region3: #{_lambda_.22} parent=0 // loop_header
    %s9 = sphi 0, %s13
    %p10 = scmp.ge.s32.totalorder %s9, 4
    %s16 = sphi 0, %s28
    %s17 = sphi 0, %s24
    %s18 = sphi 0, %s16
    %s19 = sphi 0, %s17
    %s20 = sphi 0, %s18
    %s21 = sphi 0, %s19
    %s33 = sphi 0, %s35
    %s36 = sphi 0, %s33
    %s37 = sphi 0, %s36
    %s53 = sphi 0, %s37
    %s59 = sphi 0, %s61
    %s62 = sphi 0, %s59
    %s63 = sphi 0, %s62
    %s79 = sphi 0, %s63
    %s85 = sphi 0, %s87
    %s88 = sphi 0, %s85
    %s89 = sphi 0, %s88
    %s105 = sphi 0, %s89
  $region4: #{_lambda_.22} parent=0 // loop_header_branch
    %12 = sbr.rel (%p10) target = $region8
  $region5: #{_lambda_.22} parent=0 // loop_body
    %s14 = ssub.s32 %s9, 1
    %s15 = ssub.s32 %s9, 2
    %s22 = sadd.s32 1, %s17
    %p23 = scmp.ge.s32.totalorder %s22, 1
    %s24 = scalar_select %p23, 0, %s22
    %s25 = sadd.s32 1, %s16
    %s26 = scalar_select %p23, %s25, %s16
    %p27 = scmp.ge.s32.totalorder %s26, 2
    %s28 = scalar_select %p27, 0, %s26
    %s29 = ssub.s32 %s16, %s28
    %s30 = ssub.s32 %s17, %s24
    %s31 = sor.u32 %s29, %s30
    %p32 = scmp.eq.s32.totalorder %s31, 0
    %s34 = sadd.s32 %s33, 1
    %s35 = scalar_select %p32, %s33, %s34
    %p38 = pneg %p32
    %p39 = scmp.eq.s32.totalorder %s9, 1
    %p40 = por %p38, %p39
    %p41 = scmp.ne.s32.totalorder %s33, %s36
    %p42 = scmp.eq.s32.totalorder %s9, 0
    %p43 = por %p41, %p42
    %p44 = scmp.ne.s32.totalorder %s33, %s36
    %p45 = scmp.eq.s32.totalorder %s14, 1
    %p46 = por %p44, %p45
    %p47 = scmp.ne.s32.totalorder %s36, %s37
    %p48 = scmp.eq.s32.totalorder %s14, 0
    %p49 = por %p47, %p48
    %p50 = scmp.ne.s32.totalorder %s36, %s37
    %p51 = scmp.eq.s32.totalorder %s15, 1
    %p52 = por %p50, %p51
    %p54 = scmp.ne.s32.totalorder %s37, %s53
    %p55 = scmp.eq.s32.totalorder %s15, 0
    %p56 = por %p54, %p55
    %s57 = ssub.s32 %s16, %s28
    %p58 = scmp.eq.s32.totalorder %s57, 0
    %s60 = sadd.s32 %s59, 1
    %s61 = scalar_select %p58, %s59, %s60
    %p64 = pneg %p58
    %p65 = scmp.eq.s32.totalorder %s9, 1
    %p66 = por %p64, %p65
    %p67 = scmp.ne.s32.totalorder %s59, %s62
    %p68 = scmp.eq.s32.totalorder %s9, 0
    %p69 = por %p67, %p68
    %p70 = scmp.ne.s32.totalorder %s59, %s62
    %p71 = scmp.eq.s32.totalorder %s14, 1
    %p72 = por %p70, %p71
    %p73 = scmp.ne.s32.totalorder %s62, %s63
    %p74 = scmp.eq.s32.totalorder %s14, 0
    %p75 = por %p73, %p74
    %p76 = scmp.ne.s32.totalorder %s62, %s63
    %p77 = scmp.eq.s32.totalorder %s15, 1
    %p78 = por %p76, %p77
    %p80 = scmp.ne.s32.totalorder %s63, %s79
    %p81 = scmp.eq.s32.totalorder %s15, 0
    %p82 = por %p80, %p81
    %s83 = ssub.s32 %s16, %s28
    %p84 = scmp.eq.s32.totalorder %s83, 0
    %s86 = sadd.s32 %s85, 1
    %s87 = scalar_select %p84, %s85, %s86
    %p90 = pneg %p84
    %p91 = scmp.eq.s32.totalorder %s9, 1
    %p92 = por %p90, %p91
    %p93 = scmp.ne.s32.totalorder %s85, %s88
    %p94 = scmp.eq.s32.totalorder %s9, 0
    %p95 = por %p93, %p94
    %p96 = scmp.ne.s32.totalorder %s85, %s88
    %p97 = scmp.eq.s32.totalorder %s14, 1
    %p98 = por %p96, %p97
    %p99 = scmp.ne.s32.totalorder %s88, %s89
    %p100 = scmp.eq.s32.totalorder %s14, 0
    %p101 = por %p99, %p100
    %p102 = scmp.ne.s32.totalorder %s88, %s89
    %p103 = scmp.eq.s32.totalorder %s15, 1
    %p104 = por %p102, %p103
    %p106 = scmp.ne.s32.totalorder %s89, %s105
    %p107 = scmp.eq.s32.totalorder %s15, 0
    %p108 = por %p106, %p107
    %p109 = scmp.le.s32.totalorder 1, %s9
    %p110 = scmp.lt.s32.totalorder %s9, 3
    %p111 = pnand %p109, %p110
    %p112 = pneg %p111
    // Predicated region
    $region9: #{_lambda_.22} parent=5 // pred_check
      _
    $region10: #{_lambda_.22} parent=5 // pred_check_branch
      %114 = sbr.rel (%p111) target = $region12
    $region11: #{_lambda_.22} parent=5 // pred_region
      %s115 = ssub.s32 %s9, 1
    $region12: #{_lambda_.22} parent=5 // pred_fallthru
      _
    %p116 = scmp.lt.s32.totalorder %s9, 2
    // Predicated region
    $region13: #{_lambda_.22} parent=5 // pred_check
      %p117 = pneg %p116
    $region14: #{_lambda_.22} parent=5 // pred_check_branch
      %119 = sbr.rel (%p117) target = $region16
    $region15: #{_lambda_.22} parent=5 // pred_region
      // Predicated region
      $region17: #{_lambda_.22} parent=15 // pred_check
        %p120 = pneg %p43
      $region18: #{_lambda_.22} parent=15 // pred_check_branch
        %122 = sbr.rel (%p120) target = $region20
      $region19: #{_lambda_.22} parent=15 // pred_region
        %s123 = smul.u32 32, %s17
        %p124 = scmp.lt.s32.totalorder %s16, 1
        %s125 = scalar_select %p124, %s16, 1
        %p126 = scmp.lt.s32.totalorder %s123, 31
        %s127 = scalar_select %p126, %s123, 31
        %s128 = smul.addr %s125, 32
        %s129 = sadd.s32 %s127, %s128
        %s130 = smul.addr %s129, 8
        %s131 = scalar_lea.vmem %s0, %s130
        %s132 = smul.u32 32, %s17
      $region20: #{_lambda_.22} parent=15 // pred_fallthru
        _
    $region16: #{_lambda_.22} parent=5 // pred_fallthru
      _
    %p133 = scmp.le.s32.totalorder 1, %s9
    %p134 = scmp.lt.s32.totalorder %s9, 3
    %p135 = pnand %p133, %p134
    %p136 = pneg %p135
    // Predicated region
    $region21: #{_lambda_.22} parent=5 // pred_check
      _
    $region22: #{_lambda_.22} parent=5 // pred_check_branch
      %138 = sbr.rel (%p135) target = $region24
    $region23: #{_lambda_.22} parent=5 // pred_region
      %s139 = ssub.s32 %s9, 1
      %s140 = smul.u32 32, %s19
      %p141 = scmp.lt.s32.totalorder %s18, 1
      %s142 = scalar_select %p141, %s18, 1
      %p143 = scmp.lt.s32.totalorder %s140, 31
      %s144 = scalar_select %p143, %s140, 31
      %s145 = smul.addr %s142, 32
      %s146 = sadd.s32 %s144, %s145
      %s147 = smul.addr %s146, 8
      %s148 = scalar_lea.vmem %s0, %s147
      %p149 = pneg %p49
      %p150 = pneg %p46
      %p151 = pneg %p75
      %p152 = pneg %p72
      %p153 = scmp.lt.s32.totalorder %s18, 1
      %s154 = scalar_select %p153, %s18, 1
      %s155 = scalar_lea.vmem %s1, %s154
      %p156 = pneg %p101
      %p157 = pneg %p98
      %p158 = scmp.lt.s32.totalorder %s18, 1
      %s159 = scalar_select %p158, %s18, 1
      %s160 = scalar_lea.vmem %s2, %s159
      %s161 = smul.u32 32, %s19
      %p162 = scmp.lt.s32.totalorder %s18, 1
      %s163 = scalar_select %p162, %s18, 1
      %p164 = scmp.lt.s32.totalorder %s161, 31
      %s165 = scalar_select %p164, %s161, 31
      %s166 = smul.addr %s163, 32
      %s167 = sadd.s32 %s165, %s166
      %s168 = smul.addr %s167, 8
      %s169 = scalar_lea.vmem %s0, %s168
      %s170 = smul.u32 32, %s19
      %p171 = scmp.lt.s32.totalorder %s18, 1
      %s172 = scalar_select %p171, %s18, 1
      %s173 = scalar_lea.vmem %s1, %s172
      %p174 = scmp.lt.s32.totalorder %s18, 1
      %s175 = scalar_select %p174, %s18, 1
      %s176 = scalar_lea.vmem %s2, %s175
      %p177 = scmp.eq.s32.totalorder %s19, 0
      // Predicated region
      $region25: #{_lambda_.22} parent=23 // pred_check
        %p178 = pneg %p177
      $region26: #{_lambda_.22} parent=23 // pred_check_branch
        %180 = sbr.rel (%p178) target = $region28
      $region27: #{_lambda_.22} parent=23 // pred_region
        %vm181 = vcmask 57344
        %182 = vst.msk [vmem:[#allocation2] sm:$0x1] %vm181, 0.0
        %183 = vst.msk [vmem:[#allocation3] sm:$0x1] %vm181, 0.0
      $region28: #{_lambda_.22} parent=23 // pred_fallthru
        _
      %v184 = vld [vmem:[%s169] sm:$0xff]
      %v185 = vld [vmem:[%s169 + $0x8] sm:$0xff]
      %v186 = vld [vmem:[%s169 + $0x10] sm:$0xff]
      %v187 = vld [vmem:[%s169 + $0x18] sm:$0xff]
      %v188 = vld [vmem:[%s169 + $0x20] sm:$0xff]
      %v189 = vld [vmem:[%s169 + $0x28] sm:$0xff]
      %v190 = vld [vmem:[%s169 + $0x30] sm:$0xff]
      %v191 = vld [vmem:[%s169 + $0x38] sm:$0xff]
      %v192 = vld [vmem:[%s169 + $0x40] sm:$0xff]
      %v193 = vld [vmem:[%s169 + $0x48] sm:$0xff]
      %v194 = vld [vmem:[%s169 + $0x50] sm:$0xff]
      %v195 = vld [vmem:[%s169 + $0x58] sm:$0xff]
      %v196 = vld [vmem:[%s169 + $0x60] sm:$0xff]
      %v197 = vld [vmem:[%s169 + $0x68] sm:$0xff]
      %v198 = vld [vmem:[%s169 + $0x70] sm:$0xff]
      %v199 = vld [vmem:[%s169 + $0x78] sm:$0xff]
      %v200 = vld [vmem:[%s169 + $0x80] sm:$0xff]
      %v201 = vld [vmem:[%s169 + $0x88] sm:$0xff]
      %v202 = vld [vmem:[%s169 + $0x90] sm:$0xff]
      %v203 = vld [vmem:[%s169 + $0x98] sm:$0xff]
      %v204 = vld [vmem:[%s169 + $0xa0] sm:$0xff]
      %v205 = vld [vmem:[%s169 + $0xa8] sm:$0xff]
      %v206 = vld [vmem:[%s169 + $0xb0] sm:$0xff]
      %v207 = vld [vmem:[%s169 + $0xb8] sm:$0xff]
      %v208 = vld [vmem:[%s169 + $0xc0] sm:$0xff]
      %v209 = vld [vmem:[%s169 + $0xc8] sm:$0xff]
      %v210 = vld [vmem:[%s169 + $0xd0] sm:$0xff]
      %v211 = vld [vmem:[%s169 + $0xd8] sm:$0xff]
      %v212 = vld [vmem:[%s169 + $0xe0] sm:$0xff]
      %v213 = vld [vmem:[%s169 + $0xe8] sm:$0xff]
      %v214 = vld [vmem:[%s169 + $0xf0] sm:$0xff]
      %v215 = vld [vmem:[%s169 + $0xf8] sm:$0xff]
      %v216 = vld [vmem:[#allocation2] sm:$0x1]
      %vm217 = vcmask 64512
      %v218 = vsel %vm217, %v184, 0.0
      %v219 = vsel %vm217, %v185, 0.0
      %v220 = vadd.f32 %v218, %v219
      %v221 = vsel %vm217, %v186, 0.0
      %v222 = vadd.f32 %v220, %v221
      %v223 = vsel %vm217, %v187, 0.0
      %v224 = vadd.f32 %v222, %v223
      %v225 = vsel %vm217, %v188, 0.0
      %v226 = vadd.f32 %v224, %v225
      %v227 = vsel %vm217, %v189, 0.0
      %v228 = vadd.f32 %v226, %v227
      %v229 = vsel %vm217, %v190, 0.0
      %v230 = vadd.f32 %v228, %v229
      %v231 = vsel %vm217, %v191, 0.0
      %v232 = vadd.f32 %v230, %v231
      %v233 = vsel %vm217, %v192, 0.0
      %v234 = vadd.f32 %v232, %v233
      %v235 = vsel %vm217, %v193, 0.0
      %v236 = vadd.f32 %v234, %v235
      %v237 = vsel %vm217, %v194, 0.0
      %v238 = vadd.f32 %v236, %v237
      %v239 = vsel %vm217, %v195, 0.0
      %v240 = vadd.f32 %v238, %v239
      %v241 = vsel %vm217, %v196, 0.0
      %v242 = vadd.f32 %v240, %v241
      %v243 = vsel %vm217, %v197, 0.0
      %v244 = vadd.f32 %v242, %v243
      %v245 = vsel %vm217, %v198, 0.0
      %v246 = vadd.f32 %v244, %v245
      %v247 = vsel %vm217, %v199, 0.0
      %v248 = vadd.f32 %v246, %v247
      %v249 = vsel %vm217, %v200, 0.0
      %v250 = vadd.f32 %v248, %v249
      %v251 = vsel %vm217, %v201, 0.0
      %v252 = vadd.f32 %v250, %v251
      %v253 = vsel %vm217, %v202, 0.0
      %v254 = vadd.f32 %v252, %v253
      %v255 = vsel %vm217, %v203, 0.0
      %v256 = vadd.f32 %v254, %v255
      %v257 = vsel %vm217, %v204, 0.0
      %v258 = vadd.f32 %v256, %v257
      %v259 = vsel %vm217, %v205, 0.0
      %v260 = vadd.f32 %v258, %v259
      %v261 = vsel %vm217, %v206, 0.0
      %v262 = vadd.f32 %v260, %v261
      %v263 = vsel %vm217, %v207, 0.0
      %v264 = vadd.f32 %v262, %v263
      %v265 = vsel %vm217, %v208, 0.0
      %v266 = vadd.f32 %v264, %v265
      %v267 = vsel %vm217, %v209, 0.0
      %v268 = vadd.f32 %v266, %v267
      %v269 = vsel %vm217, %v210, 0.0
      %v270 = vadd.f32 %v268, %v269
      %v271 = vsel %vm217, %v211, 0.0
      %v272 = vadd.f32 %v270, %v271
      %v273 = vsel %vm217, %v212, 0.0
      %v274 = vadd.f32 %v272, %v273
      %v275 = vsel %vm217, %v213, 0.0
      %v276 = vadd.f32 %v274, %v275
      %v277 = vsel %vm217, %v214, 0.0
      %v278 = vadd.f32 %v276, %v277
      %v279 = vsel %vm217, %v215, 0.0
      %v280 = vadd.f32 %v278, %v279
      %v281 = vrot.slane %v280, 4
      %v282 = vadd.f32 %v280, %v281
      %v283 = vrot.slane %v282, 2
      %v284 = vadd.f32 %v282, %v283
      %v285 = vrot.slane %v284, 1
      %v286 = vadd.f32 %v284, %v285
      %v287 = vadd.f32 %v216, %v286
      %vm288 = vcmask 57344
      %289 = vst.msk [vmem:[#allocation2] sm:$0x1] %vm288, %v287
      %v290 = vld [vmem:[#allocation3] sm:$0x1]
      %v291 = vmul.f32 %v184, %v184
      %v292 = vmul.f32 %v185, %v185
      %v293 = vmul.f32 %v186, %v186
      %v294 = vmul.f32 %v187, %v187
      %v295 = vmul.f32 %v188, %v188
      %v296 = vmul.f32 %v189, %v189
      %v297 = vmul.f32 %v190, %v190
      %v298 = vmul.f32 %v191, %v191
      %v299 = vmul.f32 %v192, %v192
      %v300 = vmul.f32 %v193, %v193
      %v301 = vmul.f32 %v194, %v194
      %v302 = vmul.f32 %v195, %v195
      %v303 = vmul.f32 %v196, %v196
      %v304 = vmul.f32 %v197, %v197
      %v305 = vmul.f32 %v198, %v198
      %v306 = vmul.f32 %v199, %v199
      %v307 = vmul.f32 %v200, %v200
      %v308 = vmul.f32 %v201, %v201
      %v309 = vmul.f32 %v202, %v202
      %v310 = vmul.f32 %v203, %v203
      %v311 = vmul.f32 %v204, %v204
      %v312 = vmul.f32 %v205, %v205
      %v313 = vmul.f32 %v206, %v206
      %v314 = vmul.f32 %v207, %v207
      %v315 = vmul.f32 %v208, %v208
      %v316 = vmul.f32 %v209, %v209
      %v317 = vmul.f32 %v210, %v210
      %v318 = vmul.f32 %v211, %v211
      %v319 = vmul.f32 %v212, %v212
      %v320 = vmul.f32 %v213, %v213
      %v321 = vmul.f32 %v214, %v214
      %v322 = vmul.f32 %v215, %v215
      %v323 = vsel %vm217, %v291, 0.0
      %v324 = vsel %vm217, %v292, 0.0
      %v325 = vadd.f32 %v323, %v324
      %v326 = vsel %vm217, %v293, 0.0
      %v327 = vadd.f32 %v325, %v326
      %v328 = vsel %vm217, %v294, 0.0
      %v329 = vadd.f32 %v327, %v328
      %v330 = vsel %vm217, %v295, 0.0
      %v331 = vadd.f32 %v329, %v330
      %v332 = vsel %vm217, %v296, 0.0
      %v333 = vadd.f32 %v331, %v332
      %v334 = vsel %vm217, %v297, 0.0
      %v335 = vadd.f32 %v333, %v334
      %v336 = vsel %vm217, %v298, 0.0
      %v337 = vadd.f32 %v335, %v336
      %v338 = vsel %vm217, %v299, 0.0
      %v339 = vadd.f32 %v337, %v338
      %v340 = vsel %vm217, %v300, 0.0
      %v341 = vadd.f32 %v339, %v340
      %v342 = vsel %vm217, %v301, 0.0
      %v343 = vadd.f32 %v341, %v342
      %v344 = vsel %vm217, %v302, 0.0
      %v345 = vadd.f32 %v343, %v344
      %v346 = vsel %vm217, %v303, 0.0
      %v347 = vadd.f32 %v345, %v346
      %v348 = vsel %vm217, %v304, 0.0
      %v349 = vadd.f32 %v347, %v348
      %v350 = vsel %vm217, %v305, 0.0
      %v351 = vadd.f32 %v349, %v350
      %v352 = vsel %vm217, %v306, 0.0
      %v353 = vadd.f32 %v351, %v352
      %v354 = vsel %vm217, %v307, 0.0
      %v355 = vadd.f32 %v353, %v354
      %v356 = vsel %vm217, %v308, 0.0
      %v357 = vadd.f32 %v355, %v356
      %v358 = vsel %vm217, %v309, 0.0
      %v359 = vadd.f32 %v357, %v358
      %v360 = vsel %vm217, %v310, 0.0
      %v361 = vadd.f32 %v359, %v360
      %v362 = vsel %vm217, %v311, 0.0
      %v363 = vadd.f32 %v361, %v362
      %v364 = vsel %vm217, %v312, 0.0
      %v365 = vadd.f32 %v363, %v364
      %v366 = vsel %vm217, %v313, 0.0
      %v367 = vadd.f32 %v365, %v366
      %v368 = vsel %vm217, %v314, 0.0
      %v369 = vadd.f32 %v367, %v368
      %v370 = vsel %vm217, %v315, 0.0
      %v371 = vadd.f32 %v369, %v370
      %v372 = vsel %vm217, %v316, 0.0
      %v373 = vadd.f32 %v371, %v372
      %v374 = vsel %vm217, %v317, 0.0
      %v375 = vadd.f32 %v373, %v374
      %v376 = vsel %vm217, %v318, 0.0
      %v377 = vadd.f32 %v375, %v376
      %v378 = vsel %vm217, %v319, 0.0
      %v379 = vadd.f32 %v377, %v378
      %v380 = vsel %vm217, %v320, 0.0
      %v381 = vadd.f32 %v379, %v380
      %v382 = vsel %vm217, %v321, 0.0
      %v383 = vadd.f32 %v381, %v382
      %v384 = vsel %vm217, %v322, 0.0
      %v385 = vadd.f32 %v383, %v384
      %v386 = vrot.slane %v385, 4
      %v387 = vadd.f32 %v385, %v386
      %v388 = vrot.slane %v387, 2
      %v389 = vadd.f32 %v387, %v388
      %v390 = vrot.slane %v389, 1
      %v391 = vadd.f32 %v389, %v390
      %v392 = vadd.f32 %v290, %v391
      %393 = vst.msk [vmem:[#allocation3] sm:$0x1] %vm288, %v392
      // Predicated region
      $region29: #{_lambda_.22} parent=23 // pred_check
        %p394 = pneg %p177
      $region30: #{_lambda_.22} parent=23 // pred_check_branch
        %396 = sbr.rel (%p394) target = $region32
      $region31: #{_lambda_.22} parent=23 // pred_region
        %v397 = vld [vmem:[#allocation2] sm:$0x1]
        %398 = vst.msk [vmem:[%s173] sm:$0x1] %vm288, %v397
        %v399 = vld [vmem:[#allocation3] sm:$0x1]
        %400 = vst.msk [vmem:[%s176] sm:$0x1] %vm288, %v399
      $region32: #{_lambda_.22} parent=23 // pred_fallthru
        _
      %p401 = scmp.lt.s32.totalorder %s18, 1
      %s402 = scalar_select %p401, %s18, 1
      %s403 = scalar_lea.vmem %s1, %s402
      %p404 = scmp.lt.s32.totalorder %s18, 1
      %s405 = scalar_select %p404, %s18, 1
      %s406 = scalar_lea.vmem %s2, %s405
      // Predicated region
      $region33: #{_lambda_.22} parent=23 // pred_check
        %p407 = pneg %p72
      $region34: #{_lambda_.22} parent=23 // pred_check_branch
        %409 = sbr.rel (%p407) target = $region36
      $region35: #{_lambda_.22} parent=23 // pred_region
        _
      $region36: #{_lambda_.22} parent=23 // pred_fallthru
        _
      // Predicated region
      $region37: #{_lambda_.22} parent=23 // pred_check
        %p410 = pneg %p98
      $region38: #{_lambda_.22} parent=23 // pred_check_branch
        %412 = sbr.rel (%p410) target = $region40
      $region39: #{_lambda_.22} parent=23 // pred_region
        _
      $region40: #{_lambda_.22} parent=23 // pred_fallthru
        _
    $region24: #{_lambda_.22} parent=5 // pred_fallthru
      _
    %p413 = scmp.le.s32.totalorder 2, %s9
    // Predicated region
    $region41: #{_lambda_.22} parent=5 // pred_check
      %p414 = pneg %p413
    $region42: #{_lambda_.22} parent=5 // pred_check_branch
      %416 = sbr.rel (%p414) target = $region44
    $region43: #{_lambda_.22} parent=5 // pred_region
      %s417 = ssub.s32 %s9, 2
      // Predicated region
      $region45: #{_lambda_.22} parent=43 // pred_check
        %p418 = pneg %p78
      $region46: #{_lambda_.22} parent=43 // pred_check_branch
        %420 = sbr.rel (%p418) target = $region48
      $region47: #{_lambda_.22} parent=43 // pred_region
        %p421 = scmp.lt.s32.totalorder %s20, 1
        %s422 = scalar_select %p421, %s20, 1
        %s423 = scalar_lea.vmem %s1, %s422
      $region48: #{_lambda_.22} parent=43 // pred_fallthru
        _
      // Predicated region
      $region49: #{_lambda_.22} parent=43 // pred_check
        %p424 = pneg %p104
      $region50: #{_lambda_.22} parent=43 // pred_check_branch
        %426 = sbr.rel (%p424) target = $region52
      $region51: #{_lambda_.22} parent=43 // pred_region
        %p427 = scmp.lt.s32.totalorder %s20, 1
        %s428 = scalar_select %p427, %s20, 1
        %s429 = scalar_lea.vmem %s2, %s428
      $region52: #{_lambda_.22} parent=43 // pred_fallthru
        _
    $region44: #{_lambda_.22} parent=5 // pred_fallthru
      _
  $region6: #{_lambda_.22} parent=0 // loop_footer
    %s13 = sadd.s32 1, %s9
  $region7: #{_lambda_.22} parent=0 // loop_footer_branch
    %8 = sbr.rel target = $region3
  $region8: #{_lambda_.22} parent=0 // loop_exit
    _

// kernel: _lambda_.21
$region0: #{_lambda_.21}
  #allocation0 [shape = 'u32[]', space=smem, size = 0x4, offset = 0x4, fixed_abs, tag = 'smem constant byte address 0x4 - core index']
  #allocation1 [shape = 'u32[144,128]{1,0:T(1,128)}', space=vmem, size = 0x12000, scoped, tag = 'internal scratch']
  %s0 = inlined_call_operand.vmem [shape: bf16[2,256,27], index: 0, kind: input, shape index: {}]
  %s1 = inlined_call_operand.vmem [shape: bf16[27,128], index: 1, kind: input, shape index: {}]
  %s2 = inlined_call_operand.vmem [shape: f32[1,128], index: 2, kind: input, shape index: {}]
  %s3 = inlined_call_operand.vmem [shape: f32[2,256,128], index: 3, kind: output, shape index: {}]
  %s4 = sld [smem:[#allocation0]]
  $region45: #{_lambda_.21} parent=0
    _
  %s6 = ssub.s32 1, %s4
  %s7 = scalar_select 0, %s6, %s4
  loop: start=0, step=1, limit=4
  $region2: #{_lambda_.21} parent=0 // loop_pre_header
    _
  $region3: #{_lambda_.21} parent=0 // loop_header
    %s9 = sphi 0, %s13
    %p10 = scmp.ge.s32.totalorder %s9, 4
    %s16 = sphi 0, %s28
    %s17 = sphi 0, %s24
    %s18 = sphi 0, %s16
    %s19 = sphi 0, %s17
    %s20 = sphi 0, %s18
    %s21 = sphi 0, %s19
    %s33 = sphi 0, %s35
    %s36 = sphi 0, %s33
    %s37 = sphi 0, %s36
    %s53 = sphi 0, %s37
    %s57 = sphi 0, %s57
    %s59 = sphi 0, %s57
    %s60 = sphi 0, %s59
    %s74 = sphi 0, %s60
    %s78 = sphi 0, %s78
    %s80 = sphi 0, %s78
    %s81 = sphi 0, %s80
    %s95 = sphi 0, %s81
    %s103 = sphi 0, %s105
    %s106 = sphi 0, %s103
    %s107 = sphi 0, %s106
    %s123 = sphi 0, %s107
  $region4: #{_lambda_.21} parent=0 // loop_header_branch
    %12 = sbr.rel (%p10) target = $region8
  $region5: #{_lambda_.21} parent=0 // loop_body
    %s14 = ssub.s32 %s9, 1
    %s15 = ssub.s32 %s9, 2
    %s22 = sadd.s32 1, %s17
    %p23 = scmp.ge.s32.totalorder %s22, 1
    %s24 = scalar_select %p23, 0, %s22
    %s25 = sadd.s32 1, %s16
    %s26 = scalar_select %p23, %s25, %s16
    %p27 = scmp.ge.s32.totalorder %s26, 2
    %s28 = scalar_select %p27, 0, %s26
    %s29 = ssub.s32 %s16, %s28
    %s30 = ssub.s32 %s17, %s24
    %s31 = sor.u32 %s29, %s30
    %p32 = scmp.eq.s32.totalorder %s31, 0
    %s34 = sadd.s32 %s33, 1
    %s35 = scalar_select %p32, %s33, %s34
    %p38 = pneg %p32
    %p39 = scmp.eq.s32.totalorder %s9, 1
    %p40 = por %p38, %p39
    %p41 = scmp.ne.s32.totalorder %s33, %s36
    %p42 = scmp.eq.s32.totalorder %s9, 0
    %p43 = por %p41, %p42
    %p44 = scmp.ne.s32.totalorder %s33, %s36
    %p45 = scmp.eq.s32.totalorder %s14, 1
    %p46 = por %p44, %p45
    %p47 = scmp.ne.s32.totalorder %s36, %s37
    %p48 = scmp.eq.s32.totalorder %s14, 0
    %p49 = por %p47, %p48
    %p50 = scmp.ne.s32.totalorder %s36, %s37
    %p51 = scmp.eq.s32.totalorder %s15, 1
    %p52 = por %p50, %p51
    %p54 = scmp.ne.s32.totalorder %s37, %s53
    %p55 = scmp.eq.s32.totalorder %s15, 0
    %p56 = por %p54, %p55
    %s58 = sadd.s32 %s57, 1
    %p61 = scmp.eq.s32.totalorder %s9, 1
    %p62 = scmp.ne.s32.totalorder %s57, %s59
    %p63 = scmp.eq.s32.totalorder %s9, 0
    %p64 = por %p62, %p63
    %p65 = scmp.ne.s32.totalorder %s57, %s59
    %p66 = scmp.eq.s32.totalorder %s14, 1
    %p67 = por %p65, %p66
    %p68 = scmp.ne.s32.totalorder %s59, %s60
    %p69 = scmp.eq.s32.totalorder %s14, 0
    %p70 = por %p68, %p69
    %p71 = scmp.ne.s32.totalorder %s59, %s60
    %p72 = scmp.eq.s32.totalorder %s15, 1
    %p73 = por %p71, %p72
    %p75 = scmp.ne.s32.totalorder %s60, %s74
    %p76 = scmp.eq.s32.totalorder %s15, 0
    %p77 = por %p75, %p76
    %s79 = sadd.s32 %s78, 1
    %p82 = scmp.eq.s32.totalorder %s9, 1
    %p83 = scmp.ne.s32.totalorder %s78, %s80
    %p84 = scmp.eq.s32.totalorder %s9, 0
    %p85 = por %p83, %p84
    %p86 = scmp.ne.s32.totalorder %s78, %s80
    %p87 = scmp.eq.s32.totalorder %s14, 1
    %p88 = por %p86, %p87
    %p89 = scmp.ne.s32.totalorder %s80, %s81
    %p90 = scmp.eq.s32.totalorder %s14, 0
    %p91 = por %p89, %p90
    %p92 = scmp.ne.s32.totalorder %s80, %s81
    %p93 = scmp.eq.s32.totalorder %s15, 1
    %p94 = por %p92, %p93
    %p96 = scmp.ne.s32.totalorder %s81, %s95
    %p97 = scmp.eq.s32.totalorder %s15, 0
    %p98 = por %p96, %p97
    %s99 = ssub.s32 %s16, %s28
    %s100 = ssub.s32 %s17, %s24
    %s101 = sor.u32 %s99, %s100
    %p102 = scmp.eq.s32.totalorder %s101, 0
    %s104 = sadd.s32 %s103, 1
    %s105 = scalar_select %p102, %s103, %s104
    %p108 = pneg %p102
    %p109 = scmp.eq.s32.totalorder %s9, 1
    %p110 = por %p108, %p109
    %p111 = scmp.ne.s32.totalorder %s103, %s106
    %p112 = scmp.eq.s32.totalorder %s9, 0
    %p113 = por %p111, %p112
    %p114 = scmp.ne.s32.totalorder %s103, %s106
    %p115 = scmp.eq.s32.totalorder %s14, 1
    %p116 = por %p114, %p115
    %p117 = scmp.ne.s32.totalorder %s106, %s107
    %p118 = scmp.eq.s32.totalorder %s14, 0
    %p119 = por %p117, %p118
    %p120 = scmp.ne.s32.totalorder %s106, %s107
    %p121 = scmp.eq.s32.totalorder %s15, 1
    %p122 = por %p120, %p121
    %p124 = scmp.ne.s32.totalorder %s107, %s123
    %p125 = scmp.eq.s32.totalorder %s15, 0
    %p126 = por %p124, %p125
    %p127 = scmp.le.s32.totalorder 1, %s9
    %p128 = scmp.lt.s32.totalorder %s9, 3
    %p129 = pnand %p127, %p128
    %p130 = pneg %p129
    // Predicated region
    $region9: #{_lambda_.21} parent=5 // pred_check
      _
    $region10: #{_lambda_.21} parent=5 // pred_check_branch
      %132 = sbr.rel (%p129) target = $region12
    $region11: #{_lambda_.21} parent=5 // pred_region
      %s133 = ssub.s32 %s9, 1
      // Predicated region
      $region13: #{_lambda_.21} parent=11 // pred_check
        %p134 = pneg %p70
      $region14: #{_lambda_.21} parent=11 // pred_check_branch
        %136 = sbr.rel (%p134) target = $region16
      $region15: #{_lambda_.21} parent=11 // pred_region
        _
      $region16: #{_lambda_.21} parent=11 // pred_fallthru
        _
      // Predicated region
      $region17: #{_lambda_.21} parent=11 // pred_check
        %p137 = pneg %p91
      $region18: #{_lambda_.21} parent=11 // pred_check_branch
        %139 = sbr.rel (%p137) target = $region20
      $region19: #{_lambda_.21} parent=11 // pred_region
        _
      $region20: #{_lambda_.21} parent=11 // pred_fallthru
        _
    $region12: #{_lambda_.21} parent=5 // pred_fallthru
      _
    %p140 = scmp.lt.s32.totalorder %s9, 2
    // Predicated region
    $region21: #{_lambda_.21} parent=5 // pred_check
      %p141 = pneg %p140
    $region22: #{_lambda_.21} parent=5 // pred_check_branch
      %143 = sbr.rel (%p141) target = $region24
    $region23: #{_lambda_.21} parent=5 // pred_region
      // Predicated region
      $region25: #{_lambda_.21} parent=23 // pred_check
        %p144 = pneg %p43
      $region26: #{_lambda_.21} parent=23 // pred_check_branch
        %146 = sbr.rel (%p144) target = $region28
      $region27: #{_lambda_.21} parent=23 // pred_region
        %s147 = smul.u32 32, %s17
        %p148 = scmp.lt.s32.totalorder %s16, 1
        %s149 = scalar_select %p148, %s16, 1
        %p150 = scmp.lt.s32.totalorder %s147, 31
        %s151 = scalar_select %p150, %s147, 31
        %s152 = smul.addr %s149, 32
        %s153 = sadd.s32 %s151, %s152
        %s154 = smul.addr %s153, 4
        %s155 = scalar_lea.vmem %s0, %s154
        %s156 = smul.u32 32, %s17
      $region28: #{_lambda_.21} parent=23 // pred_fallthru
        _
    $region24: #{_lambda_.21} parent=5 // pred_fallthru
      _
    %p157 = scmp.le.s32.totalorder 1, %s9
    %p158 = scmp.lt.s32.totalorder %s9, 3
    %p159 = pnand %p157, %p158
    %p160 = pneg %p159
    // Predicated region
    $region29: #{_lambda_.21} parent=5 // pred_check
      _
    $region30: #{_lambda_.21} parent=5 // pred_check_branch
      %162 = sbr.rel (%p159) target = $region32
    $region31: #{_lambda_.21} parent=5 // pred_region
      %s163 = ssub.s32 %s9, 1
      %s164 = smul.u32 32, %s19
      %p165 = scmp.lt.s32.totalorder %s18, 1
      %s166 = scalar_select %p165, %s18, 1
      %p167 = scmp.lt.s32.totalorder %s164, 31
      %s168 = scalar_select %p167, %s164, 31
      %s169 = smul.addr %s166, 32
      %s170 = sadd.s32 %s168, %s169
      %s171 = smul.addr %s170, 4
      %s172 = scalar_lea.vmem %s0, %s171
      %p173 = pneg %p49
      %p174 = pneg %p46
      %p175 = pneg %p70
      %p176 = pneg %p67
      %p177 = pneg %p91
      %p178 = pneg %p88
      %p179 = pneg %p119
      %p180 = pneg %p116
      %s181 = smul.u32 32, %s19
      %p182 = scmp.lt.s32.totalorder %s18, 1
      %s183 = scalar_select %p182, %s18, 1
      %p184 = scmp.lt.s32.totalorder %s181, 31
      %s185 = scalar_select %p184, %s181, 31
      %s186 = smul.addr %s183, 32
      %s187 = sadd.s32 %s185, %s186
      %s188 = smul.addr %s187, 8
      %s189 = scalar_lea.vmem %s3, %s188
      %s190 = smul.u32 32, %s19
      %p191 = scmp.lt.s32.totalorder %s18, 1
      %s192 = scalar_select %p191, %s18, 1
      %p193 = scmp.lt.s32.totalorder %s190, 31
      %s194 = scalar_select %p193, %s190, 31
      %s195 = smul.addr %s192, 32
      %s196 = sadd.s32 %s194, %s195
      %s197 = smul.addr %s196, 4
      %s198 = scalar_lea.vmem %s0, %s197
      %s199 = smul.u32 32, %s19
      %s200 = smul.u32 32, %s19
      %p201 = scmp.lt.s32.totalorder %s18, 1
      %s202 = scalar_select %p201, %s18, 1
      %p203 = scmp.lt.s32.totalorder %s200, 31
      %s204 = scalar_select %p203, %s200, 31
      %s205 = smul.addr %s202, 32
      %s206 = sadd.s32 %s204, %s205
      %s207 = smul.addr %s206, 8
      %s208 = scalar_lea.vmem %s3, %s207
      %s209 = smul.u32 32, %s19
      %v211 = vld [vmem:[%s198] sm:$0xf]
      %v212 = vld [vmem:[%s198 + $0x4] sm:$0xf]
      %v213 = vld [vmem:[%s198 + $0x8] sm:$0xf]
      %v214 = vld [vmem:[%s198 + $0xc] sm:$0xf]
      %v215 = vld [vmem:[%s198 + $0x10] sm:$0xf]
      %v216 = vld [vmem:[%s198 + $0x14] sm:$0xf]
      %v217 = vld [vmem:[%s198 + $0x18] sm:$0xf]
      %v218 = vld [vmem:[%s198 + $0x1c] sm:$0xf]
      %v219 = vld [vmem:[%s198 + $0x20] sm:$0xf]
      %v220 = vld [vmem:[%s198 + $0x24] sm:$0xf]
      %v221 = vld [vmem:[%s198 + $0x28] sm:$0xf]
      %v222 = vld [vmem:[%s198 + $0x2c] sm:$0xf]
      %v223 = vld [vmem:[%s198 + $0x30] sm:$0xf]
      %v224 = vld [vmem:[%s198 + $0x34] sm:$0xf]
      %v225 = vld [vmem:[%s198 + $0x38] sm:$0xf]
      %v226 = vld [vmem:[%s198 + $0x3c] sm:$0xf]
      %v227 = vld [vmem:[%s198 + $0x40] sm:$0xf]
      %v228 = vld [vmem:[%s198 + $0x44] sm:$0xf]
      %v229 = vld [vmem:[%s198 + $0x48] sm:$0xf]
      %v230 = vld [vmem:[%s198 + $0x4c] sm:$0xf]
      %v231 = vld [vmem:[%s198 + $0x50] sm:$0xf]
      %v232 = vld [vmem:[%s198 + $0x54] sm:$0xf]
      %v233 = vld [vmem:[%s198 + $0x58] sm:$0xf]
      %v234 = vld [vmem:[%s198 + $0x5c] sm:$0xf]
      %v235 = vld [vmem:[%s198 + $0x60] sm:$0xf]
      %v236 = vld [vmem:[%s198 + $0x64] sm:$0xf]
      %v237 = vld [vmem:[%s198 + $0x68] sm:$0xf]
      %v238 = vld [vmem:[%s198 + $0x6c] sm:$0xf]
      %v239 = vld [vmem:[%s198 + $0x70] sm:$0xf]
      %v240 = vld [vmem:[%s198 + $0x74] sm:$0xf]
      %v241 = vld [vmem:[%s198 + $0x78] sm:$0xf]
      %v242 = vld [vmem:[%s198 + $0x7c] sm:$0xf]
      %v243 = vld [vmem:[%s1] sm:$0xf]
      %v244 = vld [vmem:[%s1 + $0x4] sm:$0xf]
      %v245 = vld [vmem:[%s1 + $0x8] sm:$0xf]
      %v246 = vld [vmem:[%s1 + $0xc] sm:$0x3]
      %v247 = vld [vmem:[%s2] sm:$0x1]
      %v249 = vlaneseq
      %v250 = vshrl.u32 %v249, 7
      %v251 = vsub.s32 0, %v250
      %v252 = vrot.slane %v247, %v251
      %v286 = vunpack.c.l.b16 %v211
      %v287 = vunpack.c.l.b16 %v212
      %v288 = vunpack.c.l.b16 %v213
      %v289 = vunpack.c.l.b16 %v214
      %v290 = vunpack.c.l.b16 %v215
      %v291 = vunpack.c.l.b16 %v216
      %v292 = vunpack.c.l.b16 %v217
      %v293 = vunpack.c.l.b16 %v218
      %v294 = vunpack.c.l.b16 %v219
      %v295 = vunpack.c.l.b16 %v220
      %v296 = vunpack.c.l.b16 %v221
      %v297 = vunpack.c.l.b16 %v222
      %v298 = vunpack.c.l.b16 %v223
      %v299 = vunpack.c.l.b16 %v224
      %v300 = vunpack.c.l.b16 %v225
      %v301 = vunpack.c.l.b16 %v226
      %v302 = vunpack.c.l.b16 %v227
      %v303 = vunpack.c.l.b16 %v228
      %v304 = vunpack.c.l.b16 %v229
      %v305 = vunpack.c.l.b16 %v230
      %v306 = vunpack.c.l.b16 %v231
      %v307 = vunpack.c.l.b16 %v232
      %v308 = vunpack.c.l.b16 %v233
      %v309 = vunpack.c.l.b16 %v234
      %v310 = vunpack.c.l.b16 %v235
      %v311 = vunpack.c.l.b16 %v236
      %v312 = vunpack.c.l.b16 %v237
      %v313 = vunpack.c.l.b16 %v238
      %v314 = vunpack.c.l.b16 %v239
      %v315 = vunpack.c.l.b16 %v240
      %v316 = vunpack.c.l.b16 %v241
      %v317 = vunpack.c.l.b16 %v242
      %v318 = vpack.c.b16 %v287, %v286
      %v319 = vpack.c.b16 %v289, %v288
      %v320 = vpack.c.b16 %v291, %v290
      %v321 = vpack.c.b16 %v293, %v292
      %v322 = vpack.c.b16 %v295, %v294
      %v323 = vpack.c.b16 %v297, %v296
      %v324 = vpack.c.b16 %v299, %v298
      %v325 = vpack.c.b16 %v301, %v300
      %v326 = vpack.c.b16 %v303, %v302
      %v327 = vpack.c.b16 %v305, %v304
      %v328 = vpack.c.b16 %v307, %v306
      %v329 = vpack.c.b16 %v309, %v308
      %v330 = vpack.c.b16 %v311, %v310
      %v331 = vpack.c.b16 %v313, %v312
      %v332 = vpack.c.b16 %v315, %v314
      %v333 = vpack.c.b16 %v317, %v316
      %v338 = vunpack.c.l.b16 %v243
      %v339 = vunpack.c.l.b16 %v244
      %v340 = vunpack.c.l.b16 %v245
      %v341 = vunpack.c.l.b16 %v246
      %v342 = vpack.c.b16 %v339, %v338
      %v343 = vpack.c.b16 %v341, %v340
      %vm345 = vcmask 220160
      %v347 = vsel %vm345, %v318, 0
      %v350 = vsel %vm345, %v319, 0
      %v353 = vsel %vm345, %v320, 0
      %v356 = vsel %vm345, %v321, 0
      %v359 = vsel %vm345, %v322, 0
      %v362 = vsel %vm345, %v323, 0
      %v365 = vsel %vm345, %v324, 0
      %v368 = vsel %vm345, %v325, 0
      %v371 = vsel %vm345, %v326, 0
      %v374 = vsel %vm345, %v327, 0
      %v377 = vsel %vm345, %v328, 0
      %v380 = vsel %vm345, %v329, 0
      %v383 = vsel %vm345, %v330, 0
      %v386 = vsel %vm345, %v331, 0
      %v389 = vsel %vm345, %v332, 0
      %v392 = vsel %vm345, %v333, 0
      %vm394 = vcmask 1044480
      %vm395 = vcmask 1045504
      %v396 = vsel %vm394, 4294967295, 65535
      %v397 = vsel %vm395, %v396, 0
      %v399 = vand.u32 %v343, %v397
      %401 = vmatprep.subr.bf16.mxu0 0
      %402 = vmatpush1.bf16.msra.mxu0 %v342
      %403 = vmatprep.subr.bf16.mxu0 0
      %404 = vmatpush1.bf16.msra.mxu0 %v399
      %405 = vmatprep.subr.bf16.mxu0 0
      %406 = vmatpush1.bf16.msra.mxu0 0
      %407 = vmatprep.subr.bf16.mxu0 0
      %408 = vmatpush1.bf16.msra.mxu0 0
      %409 = vmatprep.subr.bf16.mxu0 0
      %410 = vmatpush1.bf16.msra.mxu0 0
      %411 = vmatprep.subr.bf16.mxu0 0
      %412 = vmatpush1.bf16.msra.mxu0 0
      %413 = vmatprep.subr.bf16.mxu0 0
      %414 = vmatpush1.bf16.msra.mxu0 0
      %415 = vmatprep.subr.bf16.mxu0 0
      %416 = vmatpush1.bf16.msra.mxu0 0
      %417 = vmatprep.subr.bf16.mxu0 0
      %418 = vmatpush1.bf16.msra.mxu0 0
      %419 = vmatprep.subr.bf16.mxu0 0
      %420 = vmatpush1.bf16.msra.mxu0 0
      %421 = vmatprep.subr.bf16.mxu0 0
      %422 = vmatpush1.bf16.msra.mxu0 0
      %423 = vmatprep.subr.bf16.mxu0 0
      %424 = vmatpush1.bf16.msra.mxu0 0
      %425 = vmatprep.subr.bf16.mxu0 0
      %426 = vmatpush1.bf16.msra.mxu0 0
      %427 = vmatprep.subr.bf16.mxu0 0
      %428 = vmatpush1.bf16.msra.mxu0 0
      %429 = vmatprep.subr.bf16.mxu0 0
      %430 = vmatpush1.bf16.msra.mxu0 0
      %431 = vmatprep.subr.bf16.mxu0 0
      %432 = vmatpush1.bf16.msra.mxu0 0
      %433 = vmatprep.mubr.bf16.mxu0 0
      %434 = vmatmul.mubr.bf16.gmra.mrb[0].mxu0 %v347
      %v435 = vpop.f32.mrb[0].mxu0
      %v436 = vadd.f32 %v252, %v435
      %v437 = vpop.f32.mrb[0].mxu0
      %v438 = vpop.f32.mrb[0].mxu0
      %v439 = vadd.f32 %v252, %v438
      %v440 = vpop.f32.mrb[0].mxu0
      %441 = vmatprep.mubr.bf16.mxu0 0
      %442 = vmatmul.mubr.bf16.gmra.mrb[0].mxu0 %v350
      %v443 = vpop.f32.mrb[0].mxu0
      %v444 = vadd.f32 %v252, %v443
      %v445 = vpop.f32.mrb[0].mxu0
      %v446 = vpop.f32.mrb[0].mxu0
      %v447 = vadd.f32 %v252, %v446
      %v448 = vpop.f32.mrb[0].mxu0
      %449 = vmatprep.mubr.bf16.mxu0 0
      %450 = vmatmul.mubr.bf16.gmra.mrb[0].mxu0 %v353
      %v451 = vpop.f32.mrb[0].mxu0
      %v452 = vadd.f32 %v252, %v451
      %v453 = vpop.f32.mrb[0].mxu0
      %v454 = vpop.f32.mrb[0].mxu0
      %v455 = vadd.f32 %v252, %v454
      %v456 = vpop.f32.mrb[0].mxu0
      %457 = vmatprep.mubr.bf16.mxu0 0
      %458 = vmatmul.mubr.bf16.gmra.mrb[0].mxu0 %v356
      %v459 = vpop.f32.mrb[0].mxu0
      %v460 = vadd.f32 %v252, %v459
      %v461 = vpop.f32.mrb[0].mxu0
      %v462 = vpop.f32.mrb[0].mxu0
      %v463 = vadd.f32 %v252, %v462
      %v464 = vpop.f32.mrb[0].mxu0
      %465 = vmatprep.mubr.bf16.mxu0 0
      %466 = vmatmul.mubr.bf16.gmra.mrb[0].mxu0 %v359
      %v467 = vpop.f32.mrb[0].mxu0
      %v468 = vadd.f32 %v252, %v467
      %v469 = vpop.f32.mrb[0].mxu0
      %v470 = vpop.f32.mrb[0].mxu0
      %v471 = vadd.f32 %v252, %v470
      %v472 = vpop.f32.mrb[0].mxu0
      %473 = vmatprep.mubr.bf16.mxu0 0
      %474 = vmatmul.mubr.bf16.gmra.mrb[0].mxu0 %v362
      %v475 = vpop.f32.mrb[0].mxu0
      %v476 = vadd.f32 %v252, %v475
      %v477 = vpop.f32.mrb[0].mxu0
      %v478 = vpop.f32.mrb[0].mxu0
      %v479 = vadd.f32 %v252, %v478
      %v480 = vpop.f32.mrb[0].mxu0
      %481 = vmatprep.mubr.bf16.mxu0 0
      %482 = vmatmul.mubr.bf16.gmra.mrb[0].mxu0 %v365
      %v483 = vpop.f32.mrb[0].mxu0
      %v484 = vadd.f32 %v252, %v483
      %v485 = vpop.f32.mrb[0].mxu0
      %v486 = vpop.f32.mrb[0].mxu0
      %v487 = vadd.f32 %v252, %v486
      %v488 = vpop.f32.mrb[0].mxu0
      %489 = vmatprep.mubr.bf16.mxu0 0
      %490 = vmatmul.mubr.bf16.gmra.mrb[0].mxu0 %v368
      %v491 = vpop.f32.mrb[0].mxu0
      %v492 = vadd.f32 %v252, %v491
      %v493 = vpop.f32.mrb[0].mxu0
      %v494 = vpop.f32.mrb[0].mxu0
      %v495 = vadd.f32 %v252, %v494
      %v496 = vpop.f32.mrb[0].mxu0
      %497 = vmatprep.mubr.bf16.mxu0 0
      %498 = vmatmul.mubr.bf16.gmra.mrb[0].mxu0 %v371
      %v499 = vpop.f32.mrb[0].mxu0
      %v500 = vadd.f32 %v252, %v499
      %v501 = vpop.f32.mrb[0].mxu0
      %v502 = vpop.f32.mrb[0].mxu0
      %v503 = vadd.f32 %v252, %v502
      %v504 = vpop.f32.mrb[0].mxu0
      %505 = vmatprep.mubr.bf16.mxu0 0
      %506 = vmatmul.mubr.bf16.gmra.mrb[0].mxu0 %v374
      %v507 = vpop.f32.mrb[0].mxu0
      %v508 = vadd.f32 %v252, %v507
      %v509 = vpop.f32.mrb[0].mxu0
      %v510 = vpop.f32.mrb[0].mxu0
      %v511 = vadd.f32 %v252, %v510
      %v512 = vpop.f32.mrb[0].mxu0
      %513 = vmatprep.mubr.bf16.mxu0 0
      %514 = vmatmul.mubr.bf16.gmra.mrb[0].mxu0 %v377
      %v515 = vpop.f32.mrb[0].mxu0
      %v516 = vadd.f32 %v252, %v515
      %v517 = vpop.f32.mrb[0].mxu0
      %v518 = vpop.f32.mrb[0].mxu0
      %v519 = vadd.f32 %v252, %v518
      %v520 = vpop.f32.mrb[0].mxu0
      %521 = vmatprep.mubr.bf16.mxu0 0
      %522 = vmatmul.mubr.bf16.gmra.mrb[0].mxu0 %v380
      %v523 = vpop.f32.mrb[0].mxu0
      %v524 = vadd.f32 %v252, %v523
      %v525 = vpop.f32.mrb[0].mxu0
      %v526 = vpop.f32.mrb[0].mxu0
      %v527 = vadd.f32 %v252, %v526
      %v528 = vpop.f32.mrb[0].mxu0
      %529 = vmatprep.mubr.bf16.mxu0 0
      %530 = vmatmul.mubr.bf16.gmra.mrb[0].mxu0 %v383
      %v531 = vpop.f32.mrb[0].mxu0
      %v532 = vadd.f32 %v252, %v531
      %v533 = vpop.f32.mrb[0].mxu0
      %v534 = vpop.f32.mrb[0].mxu0
      %v535 = vadd.f32 %v252, %v534
      %v536 = vpop.f32.mrb[0].mxu0
      %537 = vmatprep.mubr.bf16.mxu0 0
      %538 = vmatmul.mubr.bf16.gmra.mrb[0].mxu0 %v386
      %v539 = vpop.f32.mrb[0].mxu0
      %v540 = vadd.f32 %v252, %v539
      %v541 = vpop.f32.mrb[0].mxu0
      %v542 = vpop.f32.mrb[0].mxu0
      %v543 = vadd.f32 %v252, %v542
      %v544 = vpop.f32.mrb[0].mxu0
      %545 = vmatprep.mubr.bf16.mxu0 0
      %546 = vmatmul.mubr.bf16.gmra.mrb[0].mxu0 %v389
      %v547 = vpop.f32.mrb[0].mxu0
      %v548 = vadd.f32 %v252, %v547
      %v549 = vpop.f32.mrb[0].mxu0
      %v550 = vpop.f32.mrb[0].mxu0
      %v551 = vadd.f32 %v252, %v550
      %v552 = vpop.f32.mrb[0].mxu0
      %553 = vmatprep.mubr.bf16.mxu0 0
      %554 = vmatmul.mubr.bf16.gmra.mrb[0].mxu0 %v392
      %v555 = vpop.f32.mrb[0].mxu0
      %v556 = vadd.f32 %v252, %v555
      %v557 = vpop.f32.mrb[0].mxu0
      %v558 = vpop.f32.mrb[0].mxu0
      %v559 = vadd.f32 %v252, %v558
      %v560 = vpop.f32.mrb[0].mxu0
      %561 = vdwg.mxu0
      %562 = vst [vmem:[%s208] sm:$0xff] %v436
      %563 = vst [vmem:[%s208 + $0x8] sm:$0xff] %v439
      %564 = vst [vmem:[%s208 + $0x10] sm:$0xff] %v444
      %565 = vst [vmem:[%s208 + $0x18] sm:$0xff] %v447
      %566 = vst [vmem:[%s208 + $0x20] sm:$0xff] %v452
      %567 = vst [vmem:[%s208 + $0x28] sm:$0xff] %v455
      %568 = vst [vmem:[%s208 + $0x30] sm:$0xff] %v460
      %569 = vst [vmem:[%s208 + $0x38] sm:$0xff] %v463
      %570 = vst [vmem:[%s208 + $0x40] sm:$0xff] %v468
      %571 = vst [vmem:[%s208 + $0x48] sm:$0xff] %v471
      %572 = vst [vmem:[%s208 + $0x50] sm:$0xff] %v476
      %573 = vst [vmem:[%s208 + $0x58] sm:$0xff] %v479
      %574 = vst [vmem:[%s208 + $0x60] sm:$0xff] %v484
      %575 = vst [vmem:[%s208 + $0x68] sm:$0xff] %v487
      %576 = vst [vmem:[%s208 + $0x70] sm:$0xff] %v492
      %577 = vst [vmem:[%s208 + $0x78] sm:$0xff] %v495
      %578 = vst [vmem:[%s208 + $0x80] sm:$0xff] %v500
      %579 = vst [vmem:[%s208 + $0x88] sm:$0xff] %v503
      %580 = vst [vmem:[%s208 + $0x90] sm:$0xff] %v508
      %581 = vst [vmem:[%s208 + $0x98] sm:$0xff] %v511
      %582 = vst [vmem:[%s208 + $0xa0] sm:$0xff] %v516
      %583 = vst [vmem:[%s208 + $0xa8] sm:$0xff] %v519
      %584 = vst [vmem:[%s208 + $0xb0] sm:$0xff] %v524
      %585 = vst [vmem:[%s208 + $0xb8] sm:$0xff] %v527
      %586 = vst [vmem:[%s208 + $0xc0] sm:$0xff] %v532
      %587 = vst [vmem:[%s208 + $0xc8] sm:$0xff] %v535
      %588 = vst [vmem:[%s208 + $0xd0] sm:$0xff] %v540
      %589 = vst [vmem:[%s208 + $0xd8] sm:$0xff] %v543
      %590 = vst [vmem:[%s208 + $0xe0] sm:$0xff] %v548
      %591 = vst [vmem:[%s208 + $0xe8] sm:$0xff] %v551
      %592 = vst [vmem:[%s208 + $0xf0] sm:$0xff] %v556
      %593 = vst [vmem:[%s208 + $0xf8] sm:$0xff] %v559
      %s594 = smul.u32 32, %s19
      %p595 = scmp.lt.s32.totalorder %s18, 1
      %s596 = scalar_select %p595, %s18, 1
      %p597 = scmp.lt.s32.totalorder %s594, 31
      %s598 = scalar_select %p597, %s594, 31
      %s599 = smul.addr %s596, 32
      %s600 = sadd.s32 %s598, %s599
      %s601 = smul.addr %s600, 8
      %s602 = scalar_lea.vmem %s3, %s601
      // Predicated region
      $region33: #{_lambda_.21} parent=31 // pred_check
        %p603 = pneg %p116
      $region34: #{_lambda_.21} parent=31 // pred_check_branch
        %605 = sbr.rel (%p603) target = $region36
      $region35: #{_lambda_.21} parent=31 // pred_region
        %s606 = smul.u32 32, %s19
      $region36: #{_lambda_.21} parent=31 // pred_fallthru
        _
    $region32: #{_lambda_.21} parent=5 // pred_fallthru
      _
    %p607 = scmp.le.s32.totalorder 2, %s9
    // Predicated region
    $region37: #{_lambda_.21} parent=5 // pred_check
      %p608 = pneg %p607
    $region38: #{_lambda_.21} parent=5 // pred_check_branch
      %610 = sbr.rel (%p608) target = $region40
    $region39: #{_lambda_.21} parent=5 // pred_region
      %s611 = ssub.s32 %s9, 2
      // Predicated region
      $region41: #{_lambda_.21} parent=39 // pred_check
        %p612 = pneg %p122
      $region42: #{_lambda_.21} parent=39 // pred_check_branch
        %614 = sbr.rel (%p612) target = $region44
      $region43: #{_lambda_.21} parent=39 // pred_region
        %s615 = smul.u32 32, %s21
        %p616 = scmp.lt.s32.totalorder %s20, 1
        %s617 = scalar_select %p616, %s20, 1
        %p618 = scmp.lt.s32.totalorder %s615, 31
        %s619 = scalar_select %p618, %s615, 31
        %s620 = smul.addr %s617, 32
        %s621 = sadd.s32 %s619, %s620
        %s622 = smul.addr %s621, 8
        %s623 = scalar_lea.vmem %s3, %s622
      $region44: #{_lambda_.21} parent=39 // pred_fallthru
        _
    $region40: #{_lambda_.21} parent=5 // pred_fallthru
      _
  $region6: #{_lambda_.21} parent=0 // loop_footer
    %s13 = sadd.s32 1, %s9
  $region7: #{_lambda_.21} parent=0 // loop_footer_branch
    %8 = sbr.rel target = $region3
  $region8: #{_lambda_.21} parent=0 // loop_exit
    _

// kernel: _lambda_.23
$region0: #{_lambda_.23}
  #allocation0 [shape = 'u32[]', space=smem, size = 0x4, offset = 0x4, fixed_abs, tag = 'smem constant byte address 0x4 - core index']
  #allocation1 [shape = 'u32[144,128]{1,0:T(1,128)}', space=vmem, size = 0x12000, scoped, tag = 'internal scratch']
  %s0 = inlined_call_operand.vmem [shape: f32[2,256,8], index: 0, kind: input, shape index: {}]
  %s1 = inlined_call_operand.vmem [shape: f32[2,1,8], index: 1, kind: input, shape index: {}]
  %s2 = inlined_call_operand.vmem [shape: f32[2,1,8], index: 2, kind: input, shape index: {}]
  %s3 = inlined_call_operand.vmem [shape: bf16[2,256,8], index: 3, kind: output, shape index: {}]
  %s4 = sld [smem:[#allocation0]]
  $region45: #{_lambda_.23} parent=0
    _
  %s6 = ssub.s32 1, %s4
  %s7 = scalar_select 0, %s6, %s4
  loop: start=0, step=1, limit=4
  $region2: #{_lambda_.23} parent=0 // loop_pre_header
    _
  $region3: #{_lambda_.23} parent=0 // loop_header
    %s9 = sphi 0, %s13
    %p10 = scmp.ge.s32.totalorder %s9, 4
    %s16 = sphi 0, %s28
    %s17 = sphi 0, %s24
    %s18 = sphi 0, %s16
    %s19 = sphi 0, %s17
    %s20 = sphi 0, %s18
    %s21 = sphi 0, %s19
    %s33 = sphi 0, %s35
    %s36 = sphi 0, %s33
    %s37 = sphi 0, %s36
    %s53 = sphi 0, %s37
    %s59 = sphi 0, %s61
    %s62 = sphi 0, %s59
    %s63 = sphi 0, %s62
    %s79 = sphi 0, %s63
    %s85 = sphi 0, %s87
    %s88 = sphi 0, %s85
    %s89 = sphi 0, %s88
    %s105 = sphi 0, %s89
    %s113 = sphi 0, %s115
    %s116 = sphi 0, %s113
    %s117 = sphi 0, %s116
    %s133 = sphi 0, %s117
  $region4: #{_lambda_.23} parent=0 // loop_header_branch
    %12 = sbr.rel (%p10) target = $region8
  $region5: #{_lambda_.23} parent=0 // loop_body
    %s14 = ssub.s32 %s9, 1
    %s15 = ssub.s32 %s9, 2
    %s22 = sadd.s32 1, %s17
    %p23 = scmp.ge.s32.totalorder %s22, 1
    %s24 = scalar_select %p23, 0, %s22
    %s25 = sadd.s32 1, %s16
    %s26 = scalar_select %p23, %s25, %s16
    %p27 = scmp.ge.s32.totalorder %s26, 2
    %s28 = scalar_select %p27, 0, %s26
    %s29 = ssub.s32 %s16, %s28
    %s30 = ssub.s32 %s17, %s24
    %s31 = sor.u32 %s29, %s30
    %p32 = scmp.eq.s32.totalorder %s31, 0
    %s34 = sadd.s32 %s33, 1
    %s35 = scalar_select %p32, %s33, %s34
    %p38 = pneg %p32
    %p39 = scmp.eq.s32.totalorder %s9, 1
    %p40 = por %p38, %p39
    %p41 = scmp.ne.s32.totalorder %s33, %s36
    %p42 = scmp.eq.s32.totalorder %s9, 0
    %p43 = por %p41, %p42
    %p44 = scmp.ne.s32.totalorder %s33, %s36
    %p45 = scmp.eq.s32.totalorder %s14, 1
    %p46 = por %p44, %p45
    %p47 = scmp.ne.s32.totalorder %s36, %s37
    %p48 = scmp.eq.s32.totalorder %s14, 0
    %p49 = por %p47, %p48
    %p50 = scmp.ne.s32.totalorder %s36, %s37
    %p51 = scmp.eq.s32.totalorder %s15, 1
    %p52 = por %p50, %p51
    %p54 = scmp.ne.s32.totalorder %s37, %s53
    %p55 = scmp.eq.s32.totalorder %s15, 0
    %p56 = por %p54, %p55
    %s57 = ssub.s32 %s16, %s28
    %p58 = scmp.eq.s32.totalorder %s57, 0
    %s60 = sadd.s32 %s59, 1
    %s61 = scalar_select %p58, %s59, %s60
    %p64 = pneg %p58
    %p65 = scmp.eq.s32.totalorder %s9, 1
    %p66 = por %p64, %p65
    %p67 = scmp.ne.s32.totalorder %s59, %s62
    %p68 = scmp.eq.s32.totalorder %s9, 0
    %p69 = por %p67, %p68
    %p70 = scmp.ne.s32.totalorder %s59, %s62
    %p71 = scmp.eq.s32.totalorder %s14, 1
    %p72 = por %p70, %p71
    %p73 = scmp.ne.s32.totalorder %s62, %s63
    %p74 = scmp.eq.s32.totalorder %s14, 0
    %p75 = por %p73, %p74
    %p76 = scmp.ne.s32.totalorder %s62, %s63
    %p77 = scmp.eq.s32.totalorder %s15, 1
    %p78 = por %p76, %p77
    %p80 = scmp.ne.s32.totalorder %s63, %s79
    %p81 = scmp.eq.s32.totalorder %s15, 0
    %p82 = por %p80, %p81
    %s83 = ssub.s32 %s16, %s28
    %p84 = scmp.eq.s32.totalorder %s83, 0
    %s86 = sadd.s32 %s85, 1
    %s87 = scalar_select %p84, %s85, %s86
    %p90 = pneg %p84
    %p91 = scmp.eq.s32.totalorder %s9, 1
    %p92 = por %p90, %p91
    %p93 = scmp.ne.s32.totalorder %s85, %s88
    %p94 = scmp.eq.s32.totalorder %s9, 0
    %p95 = por %p93, %p94
    %p96 = scmp.ne.s32.totalorder %s85, %s88
    %p97 = scmp.eq.s32.totalorder %s14, 1
    %p98 = por %p96, %p97
    %p99 = scmp.ne.s32.totalorder %s88, %s89
    %p100 = scmp.eq.s32.totalorder %s14, 0
    %p101 = por %p99, %p100
    %p102 = scmp.ne.s32.totalorder %s88, %s89
    %p103 = scmp.eq.s32.totalorder %s15, 1
    %p104 = por %p102, %p103
    %p106 = scmp.ne.s32.totalorder %s89, %s105
    %p107 = scmp.eq.s32.totalorder %s15, 0
    %p108 = por %p106, %p107
    %s109 = ssub.s32 %s16, %s28
    %s110 = ssub.s32 %s17, %s24
    %s111 = sor.u32 %s109, %s110
    %p112 = scmp.eq.s32.totalorder %s111, 0
    %s114 = sadd.s32 %s113, 1
    %s115 = scalar_select %p112, %s113, %s114
    %p118 = pneg %p112
    %p119 = scmp.eq.s32.totalorder %s9, 1
    %p120 = por %p118, %p119
    %p121 = scmp.ne.s32.totalorder %s113, %s116
    %p122 = scmp.eq.s32.totalorder %s9, 0
    %p123 = por %p121, %p122
    %p124 = scmp.ne.s32.totalorder %s113, %s116
    %p125 = scmp.eq.s32.totalorder %s14, 1
    %p126 = por %p124, %p125
    %p127 = scmp.ne.s32.totalorder %s116, %s117
    %p128 = scmp.eq.s32.totalorder %s14, 0
    %p129 = por %p127, %p128
    %p130 = scmp.ne.s32.totalorder %s116, %s117
    %p131 = scmp.eq.s32.totalorder %s15, 1
    %p132 = por %p130, %p131
    %p134 = scmp.ne.s32.totalorder %s117, %s133
    %p135 = scmp.eq.s32.totalorder %s15, 0
    %p136 = por %p134, %p135
    %p137 = scmp.le.s32.totalorder 1, %s9
    %p138 = scmp.lt.s32.totalorder %s9, 3
    %p139 = pnand %p137, %p138
    %p140 = pneg %p139
    // Predicated region
    $region9: #{_lambda_.23} parent=5 // pred_check
      _
    $region10: #{_lambda_.23} parent=5 // pred_check_branch
      %142 = sbr.rel (%p139) target = $region12
    $region11: #{_lambda_.23} parent=5 // pred_region
      %s143 = ssub.s32 %s9, 1
    $region12: #{_lambda_.23} parent=5 // pred_fallthru
      _
    %p144 = scmp.lt.s32.totalorder %s9, 2
    // Predicated region
    $region13: #{_lambda_.23} parent=5 // pred_check
      %p145 = pneg %p144
    $region14: #{_lambda_.23} parent=5 // pred_check_branch
      %147 = sbr.rel (%p145) target = $region16
    $region15: #{_lambda_.23} parent=5 // pred_region
      // Predicated region
      $region17: #{_lambda_.23} parent=15 // pred_check
        %p148 = pneg %p43
      $region18: #{_lambda_.23} parent=15 // pred_check_branch
        %150 = sbr.rel (%p148) target = $region20
      $region19: #{_lambda_.23} parent=15 // pred_region
        %s151 = smul.u32 32, %s17
        %p152 = scmp.lt.s32.totalorder %s16, 1
        %s153 = scalar_select %p152, %s16, 1
        %p154 = scmp.lt.s32.totalorder %s151, 31
        %s155 = scalar_select %p154, %s151, 31
        %s156 = smul.addr %s153, 32
        %s157 = sadd.s32 %s155, %s156
        %s158 = smul.addr %s157, 8
        %s159 = scalar_lea.vmem %s0, %s158
        %s160 = smul.u32 32, %s17
      $region20: #{_lambda_.23} parent=15 // pred_fallthru
        _
      // Predicated region
      $region21: #{_lambda_.23} parent=15 // pred_check
        %p161 = pneg %p69
      $region22: #{_lambda_.23} parent=15 // pred_check_branch
        %163 = sbr.rel (%p161) target = $region24
      $region23: #{_lambda_.23} parent=15 // pred_region
        %p164 = scmp.lt.s32.totalorder %s16, 1
        %s165 = scalar_select %p164, %s16, 1
        %s166 = scalar_lea.vmem %s1, %s165
      $region24: #{_lambda_.23} parent=15 // pred_fallthru
        _
      // Predicated region
      $region25: #{_lambda_.23} parent=15 // pred_check
        %p167 = pneg %p95
      $region26: #{_lambda_.23} parent=15 // pred_check_branch
        %169 = sbr.rel (%p167) target = $region28
      $region27: #{_lambda_.23} parent=15 // pred_region
        %p170 = scmp.lt.s32.totalorder %s16, 1
        %s171 = scalar_select %p170, %s16, 1
        %s172 = scalar_lea.vmem %s2, %s171
      $region28: #{_lambda_.23} parent=15 // pred_fallthru
        _
    $region16: #{_lambda_.23} parent=5 // pred_fallthru
      _
    %p173 = scmp.le.s32.totalorder 1, %s9
    %p174 = scmp.lt.s32.totalorder %s9, 3
    %p175 = pnand %p173, %p174
    %p176 = pneg %p175
    // Predicated region
    $region29: #{_lambda_.23} parent=5 // pred_check
      _
    $region30: #{_lambda_.23} parent=5 // pred_check_branch
      %178 = sbr.rel (%p175) target = $region32
    $region31: #{_lambda_.23} parent=5 // pred_region
      %s179 = ssub.s32 %s9, 1
      %s180 = smul.u32 32, %s19
      %p181 = scmp.lt.s32.totalorder %s18, 1
      %s182 = scalar_select %p181, %s18, 1
      %p183 = scmp.lt.s32.totalorder %s180, 31
      %s184 = scalar_select %p183, %s180, 31
      %s185 = smul.addr %s182, 32
      %s186 = sadd.s32 %s184, %s185
      %s187 = smul.addr %s186, 8
      %s188 = scalar_lea.vmem %s0, %s187
      %p189 = pneg %p49
      %p190 = pneg %p46
      %p191 = scmp.lt.s32.totalorder %s18, 1
      %s192 = scalar_select %p191, %s18, 1
      %s193 = scalar_lea.vmem %s1, %s192
      %p194 = pneg %p75
      %p195 = pneg %p72
      %p196 = scmp.lt.s32.totalorder %s18, 1
      %s197 = scalar_select %p196, %s18, 1
      %s198 = scalar_lea.vmem %s2, %s197
      %p199 = pneg %p101
      %p200 = pneg %p98
      %p201 = pneg %p129
      %p202 = pneg %p126
      %s203 = smul.u32 32, %s19
      %p204 = scmp.lt.s32.totalorder %s18, 1
      %s205 = scalar_select %p204, %s18, 1
      %p206 = scmp.lt.s32.totalorder %s203, 31
      %s207 = scalar_select %p206, %s203, 31
      %s208 = smul.addr %s205, 32
      %s209 = sadd.s32 %s207, %s208
      %s210 = smul.addr %s209, 4
      %s211 = scalar_lea.vmem %s3, %s210
      %s212 = smul.u32 32, %s19
      %p213 = scmp.lt.s32.totalorder %s18, 1
      %s214 = scalar_select %p213, %s18, 1
      %p215 = scmp.lt.s32.totalorder %s212, 31
      %s216 = scalar_select %p215, %s212, 31
      %s217 = smul.addr %s214, 32
      %s218 = sadd.s32 %s216, %s217
      %s219 = smul.addr %s218, 8
      %s220 = scalar_lea.vmem %s0, %s219
      %s221 = smul.u32 32, %s19
      %p222 = scmp.lt.s32.totalorder %s18, 1
      %s223 = scalar_select %p222, %s18, 1
      %s224 = scalar_lea.vmem %s1, %s223
      %p225 = scmp.lt.s32.totalorder %s18, 1
      %s226 = scalar_select %p225, %s18, 1
      %s227 = scalar_lea.vmem %s2, %s226
      %s228 = smul.u32 32, %s19
      %p229 = scmp.lt.s32.totalorder %s18, 1
      %s230 = scalar_select %p229, %s18, 1
      %p231 = scmp.lt.s32.totalorder %s228, 31
      %s232 = scalar_select %p231, %s228, 31
      %s233 = smul.addr %s230, 32
      %s234 = sadd.s32 %s232, %s233
      %s235 = smul.addr %s234, 4
      %s236 = scalar_lea.vmem %s3, %s235
      %s237 = smul.u32 32, %s19
      %v238 = vld [vmem:[%s220] sm:$0xff]
      %v239 = vld [vmem:[%s220 + $0x8] sm:$0xff]
      %v240 = vld [vmem:[%s220 + $0x10] sm:$0xff]
      %v241 = vld [vmem:[%s220 + $0x18] sm:$0xff]
      %v242 = vld [vmem:[%s220 + $0x20] sm:$0xff]
      %v243 = vld [vmem:[%s220 + $0x28] sm:$0xff]
      %v244 = vld [vmem:[%s220 + $0x30] sm:$0xff]
      %v245 = vld [vmem:[%s220 + $0x38] sm:$0xff]
      %v246 = vld [vmem:[%s220 + $0x40] sm:$0xff]
      %v247 = vld [vmem:[%s220 + $0x48] sm:$0xff]
      %v248 = vld [vmem:[%s220 + $0x50] sm:$0xff]
      %v249 = vld [vmem:[%s220 + $0x58] sm:$0xff]
      %v250 = vld [vmem:[%s220 + $0x60] sm:$0xff]
      %v251 = vld [vmem:[%s220 + $0x68] sm:$0xff]
      %v252 = vld [vmem:[%s220 + $0x70] sm:$0xff]
      %v253 = vld [vmem:[%s220 + $0x78] sm:$0xff]
      %v254 = vld [vmem:[%s220 + $0x80] sm:$0xff]
      %v255 = vld [vmem:[%s220 + $0x88] sm:$0xff]
      %v256 = vld [vmem:[%s220 + $0x90] sm:$0xff]
      %v257 = vld [vmem:[%s220 + $0x98] sm:$0xff]
      %v258 = vld [vmem:[%s220 + $0xa0] sm:$0xff]
      %v259 = vld [vmem:[%s220 + $0xa8] sm:$0xff]
      %v260 = vld [vmem:[%s220 + $0xb0] sm:$0xff]
      %v261 = vld [vmem:[%s220 + $0xb8] sm:$0xff]
      %v262 = vld [vmem:[%s220 + $0xc0] sm:$0xff]
      %v263 = vld [vmem:[%s220 + $0xc8] sm:$0xff]
      %v264 = vld [vmem:[%s220 + $0xd0] sm:$0xff]
      %v265 = vld [vmem:[%s220 + $0xd8] sm:$0xff]
      %v266 = vld [vmem:[%s220 + $0xe0] sm:$0xff]
      %v267 = vld [vmem:[%s220 + $0xe8] sm:$0xff]
      %v268 = vld [vmem:[%s220 + $0xf0] sm:$0xff]
      %v269 = vld [vmem:[%s220 + $0xf8] sm:$0xff]
      %v270 = vld [vmem:[%s224] sm:$0x1]
      %v272 = vlaneseq
      %v273 = vshrl.u32 %v272, 7
      %v274 = vsub.s32 0, %v273
      %v275 = vrot.slane %v270, %v274
      %v277 = vmul.f32 %v238, %v275
      %v278 = vmul.f32 %v239, %v275
      %v279 = vmul.f32 %v240, %v275
      %v280 = vmul.f32 %v241, %v275
      %v281 = vmul.f32 %v242, %v275
      %v282 = vmul.f32 %v243, %v275
      %v283 = vmul.f32 %v244, %v275
      %v284 = vmul.f32 %v245, %v275
      %v285 = vmul.f32 %v246, %v275
      %v286 = vmul.f32 %v247, %v275
      %v287 = vmul.f32 %v248, %v275
      %v288 = vmul.f32 %v249, %v275
      %v289 = vmul.f32 %v250, %v275
      %v290 = vmul.f32 %v251, %v275
      %v291 = vmul.f32 %v252, %v275
      %v292 = vmul.f32 %v253, %v275
      %v293 = vmul.f32 %v254, %v275
      %v294 = vmul.f32 %v255, %v275
      %v295 = vmul.f32 %v256, %v275
      %v296 = vmul.f32 %v257, %v275
      %v297 = vmul.f32 %v258, %v275
      %v298 = vmul.f32 %v259, %v275
      %v299 = vmul.f32 %v260, %v275
      %v300 = vmul.f32 %v261, %v275
      %v301 = vmul.f32 %v262, %v275
      %v302 = vmul.f32 %v263, %v275
      %v303 = vmul.f32 %v264, %v275
      %v304 = vmul.f32 %v265, %v275
      %v305 = vmul.f32 %v266, %v275
      %v306 = vmul.f32 %v267, %v275
      %v307 = vmul.f32 %v268, %v275
      %v308 = vmul.f32 %v269, %v275
      %v309 = vld [vmem:[%s227] sm:$0x1]
      %v311 = vlaneseq
      %v312 = vshrl.u32 %v311, 7
      %v313 = vsub.s32 0, %v312
      %v314 = vrot.slane %v309, %v313
      %v316 = vadd.f32 %v277, %v314
      %v317 = vadd.f32 %v278, %v314
      %v318 = vadd.f32 %v279, %v314
      %v319 = vadd.f32 %v280, %v314
      %v320 = vadd.f32 %v281, %v314
      %v321 = vadd.f32 %v282, %v314
      %v322 = vadd.f32 %v283, %v314
      %v323 = vadd.f32 %v284, %v314
      %v324 = vadd.f32 %v285, %v314
      %v325 = vadd.f32 %v286, %v314
      %v326 = vadd.f32 %v287, %v314
      %v327 = vadd.f32 %v288, %v314
      %v328 = vadd.f32 %v289, %v314
      %v329 = vadd.f32 %v290, %v314
      %v330 = vadd.f32 %v291, %v314
      %v331 = vadd.f32 %v292, %v314
      %v332 = vadd.f32 %v293, %v314
      %v333 = vadd.f32 %v294, %v314
      %v334 = vadd.f32 %v295, %v314
      %v335 = vadd.f32 %v296, %v314
      %v336 = vadd.f32 %v297, %v314
      %v337 = vadd.f32 %v298, %v314
      %v338 = vadd.f32 %v299, %v314
      %v339 = vadd.f32 %v300, %v314
      %v340 = vadd.f32 %v301, %v314
      %v341 = vadd.f32 %v302, %v314
      %v342 = vadd.f32 %v303, %v314
      %v343 = vadd.f32 %v304, %v314
      %v344 = vadd.f32 %v305, %v314
      %v345 = vadd.f32 %v306, %v314
      %v346 = vadd.f32 %v307, %v314
      %v347 = vadd.f32 %v308, %v314
      %v348 = vxor.u32 %v316, 2147483648
      %v349 = vxor.u32 %v317, 2147483648
      %v350 = vxor.u32 %v318, 2147483648
      %v351 = vxor.u32 %v319, 2147483648
      %v352 = vxor.u32 %v320, 2147483648
      %v353 = vxor.u32 %v321, 2147483648
      %v354 = vxor.u32 %v322, 2147483648
      %v355 = vxor.u32 %v323, 2147483648
      %v356 = vxor.u32 %v324, 2147483648
      %v357 = vxor.u32 %v325, 2147483648
      %v358 = vxor.u32 %v326, 2147483648
      %v359 = vxor.u32 %v327, 2147483648
      %v360 = vxor.u32 %v328, 2147483648
      %v361 = vxor.u32 %v329, 2147483648
      %v362 = vxor.u32 %v330, 2147483648
      %v363 = vxor.u32 %v331, 2147483648
      %v364 = vxor.u32 %v332, 2147483648
      %v365 = vxor.u32 %v333, 2147483648
      %v366 = vxor.u32 %v334, 2147483648
      %v367 = vxor.u32 %v335, 2147483648
      %v368 = vxor.u32 %v336, 2147483648
      %v369 = vxor.u32 %v337, 2147483648
      %v370 = vxor.u32 %v338, 2147483648
      %v371 = vxor.u32 %v339, 2147483648
      %v372 = vxor.u32 %v340, 2147483648
      %v373 = vxor.u32 %v341, 2147483648
      %v374 = vxor.u32 %v342, 2147483648
      %v375 = vxor.u32 %v343, 2147483648
      %v376 = vxor.u32 %v344, 2147483648
      %v377 = vxor.u32 %v345, 2147483648
      %v378 = vxor.u32 %v346, 2147483648
      %v379 = vxor.u32 %v347, 2147483648
      %v380 = vmul.f32 %v348, 1.442695
      %v381 = vpow.pop %v380
      %v382 = vmul.f32 %v349, 1.442695
      %v383 = vpow.pop %v382
      %v384 = vmul.f32 %v350, 1.442695
      %v385 = vpow.pop %v384
      %v386 = vmul.f32 %v351, 1.442695
      %v387 = vpow.pop %v386
      %v388 = vmul.f32 %v352, 1.442695
      %v389 = vpow.pop %v388
      %v390 = vmul.f32 %v353, 1.442695
      %v391 = vpow.pop %v390
      %v392 = vmul.f32 %v354, 1.442695
      %v393 = vpow.pop %v392
      %v394 = vmul.f32 %v355, 1.442695
      %v395 = vpow.pop %v394
      %v396 = vmul.f32 %v356, 1.442695
      %v397 = vpow.pop %v396
      %v398 = vmul.f32 %v357, 1.442695
      %v399 = vpow.pop %v398
      %v400 = vmul.f32 %v358, 1.442695
      %v401 = vpow.pop %v400
      %v402 = vmul.f32 %v359, 1.442695
      %v403 = vpow.pop %v402
      %v404 = vmul.f32 %v360, 1.442695
      %v405 = vpow.pop %v404
      %v406 = vmul.f32 %v361, 1.442695
      %v407 = vpow.pop %v406
      %v408 = vmul.f32 %v362, 1.442695
      %v409 = vpow.pop %v408
      %v410 = vmul.f32 %v363, 1.442695
      %v411 = vpow.pop %v410
      %v412 = vmul.f32 %v364, 1.442695
      %v413 = vpow.pop %v412
      %v414 = vmul.f32 %v365, 1.442695
      %v415 = vpow.pop %v414
      %v416 = vmul.f32 %v366, 1.442695
      %v417 = vpow.pop %v416
      %v418 = vmul.f32 %v367, 1.442695
      %v419 = vpow.pop %v418
      %v420 = vmul.f32 %v368, 1.442695
      %v421 = vpow.pop %v420
      %v422 = vmul.f32 %v369, 1.442695
      %v423 = vpow.pop %v422
      %v424 = vmul.f32 %v370, 1.442695
      %v425 = vpow.pop %v424
      %v426 = vmul.f32 %v371, 1.442695
      %v427 = vpow.pop %v426
      %v428 = vmul.f32 %v372, 1.442695
      %v429 = vpow.pop %v428
      %v430 = vmul.f32 %v373, 1.442695
      %v431 = vpow.pop %v430
      %v432 = vmul.f32 %v374, 1.442695
      %v433 = vpow.pop %v432
      %v434 = vmul.f32 %v375, 1.442695
      %v435 = vpow.pop %v434
      %v436 = vmul.f32 %v376, 1.442695
      %v437 = vpow.pop %v436
      %v438 = vmul.f32 %v377, 1.442695
      %v439 = vpow.pop %v438
      %v440 = vmul.f32 %v378, 1.442695
      %v441 = vpow.pop %v440
      %v442 = vmul.f32 %v379, 1.442695
      %v443 = vpow.pop %v442
      %v444 = vadd.f32 %v381, 1.0
      %v445 = vadd.f32 %v383, 1.0
      %v446 = vadd.f32 %v385, 1.0
      %v447 = vadd.f32 %v387, 1.0
      %v448 = vadd.f32 %v389, 1.0
      %v449 = vadd.f32 %v391, 1.0
      %v450 = vadd.f32 %v393, 1.0
      %v451 = vadd.f32 %v395, 1.0
      %v452 = vadd.f32 %v397, 1.0
      %v453 = vadd.f32 %v399, 1.0
      %v454 = vadd.f32 %v401, 1.0
      %v455 = vadd.f32 %v403, 1.0
      %v456 = vadd.f32 %v405, 1.0
      %v457 = vadd.f32 %v407, 1.0
      %v458 = vadd.f32 %v409, 1.0
      %v459 = vadd.f32 %v411, 1.0
      %v460 = vadd.f32 %v413, 1.0
      %v461 = vadd.f32 %v415, 1.0
      %v462 = vadd.f32 %v417, 1.0
      %v463 = vadd.f32 %v419, 1.0
      %v464 = vadd.f32 %v421, 1.0
      %v465 = vadd.f32 %v423, 1.0
      %v466 = vadd.f32 %v425, 1.0
      %v467 = vadd.f32 %v427, 1.0
      %v468 = vadd.f32 %v429, 1.0
      %v469 = vadd.f32 %v431, 1.0
      %v470 = vadd.f32 %v433, 1.0
      %v471 = vadd.f32 %v435, 1.0
      %v472 = vadd.f32 %v437, 1.0
      %v473 = vadd.f32 %v439, 1.0
      %v474 = vadd.f32 %v441, 1.0
      %v475 = vadd.f32 %v443, 1.0
      %v476 = vrcp.pop %v444
      %v477 = vmul.f32 1.0, %v476
      %v478 = vrcp.pop %v445
      %v479 = vmul.f32 1.0, %v478
      %v480 = vrcp.pop %v446
      %v481 = vmul.f32 1.0, %v480
      %v482 = vrcp.pop %v447
      %v483 = vmul.f32 1.0, %v482
      %v484 = vrcp.pop %v448
      %v485 = vmul.f32 1.0, %v484
      %v486 = vrcp.pop %v449
      %v487 = vmul.f32 1.0, %v486
      %v488 = vrcp.pop %v450
      %v489 = vmul.f32 1.0, %v488
      %v490 = vrcp.pop %v451
      %v491 = vmul.f32 1.0, %v490
      %v492 = vrcp.pop %v452
      %v493 = vmul.f32 1.0, %v492
      %v494 = vrcp.pop %v453
      %v495 = vmul.f32 1.0, %v494
      %v496 = vrcp.pop %v454
      %v497 = vmul.f32 1.0, %v496
      %v498 = vrcp.pop %v455
      %v499 = vmul.f32 1.0, %v498
      %v500 = vrcp.pop %v456
      %v501 = vmul.f32 1.0, %v500
      %v502 = vrcp.pop %v457
      %v503 = vmul.f32 1.0, %v502
      %v504 = vrcp.pop %v458
      %v505 = vmul.f32 1.0, %v504
      %v506 = vrcp.pop %v459
      %v507 = vmul.f32 1.0, %v506
      %v508 = vrcp.pop %v460
      %v509 = vmul.f32 1.0, %v508
      %v510 = vrcp.pop %v461
      %v511 = vmul.f32 1.0, %v510
      %v512 = vrcp.pop %v462
      %v513 = vmul.f32 1.0, %v512
      %v514 = vrcp.pop %v463
      %v515 = vmul.f32 1.0, %v514
      %v516 = vrcp.pop %v464
      %v517 = vmul.f32 1.0, %v516
      %v518 = vrcp.pop %v465
      %v519 = vmul.f32 1.0, %v518
      %v520 = vrcp.pop %v466
      %v521 = vmul.f32 1.0, %v520
      %v522 = vrcp.pop %v467
      %v523 = vmul.f32 1.0, %v522
      %v524 = vrcp.pop %v468
      %v525 = vmul.f32 1.0, %v524
      %v526 = vrcp.pop %v469
      %v527 = vmul.f32 1.0, %v526
      %v528 = vrcp.pop %v470
      %v529 = vmul.f32 1.0, %v528
      %v530 = vrcp.pop %v471
      %v531 = vmul.f32 1.0, %v530
      %v532 = vrcp.pop %v472
      %v533 = vmul.f32 1.0, %v532
      %v534 = vrcp.pop %v473
      %v535 = vmul.f32 1.0, %v534
      %v536 = vrcp.pop %v474
      %v537 = vmul.f32 1.0, %v536
      %v538 = vrcp.pop %v475
      %v539 = vmul.f32 1.0, %v538
      %v540 = vmul.f32 %v316, %v477
      %v541 = vmul.f32 %v317, %v479
      %v542 = vmul.f32 %v318, %v481
      %v543 = vmul.f32 %v319, %v483
      %v544 = vmul.f32 %v320, %v485
      %v545 = vmul.f32 %v321, %v487
      %v546 = vmul.f32 %v322, %v489
      %v547 = vmul.f32 %v323, %v491
      %v548 = vmul.f32 %v324, %v493
      %v549 = vmul.f32 %v325, %v495
      %v550 = vmul.f32 %v326, %v497
      %v551 = vmul.f32 %v327, %v499
      %v552 = vmul.f32 %v328, %v501
      %v553 = vmul.f32 %v329, %v503
      %v554 = vmul.f32 %v330, %v505
      %v555 = vmul.f32 %v331, %v507
      %v556 = vmul.f32 %v332, %v509
      %v557 = vmul.f32 %v333, %v511
      %v558 = vmul.f32 %v334, %v513
      %v559 = vmul.f32 %v335, %v515
      %v560 = vmul.f32 %v336, %v517
      %v561 = vmul.f32 %v337, %v519
      %v562 = vmul.f32 %v338, %v521
      %v563 = vmul.f32 %v339, %v523
      %v564 = vmul.f32 %v340, %v525
      %v565 = vmul.f32 %v341, %v527
      %v566 = vmul.f32 %v342, %v529
      %v567 = vmul.f32 %v343, %v531
      %v568 = vmul.f32 %v344, %v533
      %v569 = vmul.f32 %v345, %v535
      %v570 = vmul.f32 %v346, %v537
      %v571 = vmul.f32 %v347, %v539
      %v572 = vpack.c.bf16 %v541, %v540
      %v573 = vpack.c.bf16 %v543, %v542
      %v574 = vpack.c.bf16 %v545, %v544
      %v575 = vpack.c.bf16 %v547, %v546
      %v576 = vpack.c.bf16 %v549, %v548
      %v577 = vpack.c.bf16 %v551, %v550
      %v578 = vpack.c.bf16 %v553, %v552
      %v579 = vpack.c.bf16 %v555, %v554
      %v580 = vpack.c.bf16 %v557, %v556
      %v581 = vpack.c.bf16 %v559, %v558
      %v582 = vpack.c.bf16 %v561, %v560
      %v583 = vpack.c.bf16 %v563, %v562
      %v584 = vpack.c.bf16 %v565, %v564
      %v585 = vpack.c.bf16 %v567, %v566
      %v586 = vpack.c.bf16 %v569, %v568
      %v587 = vpack.c.bf16 %v571, %v570
      %v604 = vunpack.c.l.b16 %v572
      %v605 = vunpack.c.h.b16 %v572
      %v606 = vunpack.c.l.b16 %v573
      %v607 = vunpack.c.h.b16 %v573
      %v608 = vunpack.c.l.b16 %v574
      %v609 = vunpack.c.h.b16 %v574
      %v610 = vunpack.c.l.b16 %v575
      %v611 = vunpack.c.h.b16 %v575
      %v612 = vunpack.c.l.b16 %v576
      %v613 = vunpack.c.h.b16 %v576
      %v614 = vunpack.c.l.b16 %v577
      %v615 = vunpack.c.h.b16 %v577
      %v616 = vunpack.c.l.b16 %v578
      %v617 = vunpack.c.h.b16 %v578
      %v618 = vunpack.c.l.b16 %v579
      %v619 = vunpack.c.h.b16 %v579
      %v620 = vunpack.c.l.b16 %v580
      %v621 = vunpack.c.h.b16 %v580
      %v622 = vunpack.c.l.b16 %v581
      %v623 = vunpack.c.h.b16 %v581
      %v624 = vunpack.c.l.b16 %v582
      %v625 = vunpack.c.h.b16 %v582
      %v626 = vunpack.c.l.b16 %v583
      %v627 = vunpack.c.h.b16 %v583
      %v628 = vunpack.c.l.b16 %v584
      %v629 = vunpack.c.h.b16 %v584
      %v630 = vunpack.c.l.b16 %v585
      %v631 = vunpack.c.h.b16 %v585
      %v632 = vunpack.c.l.b16 %v586
      %v633 = vunpack.c.h.b16 %v586
      %v634 = vunpack.c.l.b16 %v587
      %v635 = vunpack.c.h.b16 %v587
      %v636 = vpack.c.b16 %v604, %v604
      %v637 = vpack.c.b16 %v605, %v605
      %v638 = vpack.c.b16 %v606, %v606
      %v639 = vpack.c.b16 %v607, %v607
      %v640 = vpack.c.b16 %v608, %v608
      %v641 = vpack.c.b16 %v609, %v609
      %v642 = vpack.c.b16 %v610, %v610
      %v643 = vpack.c.b16 %v611, %v611
      %v644 = vpack.c.b16 %v612, %v612
      %v645 = vpack.c.b16 %v613, %v613
      %v646 = vpack.c.b16 %v614, %v614
      %v647 = vpack.c.b16 %v615, %v615
      %v648 = vpack.c.b16 %v616, %v616
      %v649 = vpack.c.b16 %v617, %v617
      %v650 = vpack.c.b16 %v618, %v618
      %v651 = vpack.c.b16 %v619, %v619
      %v652 = vpack.c.b16 %v620, %v620
      %v653 = vpack.c.b16 %v621, %v621
      %v654 = vpack.c.b16 %v622, %v622
      %v655 = vpack.c.b16 %v623, %v623
      %v656 = vpack.c.b16 %v624, %v624
      %v657 = vpack.c.b16 %v625, %v625
      %v658 = vpack.c.b16 %v626, %v626
      %v659 = vpack.c.b16 %v627, %v627
      %v660 = vpack.c.b16 %v628, %v628
      %v661 = vpack.c.b16 %v629, %v629
      %v662 = vpack.c.b16 %v630, %v630
      %v663 = vpack.c.b16 %v631, %v631
      %v664 = vpack.c.b16 %v632, %v632
      %v665 = vpack.c.b16 %v633, %v633
      %v666 = vpack.c.b16 %v634, %v634
      %v667 = vpack.c.b16 %v635, %v635
      %vm700 = vcmask 60416
      %701 = vst.msk [vmem:[%s236] sm:$0xf] %vm700, %v636
      %702 = vst.msk [vmem:[%s236 + $0x4] sm:$0xf] %vm700, %v637
      %703 = vst.msk [vmem:[%s236 + $0x8] sm:$0xf] %vm700, %v638
      %704 = vst.msk [vmem:[%s236 + $0xc] sm:$0xf] %vm700, %v639
      %705 = vst.msk [vmem:[%s236 + $0x10] sm:$0xf] %vm700, %v640
      %706 = vst.msk [vmem:[%s236 + $0x14] sm:$0xf] %vm700, %v641
      %707 = vst.msk [vmem:[%s236 + $0x18] sm:$0xf] %vm700, %v642
      %708 = vst.msk [vmem:[%s236 + $0x1c] sm:$0xf] %vm700, %v643
      %709 = vst.msk [vmem:[%s236 + $0x20] sm:$0xf] %vm700, %v644
      %710 = vst.msk [vmem:[%s236 + $0x24] sm:$0xf] %vm700, %v645
      %711 = vst.msk [vmem:[%s236 + $0x28] sm:$0xf] %vm700, %v646
      %712 = vst.msk [vmem:[%s236 + $0x2c] sm:$0xf] %vm700, %v647
      %713 = vst.msk [vmem:[%s236 + $0x30] sm:$0xf] %vm700, %v648
      %714 = vst.msk [vmem:[%s236 + $0x34] sm:$0xf] %vm700, %v649
      %715 = vst.msk [vmem:[%s236 + $0x38] sm:$0xf] %vm700, %v650
      %716 = vst.msk [vmem:[%s236 + $0x3c] sm:$0xf] %vm700, %v651
      %717 = vst.msk [vmem:[%s236 + $0x40] sm:$0xf] %vm700, %v652
      %718 = vst.msk [vmem:[%s236 + $0x44] sm:$0xf] %vm700, %v653
      %719 = vst.msk [vmem:[%s236 + $0x48] sm:$0xf] %vm700, %v654
      %720 = vst.msk [vmem:[%s236 + $0x4c] sm:$0xf] %vm700, %v655
      %721 = vst.msk [vmem:[%s236 + $0x50] sm:$0xf] %vm700, %v656
      %722 = vst.msk [vmem:[%s236 + $0x54] sm:$0xf] %vm700, %v657
      %723 = vst.msk [vmem:[%s236 + $0x58] sm:$0xf] %vm700, %v658
      %724 = vst.msk [vmem:[%s236 + $0x5c] sm:$0xf] %vm700, %v659
      %725 = vst.msk [vmem:[%s236 + $0x60] sm:$0xf] %vm700, %v660
      %726 = vst.msk [vmem:[%s236 + $0x64] sm:$0xf] %vm700, %v661
      %727 = vst.msk [vmem:[%s236 + $0x68] sm:$0xf] %vm700, %v662
      %728 = vst.msk [vmem:[%s236 + $0x6c] sm:$0xf] %vm700, %v663
      %729 = vst.msk [vmem:[%s236 + $0x70] sm:$0xf] %vm700, %v664
      %730 = vst.msk [vmem:[%s236 + $0x74] sm:$0xf] %vm700, %v665
      %731 = vst.msk [vmem:[%s236 + $0x78] sm:$0xf] %vm700, %v666
      %732 = vst.msk [vmem:[%s236 + $0x7c] sm:$0xf] %vm700, %v667
      %s733 = smul.u32 32, %s19
      %p734 = scmp.lt.s32.totalorder %s18, 1
      %s735 = scalar_select %p734, %s18, 1
      %p736 = scmp.lt.s32.totalorder %s733, 31
      %s737 = scalar_select %p736, %s733, 31
      %s738 = smul.addr %s735, 32
      %s739 = sadd.s32 %s737, %s738
      %s740 = smul.addr %s739, 4
      %s741 = scalar_lea.vmem %s3, %s740
      // Predicated region
      $region33: #{_lambda_.23} parent=31 // pred_check
        %p742 = pneg %p126
      $region34: #{_lambda_.23} parent=31 // pred_check_branch
        %744 = sbr.rel (%p742) target = $region36
      $region35: #{_lambda_.23} parent=31 // pred_region
        %s745 = smul.u32 32, %s19
      $region36: #{_lambda_.23} parent=31 // pred_fallthru
        _
    $region32: #{_lambda_.23} parent=5 // pred_fallthru
      _
    %p746 = scmp.le.s32.totalorder 2, %s9
    // Predicated region
    $region37: #{_lambda_.23} parent=5 // pred_check
      %p747 = pneg %p746
    $region38: #{_lambda_.23} parent=5 // pred_check_branch
      %749 = sbr.rel (%p747) target = $region40
    $region39: #{_lambda_.23} parent=5 // pred_region
      %s750 = ssub.s32 %s9, 2
      // Predicated region
      $region41: #{_lambda_.23} parent=39 // pred_check
        %p751 = pneg %p132
      $region42: #{_lambda_.23} parent=39 // pred_check_branch
        %753 = sbr.rel (%p751) target = $region44
      $region43: #{_lambda_.23} parent=39 // pred_region
        %s754 = smul.u32 32, %s21
        %p755 = scmp.lt.s32.totalorder %s20, 1
        %s756 = scalar_select %p755, %s20, 1
        %p757 = scmp.lt.s32.totalorder %s754, 31
        %s758 = scalar_select %p757, %s754, 31
        %s759 = smul.addr %s756, 32
        %s760 = sadd.s32 %s758, %s759
        %s761 = smul.addr %s760, 4
        %s762 = scalar_lea.vmem %s3, %s761
      $region44: #{_lambda_.23} parent=39 // pred_fallthru
        _
    $region40: #{_lambda_.23} parent=5 // pred_fallthru
      _
  $region6: #{_lambda_.23} parent=0 // loop_footer
    %s13 = sadd.s32 1, %s9
  $region7: #{_lambda_.23} parent=0 // loop_footer_branch
    %8 = sbr.rel target = $region3
  $region8: #{_lambda_.23} parent=0 // loop_exit
    _

// kernel: _lambda_.24
$region0: #{_lambda_.24}
  #allocation0 [shape = 'u32[]', space=smem, size = 0x4, offset = 0x4, fixed_abs, tag = 'smem constant byte address 0x4 - core index']
  #allocation1 [shape = 'u32[144,128]{1,0:T(1,128)}', space=vmem, size = 0x12000, scoped, tag = 'internal scratch']
  %s0 = inlined_call_operand.vmem [shape: bf16[2,256,72], index: 0, kind: input, shape index: {}]
  %s1 = inlined_call_operand.vmem [shape: bf16[72,128], index: 1, kind: input, shape index: {}]
  %s2 = inlined_call_operand.vmem [shape: f32[1,128], index: 2, kind: input, shape index: {}]
  %s3 = inlined_call_operand.vmem [shape: f32[2,256,128], index: 3, kind: output, shape index: {}]
  %s4 = sld [smem:[#allocation0]]
  $region45: #{_lambda_.24} parent=0
    _
  %s6 = ssub.s32 1, %s4
  %s7 = scalar_select 0, %s6, %s4
  loop: start=0, step=1, limit=4
  $region2: #{_lambda_.24} parent=0 // loop_pre_header
    _
  $region3: #{_lambda_.24} parent=0 // loop_header
    %s9 = sphi 0, %s13
    %p10 = scmp.ge.s32.totalorder %s9, 4
    %s16 = sphi 0, %s28
    %s17 = sphi 0, %s24
    %s18 = sphi 0, %s16
    %s19 = sphi 0, %s17
    %s20 = sphi 0, %s18
    %s21 = sphi 0, %s19
    %s33 = sphi 0, %s35
    %s36 = sphi 0, %s33
    %s37 = sphi 0, %s36
    %s53 = sphi 0, %s37
    %s57 = sphi 0, %s57
    %s59 = sphi 0, %s57
    %s60 = sphi 0, %s59
    %s74 = sphi 0, %s60
    %s78 = sphi 0, %s78
    %s80 = sphi 0, %s78
    %s81 = sphi 0, %s80
    %s95 = sphi 0, %s81
    %s103 = sphi 0, %s105
    %s106 = sphi 0, %s103
    %s107 = sphi 0, %s106
    %s123 = sphi 0, %s107
  $region4: #{_lambda_.24} parent=0 // loop_header_branch
    %12 = sbr.rel (%p10) target = $region8
  $region5: #{_lambda_.24} parent=0 // loop_body
    %s14 = ssub.s32 %s9, 1
    %s15 = ssub.s32 %s9, 2
    %s22 = sadd.s32 1, %s17
    %p23 = scmp.ge.s32.totalorder %s22, 1
    %s24 = scalar_select %p23, 0, %s22
    %s25 = sadd.s32 1, %s16
    %s26 = scalar_select %p23, %s25, %s16
    %p27 = scmp.ge.s32.totalorder %s26, 2
    %s28 = scalar_select %p27, 0, %s26
    %s29 = ssub.s32 %s16, %s28
    %s30 = ssub.s32 %s17, %s24
    %s31 = sor.u32 %s29, %s30
    %p32 = scmp.eq.s32.totalorder %s31, 0
    %s34 = sadd.s32 %s33, 1
    %s35 = scalar_select %p32, %s33, %s34
    %p38 = pneg %p32
    %p39 = scmp.eq.s32.totalorder %s9, 1
    %p40 = por %p38, %p39
    %p41 = scmp.ne.s32.totalorder %s33, %s36
    %p42 = scmp.eq.s32.totalorder %s9, 0
    %p43 = por %p41, %p42
    %p44 = scmp.ne.s32.totalorder %s33, %s36
    %p45 = scmp.eq.s32.totalorder %s14, 1
    %p46 = por %p44, %p45
    %p47 = scmp.ne.s32.totalorder %s36, %s37
    %p48 = scmp.eq.s32.totalorder %s14, 0
    %p49 = por %p47, %p48
    %p50 = scmp.ne.s32.totalorder %s36, %s37
    %p51 = scmp.eq.s32.totalorder %s15, 1
    %p52 = por %p50, %p51
    %p54 = scmp.ne.s32.totalorder %s37, %s53
    %p55 = scmp.eq.s32.totalorder %s15, 0
    %p56 = por %p54, %p55
    %s58 = sadd.s32 %s57, 1
    %p61 = scmp.eq.s32.totalorder %s9, 1
    %p62 = scmp.ne.s32.totalorder %s57, %s59
    %p63 = scmp.eq.s32.totalorder %s9, 0
    %p64 = por %p62, %p63
    %p65 = scmp.ne.s32.totalorder %s57, %s59
    %p66 = scmp.eq.s32.totalorder %s14, 1
    %p67 = por %p65, %p66
    %p68 = scmp.ne.s32.totalorder %s59, %s60
    %p69 = scmp.eq.s32.totalorder %s14, 0
    %p70 = por %p68, %p69
    %p71 = scmp.ne.s32.totalorder %s59, %s60
    %p72 = scmp.eq.s32.totalorder %s15, 1
    %p73 = por %p71, %p72
    %p75 = scmp.ne.s32.totalorder %s60, %s74
    %p76 = scmp.eq.s32.totalorder %s15, 0
    %p77 = por %p75, %p76
    %s79 = sadd.s32 %s78, 1
    %p82 = scmp.eq.s32.totalorder %s9, 1
    %p83 = scmp.ne.s32.totalorder %s78, %s80
    %p84 = scmp.eq.s32.totalorder %s9, 0
    %p85 = por %p83, %p84
    %p86 = scmp.ne.s32.totalorder %s78, %s80
    %p87 = scmp.eq.s32.totalorder %s14, 1
    %p88 = por %p86, %p87
    %p89 = scmp.ne.s32.totalorder %s80, %s81
    %p90 = scmp.eq.s32.totalorder %s14, 0
    %p91 = por %p89, %p90
    %p92 = scmp.ne.s32.totalorder %s80, %s81
    %p93 = scmp.eq.s32.totalorder %s15, 1
    %p94 = por %p92, %p93
    %p96 = scmp.ne.s32.totalorder %s81, %s95
    %p97 = scmp.eq.s32.totalorder %s15, 0
    %p98 = por %p96, %p97
    %s99 = ssub.s32 %s16, %s28
    %s100 = ssub.s32 %s17, %s24
    %s101 = sor.u32 %s99, %s100
    %p102 = scmp.eq.s32.totalorder %s101, 0
    %s104 = sadd.s32 %s103, 1
    %s105 = scalar_select %p102, %s103, %s104
    %p108 = pneg %p102
    %p109 = scmp.eq.s32.totalorder %s9, 1
    %p110 = por %p108, %p109
    %p111 = scmp.ne.s32.totalorder %s103, %s106
    %p112 = scmp.eq.s32.totalorder %s9, 0
    %p113 = por %p111, %p112
    %p114 = scmp.ne.s32.totalorder %s103, %s106
    %p115 = scmp.eq.s32.totalorder %s14, 1
    %p116 = por %p114, %p115
    %p117 = scmp.ne.s32.totalorder %s106, %s107
    %p118 = scmp.eq.s32.totalorder %s14, 0
    %p119 = por %p117, %p118
    %p120 = scmp.ne.s32.totalorder %s106, %s107
    %p121 = scmp.eq.s32.totalorder %s15, 1
    %p122 = por %p120, %p121
    %p124 = scmp.ne.s32.totalorder %s107, %s123
    %p125 = scmp.eq.s32.totalorder %s15, 0
    %p126 = por %p124, %p125
    %p127 = scmp.le.s32.totalorder 1, %s9
    %p128 = scmp.lt.s32.totalorder %s9, 3
    %p129 = pnand %p127, %p128
    %p130 = pneg %p129
    // Predicated region
    $region9: #{_lambda_.24} parent=5 // pred_check
      _
    $region10: #{_lambda_.24} parent=5 // pred_check_branch
      %132 = sbr.rel (%p129) target = $region12
    $region11: #{_lambda_.24} parent=5 // pred_region
      %s133 = ssub.s32 %s9, 1
      // Predicated region
      $region13: #{_lambda_.24} parent=11 // pred_check
        %p134 = pneg %p70
      $region14: #{_lambda_.24} parent=11 // pred_check_branch
        %136 = sbr.rel (%p134) target = $region16
      $region15: #{_lambda_.24} parent=11 // pred_region
        _
      $region16: #{_lambda_.24} parent=11 // pred_fallthru
        _
      // Predicated region
      $region17: #{_lambda_.24} parent=11 // pred_check
        %p137 = pneg %p91
      $region18: #{_lambda_.24} parent=11 // pred_check_branch
        %139 = sbr.rel (%p137) target = $region20
      $region19: #{_lambda_.24} parent=11 // pred_region
        _
      $region20: #{_lambda_.24} parent=11 // pred_fallthru
        _
    $region12: #{_lambda_.24} parent=5 // pred_fallthru
      _
    %p140 = scmp.lt.s32.totalorder %s9, 2
    // Predicated region
    $region21: #{_lambda_.24} parent=5 // pred_check
      %p141 = pneg %p140
    $region22: #{_lambda_.24} parent=5 // pred_check_branch
      %143 = sbr.rel (%p141) target = $region24
    $region23: #{_lambda_.24} parent=5 // pred_region
      // Predicated region
      $region25: #{_lambda_.24} parent=23 // pred_check
        %p144 = pneg %p43
      $region26: #{_lambda_.24} parent=23 // pred_check_branch
        %146 = sbr.rel (%p144) target = $region28
      $region27: #{_lambda_.24} parent=23 // pred_region
        %s147 = smul.u32 32, %s17
        %p148 = scmp.lt.s32.totalorder %s16, 1
        %s149 = scalar_select %p148, %s16, 1
        %p150 = scmp.lt.s32.totalorder %s147, 31
        %s151 = scalar_select %p150, %s147, 31
        %s152 = smul.addr %s149, 32
        %s153 = sadd.s32 %s151, %s152
        %s154 = smul.addr %s153, 4
        %s155 = scalar_lea.vmem %s0, %s154
        %s156 = smul.u32 32, %s17
      $region28: #{_lambda_.24} parent=23 // pred_fallthru
        _
    $region24: #{_lambda_.24} parent=5 // pred_fallthru
      _
    %p157 = scmp.le.s32.totalorder 1, %s9
    %p158 = scmp.lt.s32.totalorder %s9, 3
    %p159 = pnand %p157, %p158
    %p160 = pneg %p159
    // Predicated region
    $region29: #{_lambda_.24} parent=5 // pred_check
      _
    $region30: #{_lambda_.24} parent=5 // pred_check_branch
      %162 = sbr.rel (%p159) target = $region32
    $region31: #{_lambda_.24} parent=5 // pred_region
      %s163 = ssub.s32 %s9, 1
      %s164 = smul.u32 32, %s19
      %p165 = scmp.lt.s32.totalorder %s18, 1
      %s166 = scalar_select %p165, %s18, 1
      %p167 = scmp.lt.s32.totalorder %s164, 31
      %s168 = scalar_select %p167, %s164, 31
      %s169 = smul.addr %s166, 32
      %s170 = sadd.s32 %s168, %s169
      %s171 = smul.addr %s170, 4
      %s172 = scalar_lea.vmem %s0, %s171
      %p173 = pneg %p49
      %p174 = pneg %p46
      %p175 = pneg %p70
      %p176 = pneg %p67
      %p177 = pneg %p91
      %p178 = pneg %p88
      %p179 = pneg %p119
      %p180 = pneg %p116
      %s181 = smul.u32 32, %s19
      %p182 = scmp.lt.s32.totalorder %s18, 1
      %s183 = scalar_select %p182, %s18, 1
      %p184 = scmp.lt.s32.totalorder %s181, 31
      %s185 = scalar_select %p184, %s181, 31
      %s186 = smul.addr %s183, 32
      %s187 = sadd.s32 %s185, %s186
      %s188 = smul.addr %s187, 8
      %s189 = scalar_lea.vmem %s3, %s188
      %s190 = smul.u32 32, %s19
      %p191 = scmp.lt.s32.totalorder %s18, 1
      %s192 = scalar_select %p191, %s18, 1
      %p193 = scmp.lt.s32.totalorder %s190, 31
      %s194 = scalar_select %p193, %s190, 31
      %s195 = smul.addr %s192, 32
      %s196 = sadd.s32 %s194, %s195
      %s197 = smul.addr %s196, 4
      %s198 = scalar_lea.vmem %s0, %s197
      %s199 = smul.u32 32, %s19
      %s200 = smul.u32 32, %s19
      %p201 = scmp.lt.s32.totalorder %s18, 1
      %s202 = scalar_select %p201, %s18, 1
      %p203 = scmp.lt.s32.totalorder %s200, 31
      %s204 = scalar_select %p203, %s200, 31
      %s205 = smul.addr %s202, 32
      %s206 = sadd.s32 %s204, %s205
      %s207 = smul.addr %s206, 8
      %s208 = scalar_lea.vmem %s3, %s207
      %s209 = smul.u32 32, %s19
      %v211 = vld [vmem:[%s198] sm:$0xf]
      %v212 = vld [vmem:[%s198 + $0x4] sm:$0xf]
      %v213 = vld [vmem:[%s198 + $0x8] sm:$0xf]
      %v214 = vld [vmem:[%s198 + $0xc] sm:$0xf]
      %v215 = vld [vmem:[%s198 + $0x10] sm:$0xf]
      %v216 = vld [vmem:[%s198 + $0x14] sm:$0xf]
      %v217 = vld [vmem:[%s198 + $0x18] sm:$0xf]
      %v218 = vld [vmem:[%s198 + $0x1c] sm:$0xf]
      %v219 = vld [vmem:[%s198 + $0x20] sm:$0xf]
      %v220 = vld [vmem:[%s198 + $0x24] sm:$0xf]
      %v221 = vld [vmem:[%s198 + $0x28] sm:$0xf]
      %v222 = vld [vmem:[%s198 + $0x2c] sm:$0xf]
      %v223 = vld [vmem:[%s198 + $0x30] sm:$0xf]
      %v224 = vld [vmem:[%s198 + $0x34] sm:$0xf]
      %v225 = vld [vmem:[%s198 + $0x38] sm:$0xf]
      %v226 = vld [vmem:[%s198 + $0x3c] sm:$0xf]
      %v227 = vld [vmem:[%s198 + $0x40] sm:$0xf]
      %v228 = vld [vmem:[%s198 + $0x44] sm:$0xf]
      %v229 = vld [vmem:[%s198 + $0x48] sm:$0xf]
      %v230 = vld [vmem:[%s198 + $0x4c] sm:$0xf]
      %v231 = vld [vmem:[%s198 + $0x50] sm:$0xf]
      %v232 = vld [vmem:[%s198 + $0x54] sm:$0xf]
      %v233 = vld [vmem:[%s198 + $0x58] sm:$0xf]
      %v234 = vld [vmem:[%s198 + $0x5c] sm:$0xf]
      %v235 = vld [vmem:[%s198 + $0x60] sm:$0xf]
      %v236 = vld [vmem:[%s198 + $0x64] sm:$0xf]
      %v237 = vld [vmem:[%s198 + $0x68] sm:$0xf]
      %v238 = vld [vmem:[%s198 + $0x6c] sm:$0xf]
      %v239 = vld [vmem:[%s198 + $0x70] sm:$0xf]
      %v240 = vld [vmem:[%s198 + $0x74] sm:$0xf]
      %v241 = vld [vmem:[%s198 + $0x78] sm:$0xf]
      %v242 = vld [vmem:[%s198 + $0x7c] sm:$0xf]
      %v243 = vld [vmem:[%s1] sm:$0xf]
      %v244 = vld [vmem:[%s1 + $0x4] sm:$0xf]
      %v245 = vld [vmem:[%s1 + $0x8] sm:$0xf]
      %v246 = vld [vmem:[%s1 + $0xc] sm:$0xf]
      %v247 = vld [vmem:[%s1 + $0x10] sm:$0xf]
      %v248 = vld [vmem:[%s1 + $0x14] sm:$0xf]
      %v249 = vld [vmem:[%s1 + $0x18] sm:$0xf]
      %v250 = vld [vmem:[%s1 + $0x1c] sm:$0xf]
      %v251 = vld [vmem:[%s1 + $0x20] sm:$0xf]
      %v252 = vld [vmem:[%s2] sm:$0x1]
      %v254 = vlaneseq
      %v255 = vshrl.u32 %v254, 7
      %v256 = vsub.s32 0, %v255
      %v257 = vrot.slane %v252, %v256
      %v291 = vunpack.c.l.b16 %v211
      %v292 = vunpack.c.l.b16 %v212
      %v293 = vunpack.c.l.b16 %v213
      %v294 = vunpack.c.l.b16 %v214
      %v295 = vunpack.c.l.b16 %v215
      %v296 = vunpack.c.l.b16 %v216
      %v297 = vunpack.c.l.b16 %v217
      %v298 = vunpack.c.l.b16 %v218
      %v299 = vunpack.c.l.b16 %v219
      %v300 = vunpack.c.l.b16 %v220
      %v301 = vunpack.c.l.b16 %v221
      %v302 = vunpack.c.l.b16 %v222
      %v303 = vunpack.c.l.b16 %v223
      %v304 = vunpack.c.l.b16 %v224
      %v305 = vunpack.c.l.b16 %v225
      %v306 = vunpack.c.l.b16 %v226
      %v307 = vunpack.c.l.b16 %v227
      %v308 = vunpack.c.l.b16 %v228
      %v309 = vunpack.c.l.b16 %v229
      %v310 = vunpack.c.l.b16 %v230
      %v311 = vunpack.c.l.b16 %v231
      %v312 = vunpack.c.l.b16 %v232
      %v313 = vunpack.c.l.b16 %v233
      %v314 = vunpack.c.l.b16 %v234
      %v315 = vunpack.c.l.b16 %v235
      %v316 = vunpack.c.l.b16 %v236
      %v317 = vunpack.c.l.b16 %v237
      %v318 = vunpack.c.l.b16 %v238
      %v319 = vunpack.c.l.b16 %v239
      %v320 = vunpack.c.l.b16 %v240
      %v321 = vunpack.c.l.b16 %v241
      %v322 = vunpack.c.l.b16 %v242
      %v323 = vpack.c.b16 %v292, %v291
      %v324 = vpack.c.b16 %v294, %v293
      %v325 = vpack.c.b16 %v296, %v295
      %v326 = vpack.c.b16 %v298, %v297
      %v327 = vpack.c.b16 %v300, %v299
      %v328 = vpack.c.b16 %v302, %v301
      %v329 = vpack.c.b16 %v304, %v303
      %v330 = vpack.c.b16 %v306, %v305
      %v331 = vpack.c.b16 %v308, %v307
      %v332 = vpack.c.b16 %v310, %v309
      %v333 = vpack.c.b16 %v312, %v311
      %v334 = vpack.c.b16 %v314, %v313
      %v335 = vpack.c.b16 %v316, %v315
      %v336 = vpack.c.b16 %v318, %v317
      %v337 = vpack.c.b16 %v320, %v319
      %v338 = vpack.c.b16 %v322, %v321
      %v348 = vunpack.c.l.b16 %v243
      %v349 = vunpack.c.l.b16 %v244
      %v350 = vunpack.c.l.b16 %v245
      %v351 = vunpack.c.l.b16 %v246
      %v352 = vunpack.c.l.b16 %v247
      %v353 = vunpack.c.l.b16 %v248
      %v354 = vunpack.c.l.b16 %v249
      %v355 = vunpack.c.l.b16 %v250
      %v356 = vunpack.c.l.b16 %v251
      %v357 = vpack.c.b16 %v349, %v348
      %v358 = vpack.c.b16 %v351, %v350
      %v359 = vpack.c.b16 %v353, %v352
      %v360 = vpack.c.b16 %v355, %v354
      %v361 = vpack.c.b16 %v356, %v356
      %vm366 = vcmask 588800
      %v368 = vsel %vm366, %v323, 0
      %v371 = vsel %vm366, %v324, 0
      %v374 = vsel %vm366, %v325, 0
      %v377 = vsel %vm366, %v326, 0
      %v380 = vsel %vm366, %v327, 0
      %v383 = vsel %vm366, %v328, 0
      %v386 = vsel %vm366, %v329, 0
      %v389 = vsel %vm366, %v330, 0
      %v392 = vsel %vm366, %v331, 0
      %v395 = vsel %vm366, %v332, 0
      %v398 = vsel %vm366, %v333, 0
      %v401 = vsel %vm366, %v334, 0
      %v404 = vsel %vm366, %v335, 0
      %v407 = vsel %vm366, %v336, 0
      %v410 = vsel %vm366, %v337, 0
      %v413 = vsel %vm366, %v338, 0
      %vm415 = vcmask 1043456
      %v417 = vsel %vm415, %v361, 0
      %419 = vmatprep.subr.bf16.mxu0 0
      %420 = vmatpush1.bf16.msra.mxu0 %v357
      %421 = vmatprep.subr.bf16.mxu0 0
      %422 = vmatpush1.bf16.msra.mxu0 %v358
      %423 = vmatprep.subr.bf16.mxu0 0
      %424 = vmatpush1.bf16.msra.mxu0 %v359
      %425 = vmatprep.subr.bf16.mxu0 0
      %426 = vmatpush1.bf16.msra.mxu0 %v360
      %427 = vmatprep.subr.bf16.mxu0 0
      %428 = vmatpush1.bf16.msra.mxu0 %v417
      %429 = vmatprep.subr.bf16.mxu0 0
      %430 = vmatpush1.bf16.msra.mxu0 0
      %431 = vmatprep.subr.bf16.mxu0 0
      %432 = vmatpush1.bf16.msra.mxu0 0
      %433 = vmatprep.subr.bf16.mxu0 0
      %434 = vmatpush1.bf16.msra.mxu0 0
      %435 = vmatprep.subr.bf16.mxu0 0
      %436 = vmatpush1.bf16.msra.mxu0 0
      %437 = vmatprep.subr.bf16.mxu0 0
      %438 = vmatpush1.bf16.msra.mxu0 0
      %439 = vmatprep.subr.bf16.mxu0 0
      %440 = vmatpush1.bf16.msra.mxu0 0
      %441 = vmatprep.subr.bf16.mxu0 0
      %442 = vmatpush1.bf16.msra.mxu0 0
      %443 = vmatprep.subr.bf16.mxu0 0
      %444 = vmatpush1.bf16.msra.mxu0 0
      %445 = vmatprep.subr.bf16.mxu0 0
      %446 = vmatpush1.bf16.msra.mxu0 0
      %447 = vmatprep.subr.bf16.mxu0 0
      %448 = vmatpush1.bf16.msra.mxu0 0
      %449 = vmatprep.subr.bf16.mxu0 0
      %450 = vmatpush1.bf16.msra.mxu0 0
      %451 = vmatprep.mubr.bf16.mxu0 0
      %452 = vmatmul.mubr.bf16.gmra.mrb[0].mxu0 %v368
      %v453 = vpop.f32.mrb[0].mxu0
      %v454 = vadd.f32 %v257, %v453
      %v455 = vpop.f32.mrb[0].mxu0
      %v456 = vpop.f32.mrb[0].mxu0
      %v457 = vadd.f32 %v257, %v456
      %v458 = vpop.f32.mrb[0].mxu0
      %459 = vmatprep.mubr.bf16.mxu0 0
      %460 = vmatmul.mubr.bf16.gmra.mrb[0].mxu0 %v371
      %v461 = vpop.f32.mrb[0].mxu0
      %v462 = vadd.f32 %v257, %v461
      %v463 = vpop.f32.mrb[0].mxu0
      %v464 = vpop.f32.mrb[0].mxu0
      %v465 = vadd.f32 %v257, %v464
      %v466 = vpop.f32.mrb[0].mxu0
      %467 = vmatprep.mubr.bf16.mxu0 0
      %468 = vmatmul.mubr.bf16.gmra.mrb[0].mxu0 %v374
      %v469 = vpop.f32.mrb[0].mxu0
      %v470 = vadd.f32 %v257, %v469
      %v471 = vpop.f32.mrb[0].mxu0
      %v472 = vpop.f32.mrb[0].mxu0
      %v473 = vadd.f32 %v257, %v472
      %v474 = vpop.f32.mrb[0].mxu0
      %475 = vmatprep.mubr.bf16.mxu0 0
      %476 = vmatmul.mubr.bf16.gmra.mrb[0].mxu0 %v377
      %v477 = vpop.f32.mrb[0].mxu0
      %v478 = vadd.f32 %v257, %v477
      %v479 = vpop.f32.mrb[0].mxu0
      %v480 = vpop.f32.mrb[0].mxu0
      %v481 = vadd.f32 %v257, %v480
      %v482 = vpop.f32.mrb[0].mxu0
      %483 = vmatprep.mubr.bf16.mxu0 0
      %484 = vmatmul.mubr.bf16.gmra.mrb[0].mxu0 %v380
      %v485 = vpop.f32.mrb[0].mxu0
      %v486 = vadd.f32 %v257, %v485
      %v487 = vpop.f32.mrb[0].mxu0
      %v488 = vpop.f32.mrb[0].mxu0
      %v489 = vadd.f32 %v257, %v488
      %v490 = vpop.f32.mrb[0].mxu0
      %491 = vmatprep.mubr.bf16.mxu0 0
      %492 = vmatmul.mubr.bf16.gmra.mrb[0].mxu0 %v383
      %v493 = vpop.f32.mrb[0].mxu0
      %v494 = vadd.f32 %v257, %v493
      %v495 = vpop.f32.mrb[0].mxu0
      %v496 = vpop.f32.mrb[0].mxu0
      %v497 = vadd.f32 %v257, %v496
      %v498 = vpop.f32.mrb[0].mxu0
      %499 = vmatprep.mubr.bf16.mxu0 0
      %500 = vmatmul.mubr.bf16.gmra.mrb[0].mxu0 %v386
      %v501 = vpop.f32.mrb[0].mxu0
      %v502 = vadd.f32 %v257, %v501
      %v503 = vpop.f32.mrb[0].mxu0
      %v504 = vpop.f32.mrb[0].mxu0
      %v505 = vadd.f32 %v257, %v504
      %v506 = vpop.f32.mrb[0].mxu0
      %507 = vmatprep.mubr.bf16.mxu0 0
      %508 = vmatmul.mubr.bf16.gmra.mrb[0].mxu0 %v389
      %v509 = vpop.f32.mrb[0].mxu0
      %v510 = vadd.f32 %v257, %v509
      %v511 = vpop.f32.mrb[0].mxu0
      %v512 = vpop.f32.mrb[0].mxu0
      %v513 = vadd.f32 %v257, %v512
      %v514 = vpop.f32.mrb[0].mxu0
      %515 = vmatprep.mubr.bf16.mxu0 0
      %516 = vmatmul.mubr.bf16.gmra.mrb[0].mxu0 %v392
      %v517 = vpop.f32.mrb[0].mxu0
      %v518 = vadd.f32 %v257, %v517
      %v519 = vpop.f32.mrb[0].mxu0
      %v520 = vpop.f32.mrb[0].mxu0
      %v521 = vadd.f32 %v257, %v520
      %v522 = vpop.f32.mrb[0].mxu0
      %523 = vmatprep.mubr.bf16.mxu0 0
      %524 = vmatmul.mubr.bf16.gmra.mrb[0].mxu0 %v395
      %v525 = vpop.f32.mrb[0].mxu0
      %v526 = vadd.f32 %v257, %v525
      %v527 = vpop.f32.mrb[0].mxu0
      %v528 = vpop.f32.mrb[0].mxu0
      %v529 = vadd.f32 %v257, %v528
      %v530 = vpop.f32.mrb[0].mxu0
      %531 = vmatprep.mubr.bf16.mxu0 0
      %532 = vmatmul.mubr.bf16.gmra.mrb[0].mxu0 %v398
      %v533 = vpop.f32.mrb[0].mxu0
      %v534 = vadd.f32 %v257, %v533
      %v535 = vpop.f32.mrb[0].mxu0
      %v536 = vpop.f32.mrb[0].mxu0
      %v537 = vadd.f32 %v257, %v536
      %v538 = vpop.f32.mrb[0].mxu0
      %539 = vmatprep.mubr.bf16.mxu0 0
      %540 = vmatmul.mubr.bf16.gmra.mrb[0].mxu0 %v401
      %v541 = vpop.f32.mrb[0].mxu0
      %v542 = vadd.f32 %v257, %v541
      %v543 = vpop.f32.mrb[0].mxu0
      %v544 = vpop.f32.mrb[0].mxu0
      %v545 = vadd.f32 %v257, %v544
      %v546 = vpop.f32.mrb[0].mxu0
      %547 = vmatprep.mubr.bf16.mxu0 0
      %548 = vmatmul.mubr.bf16.gmra.mrb[0].mxu0 %v404
      %v549 = vpop.f32.mrb[0].mxu0
      %v550 = vadd.f32 %v257, %v549
      %v551 = vpop.f32.mrb[0].mxu0
      %v552 = vpop.f32.mrb[0].mxu0
      %v553 = vadd.f32 %v257, %v552
      %v554 = vpop.f32.mrb[0].mxu0
      %555 = vmatprep.mubr.bf16.mxu0 0
      %556 = vmatmul.mubr.bf16.gmra.mrb[0].mxu0 %v407
      %v557 = vpop.f32.mrb[0].mxu0
      %v558 = vadd.f32 %v257, %v557
      %v559 = vpop.f32.mrb[0].mxu0
      %v560 = vpop.f32.mrb[0].mxu0
      %v561 = vadd.f32 %v257, %v560
      %v562 = vpop.f32.mrb[0].mxu0
      %563 = vmatprep.mubr.bf16.mxu0 0
      %564 = vmatmul.mubr.bf16.gmra.mrb[0].mxu0 %v410
      %v565 = vpop.f32.mrb[0].mxu0
      %v566 = vadd.f32 %v257, %v565
      %v567 = vpop.f32.mrb[0].mxu0
      %v568 = vpop.f32.mrb[0].mxu0
      %v569 = vadd.f32 %v257, %v568
      %v570 = vpop.f32.mrb[0].mxu0
      %571 = vmatprep.mubr.bf16.mxu0 0
      %572 = vmatmul.mubr.bf16.gmra.mrb[0].mxu0 %v413
      %v573 = vpop.f32.mrb[0].mxu0
      %v574 = vadd.f32 %v257, %v573
      %v575 = vpop.f32.mrb[0].mxu0
      %v576 = vpop.f32.mrb[0].mxu0
      %v577 = vadd.f32 %v257, %v576
      %v578 = vpop.f32.mrb[0].mxu0
      %579 = vdwg.mxu0
      %580 = vst [vmem:[%s208] sm:$0xff] %v454
      %581 = vst [vmem:[%s208 + $0x8] sm:$0xff] %v457
      %582 = vst [vmem:[%s208 + $0x10] sm:$0xff] %v462
      %583 = vst [vmem:[%s208 + $0x18] sm:$0xff] %v465
      %584 = vst [vmem:[%s208 + $0x20] sm:$0xff] %v470
      %585 = vst [vmem:[%s208 + $0x28] sm:$0xff] %v473
      %586 = vst [vmem:[%s208 + $0x30] sm:$0xff] %v478
      %587 = vst [vmem:[%s208 + $0x38] sm:$0xff] %v481
      %588 = vst [vmem:[%s208 + $0x40] sm:$0xff] %v486
      %589 = vst [vmem:[%s208 + $0x48] sm:$0xff] %v489
      %590 = vst [vmem:[%s208 + $0x50] sm:$0xff] %v494
      %591 = vst [vmem:[%s208 + $0x58] sm:$0xff] %v497
      %592 = vst [vmem:[%s208 + $0x60] sm:$0xff] %v502
      %593 = vst [vmem:[%s208 + $0x68] sm:$0xff] %v505
      %594 = vst [vmem:[%s208 + $0x70] sm:$0xff] %v510
      %595 = vst [vmem:[%s208 + $0x78] sm:$0xff] %v513
      %596 = vst [vmem:[%s208 + $0x80] sm:$0xff] %v518
      %597 = vst [vmem:[%s208 + $0x88] sm:$0xff] %v521
      %598 = vst [vmem:[%s208 + $0x90] sm:$0xff] %v526
      %599 = vst [vmem:[%s208 + $0x98] sm:$0xff] %v529
      %600 = vst [vmem:[%s208 + $0xa0] sm:$0xff] %v534
      %601 = vst [vmem:[%s208 + $0xa8] sm:$0xff] %v537
      %602 = vst [vmem:[%s208 + $0xb0] sm:$0xff] %v542
      %603 = vst [vmem:[%s208 + $0xb8] sm:$0xff] %v545
      %604 = vst [vmem:[%s208 + $0xc0] sm:$0xff] %v550
      %605 = vst [vmem:[%s208 + $0xc8] sm:$0xff] %v553
      %606 = vst [vmem:[%s208 + $0xd0] sm:$0xff] %v558
      %607 = vst [vmem:[%s208 + $0xd8] sm:$0xff] %v561
      %608 = vst [vmem:[%s208 + $0xe0] sm:$0xff] %v566
      %609 = vst [vmem:[%s208 + $0xe8] sm:$0xff] %v569
      %610 = vst [vmem:[%s208 + $0xf0] sm:$0xff] %v574
      %611 = vst [vmem:[%s208 + $0xf8] sm:$0xff] %v577
      %s612 = smul.u32 32, %s19
      %p613 = scmp.lt.s32.totalorder %s18, 1
      %s614 = scalar_select %p613, %s18, 1
      %p615 = scmp.lt.s32.totalorder %s612, 31
      %s616 = scalar_select %p615, %s612, 31
      %s617 = smul.addr %s614, 32
      %s618 = sadd.s32 %s616, %s617
      %s619 = smul.addr %s618, 8
      %s620 = scalar_lea.vmem %s3, %s619
      // Predicated region
      $region33: #{_lambda_.24} parent=31 // pred_check
        %p621 = pneg %p116
      $region34: #{_lambda_.24} parent=31 // pred_check_branch
        %623 = sbr.rel (%p621) target = $region36
      $region35: #{_lambda_.24} parent=31 // pred_region
        %s624 = smul.u32 32, %s19
      $region36: #{_lambda_.24} parent=31 // pred_fallthru
        _
    $region32: #{_lambda_.24} parent=5 // pred_fallthru
      _
    %p625 = scmp.le.s32.totalorder 2, %s9
    // Predicated region
    $region37: #{_lambda_.24} parent=5 // pred_check
      %p626 = pneg %p625
    $region38: #{_lambda_.24} parent=5 // pred_check_branch
      %628 = sbr.rel (%p626) target = $region40
    $region39: #{_lambda_.24} parent=5 // pred_region
      %s629 = ssub.s32 %s9, 2
      // Predicated region
      $region41: #{_lambda_.24} parent=39 // pred_check
        %p630 = pneg %p122
      $region42: #{_lambda_.24} parent=39 // pred_check_branch
        %632 = sbr.rel (%p630) target = $region44
      $region43: #{_lambda_.24} parent=39 // pred_region
        %s633 = smul.u32 32, %s21
        %p634 = scmp.lt.s32.totalorder %s20, 1
        %s635 = scalar_select %p634, %s20, 1
        %p636 = scmp.lt.s32.totalorder %s633, 31
        %s637 = scalar_select %p636, %s633, 31
        %s638 = smul.addr %s635, 32
        %s639 = sadd.s32 %s637, %s638
        %s640 = smul.addr %s639, 8
        %s641 = scalar_lea.vmem %s3, %s640
      $region44: #{_lambda_.24} parent=39 // pred_fallthru
        _
    $region40: #{_lambda_.24} parent=5 // pred_fallthru
      _
  $region6: #{_lambda_.24} parent=0 // loop_footer
    %s13 = sadd.s32 1, %s9
  $region7: #{_lambda_.24} parent=0 // loop_footer_branch
    %8 = sbr.rel target = $region3
  $region8: #{_lambda_.24} parent=0 // loop_exit
    _

// kernel: _lambda_.27
$region0: #{_lambda_.27}
  #allocation0 [shape = 'u32[]', space=smem, size = 0x4, offset = 0x4, fixed_abs, tag = 'smem constant byte address 0x4 - core index']
  #allocation1 [shape = 'u32[144,128]{1,0:T(1,128)}', space=vmem, size = 0x12000, scoped, tag = 'internal scratch']
  %s0 = inlined_call_operand.vmem [shape: bf16[2,256,72], index: 0, kind: input, shape index: {}]
  %s1 = inlined_call_operand.vmem [shape: bf16[72,128], index: 1, kind: input, shape index: {}]
  %s2 = inlined_call_operand.vmem [shape: f32[1,128], index: 2, kind: input, shape index: {}]
  %s3 = inlined_call_operand.vmem [shape: f32[2,256,128], index: 3, kind: input, shape index: {}]
  %s4 = inlined_call_operand.vmem [shape: f32[2,256,128], index: 4, kind: output, shape index: {}]
  %s5 = sld [smem:[#allocation0]]
  $region49: #{_lambda_.27} parent=0
    _
  %s7 = ssub.s32 1, %s5
  %s8 = scalar_select 0, %s7, %s5
  loop: start=0, step=1, limit=4
  $region2: #{_lambda_.27} parent=0 // loop_pre_header
    _
  $region3: #{_lambda_.27} parent=0 // loop_header
    %s10 = sphi 0, %s14
    %p11 = scmp.ge.s32.totalorder %s10, 4
    %s17 = sphi 0, %s29
    %s18 = sphi 0, %s25
    %s19 = sphi 0, %s17
    %s20 = sphi 0, %s18
    %s21 = sphi 0, %s19
    %s22 = sphi 0, %s20
    %s34 = sphi 0, %s36
    %s37 = sphi 0, %s34
    %s38 = sphi 0, %s37
    %s54 = sphi 0, %s38
    %s58 = sphi 0, %s58
    %s60 = sphi 0, %s58
    %s61 = sphi 0, %s60
    %s75 = sphi 0, %s61
    %s79 = sphi 0, %s79
    %s81 = sphi 0, %s79
    %s82 = sphi 0, %s81
    %s96 = sphi 0, %s82
    %s104 = sphi 0, %s106
    %s107 = sphi 0, %s104
    %s108 = sphi 0, %s107
    %s124 = sphi 0, %s108
    %s132 = sphi 0, %s134
    %s135 = sphi 0, %s132
    %s136 = sphi 0, %s135
    %s152 = sphi 0, %s136
  $region4: #{_lambda_.27} parent=0 // loop_header_branch
    %13 = sbr.rel (%p11) target = $region8
  $region5: #{_lambda_.27} parent=0 // loop_body
    %s15 = ssub.s32 %s10, 1
    %s16 = ssub.s32 %s10, 2
    %s23 = sadd.s32 1, %s18
    %p24 = scmp.ge.s32.totalorder %s23, 1
    %s25 = scalar_select %p24, 0, %s23
    %s26 = sadd.s32 1, %s17
    %s27 = scalar_select %p24, %s26, %s17
    %p28 = scmp.ge.s32.totalorder %s27, 2
    %s29 = scalar_select %p28, 0, %s27
    %s30 = ssub.s32 %s17, %s29
    %s31 = ssub.s32 %s18, %s25
    %s32 = sor.u32 %s30, %s31
    %p33 = scmp.eq.s32.totalorder %s32, 0
    %s35 = sadd.s32 %s34, 1
    %s36 = scalar_select %p33, %s34, %s35
    %p39 = pneg %p33
    %p40 = scmp.eq.s32.totalorder %s10, 1
    %p41 = por %p39, %p40
    %p42 = scmp.ne.s32.totalorder %s34, %s37
    %p43 = scmp.eq.s32.totalorder %s10, 0
    %p44 = por %p42, %p43
    %p45 = scmp.ne.s32.totalorder %s34, %s37
    %p46 = scmp.eq.s32.totalorder %s15, 1
    %p47 = por %p45, %p46
    %p48 = scmp.ne.s32.totalorder %s37, %s38
    %p49 = scmp.eq.s32.totalorder %s15, 0
    %p50 = por %p48, %p49
    %p51 = scmp.ne.s32.totalorder %s37, %s38
    %p52 = scmp.eq.s32.totalorder %s16, 1
    %p53 = por %p51, %p52
    %p55 = scmp.ne.s32.totalorder %s38, %s54
    %p56 = scmp.eq.s32.totalorder %s16, 0
    %p57 = por %p55, %p56
    %s59 = sadd.s32 %s58, 1
    %p62 = scmp.eq.s32.totalorder %s10, 1
    %p63 = scmp.ne.s32.totalorder %s58, %s60
    %p64 = scmp.eq.s32.totalorder %s10, 0
    %p65 = por %p63, %p64
    %p66 = scmp.ne.s32.totalorder %s58, %s60
    %p67 = scmp.eq.s32.totalorder %s15, 1
    %p68 = por %p66, %p67
    %p69 = scmp.ne.s32.totalorder %s60, %s61
    %p70 = scmp.eq.s32.totalorder %s15, 0
    %p71 = por %p69, %p70
    %p72 = scmp.ne.s32.totalorder %s60, %s61
    %p73 = scmp.eq.s32.totalorder %s16, 1
    %p74 = por %p72, %p73
    %p76 = scmp.ne.s32.totalorder %s61, %s75
    %p77 = scmp.eq.s32.totalorder %s16, 0
    %p78 = por %p76, %p77
    %s80 = sadd.s32 %s79, 1
    %p83 = scmp.eq.s32.totalorder %s10, 1
    %p84 = scmp.ne.s32.totalorder %s79, %s81
    %p85 = scmp.eq.s32.totalorder %s10, 0
    %p86 = por %p84, %p85
    %p87 = scmp.ne.s32.totalorder %s79, %s81
    %p88 = scmp.eq.s32.totalorder %s15, 1
    %p89 = por %p87, %p88
    %p90 = scmp.ne.s32.totalorder %s81, %s82
    %p91 = scmp.eq.s32.totalorder %s15, 0
    %p92 = por %p90, %p91
    %p93 = scmp.ne.s32.totalorder %s81, %s82
    %p94 = scmp.eq.s32.totalorder %s16, 1
    %p95 = por %p93, %p94
    %p97 = scmp.ne.s32.totalorder %s82, %s96
    %p98 = scmp.eq.s32.totalorder %s16, 0
    %p99 = por %p97, %p98
    %s100 = ssub.s32 %s17, %s29
    %s101 = ssub.s32 %s18, %s25
    %s102 = sor.u32 %s100, %s101
    %p103 = scmp.eq.s32.totalorder %s102, 0
    %s105 = sadd.s32 %s104, 1
    %s106 = scalar_select %p103, %s104, %s105
    %p109 = pneg %p103
    %p110 = scmp.eq.s32.totalorder %s10, 1
    %p111 = por %p109, %p110
    %p112 = scmp.ne.s32.totalorder %s104, %s107
    %p113 = scmp.eq.s32.totalorder %s10, 0
    %p114 = por %p112, %p113
    %p115 = scmp.ne.s32.totalorder %s104, %s107
    %p116 = scmp.eq.s32.totalorder %s15, 1
    %p117 = por %p115, %p116
    %p118 = scmp.ne.s32.totalorder %s107, %s108
    %p119 = scmp.eq.s32.totalorder %s15, 0
    %p120 = por %p118, %p119
    %p121 = scmp.ne.s32.totalorder %s107, %s108
    %p122 = scmp.eq.s32.totalorder %s16, 1
    %p123 = por %p121, %p122
    %p125 = scmp.ne.s32.totalorder %s108, %s124
    %p126 = scmp.eq.s32.totalorder %s16, 0
    %p127 = por %p125, %p126
    %s128 = ssub.s32 %s17, %s29
    %s129 = ssub.s32 %s18, %s25
    %s130 = sor.u32 %s128, %s129
    %p131 = scmp.eq.s32.totalorder %s130, 0
    %s133 = sadd.s32 %s132, 1
    %s134 = scalar_select %p131, %s132, %s133
    %p137 = pneg %p131
    %p138 = scmp.eq.s32.totalorder %s10, 1
    %p139 = por %p137, %p138
    %p140 = scmp.ne.s32.totalorder %s132, %s135
    %p141 = scmp.eq.s32.totalorder %s10, 0
    %p142 = por %p140, %p141
    %p143 = scmp.ne.s32.totalorder %s132, %s135
    %p144 = scmp.eq.s32.totalorder %s15, 1
    %p145 = por %p143, %p144
    %p146 = scmp.ne.s32.totalorder %s135, %s136
    %p147 = scmp.eq.s32.totalorder %s15, 0
    %p148 = por %p146, %p147
    %p149 = scmp.ne.s32.totalorder %s135, %s136
    %p150 = scmp.eq.s32.totalorder %s16, 1
    %p151 = por %p149, %p150
    %p153 = scmp.ne.s32.totalorder %s136, %s152
    %p154 = scmp.eq.s32.totalorder %s16, 0
    %p155 = por %p153, %p154
    %p156 = scmp.le.s32.totalorder 1, %s10
    %p157 = scmp.lt.s32.totalorder %s10, 3
    %p158 = pnand %p156, %p157
    %p159 = pneg %p158
    // Predicated region
    $region9: #{_lambda_.27} parent=5 // pred_check
      _
    $region10: #{_lambda_.27} parent=5 // pred_check_branch
      %161 = sbr.rel (%p158) target = $region12
    $region11: #{_lambda_.27} parent=5 // pred_region
      %s162 = ssub.s32 %s10, 1
      // Predicated region
      $region13: #{_lambda_.27} parent=11 // pred_check
        %p163 = pneg %p71
      $region14: #{_lambda_.27} parent=11 // pred_check_branch
        %165 = sbr.rel (%p163) target = $region16
      $region15: #{_lambda_.27} parent=11 // pred_region
        _
      $region16: #{_lambda_.27} parent=11 // pred_fallthru
        _
      // Predicated region
      $region17: #{_lambda_.27} parent=11 // pred_check
        %p166 = pneg %p92
      $region18: #{_lambda_.27} parent=11 // pred_check_branch
        %168 = sbr.rel (%p166) target = $region20
      $region19: #{_lambda_.27} parent=11 // pred_region
        _
      $region20: #{_lambda_.27} parent=11 // pred_fallthru
        _
    $region12: #{_lambda_.27} parent=5 // pred_fallthru
      _
    %p169 = scmp.lt.s32.totalorder %s10, 2
    // Predicated region
    $region21: #{_lambda_.27} parent=5 // pred_check
      %p170 = pneg %p169
    $region22: #{_lambda_.27} parent=5 // pred_check_branch
      %172 = sbr.rel (%p170) target = $region24
    $region23: #{_lambda_.27} parent=5 // pred_region
      // Predicated region
      $region25: #{_lambda_.27} parent=23 // pred_check
        %p173 = pneg %p44
      $region26: #{_lambda_.27} parent=23 // pred_check_branch
        %175 = sbr.rel (%p173) target = $region28
      $region27: #{_lambda_.27} parent=23 // pred_region
        %s176 = smul.u32 32, %s18
        %p177 = scmp.lt.s32.totalorder %s17, 1
        %s178 = scalar_select %p177, %s17, 1
        %p179 = scmp.lt.s32.totalorder %s176, 31
        %s180 = scalar_select %p179, %s176, 31
        %s181 = smul.addr %s178, 32
        %s182 = sadd.s32 %s180, %s181
        %s183 = smul.addr %s182, 4
        %s184 = scalar_lea.vmem %s0, %s183
        %s185 = smul.u32 32, %s18
      $region28: #{_lambda_.27} parent=23 // pred_fallthru
        _
      // Predicated region
      $region29: #{_lambda_.27} parent=23 // pred_check
        %p186 = pneg %p114
      $region30: #{_lambda_.27} parent=23 // pred_check_branch
        %188 = sbr.rel (%p186) target = $region32
      $region31: #{_lambda_.27} parent=23 // pred_region
        %s189 = smul.u32 32, %s18
        %p190 = scmp.lt.s32.totalorder %s17, 1
        %s191 = scalar_select %p190, %s17, 1
        %p192 = scmp.lt.s32.totalorder %s189, 31
        %s193 = scalar_select %p192, %s189, 31
        %s194 = smul.addr %s191, 32
        %s195 = sadd.s32 %s193, %s194
        %s196 = smul.addr %s195, 8
        %s197 = scalar_lea.vmem %s3, %s196
        %s198 = smul.u32 32, %s18
      $region32: #{_lambda_.27} parent=23 // pred_fallthru
        _
    $region24: #{_lambda_.27} parent=5 // pred_fallthru
      _
    %p199 = scmp.le.s32.totalorder 1, %s10
    %p200 = scmp.lt.s32.totalorder %s10, 3
    %p201 = pnand %p199, %p200
    %p202 = pneg %p201
    // Predicated region
    $region33: #{_lambda_.27} parent=5 // pred_check
      _
    $region34: #{_lambda_.27} parent=5 // pred_check_branch
      %204 = sbr.rel (%p201) target = $region36
    $region35: #{_lambda_.27} parent=5 // pred_region
      %s205 = ssub.s32 %s10, 1
      %s206 = smul.u32 32, %s20
      %p207 = scmp.lt.s32.totalorder %s19, 1
      %s208 = scalar_select %p207, %s19, 1
      %p209 = scmp.lt.s32.totalorder %s206, 31
      %s210 = scalar_select %p209, %s206, 31
      %s211 = smul.addr %s208, 32
      %s212 = sadd.s32 %s210, %s211
      %s213 = smul.addr %s212, 4
      %s214 = scalar_lea.vmem %s0, %s213
      %p215 = pneg %p50
      %p216 = pneg %p47
      %p217 = pneg %p71
      %p218 = pneg %p68
      %p219 = pneg %p92
      %p220 = pneg %p89
      %s221 = smul.u32 32, %s20
      %p222 = scmp.lt.s32.totalorder %s19, 1
      %s223 = scalar_select %p222, %s19, 1
      %p224 = scmp.lt.s32.totalorder %s221, 31
      %s225 = scalar_select %p224, %s221, 31
      %s226 = smul.addr %s223, 32
      %s227 = sadd.s32 %s225, %s226
      %s228 = smul.addr %s227, 8
      %s229 = scalar_lea.vmem %s3, %s228
      %p230 = pneg %p120
      %p231 = pneg %p117
      %p232 = pneg %p148
      %p233 = pneg %p145
      %s234 = smul.u32 32, %s20
      %p235 = scmp.lt.s32.totalorder %s19, 1
      %s236 = scalar_select %p235, %s19, 1
      %p237 = scmp.lt.s32.totalorder %s234, 31
      %s238 = scalar_select %p237, %s234, 31
      %s239 = smul.addr %s236, 32
      %s240 = sadd.s32 %s238, %s239
      %s241 = smul.addr %s240, 8
      %s242 = scalar_lea.vmem %s4, %s241
      %s243 = smul.u32 32, %s20
      %p244 = scmp.lt.s32.totalorder %s19, 1
      %s245 = scalar_select %p244, %s19, 1
      %p246 = scmp.lt.s32.totalorder %s243, 31
      %s247 = scalar_select %p246, %s243, 31
      %s248 = smul.addr %s245, 32
      %s249 = sadd.s32 %s247, %s248
      %s250 = smul.addr %s249, 4
      %s251 = scalar_lea.vmem %s0, %s250
      %s252 = smul.u32 32, %s20
      %s253 = smul.u32 32, %s20
      %p254 = scmp.lt.s32.totalorder %s19, 1
      %s255 = scalar_select %p254, %s19, 1
      %p256 = scmp.lt.s32.totalorder %s253, 31
      %s257 = scalar_select %p256, %s253, 31
      %s258 = smul.addr %s255, 32
      %s259 = sadd.s32 %s257, %s258
      %s260 = smul.addr %s259, 8
      %s261 = scalar_lea.vmem %s3, %s260
      %s262 = smul.u32 32, %s20
      %s263 = smul.u32 32, %s20
      %p264 = scmp.lt.s32.totalorder %s19, 1
      %s265 = scalar_select %p264, %s19, 1
      %p266 = scmp.lt.s32.totalorder %s263, 31
      %s267 = scalar_select %p266, %s263, 31
      %s268 = smul.addr %s265, 32
      %s269 = sadd.s32 %s267, %s268
      %s270 = smul.addr %s269, 8
      %s271 = scalar_lea.vmem %s4, %s270
      %s272 = smul.u32 32, %s20
      %v274 = vld [vmem:[%s251] sm:$0xf]
      %v275 = vld [vmem:[%s251 + $0x4] sm:$0xf]
      %v276 = vld [vmem:[%s251 + $0x8] sm:$0xf]
      %v277 = vld [vmem:[%s251 + $0xc] sm:$0xf]
      %v278 = vld [vmem:[%s251 + $0x10] sm:$0xf]
      %v279 = vld [vmem:[%s251 + $0x14] sm:$0xf]
      %v280 = vld [vmem:[%s251 + $0x18] sm:$0xf]
      %v281 = vld [vmem:[%s251 + $0x1c] sm:$0xf]
      %v282 = vld [vmem:[%s251 + $0x20] sm:$0xf]
      %v283 = vld [vmem:[%s251 + $0x24] sm:$0xf]
      %v284 = vld [vmem:[%s251 + $0x28] sm:$0xf]
      %v285 = vld [vmem:[%s251 + $0x2c] sm:$0xf]
      %v286 = vld [vmem:[%s251 + $0x30] sm:$0xf]
      %v287 = vld [vmem:[%s251 + $0x34] sm:$0xf]
      %v288 = vld [vmem:[%s251 + $0x38] sm:$0xf]
      %v289 = vld [vmem:[%s251 + $0x3c] sm:$0xf]
      %v290 = vld [vmem:[%s251 + $0x40] sm:$0xf]
      %v291 = vld [vmem:[%s251 + $0x44] sm:$0xf]
      %v292 = vld [vmem:[%s251 + $0x48] sm:$0xf]
      %v293 = vld [vmem:[%s251 + $0x4c] sm:$0xf]
      %v294 = vld [vmem:[%s251 + $0x50] sm:$0xf]
      %v295 = vld [vmem:[%s251 + $0x54] sm:$0xf]
      %v296 = vld [vmem:[%s251 + $0x58] sm:$0xf]
      %v297 = vld [vmem:[%s251 + $0x5c] sm:$0xf]
      %v298 = vld [vmem:[%s251 + $0x60] sm:$0xf]
      %v299 = vld [vmem:[%s251 + $0x64] sm:$0xf]
      %v300 = vld [vmem:[%s251 + $0x68] sm:$0xf]
      %v301 = vld [vmem:[%s251 + $0x6c] sm:$0xf]
      %v302 = vld [vmem:[%s251 + $0x70] sm:$0xf]
      %v303 = vld [vmem:[%s251 + $0x74] sm:$0xf]
      %v304 = vld [vmem:[%s251 + $0x78] sm:$0xf]
      %v305 = vld [vmem:[%s251 + $0x7c] sm:$0xf]
      %v306 = vld [vmem:[%s1] sm:$0xf]
      %v307 = vld [vmem:[%s1 + $0x4] sm:$0xf]
      %v308 = vld [vmem:[%s1 + $0x8] sm:$0xf]
      %v309 = vld [vmem:[%s1 + $0xc] sm:$0xf]
      %v310 = vld [vmem:[%s1 + $0x10] sm:$0xf]
      %v311 = vld [vmem:[%s1 + $0x14] sm:$0xf]
      %v312 = vld [vmem:[%s1 + $0x18] sm:$0xf]
      %v313 = vld [vmem:[%s1 + $0x1c] sm:$0xf]
      %v314 = vld [vmem:[%s1 + $0x20] sm:$0xf]
      %v315 = vld [vmem:[%s2] sm:$0x1]
      %v317 = vlaneseq
      %v318 = vshrl.u32 %v317, 7
      %v319 = vsub.s32 0, %v318
      %v320 = vrot.slane %v315, %v319
      %v354 = vunpack.c.l.b16 %v274
      %v355 = vunpack.c.l.b16 %v275
      %v356 = vunpack.c.l.b16 %v276
      %v357 = vunpack.c.l.b16 %v277
      %v358 = vunpack.c.l.b16 %v278
      %v359 = vunpack.c.l.b16 %v279
      %v360 = vunpack.c.l.b16 %v280
      %v361 = vunpack.c.l.b16 %v281
      %v362 = vunpack.c.l.b16 %v282
      %v363 = vunpack.c.l.b16 %v283
      %v364 = vunpack.c.l.b16 %v284
      %v365 = vunpack.c.l.b16 %v285
      %v366 = vunpack.c.l.b16 %v286
      %v367 = vunpack.c.l.b16 %v287
      %v368 = vunpack.c.l.b16 %v288
      %v369 = vunpack.c.l.b16 %v289
      %v370 = vunpack.c.l.b16 %v290
      %v371 = vunpack.c.l.b16 %v291
      %v372 = vunpack.c.l.b16 %v292
      %v373 = vunpack.c.l.b16 %v293
      %v374 = vunpack.c.l.b16 %v294
      %v375 = vunpack.c.l.b16 %v295
      %v376 = vunpack.c.l.b16 %v296
      %v377 = vunpack.c.l.b16 %v297
      %v378 = vunpack.c.l.b16 %v298
      %v379 = vunpack.c.l.b16 %v299
      %v380 = vunpack.c.l.b16 %v300
      %v381 = vunpack.c.l.b16 %v301
      %v382 = vunpack.c.l.b16 %v302
      %v383 = vunpack.c.l.b16 %v303
      %v384 = vunpack.c.l.b16 %v304
      %v385 = vunpack.c.l.b16 %v305
      %v386 = vpack.c.b16 %v355, %v354
      %v387 = vpack.c.b16 %v357, %v356
      %v388 = vpack.c.b16 %v359, %v358
      %v389 = vpack.c.b16 %v361, %v360
      %v390 = vpack.c.b16 %v363, %v362
      %v391 = vpack.c.b16 %v365, %v364
      %v392 = vpack.c.b16 %v367, %v366
      %v393 = vpack.c.b16 %v369, %v368
      %v394 = vpack.c.b16 %v371, %v370
      %v395 = vpack.c.b16 %v373, %v372
      %v396 = vpack.c.b16 %v375, %v374
      %v397 = vpack.c.b16 %v377, %v376
      %v398 = vpack.c.b16 %v379, %v378
      %v399 = vpack.c.b16 %v381, %v380
      %v400 = vpack.c.b16 %v383, %v382
      %v401 = vpack.c.b16 %v385, %v384
      %v411 = vunpack.c.l.b16 %v306
      %v412 = vunpack.c.l.b16 %v307
      %v413 = vunpack.c.l.b16 %v308
      %v414 = vunpack.c.l.b16 %v309
      %v415 = vunpack.c.l.b16 %v310
      %v416 = vunpack.c.l.b16 %v311
      %v417 = vunpack.c.l.b16 %v312
      %v418 = vunpack.c.l.b16 %v313
      %v419 = vunpack.c.l.b16 %v314
      %v420 = vpack.c.b16 %v412, %v411
      %v421 = vpack.c.b16 %v414, %v413
      %v422 = vpack.c.b16 %v416, %v415
      %v423 = vpack.c.b16 %v418, %v417
      %v424 = vpack.c.b16 %v419, %v419
      %vm429 = vcmask 588800
      %v431 = vsel %vm429, %v386, 0
      %v434 = vsel %vm429, %v387, 0
      %v437 = vsel %vm429, %v388, 0
      %v440 = vsel %vm429, %v389, 0
      %v443 = vsel %vm429, %v390, 0
      %v446 = vsel %vm429, %v391, 0
      %v449 = vsel %vm429, %v392, 0
      %v452 = vsel %vm429, %v393, 0
      %v455 = vsel %vm429, %v394, 0
      %v458 = vsel %vm429, %v395, 0
      %v461 = vsel %vm429, %v396, 0
      %v464 = vsel %vm429, %v397, 0
      %v467 = vsel %vm429, %v398, 0
      %v470 = vsel %vm429, %v399, 0
      %v473 = vsel %vm429, %v400, 0
      %v476 = vsel %vm429, %v401, 0
      %vm478 = vcmask 1043456
      %v480 = vsel %vm478, %v424, 0
      %482 = vmatprep.subr.bf16.mxu0 0
      %483 = vmatpush1.bf16.msra.mxu0 %v420
      %484 = vmatprep.subr.bf16.mxu0 0
      %485 = vmatpush1.bf16.msra.mxu0 %v421
      %486 = vmatprep.subr.bf16.mxu0 0
      %487 = vmatpush1.bf16.msra.mxu0 %v422
      %488 = vmatprep.subr.bf16.mxu0 0
      %489 = vmatpush1.bf16.msra.mxu0 %v423
      %490 = vmatprep.subr.bf16.mxu0 0
      %491 = vmatpush1.bf16.msra.mxu0 %v480
      %492 = vmatprep.subr.bf16.mxu0 0
      %493 = vmatpush1.bf16.msra.mxu0 0
      %494 = vmatprep.subr.bf16.mxu0 0
      %495 = vmatpush1.bf16.msra.mxu0 0
      %496 = vmatprep.subr.bf16.mxu0 0
      %497 = vmatpush1.bf16.msra.mxu0 0
      %498 = vmatprep.subr.bf16.mxu0 0
      %499 = vmatpush1.bf16.msra.mxu0 0
      %500 = vmatprep.subr.bf16.mxu0 0
      %501 = vmatpush1.bf16.msra.mxu0 0
      %502 = vmatprep.subr.bf16.mxu0 0
      %503 = vmatpush1.bf16.msra.mxu0 0
      %504 = vmatprep.subr.bf16.mxu0 0
      %505 = vmatpush1.bf16.msra.mxu0 0
      %506 = vmatprep.subr.bf16.mxu0 0
      %507 = vmatpush1.bf16.msra.mxu0 0
      %508 = vmatprep.subr.bf16.mxu0 0
      %509 = vmatpush1.bf16.msra.mxu0 0
      %510 = vmatprep.subr.bf16.mxu0 0
      %511 = vmatpush1.bf16.msra.mxu0 0
      %512 = vmatprep.subr.bf16.mxu0 0
      %513 = vmatpush1.bf16.msra.mxu0 0
      %514 = vmatprep.mubr.bf16.mxu0 0
      %515 = vmatmul.mubr.bf16.gmra.mrb[0].mxu0 %v431
      %v516 = vpop.f32.mrb[0].mxu0
      %v517 = vadd.f32 %v320, %v516
      %v518 = vpop.f32.mrb[0].mxu0
      %v519 = vpop.f32.mrb[0].mxu0
      %v520 = vadd.f32 %v320, %v519
      %v521 = vpop.f32.mrb[0].mxu0
      %522 = vmatprep.mubr.bf16.mxu0 0
      %523 = vmatmul.mubr.bf16.gmra.mrb[0].mxu0 %v434
      %v524 = vpop.f32.mrb[0].mxu0
      %v525 = vadd.f32 %v320, %v524
      %v526 = vpop.f32.mrb[0].mxu0
      %v527 = vpop.f32.mrb[0].mxu0
      %v528 = vadd.f32 %v320, %v527
      %v529 = vpop.f32.mrb[0].mxu0
      %530 = vmatprep.mubr.bf16.mxu0 0
      %531 = vmatmul.mubr.bf16.gmra.mrb[0].mxu0 %v437
      %v532 = vpop.f32.mrb[0].mxu0
      %v533 = vadd.f32 %v320, %v532
      %v534 = vpop.f32.mrb[0].mxu0
      %v535 = vpop.f32.mrb[0].mxu0
      %v536 = vadd.f32 %v320, %v535
      %v537 = vpop.f32.mrb[0].mxu0
      %538 = vmatprep.mubr.bf16.mxu0 0
      %539 = vmatmul.mubr.bf16.gmra.mrb[0].mxu0 %v440
      %v540 = vpop.f32.mrb[0].mxu0
      %v541 = vadd.f32 %v320, %v540
      %v542 = vpop.f32.mrb[0].mxu0
      %v543 = vpop.f32.mrb[0].mxu0
      %v544 = vadd.f32 %v320, %v543
      %v545 = vpop.f32.mrb[0].mxu0
      %546 = vmatprep.mubr.bf16.mxu0 0
      %547 = vmatmul.mubr.bf16.gmra.mrb[0].mxu0 %v443
      %v548 = vpop.f32.mrb[0].mxu0
      %v549 = vadd.f32 %v320, %v548
      %v550 = vpop.f32.mrb[0].mxu0
      %v551 = vpop.f32.mrb[0].mxu0
      %v552 = vadd.f32 %v320, %v551
      %v553 = vpop.f32.mrb[0].mxu0
      %554 = vmatprep.mubr.bf16.mxu0 0
      %555 = vmatmul.mubr.bf16.gmra.mrb[0].mxu0 %v446
      %v556 = vpop.f32.mrb[0].mxu0
      %v557 = vadd.f32 %v320, %v556
      %v558 = vpop.f32.mrb[0].mxu0
      %v559 = vpop.f32.mrb[0].mxu0
      %v560 = vadd.f32 %v320, %v559
      %v561 = vpop.f32.mrb[0].mxu0
      %562 = vmatprep.mubr.bf16.mxu0 0
      %563 = vmatmul.mubr.bf16.gmra.mrb[0].mxu0 %v449
      %v564 = vpop.f32.mrb[0].mxu0
      %v565 = vadd.f32 %v320, %v564
      %v566 = vpop.f32.mrb[0].mxu0
      %v567 = vpop.f32.mrb[0].mxu0
      %v568 = vadd.f32 %v320, %v567
      %v569 = vpop.f32.mrb[0].mxu0
      %570 = vmatprep.mubr.bf16.mxu0 0
      %571 = vmatmul.mubr.bf16.gmra.mrb[0].mxu0 %v452
      %v572 = vpop.f32.mrb[0].mxu0
      %v573 = vadd.f32 %v320, %v572
      %v574 = vpop.f32.mrb[0].mxu0
      %v575 = vpop.f32.mrb[0].mxu0
      %v576 = vadd.f32 %v320, %v575
      %v577 = vpop.f32.mrb[0].mxu0
      %578 = vmatprep.mubr.bf16.mxu0 0
      %579 = vmatmul.mubr.bf16.gmra.mrb[0].mxu0 %v455
      %v580 = vpop.f32.mrb[0].mxu0
      %v581 = vadd.f32 %v320, %v580
      %v582 = vpop.f32.mrb[0].mxu0
      %v583 = vpop.f32.mrb[0].mxu0
      %v584 = vadd.f32 %v320, %v583
      %v585 = vpop.f32.mrb[0].mxu0
      %586 = vmatprep.mubr.bf16.mxu0 0
      %587 = vmatmul.mubr.bf16.gmra.mrb[0].mxu0 %v458
      %v588 = vpop.f32.mrb[0].mxu0
      %v589 = vadd.f32 %v320, %v588
      %v590 = vpop.f32.mrb[0].mxu0
      %v591 = vpop.f32.mrb[0].mxu0
      %v592 = vadd.f32 %v320, %v591
      %v593 = vpop.f32.mrb[0].mxu0
      %594 = vmatprep.mubr.bf16.mxu0 0
      %595 = vmatmul.mubr.bf16.gmra.mrb[0].mxu0 %v461
      %v596 = vpop.f32.mrb[0].mxu0
      %v597 = vadd.f32 %v320, %v596
      %v598 = vpop.f32.mrb[0].mxu0
      %v599 = vpop.f32.mrb[0].mxu0
      %v600 = vadd.f32 %v320, %v599
      %v601 = vpop.f32.mrb[0].mxu0
      %602 = vmatprep.mubr.bf16.mxu0 0
      %603 = vmatmul.mubr.bf16.gmra.mrb[0].mxu0 %v464
      %v604 = vpop.f32.mrb[0].mxu0
      %v605 = vadd.f32 %v320, %v604
      %v606 = vpop.f32.mrb[0].mxu0
      %v607 = vpop.f32.mrb[0].mxu0
      %v608 = vadd.f32 %v320, %v607
      %v609 = vpop.f32.mrb[0].mxu0
      %610 = vmatprep.mubr.bf16.mxu0 0
      %611 = vmatmul.mubr.bf16.gmra.mrb[0].mxu0 %v467
      %v612 = vpop.f32.mrb[0].mxu0
      %v613 = vadd.f32 %v320, %v612
      %v614 = vpop.f32.mrb[0].mxu0
      %v615 = vpop.f32.mrb[0].mxu0
      %v616 = vadd.f32 %v320, %v615
      %v617 = vpop.f32.mrb[0].mxu0
      %618 = vmatprep.mubr.bf16.mxu0 0
      %619 = vmatmul.mubr.bf16.gmra.mrb[0].mxu0 %v470
      %v620 = vpop.f32.mrb[0].mxu0
      %v621 = vadd.f32 %v320, %v620
      %v622 = vpop.f32.mrb[0].mxu0
      %v623 = vpop.f32.mrb[0].mxu0
      %v624 = vadd.f32 %v320, %v623
      %v625 = vpop.f32.mrb[0].mxu0
      %626 = vmatprep.mubr.bf16.mxu0 0
      %627 = vmatmul.mubr.bf16.gmra.mrb[0].mxu0 %v473
      %v628 = vpop.f32.mrb[0].mxu0
      %v629 = vadd.f32 %v320, %v628
      %v630 = vpop.f32.mrb[0].mxu0
      %v631 = vpop.f32.mrb[0].mxu0
      %v632 = vadd.f32 %v320, %v631
      %v633 = vpop.f32.mrb[0].mxu0
      %634 = vmatprep.mubr.bf16.mxu0 0
      %635 = vmatmul.mubr.bf16.gmra.mrb[0].mxu0 %v476
      %v636 = vpop.f32.mrb[0].mxu0
      %v637 = vadd.f32 %v320, %v636
      %v638 = vpop.f32.mrb[0].mxu0
      %v639 = vpop.f32.mrb[0].mxu0
      %v640 = vadd.f32 %v320, %v639
      %v641 = vpop.f32.mrb[0].mxu0
      %642 = vdwg.mxu0
      %v643 = vld [vmem:[%s261] sm:$0xff]
      %v644 = vld [vmem:[%s261 + $0x8] sm:$0xff]
      %v645 = vld [vmem:[%s261 + $0x10] sm:$0xff]
      %v646 = vld [vmem:[%s261 + $0x18] sm:$0xff]
      %v647 = vld [vmem:[%s261 + $0x20] sm:$0xff]
      %v648 = vld [vmem:[%s261 + $0x28] sm:$0xff]
      %v649 = vld [vmem:[%s261 + $0x30] sm:$0xff]
      %v650 = vld [vmem:[%s261 + $0x38] sm:$0xff]
      %v651 = vld [vmem:[%s261 + $0x40] sm:$0xff]
      %v652 = vld [vmem:[%s261 + $0x48] sm:$0xff]
      %v653 = vld [vmem:[%s261 + $0x50] sm:$0xff]
      %v654 = vld [vmem:[%s261 + $0x58] sm:$0xff]
      %v655 = vld [vmem:[%s261 + $0x60] sm:$0xff]
      %v656 = vld [vmem:[%s261 + $0x68] sm:$0xff]
      %v657 = vld [vmem:[%s261 + $0x70] sm:$0xff]
      %v658 = vld [vmem:[%s261 + $0x78] sm:$0xff]
      %v659 = vld [vmem:[%s261 + $0x80] sm:$0xff]
      %v660 = vld [vmem:[%s261 + $0x88] sm:$0xff]
      %v661 = vld [vmem:[%s261 + $0x90] sm:$0xff]
      %v662 = vld [vmem:[%s261 + $0x98] sm:$0xff]
      %v663 = vld [vmem:[%s261 + $0xa0] sm:$0xff]
      %v664 = vld [vmem:[%s261 + $0xa8] sm:$0xff]
      %v665 = vld [vmem:[%s261 + $0xb0] sm:$0xff]
      %v666 = vld [vmem:[%s261 + $0xb8] sm:$0xff]
      %v667 = vld [vmem:[%s261 + $0xc0] sm:$0xff]
      %v668 = vld [vmem:[%s261 + $0xc8] sm:$0xff]
      %v669 = vld [vmem:[%s261 + $0xd0] sm:$0xff]
      %v670 = vld [vmem:[%s261 + $0xd8] sm:$0xff]
      %v671 = vld [vmem:[%s261 + $0xe0] sm:$0xff]
      %v672 = vld [vmem:[%s261 + $0xe8] sm:$0xff]
      %v673 = vld [vmem:[%s261 + $0xf0] sm:$0xff]
      %v674 = vld [vmem:[%s261 + $0xf8] sm:$0xff]
      %v675 = vadd.f32 %v517, %v643
      %v676 = vadd.f32 %v520, %v644
      %v677 = vadd.f32 %v525, %v645
      %v678 = vadd.f32 %v528, %v646
      %v679 = vadd.f32 %v533, %v647
      %v680 = vadd.f32 %v536, %v648
      %v681 = vadd.f32 %v541, %v649
      %v682 = vadd.f32 %v544, %v650
      %v683 = vadd.f32 %v549, %v651
      %v684 = vadd.f32 %v552, %v652
      %v685 = vadd.f32 %v557, %v653
      %v686 = vadd.f32 %v560, %v654
      %v687 = vadd.f32 %v565, %v655
      %v688 = vadd.f32 %v568, %v656
      %v689 = vadd.f32 %v573, %v657
      %v690 = vadd.f32 %v576, %v658
      %v691 = vadd.f32 %v581, %v659
      %v692 = vadd.f32 %v584, %v660
      %v693 = vadd.f32 %v589, %v661
      %v694 = vadd.f32 %v592, %v662
      %v695 = vadd.f32 %v597, %v663
      %v696 = vadd.f32 %v600, %v664
      %v697 = vadd.f32 %v605, %v665
      %v698 = vadd.f32 %v608, %v666
      %v699 = vadd.f32 %v613, %v667
      %v700 = vadd.f32 %v616, %v668
      %v701 = vadd.f32 %v621, %v669
      %v702 = vadd.f32 %v624, %v670
      %v703 = vadd.f32 %v629, %v671
      %v704 = vadd.f32 %v632, %v672
      %v705 = vadd.f32 %v637, %v673
      %v706 = vadd.f32 %v640, %v674
      %707 = vst [vmem:[%s271] sm:$0xff] %v675
      %708 = vst [vmem:[%s271 + $0x8] sm:$0xff] %v676
      %709 = vst [vmem:[%s271 + $0x10] sm:$0xff] %v677
      %710 = vst [vmem:[%s271 + $0x18] sm:$0xff] %v678
      %711 = vst [vmem:[%s271 + $0x20] sm:$0xff] %v679
      %712 = vst [vmem:[%s271 + $0x28] sm:$0xff] %v680
      %713 = vst [vmem:[%s271 + $0x30] sm:$0xff] %v681
      %714 = vst [vmem:[%s271 + $0x38] sm:$0xff] %v682
      %715 = vst [vmem:[%s271 + $0x40] sm:$0xff] %v683
      %716 = vst [vmem:[%s271 + $0x48] sm:$0xff] %v684
      %717 = vst [vmem:[%s271 + $0x50] sm:$0xff] %v685
      %718 = vst [vmem:[%s271 + $0x58] sm:$0xff] %v686
      %719 = vst [vmem:[%s271 + $0x60] sm:$0xff] %v687
      %720 = vst [vmem:[%s271 + $0x68] sm:$0xff] %v688
      %721 = vst [vmem:[%s271 + $0x70] sm:$0xff] %v689
      %722 = vst [vmem:[%s271 + $0x78] sm:$0xff] %v690
      %723 = vst [vmem:[%s271 + $0x80] sm:$0xff] %v691
      %724 = vst [vmem:[%s271 + $0x88] sm:$0xff] %v692
      %725 = vst [vmem:[%s271 + $0x90] sm:$0xff] %v693
      %726 = vst [vmem:[%s271 + $0x98] sm:$0xff] %v694
      %727 = vst [vmem:[%s271 + $0xa0] sm:$0xff] %v695
      %728 = vst [vmem:[%s271 + $0xa8] sm:$0xff] %v696
      %729 = vst [vmem:[%s271 + $0xb0] sm:$0xff] %v697
      %730 = vst [vmem:[%s271 + $0xb8] sm:$0xff] %v698
      %731 = vst [vmem:[%s271 + $0xc0] sm:$0xff] %v699
      %732 = vst [vmem:[%s271 + $0xc8] sm:$0xff] %v700
      %733 = vst [vmem:[%s271 + $0xd0] sm:$0xff] %v701
      %734 = vst [vmem:[%s271 + $0xd8] sm:$0xff] %v702
      %735 = vst [vmem:[%s271 + $0xe0] sm:$0xff] %v703
      %736 = vst [vmem:[%s271 + $0xe8] sm:$0xff] %v704
      %737 = vst [vmem:[%s271 + $0xf0] sm:$0xff] %v705
      %738 = vst [vmem:[%s271 + $0xf8] sm:$0xff] %v706
      %s739 = smul.u32 32, %s20
      %p740 = scmp.lt.s32.totalorder %s19, 1
      %s741 = scalar_select %p740, %s19, 1
      %p742 = scmp.lt.s32.totalorder %s739, 31
      %s743 = scalar_select %p742, %s739, 31
      %s744 = smul.addr %s741, 32
      %s745 = sadd.s32 %s743, %s744
      %s746 = smul.addr %s745, 8
      %s747 = scalar_lea.vmem %s4, %s746
      // Predicated region
      $region37: #{_lambda_.27} parent=35 // pred_check
        %p748 = pneg %p145
      $region38: #{_lambda_.27} parent=35 // pred_check_branch
        %750 = sbr.rel (%p748) target = $region40
      $region39: #{_lambda_.27} parent=35 // pred_region
        %s751 = smul.u32 32, %s20
      $region40: #{_lambda_.27} parent=35 // pred_fallthru
        _
    $region36: #{_lambda_.27} parent=5 // pred_fallthru
      _
    %p752 = scmp.le.s32.totalorder 2, %s10
    // Predicated region
    $region41: #{_lambda_.27} parent=5 // pred_check
      %p753 = pneg %p752
    $region42: #{_lambda_.27} parent=5 // pred_check_branch
      %755 = sbr.rel (%p753) target = $region44
    $region43: #{_lambda_.27} parent=5 // pred_region
      %s756 = ssub.s32 %s10, 2
      // Predicated region
      $region45: #{_lambda_.27} parent=43 // pred_check
        %p757 = pneg %p151
      $region46: #{_lambda_.27} parent=43 // pred_check_branch
        %759 = sbr.rel (%p757) target = $region48
      $region47: #{_lambda_.27} parent=43 // pred_region
        %s760 = smul.u32 32, %s22
        %p761 = scmp.lt.s32.totalorder %s21, 1
        %s762 = scalar_select %p761, %s21, 1
        %p763 = scmp.lt.s32.totalorder %s760, 31
        %s764 = scalar_select %p763, %s760, 31
        %s765 = smul.addr %s762, 32
        %s766 = sadd.s32 %s764, %s765
        %s767 = smul.addr %s766, 8
        %s768 = scalar_lea.vmem %s4, %s767
      $region48: #{_lambda_.27} parent=43 // pred_fallthru
        _
    $region44: #{_lambda_.27} parent=5 // pred_fallthru
      _
  $region6: #{_lambda_.27} parent=0 // loop_footer
    %s14 = sadd.s32 1, %s10
  $region7: #{_lambda_.27} parent=0 // loop_footer_branch
    %9 = sbr.rel target = $region3
  $region8: #{_lambda_.27} parent=0 // loop_exit
    _

// kernel: _lambda_.28
$region0: #{_lambda_.28}
  #allocation0 [shape = 'u32[]', space=smem, size = 0x4, offset = 0x4, fixed_abs, tag = 'smem constant byte address 0x4 - core index']
  #allocation1 [shape = 'u32[144,128]{1,0:T(1,128)}', space=vmem, size = 0x12000, scoped, tag = 'internal scratch']
  %s0 = inlined_call_operand.vmem [shape: bf16[2,64,72], index: 0, kind: input, shape index: {}]
  %s1 = inlined_call_operand.vmem [shape: bf16[72,128], index: 1, kind: input, shape index: {}]
  %s2 = inlined_call_operand.vmem [shape: f32[1,128], index: 2, kind: input, shape index: {}]
  %s3 = inlined_call_operand.vmem [shape: f32[2,64,128], index: 3, kind: output, shape index: {}]
  %s4 = sld [smem:[#allocation0]]
  $region45: #{_lambda_.28} parent=0
    _
  %s6 = ssub.s32 1, %s4
  %s7 = scalar_select 0, %s6, %s4
  loop: start=0, step=1, limit=4
  $region2: #{_lambda_.28} parent=0 // loop_pre_header
    _
  $region3: #{_lambda_.28} parent=0 // loop_header
    %s9 = sphi 0, %s13
    %p10 = scmp.ge.s32.totalorder %s9, 4
    %s16 = sphi 0, %s28
    %s17 = sphi 0, %s24
    %s18 = sphi 0, %s16
    %s19 = sphi 0, %s17
    %s20 = sphi 0, %s18
    %s21 = sphi 0, %s19
    %s33 = sphi 0, %s35
    %s36 = sphi 0, %s33
    %s37 = sphi 0, %s36
    %s53 = sphi 0, %s37
    %s57 = sphi 0, %s57
    %s59 = sphi 0, %s57
    %s60 = sphi 0, %s59
    %s74 = sphi 0, %s60
    %s78 = sphi 0, %s78
    %s80 = sphi 0, %s78
    %s81 = sphi 0, %s80
    %s95 = sphi 0, %s81
    %s103 = sphi 0, %s105
    %s106 = sphi 0, %s103
    %s107 = sphi 0, %s106
    %s123 = sphi 0, %s107
  $region4: #{_lambda_.28} parent=0 // loop_header_branch
    %12 = sbr.rel (%p10) target = $region8
  $region5: #{_lambda_.28} parent=0 // loop_body
    %s14 = ssub.s32 %s9, 1
    %s15 = ssub.s32 %s9, 2
    %s22 = sadd.s32 1, %s17
    %p23 = scmp.ge.s32.totalorder %s22, 1
    %s24 = scalar_select %p23, 0, %s22
    %s25 = sadd.s32 1, %s16
    %s26 = scalar_select %p23, %s25, %s16
    %p27 = scmp.ge.s32.totalorder %s26, 2
    %s28 = scalar_select %p27, 0, %s26
    %s29 = ssub.s32 %s16, %s28
    %s30 = ssub.s32 %s17, %s24
    %s31 = sor.u32 %s29, %s30
    %p32 = scmp.eq.s32.totalorder %s31, 0
    %s34 = sadd.s32 %s33, 1
    %s35 = scalar_select %p32, %s33, %s34
    %p38 = pneg %p32
    %p39 = scmp.eq.s32.totalorder %s9, 1
    %p40 = por %p38, %p39
    %p41 = scmp.ne.s32.totalorder %s33, %s36
    %p42 = scmp.eq.s32.totalorder %s9, 0
    %p43 = por %p41, %p42
    %p44 = scmp.ne.s32.totalorder %s33, %s36
    %p45 = scmp.eq.s32.totalorder %s14, 1
    %p46 = por %p44, %p45
    %p47 = scmp.ne.s32.totalorder %s36, %s37
    %p48 = scmp.eq.s32.totalorder %s14, 0
    %p49 = por %p47, %p48
    %p50 = scmp.ne.s32.totalorder %s36, %s37
    %p51 = scmp.eq.s32.totalorder %s15, 1
    %p52 = por %p50, %p51
    %p54 = scmp.ne.s32.totalorder %s37, %s53
    %p55 = scmp.eq.s32.totalorder %s15, 0
    %p56 = por %p54, %p55
    %s58 = sadd.s32 %s57, 1
    %p61 = scmp.eq.s32.totalorder %s9, 1
    %p62 = scmp.ne.s32.totalorder %s57, %s59
    %p63 = scmp.eq.s32.totalorder %s9, 0
    %p64 = por %p62, %p63
    %p65 = scmp.ne.s32.totalorder %s57, %s59
    %p66 = scmp.eq.s32.totalorder %s14, 1
    %p67 = por %p65, %p66
    %p68 = scmp.ne.s32.totalorder %s59, %s60
    %p69 = scmp.eq.s32.totalorder %s14, 0
    %p70 = por %p68, %p69
    %p71 = scmp.ne.s32.totalorder %s59, %s60
    %p72 = scmp.eq.s32.totalorder %s15, 1
    %p73 = por %p71, %p72
    %p75 = scmp.ne.s32.totalorder %s60, %s74
    %p76 = scmp.eq.s32.totalorder %s15, 0
    %p77 = por %p75, %p76
    %s79 = sadd.s32 %s78, 1
    %p82 = scmp.eq.s32.totalorder %s9, 1
    %p83 = scmp.ne.s32.totalorder %s78, %s80
    %p84 = scmp.eq.s32.totalorder %s9, 0
    %p85 = por %p83, %p84
    %p86 = scmp.ne.s32.totalorder %s78, %s80
    %p87 = scmp.eq.s32.totalorder %s14, 1
    %p88 = por %p86, %p87
    %p89 = scmp.ne.s32.totalorder %s80, %s81
    %p90 = scmp.eq.s32.totalorder %s14, 0
    %p91 = por %p89, %p90
    %p92 = scmp.ne.s32.totalorder %s80, %s81
    %p93 = scmp.eq.s32.totalorder %s15, 1
    %p94 = por %p92, %p93
    %p96 = scmp.ne.s32.totalorder %s81, %s95
    %p97 = scmp.eq.s32.totalorder %s15, 0
    %p98 = por %p96, %p97
    %s99 = ssub.s32 %s16, %s28
    %s100 = ssub.s32 %s17, %s24
    %s101 = sor.u32 %s99, %s100
    %p102 = scmp.eq.s32.totalorder %s101, 0
    %s104 = sadd.s32 %s103, 1
    %s105 = scalar_select %p102, %s103, %s104
    %p108 = pneg %p102
    %p109 = scmp.eq.s32.totalorder %s9, 1
    %p110 = por %p108, %p109
    %p111 = scmp.ne.s32.totalorder %s103, %s106
    %p112 = scmp.eq.s32.totalorder %s9, 0
    %p113 = por %p111, %p112
    %p114 = scmp.ne.s32.totalorder %s103, %s106
    %p115 = scmp.eq.s32.totalorder %s14, 1
    %p116 = por %p114, %p115
    %p117 = scmp.ne.s32.totalorder %s106, %s107
    %p118 = scmp.eq.s32.totalorder %s14, 0
    %p119 = por %p117, %p118
    %p120 = scmp.ne.s32.totalorder %s106, %s107
    %p121 = scmp.eq.s32.totalorder %s15, 1
    %p122 = por %p120, %p121
    %p124 = scmp.ne.s32.totalorder %s107, %s123
    %p125 = scmp.eq.s32.totalorder %s15, 0
    %p126 = por %p124, %p125
    %p127 = scmp.le.s32.totalorder 1, %s9
    %p128 = scmp.lt.s32.totalorder %s9, 3
    %p129 = pnand %p127, %p128
    %p130 = pneg %p129
    // Predicated region
    $region9: #{_lambda_.28} parent=5 // pred_check
      _
    $region10: #{_lambda_.28} parent=5 // pred_check_branch
      %132 = sbr.rel (%p129) target = $region12
    $region11: #{_lambda_.28} parent=5 // pred_region
      %s133 = ssub.s32 %s9, 1
      // Predicated region
      $region13: #{_lambda_.28} parent=11 // pred_check
        %p134 = pneg %p70
      $region14: #{_lambda_.28} parent=11 // pred_check_branch
        %136 = sbr.rel (%p134) target = $region16
      $region15: #{_lambda_.28} parent=11 // pred_region
        _
      $region16: #{_lambda_.28} parent=11 // pred_fallthru
        _
      // Predicated region
      $region17: #{_lambda_.28} parent=11 // pred_check
        %p137 = pneg %p91
      $region18: #{_lambda_.28} parent=11 // pred_check_branch
        %139 = sbr.rel (%p137) target = $region20
      $region19: #{_lambda_.28} parent=11 // pred_region
        _
      $region20: #{_lambda_.28} parent=11 // pred_fallthru
        _
    $region12: #{_lambda_.28} parent=5 // pred_fallthru
      _
    %p140 = scmp.lt.s32.totalorder %s9, 2
    // Predicated region
    $region21: #{_lambda_.28} parent=5 // pred_check
      %p141 = pneg %p140
    $region22: #{_lambda_.28} parent=5 // pred_check_branch
      %143 = sbr.rel (%p141) target = $region24
    $region23: #{_lambda_.28} parent=5 // pred_region
      // Predicated region
      $region25: #{_lambda_.28} parent=23 // pred_check
        %p144 = pneg %p43
      $region26: #{_lambda_.28} parent=23 // pred_check_branch
        %146 = sbr.rel (%p144) target = $region28
      $region27: #{_lambda_.28} parent=23 // pred_region
        %s147 = smul.u32 8, %s17
        %p148 = scmp.lt.s32.totalorder %s16, 1
        %s149 = scalar_select %p148, %s16, 1
        %p150 = scmp.lt.s32.totalorder %s147, 7
        %s151 = scalar_select %p150, %s147, 7
        %s152 = smul.addr %s149, 8
        %s153 = sadd.s32 %s151, %s152
        %s154 = smul.addr %s153, 4
        %s155 = scalar_lea.vmem %s0, %s154
        %s156 = smul.u32 8, %s17
      $region28: #{_lambda_.28} parent=23 // pred_fallthru
        _
    $region24: #{_lambda_.28} parent=5 // pred_fallthru
      _
    %p157 = scmp.le.s32.totalorder 1, %s9
    %p158 = scmp.lt.s32.totalorder %s9, 3
    %p159 = pnand %p157, %p158
    %p160 = pneg %p159
    // Predicated region
    $region29: #{_lambda_.28} parent=5 // pred_check
      _
    $region30: #{_lambda_.28} parent=5 // pred_check_branch
      %162 = sbr.rel (%p159) target = $region32
    $region31: #{_lambda_.28} parent=5 // pred_region
      %s163 = ssub.s32 %s9, 1
      %s164 = smul.u32 8, %s19
      %p165 = scmp.lt.s32.totalorder %s18, 1
      %s166 = scalar_select %p165, %s18, 1
      %p167 = scmp.lt.s32.totalorder %s164, 7
      %s168 = scalar_select %p167, %s164, 7
      %s169 = smul.addr %s166, 8
      %s170 = sadd.s32 %s168, %s169
      %s171 = smul.addr %s170, 4
      %s172 = scalar_lea.vmem %s0, %s171
      %p173 = pneg %p49
      %p174 = pneg %p46
      %p175 = pneg %p70
      %p176 = pneg %p67
      %p177 = pneg %p91
      %p178 = pneg %p88
      %p179 = pneg %p119
      %p180 = pneg %p116
      %s181 = smul.u32 8, %s19
      %p182 = scmp.lt.s32.totalorder %s18, 1
      %s183 = scalar_select %p182, %s18, 1
      %p184 = scmp.lt.s32.totalorder %s181, 7
      %s185 = scalar_select %p184, %s181, 7
      %s186 = smul.addr %s183, 8
      %s187 = sadd.s32 %s185, %s186
      %s188 = smul.addr %s187, 8
      %s189 = scalar_lea.vmem %s3, %s188
      %s190 = smul.u32 8, %s19
      %p191 = scmp.lt.s32.totalorder %s18, 1
      %s192 = scalar_select %p191, %s18, 1
      %p193 = scmp.lt.s32.totalorder %s190, 7
      %s194 = scalar_select %p193, %s190, 7
      %s195 = smul.addr %s192, 8
      %s196 = sadd.s32 %s194, %s195
      %s197 = smul.addr %s196, 4
      %s198 = scalar_lea.vmem %s0, %s197
      %s199 = smul.u32 8, %s19
      %s200 = smul.u32 8, %s19
      %p201 = scmp.lt.s32.totalorder %s18, 1
      %s202 = scalar_select %p201, %s18, 1
      %p203 = scmp.lt.s32.totalorder %s200, 7
      %s204 = scalar_select %p203, %s200, 7
      %s205 = smul.addr %s202, 8
      %s206 = sadd.s32 %s204, %s205
      %s207 = smul.addr %s206, 8
      %s208 = scalar_lea.vmem %s3, %s207
      %s209 = smul.u32 8, %s19
      %v211 = vld [vmem:[%s198] sm:$0xf]
      %v212 = vld [vmem:[%s198 + $0x4] sm:$0xf]
      %v213 = vld [vmem:[%s198 + $0x8] sm:$0xf]
      %v214 = vld [vmem:[%s198 + $0xc] sm:$0xf]
      %v215 = vld [vmem:[%s198 + $0x10] sm:$0xf]
      %v216 = vld [vmem:[%s198 + $0x14] sm:$0xf]
      %v217 = vld [vmem:[%s198 + $0x18] sm:$0xf]
      %v218 = vld [vmem:[%s198 + $0x1c] sm:$0xf]
      %v219 = vld [vmem:[%s1] sm:$0xf]
      %v220 = vld [vmem:[%s1 + $0x4] sm:$0xf]
      %v221 = vld [vmem:[%s1 + $0x8] sm:$0xf]
      %v222 = vld [vmem:[%s1 + $0xc] sm:$0xf]
      %v223 = vld [vmem:[%s1 + $0x10] sm:$0xf]
      %v224 = vld [vmem:[%s1 + $0x14] sm:$0xf]
      %v225 = vld [vmem:[%s1 + $0x18] sm:$0xf]
      %v226 = vld [vmem:[%s1 + $0x1c] sm:$0xf]
      %v227 = vld [vmem:[%s1 + $0x20] sm:$0xf]
      %v228 = vld [vmem:[%s2] sm:$0x1]
      %v230 = vlaneseq
      %v231 = vshrl.u32 %v230, 7
      %v232 = vsub.s32 0, %v231
      %v233 = vrot.slane %v228, %v232
      %v243 = vunpack.c.l.b16 %v211
      %v244 = vunpack.c.l.b16 %v212
      %v245 = vunpack.c.l.b16 %v213
      %v246 = vunpack.c.l.b16 %v214
      %v247 = vunpack.c.l.b16 %v215
      %v248 = vunpack.c.l.b16 %v216
      %v249 = vunpack.c.l.b16 %v217
      %v250 = vunpack.c.l.b16 %v218
      %v251 = vpack.c.b16 %v244, %v243
      %v252 = vpack.c.b16 %v246, %v245
      %v253 = vpack.c.b16 %v248, %v247
      %v254 = vpack.c.b16 %v250, %v249
      %v264 = vunpack.c.l.b16 %v219
      %v265 = vunpack.c.l.b16 %v220
      %v266 = vunpack.c.l.b16 %v221
      %v267 = vunpack.c.l.b16 %v222
      %v268 = vunpack.c.l.b16 %v223
      %v269 = vunpack.c.l.b16 %v224
      %v270 = vunpack.c.l.b16 %v225
      %v271 = vunpack.c.l.b16 %v226
      %v272 = vunpack.c.l.b16 %v227
      %v273 = vpack.c.b16 %v265, %v264
      %v274 = vpack.c.b16 %v267, %v266
      %v275 = vpack.c.b16 %v269, %v268
      %v276 = vpack.c.b16 %v271, %v270
      %v277 = vpack.c.b16 %v272, %v272
      %vm282 = vcmask 588800
      %v284 = vsel %vm282, %v251, 0
      %v287 = vsel %vm282, %v252, 0
      %v290 = vsel %vm282, %v253, 0
      %v293 = vsel %vm282, %v254, 0
      %vm295 = vcmask 1043456
      %v297 = vsel %vm295, %v277, 0
      %299 = vmatprep.subr.bf16.mxu0 0
      %300 = vmatpush1.bf16.msra.mxu0 %v273
      %301 = vmatprep.subr.bf16.mxu0 0
      %302 = vmatpush1.bf16.msra.mxu0 %v274
      %303 = vmatprep.subr.bf16.mxu0 0
      %304 = vmatpush1.bf16.msra.mxu0 %v275
      %305 = vmatprep.subr.bf16.mxu0 0
      %306 = vmatpush1.bf16.msra.mxu0 %v276
      %307 = vmatprep.subr.bf16.mxu0 0
      %308 = vmatpush1.bf16.msra.mxu0 %v297
      %309 = vmatprep.subr.bf16.mxu0 0
      %310 = vmatpush1.bf16.msra.mxu0 0
      %311 = vmatprep.subr.bf16.mxu0 0
      %312 = vmatpush1.bf16.msra.mxu0 0
      %313 = vmatprep.subr.bf16.mxu0 0
      %314 = vmatpush1.bf16.msra.mxu0 0
      %315 = vmatprep.subr.bf16.mxu0 0
      %316 = vmatpush1.bf16.msra.mxu0 0
      %317 = vmatprep.subr.bf16.mxu0 0
      %318 = vmatpush1.bf16.msra.mxu0 0
      %319 = vmatprep.subr.bf16.mxu0 0
      %320 = vmatpush1.bf16.msra.mxu0 0
      %321 = vmatprep.subr.bf16.mxu0 0
      %322 = vmatpush1.bf16.msra.mxu0 0
      %323 = vmatprep.subr.bf16.mxu0 0
      %324 = vmatpush1.bf16.msra.mxu0 0
      %325 = vmatprep.subr.bf16.mxu0 0
      %326 = vmatpush1.bf16.msra.mxu0 0
      %327 = vmatprep.subr.bf16.mxu0 0
      %328 = vmatpush1.bf16.msra.mxu0 0
      %329 = vmatprep.subr.bf16.mxu0 0
      %330 = vmatpush1.bf16.msra.mxu0 0
      %331 = vmatprep.mubr.bf16.mxu0 0
      %332 = vmatmul.mubr.bf16.gmra.mrb[0].mxu0 %v284
      %v333 = vpop.f32.mrb[0].mxu0
      %v334 = vadd.f32 %v233, %v333
      %v335 = vpop.f32.mrb[0].mxu0
      %v336 = vpop.f32.mrb[0].mxu0
      %v337 = vadd.f32 %v233, %v336
      %v338 = vpop.f32.mrb[0].mxu0
      %339 = vmatprep.mubr.bf16.mxu0 0
      %340 = vmatmul.mubr.bf16.gmra.mrb[0].mxu0 %v287
      %v341 = vpop.f32.mrb[0].mxu0
      %v342 = vadd.f32 %v233, %v341
      %v343 = vpop.f32.mrb[0].mxu0
      %v344 = vpop.f32.mrb[0].mxu0
      %v345 = vadd.f32 %v233, %v344
      %v346 = vpop.f32.mrb[0].mxu0
      %347 = vmatprep.mubr.bf16.mxu0 0
      %348 = vmatmul.mubr.bf16.gmra.mrb[0].mxu0 %v290
      %v349 = vpop.f32.mrb[0].mxu0
      %v350 = vadd.f32 %v233, %v349
      %v351 = vpop.f32.mrb[0].mxu0
      %v352 = vpop.f32.mrb[0].mxu0
      %v353 = vadd.f32 %v233, %v352
      %v354 = vpop.f32.mrb[0].mxu0
      %355 = vmatprep.mubr.bf16.mxu0 0
      %356 = vmatmul.mubr.bf16.gmra.mrb[0].mxu0 %v293
      %v357 = vpop.f32.mrb[0].mxu0
      %v358 = vadd.f32 %v233, %v357
      %v359 = vpop.f32.mrb[0].mxu0
      %v360 = vpop.f32.mrb[0].mxu0
      %v361 = vadd.f32 %v233, %v360
      %v362 = vpop.f32.mrb[0].mxu0
      %363 = vdwg.mxu0
      %364 = vst [vmem:[%s208] sm:$0xff] %v334
      %365 = vst [vmem:[%s208 + $0x8] sm:$0xff] %v337
      %366 = vst [vmem:[%s208 + $0x10] sm:$0xff] %v342
      %367 = vst [vmem:[%s208 + $0x18] sm:$0xff] %v345
      %368 = vst [vmem:[%s208 + $0x20] sm:$0xff] %v350
      %369 = vst [vmem:[%s208 + $0x28] sm:$0xff] %v353
      %370 = vst [vmem:[%s208 + $0x30] sm:$0xff] %v358
      %371 = vst [vmem:[%s208 + $0x38] sm:$0xff] %v361
      %s372 = smul.u32 8, %s19
      %p373 = scmp.lt.s32.totalorder %s18, 1
      %s374 = scalar_select %p373, %s18, 1
      %p375 = scmp.lt.s32.totalorder %s372, 7
      %s376 = scalar_select %p375, %s372, 7
      %s377 = smul.addr %s374, 8
      %s378 = sadd.s32 %s376, %s377
      %s379 = smul.addr %s378, 8
      %s380 = scalar_lea.vmem %s3, %s379
      // Predicated region
      $region33: #{_lambda_.28} parent=31 // pred_check
        %p381 = pneg %p116
      $region34: #{_lambda_.28} parent=31 // pred_check_branch
        %383 = sbr.rel (%p381) target = $region36
      $region35: #{_lambda_.28} parent=31 // pred_region
        %s384 = smul.u32 8, %s19
      $region36: #{_lambda_.28} parent=31 // pred_fallthru
        _
    $region32: #{_lambda_.28} parent=5 // pred_fallthru
      _
    %p385 = scmp.le.s32.totalorder 2, %s9
    // Predicated region
    $region37: #{_lambda_.28} parent=5 // pred_check
      %p386 = pneg %p385
    $region38: #{_lambda_.28} parent=5 // pred_check_branch
      %388 = sbr.rel (%p386) target = $region40
    $region39: #{_lambda_.28} parent=5 // pred_region
      %s389 = ssub.s32 %s9, 2
      // Predicated region
      $region41: #{_lambda_.28} parent=39 // pred_check
        %p390 = pneg %p122
      $region42: #{_lambda_.28} parent=39 // pred_check_branch
        %392 = sbr.rel (%p390) target = $region44
      $region43: #{_lambda_.28} parent=39 // pred_region
        %s393 = smul.u32 8, %s21
        %p394 = scmp.lt.s32.totalorder %s20, 1
        %s395 = scalar_select %p394, %s20, 1
        %p396 = scmp.lt.s32.totalorder %s393, 7
        %s397 = scalar_select %p396, %s393, 7
        %s398 = smul.addr %s395, 8
        %s399 = sadd.s32 %s397, %s398
        %s400 = smul.addr %s399, 8
        %s401 = scalar_lea.vmem %s3, %s400
      $region44: #{_lambda_.28} parent=39 // pred_fallthru
        _
    $region40: #{_lambda_.28} parent=5 // pred_fallthru
      _
  $region6: #{_lambda_.28} parent=0 // loop_footer
    %s13 = sadd.s32 1, %s9
  $region7: #{_lambda_.28} parent=0 // loop_footer_branch
    %8 = sbr.rel target = $region3
  $region8: #{_lambda_.28} parent=0 // loop_exit
    _

// kernel: _lambda_.30
$region0: #{_lambda_.30}
  #allocation0 [shape = 'u32[]', space=smem, size = 0x4, offset = 0x4, fixed_abs, tag = 'smem constant byte address 0x4 - core index']
  #allocation1 [shape = 'u32[144,128]{1,0:T(1,128)}', space=vmem, size = 0x12000, scoped, tag = 'internal scratch']
  #allocation2 [shape = 'f32[1,8]{1,0:T(1,128)}', space=vmem, size = 0x200, scoped, tag = 'scratch operand']
  #allocation3 [shape = 'f32[1,8]{1,0:T(1,128)}', space=vmem, size = 0x200, scoped, tag = 'scratch operand']
  %s0 = inlined_call_operand.vmem [shape: f32[2,64,8], index: 0, kind: input, shape index: {}]
  %s1 = inlined_call_operand.vmem [shape: f32[2,1,8], index: 1, kind: output, shape index: {0}]
  %s2 = inlined_call_operand.vmem [shape: f32[2,1,8], index: 2, kind: output, shape index: {1}]
  %3 = xla_tuple %s1, %s2
  %s4 = sld [smem:[#allocation0]]
  $region53: #{_lambda_.30} parent=0
    _
  %s6 = ssub.s32 1, %s4
  %s7 = scalar_select 0, %s6, %s4
  loop: start=0, step=1, limit=4
  $region2: #{_lambda_.30} parent=0 // loop_pre_header
    _
  $region3: #{_lambda_.30} parent=0 // loop_header
    %s9 = sphi 0, %s13
    %p10 = scmp.ge.s32.totalorder %s9, 4
    %s16 = sphi 0, %s28
    %s17 = sphi 0, %s24
    %s18 = sphi 0, %s16
    %s19 = sphi 0, %s17
    %s20 = sphi 0, %s18
    %s21 = sphi 0, %s19
    %s33 = sphi 0, %s35
    %s36 = sphi 0, %s33
    %s37 = sphi 0, %s36
    %s53 = sphi 0, %s37
    %s59 = sphi 0, %s61
    %s62 = sphi 0, %s59
    %s63 = sphi 0, %s62
    %s79 = sphi 0, %s63
    %s85 = sphi 0, %s87
    %s88 = sphi 0, %s85
    %s89 = sphi 0, %s88
    %s105 = sphi 0, %s89
  $region4: #{_lambda_.30} parent=0 // loop_header_branch
    %12 = sbr.rel (%p10) target = $region8
  $region5: #{_lambda_.30} parent=0 // loop_body
    %s14 = ssub.s32 %s9, 1
    %s15 = ssub.s32 %s9, 2
    %s22 = sadd.s32 1, %s17
    %p23 = scmp.ge.s32.totalorder %s22, 1
    %s24 = scalar_select %p23, 0, %s22
    %s25 = sadd.s32 1, %s16
    %s26 = scalar_select %p23, %s25, %s16
    %p27 = scmp.ge.s32.totalorder %s26, 2
    %s28 = scalar_select %p27, 0, %s26
    %s29 = ssub.s32 %s16, %s28
    %s30 = ssub.s32 %s17, %s24
    %s31 = sor.u32 %s29, %s30
    %p32 = scmp.eq.s32.totalorder %s31, 0
    %s34 = sadd.s32 %s33, 1
    %s35 = scalar_select %p32, %s33, %s34
    %p38 = pneg %p32
    %p39 = scmp.eq.s32.totalorder %s9, 1
    %p40 = por %p38, %p39
    %p41 = scmp.ne.s32.totalorder %s33, %s36
    %p42 = scmp.eq.s32.totalorder %s9, 0
    %p43 = por %p41, %p42
    %p44 = scmp.ne.s32.totalorder %s33, %s36
    %p45 = scmp.eq.s32.totalorder %s14, 1
    %p46 = por %p44, %p45
    %p47 = scmp.ne.s32.totalorder %s36, %s37
    %p48 = scmp.eq.s32.totalorder %s14, 0
    %p49 = por %p47, %p48
    %p50 = scmp.ne.s32.totalorder %s36, %s37
    %p51 = scmp.eq.s32.totalorder %s15, 1
    %p52 = por %p50, %p51
    %p54 = scmp.ne.s32.totalorder %s37, %s53
    %p55 = scmp.eq.s32.totalorder %s15, 0
    %p56 = por %p54, %p55
    %s57 = ssub.s32 %s16, %s28
    %p58 = scmp.eq.s32.totalorder %s57, 0
    %s60 = sadd.s32 %s59, 1
    %s61 = scalar_select %p58, %s59, %s60
    %p64 = pneg %p58
    %p65 = scmp.eq.s32.totalorder %s9, 1
    %p66 = por %p64, %p65
    %p67 = scmp.ne.s32.totalorder %s59, %s62
    %p68 = scmp.eq.s32.totalorder %s9, 0
    %p69 = por %p67, %p68
    %p70 = scmp.ne.s32.totalorder %s59, %s62
    %p71 = scmp.eq.s32.totalorder %s14, 1
    %p72 = por %p70, %p71
    %p73 = scmp.ne.s32.totalorder %s62, %s63
    %p74 = scmp.eq.s32.totalorder %s14, 0
    %p75 = por %p73, %p74
    %p76 = scmp.ne.s32.totalorder %s62, %s63
    %p77 = scmp.eq.s32.totalorder %s15, 1
    %p78 = por %p76, %p77
    %p80 = scmp.ne.s32.totalorder %s63, %s79
    %p81 = scmp.eq.s32.totalorder %s15, 0
    %p82 = por %p80, %p81
    %s83 = ssub.s32 %s16, %s28
    %p84 = scmp.eq.s32.totalorder %s83, 0
    %s86 = sadd.s32 %s85, 1
    %s87 = scalar_select %p84, %s85, %s86
    %p90 = pneg %p84
    %p91 = scmp.eq.s32.totalorder %s9, 1
    %p92 = por %p90, %p91
    %p93 = scmp.ne.s32.totalorder %s85, %s88
    %p94 = scmp.eq.s32.totalorder %s9, 0
    %p95 = por %p93, %p94
    %p96 = scmp.ne.s32.totalorder %s85, %s88
    %p97 = scmp.eq.s32.totalorder %s14, 1
    %p98 = por %p96, %p97
    %p99 = scmp.ne.s32.totalorder %s88, %s89
    %p100 = scmp.eq.s32.totalorder %s14, 0
    %p101 = por %p99, %p100
    %p102 = scmp.ne.s32.totalorder %s88, %s89
    %p103 = scmp.eq.s32.totalorder %s15, 1
    %p104 = por %p102, %p103
    %p106 = scmp.ne.s32.totalorder %s89, %s105
    %p107 = scmp.eq.s32.totalorder %s15, 0
    %p108 = por %p106, %p107
    %p109 = scmp.le.s32.totalorder 1, %s9
    %p110 = scmp.lt.s32.totalorder %s9, 3
    %p111 = pnand %p109, %p110
    %p112 = pneg %p111
    // Predicated region
    $region9: #{_lambda_.30} parent=5 // pred_check
      _
    $region10: #{_lambda_.30} parent=5 // pred_check_branch
      %114 = sbr.rel (%p111) target = $region12
    $region11: #{_lambda_.30} parent=5 // pred_region
      %s115 = ssub.s32 %s9, 1
    $region12: #{_lambda_.30} parent=5 // pred_fallthru
      _
    %p116 = scmp.lt.s32.totalorder %s9, 2
    // Predicated region
    $region13: #{_lambda_.30} parent=5 // pred_check
      %p117 = pneg %p116
    $region14: #{_lambda_.30} parent=5 // pred_check_branch
      %119 = sbr.rel (%p117) target = $region16
    $region15: #{_lambda_.30} parent=5 // pred_region
      // Predicated region
      $region17: #{_lambda_.30} parent=15 // pred_check
        %p120 = pneg %p43
      $region18: #{_lambda_.30} parent=15 // pred_check_branch
        %122 = sbr.rel (%p120) target = $region20
      $region19: #{_lambda_.30} parent=15 // pred_region
        %s123 = smul.u32 8, %s17
        %p124 = scmp.lt.s32.totalorder %s16, 1
        %s125 = scalar_select %p124, %s16, 1
        %p126 = scmp.lt.s32.totalorder %s123, 7
        %s127 = scalar_select %p126, %s123, 7
        %s128 = smul.addr %s125, 8
        %s129 = sadd.s32 %s127, %s128
        %s130 = smul.addr %s129, 8
        %s131 = scalar_lea.vmem %s0, %s130
        %s132 = smul.u32 8, %s17
      $region20: #{_lambda_.30} parent=15 // pred_fallthru
        _
    $region16: #{_lambda_.30} parent=5 // pred_fallthru
      _
    %p133 = scmp.le.s32.totalorder 1, %s9
    %p134 = scmp.lt.s32.totalorder %s9, 3
    %p135 = pnand %p133, %p134
    %p136 = pneg %p135
    // Predicated region
    $region21: #{_lambda_.30} parent=5 // pred_check
      _
    $region22: #{_lambda_.30} parent=5 // pred_check_branch
      %138 = sbr.rel (%p135) target = $region24
    $region23: #{_lambda_.30} parent=5 // pred_region
      %s139 = ssub.s32 %s9, 1
      %s140 = smul.u32 8, %s19
      %p141 = scmp.lt.s32.totalorder %s18, 1
      %s142 = scalar_select %p141, %s18, 1
      %p143 = scmp.lt.s32.totalorder %s140, 7
      %s144 = scalar_select %p143, %s140, 7
      %s145 = smul.addr %s142, 8
      %s146 = sadd.s32 %s144, %s145
      %s147 = smul.addr %s146, 8
      %s148 = scalar_lea.vmem %s0, %s147
      %p149 = pneg %p49
      %p150 = pneg %p46
      %p151 = pneg %p75
      %p152 = pneg %p72
      %p153 = scmp.lt.s32.totalorder %s18, 1
      %s154 = scalar_select %p153, %s18, 1
      %s155 = scalar_lea.vmem %s1, %s154
      %p156 = pneg %p101
      %p157 = pneg %p98
      %p158 = scmp.lt.s32.totalorder %s18, 1
      %s159 = scalar_select %p158, %s18, 1
      %s160 = scalar_lea.vmem %s2, %s159
      %s161 = smul.u32 8, %s19
      %p162 = scmp.lt.s32.totalorder %s18, 1
      %s163 = scalar_select %p162, %s18, 1
      %p164 = scmp.lt.s32.totalorder %s161, 7
      %s165 = scalar_select %p164, %s161, 7
      %s166 = smul.addr %s163, 8
      %s167 = sadd.s32 %s165, %s166
      %s168 = smul.addr %s167, 8
      %s169 = scalar_lea.vmem %s0, %s168
      %s170 = smul.u32 8, %s19
      %p171 = scmp.lt.s32.totalorder %s18, 1
      %s172 = scalar_select %p171, %s18, 1
      %s173 = scalar_lea.vmem %s1, %s172
      %p174 = scmp.lt.s32.totalorder %s18, 1
      %s175 = scalar_select %p174, %s18, 1
      %s176 = scalar_lea.vmem %s2, %s175
      %p177 = scmp.eq.s32.totalorder %s19, 0
      // Predicated region
      $region25: #{_lambda_.30} parent=23 // pred_check
        %p178 = pneg %p177
      $region26: #{_lambda_.30} parent=23 // pred_check_branch
        %180 = sbr.rel (%p178) target = $region28
      $region27: #{_lambda_.30} parent=23 // pred_region
        %vm181 = vcmask 57344
        %182 = vst.msk [vmem:[#allocation2] sm:$0x1] %vm181, 0.0
        %183 = vst.msk [vmem:[#allocation3] sm:$0x1] %vm181, 0.0
      $region28: #{_lambda_.30} parent=23 // pred_fallthru
        _
      %v184 = vld [vmem:[%s169] sm:$0xff]
      %v185 = vld [vmem:[%s169 + $0x8] sm:$0xff]
      %v186 = vld [vmem:[%s169 + $0x10] sm:$0xff]
      %v187 = vld [vmem:[%s169 + $0x18] sm:$0xff]
      %v188 = vld [vmem:[%s169 + $0x20] sm:$0xff]
      %v189 = vld [vmem:[%s169 + $0x28] sm:$0xff]
      %v190 = vld [vmem:[%s169 + $0x30] sm:$0xff]
      %v191 = vld [vmem:[%s169 + $0x38] sm:$0xff]
      %v192 = vld [vmem:[#allocation2] sm:$0x1]
      %vm193 = vcmask 64512
      %v194 = vsel %vm193, %v184, 0.0
      %v195 = vsel %vm193, %v185, 0.0
      %v196 = vadd.f32 %v194, %v195
      %v197 = vsel %vm193, %v186, 0.0
      %v198 = vadd.f32 %v196, %v197
      %v199 = vsel %vm193, %v187, 0.0
      %v200 = vadd.f32 %v198, %v199
      %v201 = vsel %vm193, %v188, 0.0
      %v202 = vadd.f32 %v200, %v201
      %v203 = vsel %vm193, %v189, 0.0
      %v204 = vadd.f32 %v202, %v203
      %v205 = vsel %vm193, %v190, 0.0
      %v206 = vadd.f32 %v204, %v205
      %v207 = vsel %vm193, %v191, 0.0
      %v208 = vadd.f32 %v206, %v207
      %v209 = vrot.slane %v208, 4
      %v210 = vadd.f32 %v208, %v209
      %v211 = vrot.slane %v210, 2
      %v212 = vadd.f32 %v210, %v211
      %v213 = vrot.slane %v212, 1
      %v214 = vadd.f32 %v212, %v213
      %v215 = vadd.f32 %v192, %v214
      %vm216 = vcmask 57344
      %217 = vst.msk [vmem:[#allocation2] sm:$0x1] %vm216, %v215
      %v218 = vld [vmem:[#allocation3] sm:$0x1]
      %v219 = vmul.f32 %v184, %v184
      %v220 = vmul.f32 %v185, %v185
      %v221 = vmul.f32 %v186, %v186
      %v222 = vmul.f32 %v187, %v187
      %v223 = vmul.f32 %v188, %v188
      %v224 = vmul.f32 %v189, %v189
      %v225 = vmul.f32 %v190, %v190
      %v226 = vmul.f32 %v191, %v191
      %v227 = vsel %vm193, %v219, 0.0
      %v228 = vsel %vm193, %v220, 0.0
      %v229 = vadd.f32 %v227, %v228
      %v230 = vsel %vm193, %v221, 0.0
      %v231 = vadd.f32 %v229, %v230
      %v232 = vsel %vm193, %v222, 0.0
      %v233 = vadd.f32 %v231, %v232
      %v234 = vsel %vm193, %v223, 0.0
      %v235 = vadd.f32 %v233, %v234
      %v236 = vsel %vm193, %v224, 0.0
      %v237 = vadd.f32 %v235, %v236
      %v238 = vsel %vm193, %v225, 0.0
      %v239 = vadd.f32 %v237, %v238
      %v240 = vsel %vm193, %v226, 0.0
      %v241 = vadd.f32 %v239, %v240
      %v242 = vrot.slane %v241, 4
      %v243 = vadd.f32 %v241, %v242
      %v244 = vrot.slane %v243, 2
      %v245 = vadd.f32 %v243, %v244
      %v246 = vrot.slane %v245, 1
      %v247 = vadd.f32 %v245, %v246
      %v248 = vadd.f32 %v218, %v247
      %249 = vst.msk [vmem:[#allocation3] sm:$0x1] %vm216, %v248
      // Predicated region
      $region29: #{_lambda_.30} parent=23 // pred_check
        %p250 = pneg %p177
      $region30: #{_lambda_.30} parent=23 // pred_check_branch
        %252 = sbr.rel (%p250) target = $region32
      $region31: #{_lambda_.30} parent=23 // pred_region
        %v253 = vld [vmem:[#allocation2] sm:$0x1]
        %254 = vst.msk [vmem:[%s173] sm:$0x1] %vm216, %v253
        %v255 = vld [vmem:[#allocation3] sm:$0x1]
        %256 = vst.msk [vmem:[%s176] sm:$0x1] %vm216, %v255
      $region32: #{_lambda_.30} parent=23 // pred_fallthru
        _
      %p257 = scmp.lt.s32.totalorder %s18, 1
      %s258 = scalar_select %p257, %s18, 1
      %s259 = scalar_lea.vmem %s1, %s258
      %p260 = scmp.lt.s32.totalorder %s18, 1
      %s261 = scalar_select %p260, %s18, 1
      %s262 = scalar_lea.vmem %s2, %s261
      // Predicated region
      $region33: #{_lambda_.30} parent=23 // pred_check
        %p263 = pneg %p72
      $region34: #{_lambda_.30} parent=23 // pred_check_branch
        %265 = sbr.rel (%p263) target = $region36
      $region35: #{_lambda_.30} parent=23 // pred_region
        _
      $region36: #{_lambda_.30} parent=23 // pred_fallthru
        _
      // Predicated region
      $region37: #{_lambda_.30} parent=23 // pred_check
        %p266 = pneg %p98
      $region38: #{_lambda_.30} parent=23 // pred_check_branch
        %268 = sbr.rel (%p266) target = $region40
      $region39: #{_lambda_.30} parent=23 // pred_region
        _
      $region40: #{_lambda_.30} parent=23 // pred_fallthru
        _
    $region24: #{_lambda_.30} parent=5 // pred_fallthru
      _
    %p269 = scmp.le.s32.totalorder 2, %s9
    // Predicated region
    $region41: #{_lambda_.30} parent=5 // pred_check
      %p270 = pneg %p269
    $region42: #{_lambda_.30} parent=5 // pred_check_branch
      %272 = sbr.rel (%p270) target = $region44
    $region43: #{_lambda_.30} parent=5 // pred_region
      %s273 = ssub.s32 %s9, 2
      // Predicated region
      $region45: #{_lambda_.30} parent=43 // pred_check
        %p274 = pneg %p78
      $region46: #{_lambda_.30} parent=43 // pred_check_branch
        %276 = sbr.rel (%p274) target = $region48
      $region47: #{_lambda_.30} parent=43 // pred_region
        %p277 = scmp.lt.s32.totalorder %s20, 1
        %s278 = scalar_select %p277, %s20, 1
        %s279 = scalar_lea.vmem %s1, %s278
      $region48: #{_lambda_.30} parent=43 // pred_fallthru
        _
      // Predicated region
      $region49: #{_lambda_.30} parent=43 // pred_check
        %p280 = pneg %p104
      $region50: #{_lambda_.30} parent=43 // pred_check_branch
        %282 = sbr.rel (%p280) target = $region52
      $region51: #{_lambda_.30} parent=43 // pred_region
        %p283 = scmp.lt.s32.totalorder %s20, 1
        %s284 = scalar_select %p283, %s20, 1
        %s285 = scalar_lea.vmem %s2, %s284
      $region52: #{_lambda_.30} parent=43 // pred_fallthru
        _
    $region44: #{_lambda_.30} parent=5 // pred_fallthru
      _
  $region6: #{_lambda_.30} parent=0 // loop_footer
    %s13 = sadd.s32 1, %s9
  $region7: #{_lambda_.30} parent=0 // loop_footer_branch
    %8 = sbr.rel target = $region3
  $region8: #{_lambda_.30} parent=0 // loop_exit
    _

// kernel: _lambda_.31
$region0: #{_lambda_.31}
  #allocation0 [shape = 'u32[]', space=smem, size = 0x4, offset = 0x4, fixed_abs, tag = 'smem constant byte address 0x4 - core index']
  #allocation1 [shape = 'u32[144,128]{1,0:T(1,128)}', space=vmem, size = 0x12000, scoped, tag = 'internal scratch']
  %s0 = inlined_call_operand.vmem [shape: f32[2,64,8], index: 0, kind: input, shape index: {}]
  %s1 = inlined_call_operand.vmem [shape: f32[2,1,8], index: 1, kind: input, shape index: {}]
  %s2 = inlined_call_operand.vmem [shape: f32[2,1,8], index: 2, kind: input, shape index: {}]
  %s3 = inlined_call_operand.vmem [shape: bf16[2,64,8], index: 3, kind: output, shape index: {}]
  %s4 = sld [smem:[#allocation0]]
  $region45: #{_lambda_.31} parent=0
    _
  %s6 = ssub.s32 1, %s4
  %s7 = scalar_select 0, %s6, %s4
  loop: start=0, step=1, limit=4
  $region2: #{_lambda_.31} parent=0 // loop_pre_header
    _
  $region3: #{_lambda_.31} parent=0 // loop_header
    %s9 = sphi 0, %s13
    %p10 = scmp.ge.s32.totalorder %s9, 4
    %s16 = sphi 0, %s28
    %s17 = sphi 0, %s24
    %s18 = sphi 0, %s16
    %s19 = sphi 0, %s17
    %s20 = sphi 0, %s18
    %s21 = sphi 0, %s19
    %s33 = sphi 0, %s35
    %s36 = sphi 0, %s33
    %s37 = sphi 0, %s36
    %s53 = sphi 0, %s37
    %s59 = sphi 0, %s61
    %s62 = sphi 0, %s59
    %s63 = sphi 0, %s62
    %s79 = sphi 0, %s63
    %s85 = sphi 0, %s87
    %s88 = sphi 0, %s85
    %s89 = sphi 0, %s88
    %s105 = sphi 0, %s89
    %s113 = sphi 0, %s115
    %s116 = sphi 0, %s113
    %s117 = sphi 0, %s116
    %s133 = sphi 0, %s117
  $region4: #{_lambda_.31} parent=0 // loop_header_branch
    %12 = sbr.rel (%p10) target = $region8
  $region5: #{_lambda_.31} parent=0 // loop_body
    %s14 = ssub.s32 %s9, 1
    %s15 = ssub.s32 %s9, 2
    %s22 = sadd.s32 1, %s17
    %p23 = scmp.ge.s32.totalorder %s22, 1
    %s24 = scalar_select %p23, 0, %s22
    %s25 = sadd.s32 1, %s16
    %s26 = scalar_select %p23, %s25, %s16
    %p27 = scmp.ge.s32.totalorder %s26, 2
    %s28 = scalar_select %p27, 0, %s26
    %s29 = ssub.s32 %s16, %s28
    %s30 = ssub.s32 %s17, %s24
    %s31 = sor.u32 %s29, %s30
    %p32 = scmp.eq.s32.totalorder %s31, 0
    %s34 = sadd.s32 %s33, 1
    %s35 = scalar_select %p32, %s33, %s34
    %p38 = pneg %p32
    %p39 = scmp.eq.s32.totalorder %s9, 1
    %p40 = por %p38, %p39
    %p41 = scmp.ne.s32.totalorder %s33, %s36
    %p42 = scmp.eq.s32.totalorder %s9, 0
    %p43 = por %p41, %p42
    %p44 = scmp.ne.s32.totalorder %s33, %s36
    %p45 = scmp.eq.s32.totalorder %s14, 1
    %p46 = por %p44, %p45
    %p47 = scmp.ne.s32.totalorder %s36, %s37
    %p48 = scmp.eq.s32.totalorder %s14, 0
    %p49 = por %p47, %p48
    %p50 = scmp.ne.s32.totalorder %s36, %s37
    %p51 = scmp.eq.s32.totalorder %s15, 1
    %p52 = por %p50, %p51
    %p54 = scmp.ne.s32.totalorder %s37, %s53
    %p55 = scmp.eq.s32.totalorder %s15, 0
    %p56 = por %p54, %p55
    %s57 = ssub.s32 %s16, %s28
    %p58 = scmp.eq.s32.totalorder %s57, 0
    %s60 = sadd.s32 %s59, 1
    %s61 = scalar_select %p58, %s59, %s60
    %p64 = pneg %p58
    %p65 = scmp.eq.s32.totalorder %s9, 1
    %p66 = por %p64, %p65
    %p67 = scmp.ne.s32.totalorder %s59, %s62
    %p68 = scmp.eq.s32.totalorder %s9, 0
    %p69 = por %p67, %p68
    %p70 = scmp.ne.s32.totalorder %s59, %s62
    %p71 = scmp.eq.s32.totalorder %s14, 1
    %p72 = por %p70, %p71
    %p73 = scmp.ne.s32.totalorder %s62, %s63
    %p74 = scmp.eq.s32.totalorder %s14, 0
    %p75 = por %p73, %p74
    %p76 = scmp.ne.s32.totalorder %s62, %s63
    %p77 = scmp.eq.s32.totalorder %s15, 1
    %p78 = por %p76, %p77
    %p80 = scmp.ne.s32.totalorder %s63, %s79
    %p81 = scmp.eq.s32.totalorder %s15, 0
    %p82 = por %p80, %p81
    %s83 = ssub.s32 %s16, %s28
    %p84 = scmp.eq.s32.totalorder %s83, 0
    %s86 = sadd.s32 %s85, 1
    %s87 = scalar_select %p84, %s85, %s86
    %p90 = pneg %p84
    %p91 = scmp.eq.s32.totalorder %s9, 1
    %p92 = por %p90, %p91
    %p93 = scmp.ne.s32.totalorder %s85, %s88
    %p94 = scmp.eq.s32.totalorder %s9, 0
    %p95 = por %p93, %p94
    %p96 = scmp.ne.s32.totalorder %s85, %s88
    %p97 = scmp.eq.s32.totalorder %s14, 1
    %p98 = por %p96, %p97
    %p99 = scmp.ne.s32.totalorder %s88, %s89
    %p100 = scmp.eq.s32.totalorder %s14, 0
    %p101 = por %p99, %p100
    %p102 = scmp.ne.s32.totalorder %s88, %s89
    %p103 = scmp.eq.s32.totalorder %s15, 1
    %p104 = por %p102, %p103
    %p106 = scmp.ne.s32.totalorder %s89, %s105
    %p107 = scmp.eq.s32.totalorder %s15, 0
    %p108 = por %p106, %p107
    %s109 = ssub.s32 %s16, %s28
    %s110 = ssub.s32 %s17, %s24
    %s111 = sor.u32 %s109, %s110
    %p112 = scmp.eq.s32.totalorder %s111, 0
    %s114 = sadd.s32 %s113, 1
    %s115 = scalar_select %p112, %s113, %s114
    %p118 = pneg %p112
    %p119 = scmp.eq.s32.totalorder %s9, 1
    %p120 = por %p118, %p119
    %p121 = scmp.ne.s32.totalorder %s113, %s116
    %p122 = scmp.eq.s32.totalorder %s9, 0
    %p123 = por %p121, %p122
    %p124 = scmp.ne.s32.totalorder %s113, %s116
    %p125 = scmp.eq.s32.totalorder %s14, 1
    %p126 = por %p124, %p125
    %p127 = scmp.ne.s32.totalorder %s116, %s117
    %p128 = scmp.eq.s32.totalorder %s14, 0
    %p129 = por %p127, %p128
    %p130 = scmp.ne.s32.totalorder %s116, %s117
    %p131 = scmp.eq.s32.totalorder %s15, 1
    %p132 = por %p130, %p131
    %p134 = scmp.ne.s32.totalorder %s117, %s133
    %p135 = scmp.eq.s32.totalorder %s15, 0
    %p136 = por %p134, %p135
    %p137 = scmp.le.s32.totalorder 1, %s9
    %p138 = scmp.lt.s32.totalorder %s9, 3
    %p139 = pnand %p137, %p138
    %p140 = pneg %p139
    // Predicated region
    $region9: #{_lambda_.31} parent=5 // pred_check
      _
    $region10: #{_lambda_.31} parent=5 // pred_check_branch
      %142 = sbr.rel (%p139) target = $region12
    $region11: #{_lambda_.31} parent=5 // pred_region
      %s143 = ssub.s32 %s9, 1
    $region12: #{_lambda_.31} parent=5 // pred_fallthru
      _
    %p144 = scmp.lt.s32.totalorder %s9, 2
    // Predicated region
    $region13: #{_lambda_.31} parent=5 // pred_check
      %p145 = pneg %p144
    $region14: #{_lambda_.31} parent=5 // pred_check_branch
      %147 = sbr.rel (%p145) target = $region16
    $region15: #{_lambda_.31} parent=5 // pred_region
      // Predicated region
      $region17: #{_lambda_.31} parent=15 // pred_check
        %p148 = pneg %p43
      $region18: #{_lambda_.31} parent=15 // pred_check_branch
        %150 = sbr.rel (%p148) target = $region20
      $region19: #{_lambda_.31} parent=15 // pred_region
        %s151 = smul.u32 8, %s17
        %p152 = scmp.lt.s32.totalorder %s16, 1
        %s153 = scalar_select %p152, %s16, 1
        %p154 = scmp.lt.s32.totalorder %s151, 7
        %s155 = scalar_select %p154, %s151, 7
        %s156 = smul.addr %s153, 8
        %s157 = sadd.s32 %s155, %s156
        %s158 = smul.addr %s157, 8
        %s159 = scalar_lea.vmem %s0, %s158
        %s160 = smul.u32 8, %s17
      $region20: #{_lambda_.31} parent=15 // pred_fallthru
        _
      // Predicated region
      $region21: #{_lambda_.31} parent=15 // pred_check
        %p161 = pneg %p69
      $region22: #{_lambda_.31} parent=15 // pred_check_branch
        %163 = sbr.rel (%p161) target = $region24
      $region23: #{_lambda_.31} parent=15 // pred_region
        %p164 = scmp.lt.s32.totalorder %s16, 1
        %s165 = scalar_select %p164, %s16, 1
        %s166 = scalar_lea.vmem %s1, %s165
      $region24: #{_lambda_.31} parent=15 // pred_fallthru
        _
      // Predicated region
      $region25: #{_lambda_.31} parent=15 // pred_check
        %p167 = pneg %p95
      $region26: #{_lambda_.31} parent=15 // pred_check_branch
        %169 = sbr.rel (%p167) target = $region28
      $region27: #{_lambda_.31} parent=15 // pred_region
        %p170 = scmp.lt.s32.totalorder %s16, 1
        %s171 = scalar_select %p170, %s16, 1
        %s172 = scalar_lea.vmem %s2, %s171
      $region28: #{_lambda_.31} parent=15 // pred_fallthru
        _
    $region16: #{_lambda_.31} parent=5 // pred_fallthru
      _
    %p173 = scmp.le.s32.totalorder 1, %s9
    %p174 = scmp.lt.s32.totalorder %s9, 3
    %p175 = pnand %p173, %p174
    %p176 = pneg %p175
    // Predicated region
    $region29: #{_lambda_.31} parent=5 // pred_check
      _
    $region30: #{_lambda_.31} parent=5 // pred_check_branch
      %178 = sbr.rel (%p175) target = $region32
    $region31: #{_lambda_.31} parent=5 // pred_region
      %s179 = ssub.s32 %s9, 1
      %s180 = smul.u32 8, %s19
      %p181 = scmp.lt.s32.totalorder %s18, 1
      %s182 = scalar_select %p181, %s18, 1
      %p183 = scmp.lt.s32.totalorder %s180, 7
      %s184 = scalar_select %p183, %s180, 7
      %s185 = smul.addr %s182, 8
      %s186 = sadd.s32 %s184, %s185
      %s187 = smul.addr %s186, 8
      %s188 = scalar_lea.vmem %s0, %s187
      %p189 = pneg %p49
      %p190 = pneg %p46
      %p191 = scmp.lt.s32.totalorder %s18, 1
      %s192 = scalar_select %p191, %s18, 1
      %s193 = scalar_lea.vmem %s1, %s192
      %p194 = pneg %p75
      %p195 = pneg %p72
      %p196 = scmp.lt.s32.totalorder %s18, 1
      %s197 = scalar_select %p196, %s18, 1
      %s198 = scalar_lea.vmem %s2, %s197
      %p199 = pneg %p101
      %p200 = pneg %p98
      %p201 = pneg %p129
      %p202 = pneg %p126
      %s203 = smul.u32 8, %s19
      %p204 = scmp.lt.s32.totalorder %s18, 1
      %s205 = scalar_select %p204, %s18, 1
      %p206 = scmp.lt.s32.totalorder %s203, 7
      %s207 = scalar_select %p206, %s203, 7
      %s208 = smul.addr %s205, 8
      %s209 = sadd.s32 %s207, %s208
      %s210 = smul.addr %s209, 4
      %s211 = scalar_lea.vmem %s3, %s210
      %s212 = smul.u32 8, %s19
      %p213 = scmp.lt.s32.totalorder %s18, 1
      %s214 = scalar_select %p213, %s18, 1
      %p215 = scmp.lt.s32.totalorder %s212, 7
      %s216 = scalar_select %p215, %s212, 7
      %s217 = smul.addr %s214, 8
      %s218 = sadd.s32 %s216, %s217
      %s219 = smul.addr %s218, 8
      %s220 = scalar_lea.vmem %s0, %s219
      %s221 = smul.u32 8, %s19
      %p222 = scmp.lt.s32.totalorder %s18, 1
      %s223 = scalar_select %p222, %s18, 1
      %s224 = scalar_lea.vmem %s1, %s223
      %p225 = scmp.lt.s32.totalorder %s18, 1
      %s226 = scalar_select %p225, %s18, 1
      %s227 = scalar_lea.vmem %s2, %s226
      %s228 = smul.u32 8, %s19
      %p229 = scmp.lt.s32.totalorder %s18, 1
      %s230 = scalar_select %p229, %s18, 1
      %p231 = scmp.lt.s32.totalorder %s228, 7
      %s232 = scalar_select %p231, %s228, 7
      %s233 = smul.addr %s230, 8
      %s234 = sadd.s32 %s232, %s233
      %s235 = smul.addr %s234, 4
      %s236 = scalar_lea.vmem %s3, %s235
      %s237 = smul.u32 8, %s19
      %v238 = vld [vmem:[%s220] sm:$0xff]
      %v239 = vld [vmem:[%s220 + $0x8] sm:$0xff]
      %v240 = vld [vmem:[%s220 + $0x10] sm:$0xff]
      %v241 = vld [vmem:[%s220 + $0x18] sm:$0xff]
      %v242 = vld [vmem:[%s220 + $0x20] sm:$0xff]
      %v243 = vld [vmem:[%s220 + $0x28] sm:$0xff]
      %v244 = vld [vmem:[%s220 + $0x30] sm:$0xff]
      %v245 = vld [vmem:[%s220 + $0x38] sm:$0xff]
      %v246 = vld [vmem:[%s224] sm:$0x1]
      %v248 = vlaneseq
      %v249 = vshrl.u32 %v248, 7
      %v250 = vsub.s32 0, %v249
      %v251 = vrot.slane %v246, %v250
      %v253 = vmul.f32 %v238, %v251
      %v254 = vmul.f32 %v239, %v251
      %v255 = vmul.f32 %v240, %v251
      %v256 = vmul.f32 %v241, %v251
      %v257 = vmul.f32 %v242, %v251
      %v258 = vmul.f32 %v243, %v251
      %v259 = vmul.f32 %v244, %v251
      %v260 = vmul.f32 %v245, %v251
      %v261 = vld [vmem:[%s227] sm:$0x1]
      %v263 = vlaneseq
      %v264 = vshrl.u32 %v263, 7
      %v265 = vsub.s32 0, %v264
      %v266 = vrot.slane %v261, %v265
      %v268 = vadd.f32 %v253, %v266
      %v269 = vadd.f32 %v254, %v266
      %v270 = vadd.f32 %v255, %v266
      %v271 = vadd.f32 %v256, %v266
      %v272 = vadd.f32 %v257, %v266
      %v273 = vadd.f32 %v258, %v266
      %v274 = vadd.f32 %v259, %v266
      %v275 = vadd.f32 %v260, %v266
      %v276 = vxor.u32 %v268, 2147483648
      %v277 = vxor.u32 %v269, 2147483648
      %v278 = vxor.u32 %v270, 2147483648
      %v279 = vxor.u32 %v271, 2147483648
      %v280 = vxor.u32 %v272, 2147483648
      %v281 = vxor.u32 %v273, 2147483648
      %v282 = vxor.u32 %v274, 2147483648
      %v283 = vxor.u32 %v275, 2147483648
      %v284 = vmul.f32 %v276, 1.442695
      %v285 = vpow.pop %v284
      %v286 = vmul.f32 %v277, 1.442695
      %v287 = vpow.pop %v286
      %v288 = vmul.f32 %v278, 1.442695
      %v289 = vpow.pop %v288
      %v290 = vmul.f32 %v279, 1.442695
      %v291 = vpow.pop %v290
      %v292 = vmul.f32 %v280, 1.442695
      %v293 = vpow.pop %v292
      %v294 = vmul.f32 %v281, 1.442695
      %v295 = vpow.pop %v294
      %v296 = vmul.f32 %v282, 1.442695
      %v297 = vpow.pop %v296
      %v298 = vmul.f32 %v283, 1.442695
      %v299 = vpow.pop %v298
      %v300 = vadd.f32 %v285, 1.0
      %v301 = vadd.f32 %v287, 1.0
      %v302 = vadd.f32 %v289, 1.0
      %v303 = vadd.f32 %v291, 1.0
      %v304 = vadd.f32 %v293, 1.0
      %v305 = vadd.f32 %v295, 1.0
      %v306 = vadd.f32 %v297, 1.0
      %v307 = vadd.f32 %v299, 1.0
      %v308 = vrcp.pop %v300
      %v309 = vmul.f32 1.0, %v308
      %v310 = vrcp.pop %v301
      %v311 = vmul.f32 1.0, %v310
      %v312 = vrcp.pop %v302
      %v313 = vmul.f32 1.0, %v312
      %v314 = vrcp.pop %v303
      %v315 = vmul.f32 1.0, %v314
      %v316 = vrcp.pop %v304
      %v317 = vmul.f32 1.0, %v316
      %v318 = vrcp.pop %v305
      %v319 = vmul.f32 1.0, %v318
      %v320 = vrcp.pop %v306
      %v321 = vmul.f32 1.0, %v320
      %v322 = vrcp.pop %v307
      %v323 = vmul.f32 1.0, %v322
      %v324 = vmul.f32 %v268, %v309
      %v325 = vmul.f32 %v269, %v311
      %v326 = vmul.f32 %v270, %v313
      %v327 = vmul.f32 %v271, %v315
      %v328 = vmul.f32 %v272, %v317
      %v329 = vmul.f32 %v273, %v319
      %v330 = vmul.f32 %v274, %v321
      %v331 = vmul.f32 %v275, %v323
      %v332 = vpack.c.bf16 %v325, %v324
      %v333 = vpack.c.bf16 %v327, %v326
      %v334 = vpack.c.bf16 %v329, %v328
      %v335 = vpack.c.bf16 %v331, %v330
      %v340 = vunpack.c.l.b16 %v332
      %v341 = vunpack.c.h.b16 %v332
      %v342 = vunpack.c.l.b16 %v333
      %v343 = vunpack.c.h.b16 %v333
      %v344 = vunpack.c.l.b16 %v334
      %v345 = vunpack.c.h.b16 %v334
      %v346 = vunpack.c.l.b16 %v335
      %v347 = vunpack.c.h.b16 %v335
      %v348 = vpack.c.b16 %v340, %v340
      %v349 = vpack.c.b16 %v341, %v341
      %v350 = vpack.c.b16 %v342, %v342
      %v351 = vpack.c.b16 %v343, %v343
      %v352 = vpack.c.b16 %v344, %v344
      %v353 = vpack.c.b16 %v345, %v345
      %v354 = vpack.c.b16 %v346, %v346
      %v355 = vpack.c.b16 %v347, %v347
      %vm364 = vcmask 60416
      %365 = vst.msk [vmem:[%s236] sm:$0xf] %vm364, %v348
      %366 = vst.msk [vmem:[%s236 + $0x4] sm:$0xf] %vm364, %v349
      %367 = vst.msk [vmem:[%s236 + $0x8] sm:$0xf] %vm364, %v350
      %368 = vst.msk [vmem:[%s236 + $0xc] sm:$0xf] %vm364, %v351
      %369 = vst.msk [vmem:[%s236 + $0x10] sm:$0xf] %vm364, %v352
      %370 = vst.msk [vmem:[%s236 + $0x14] sm:$0xf] %vm364, %v353
      %371 = vst.msk [vmem:[%s236 + $0x18] sm:$0xf] %vm364, %v354
      %372 = vst.msk [vmem:[%s236 + $0x1c] sm:$0xf] %vm364, %v355
      %s373 = smul.u32 8, %s19
      %p374 = scmp.lt.s32.totalorder %s18, 1
      %s375 = scalar_select %p374, %s18, 1
      %p376 = scmp.lt.s32.totalorder %s373, 7
      %s377 = scalar_select %p376, %s373, 7
      %s378 = smul.addr %s375, 8
      %s379 = sadd.s32 %s377, %s378
      %s380 = smul.addr %s379, 4
      %s381 = scalar_lea.vmem %s3, %s380
      // Predicated region
      $region33: #{_lambda_.31} parent=31 // pred_check
        %p382 = pneg %p126
      $region34: #{_lambda_.31} parent=31 // pred_check_branch
        %384 = sbr.rel (%p382) target = $region36
      $region35: #{_lambda_.31} parent=31 // pred_region
        %s385 = smul.u32 8, %s19
      $region36: #{_lambda_.31} parent=31 // pred_fallthru
        _
    $region32: #{_lambda_.31} parent=5 // pred_fallthru
      _
    %p386 = scmp.le.s32.totalorder 2, %s9
    // Predicated region
    $region37: #{_lambda_.31} parent=5 // pred_check
      %p387 = pneg %p386
    $region38: #{_lambda_.31} parent=5 // pred_check_branch
      %389 = sbr.rel (%p387) target = $region40
    $region39: #{_lambda_.31} parent=5 // pred_region
      %s390 = ssub.s32 %s9, 2
      // Predicated region
      $region41: #{_lambda_.31} parent=39 // pred_check
        %p391 = pneg %p132
      $region42: #{_lambda_.31} parent=39 // pred_check_branch
        %393 = sbr.rel (%p391) target = $region44
      $region43: #{_lambda_.31} parent=39 // pred_region
        %s394 = smul.u32 8, %s21
        %p395 = scmp.lt.s32.totalorder %s20, 1
        %s396 = scalar_select %p395, %s20, 1
        %p397 = scmp.lt.s32.totalorder %s394, 7
        %s398 = scalar_select %p397, %s394, 7
        %s399 = smul.addr %s396, 8
        %s400 = sadd.s32 %s398, %s399
        %s401 = smul.addr %s400, 4
        %s402 = scalar_lea.vmem %s3, %s401
      $region44: #{_lambda_.31} parent=39 // pred_fallthru
        _
    $region40: #{_lambda_.31} parent=5 // pred_fallthru
      _
  $region6: #{_lambda_.31} parent=0 // loop_footer
    %s13 = sadd.s32 1, %s9
  $region7: #{_lambda_.31} parent=0 // loop_footer_branch
    %8 = sbr.rel target = $region3
  $region8: #{_lambda_.31} parent=0 // loop_exit
    _

// kernel: _lambda_.33
$region0: #{_lambda_.33}
  #allocation0 [shape = 'u32[]', space=smem, size = 0x4, offset = 0x4, fixed_abs, tag = 'smem constant byte address 0x4 - core index']
  #allocation1 [shape = 'u32[144,128]{1,0:T(1,128)}', space=vmem, size = 0x12000, scoped, tag = 'internal scratch']
  #allocation2 [shape = 'f32[1,16]{1,0:T(1,128)}', space=vmem, size = 0x200, scoped, tag = 'scratch operand']
  #allocation3 [shape = 'f32[1,16]{1,0:T(1,128)}', space=vmem, size = 0x200, scoped, tag = 'scratch operand']
  %s0 = inlined_call_operand.vmem [shape: f32[2,64,16], index: 0, kind: input, shape index: {}]
  %s1 = inlined_call_operand.vmem [shape: f32[2,1,16], index: 1, kind: output, shape index: {0}]
  %s2 = inlined_call_operand.vmem [shape: f32[2,1,16], index: 2, kind: output, shape index: {1}]
  %3 = xla_tuple %s1, %s2
  %s4 = sld [smem:[#allocation0]]
  $region53: #{_lambda_.33} parent=0
    _
  %s6 = ssub.s32 1, %s4
  %s7 = scalar_select 0, %s6, %s4
  loop: start=0, step=1, limit=4
  $region2: #{_lambda_.33} parent=0 // loop_pre_header
    _
  $region3: #{_lambda_.33} parent=0 // loop_header
    %s9 = sphi 0, %s13
    %p10 = scmp.ge.s32.totalorder %s9, 4
    %s16 = sphi 0, %s28
    %s17 = sphi 0, %s24
    %s18 = sphi 0, %s16
    %s19 = sphi 0, %s17
    %s20 = sphi 0, %s18
    %s21 = sphi 0, %s19
    %s33 = sphi 0, %s35
    %s36 = sphi 0, %s33
    %s37 = sphi 0, %s36
    %s53 = sphi 0, %s37
    %s59 = sphi 0, %s61
    %s62 = sphi 0, %s59
    %s63 = sphi 0, %s62
    %s79 = sphi 0, %s63
    %s85 = sphi 0, %s87
    %s88 = sphi 0, %s85
    %s89 = sphi 0, %s88
    %s105 = sphi 0, %s89
  $region4: #{_lambda_.33} parent=0 // loop_header_branch
    %12 = sbr.rel (%p10) target = $region8
  $region5: #{_lambda_.33} parent=0 // loop_body
    %s14 = ssub.s32 %s9, 1
    %s15 = ssub.s32 %s9, 2
    %s22 = sadd.s32 1, %s17
    %p23 = scmp.ge.s32.totalorder %s22, 1
    %s24 = scalar_select %p23, 0, %s22
    %s25 = sadd.s32 1, %s16
    %s26 = scalar_select %p23, %s25, %s16
    %p27 = scmp.ge.s32.totalorder %s26, 2
    %s28 = scalar_select %p27, 0, %s26
    %s29 = ssub.s32 %s16, %s28
    %s30 = ssub.s32 %s17, %s24
    %s31 = sor.u32 %s29, %s30
    %p32 = scmp.eq.s32.totalorder %s31, 0
    %s34 = sadd.s32 %s33, 1
    %s35 = scalar_select %p32, %s33, %s34
    %p38 = pneg %p32
    %p39 = scmp.eq.s32.totalorder %s9, 1
    %p40 = por %p38, %p39
    %p41 = scmp.ne.s32.totalorder %s33, %s36
    %p42 = scmp.eq.s32.totalorder %s9, 0
    %p43 = por %p41, %p42
    %p44 = scmp.ne.s32.totalorder %s33, %s36
    %p45 = scmp.eq.s32.totalorder %s14, 1
    %p46 = por %p44, %p45
    %p47 = scmp.ne.s32.totalorder %s36, %s37
    %p48 = scmp.eq.s32.totalorder %s14, 0
    %p49 = por %p47, %p48
    %p50 = scmp.ne.s32.totalorder %s36, %s37
    %p51 = scmp.eq.s32.totalorder %s15, 1
    %p52 = por %p50, %p51
    %p54 = scmp.ne.s32.totalorder %s37, %s53
    %p55 = scmp.eq.s32.totalorder %s15, 0
    %p56 = por %p54, %p55
    %s57 = ssub.s32 %s16, %s28
    %p58 = scmp.eq.s32.totalorder %s57, 0
    %s60 = sadd.s32 %s59, 1
    %s61 = scalar_select %p58, %s59, %s60
    %p64 = pneg %p58
    %p65 = scmp.eq.s32.totalorder %s9, 1
    %p66 = por %p64, %p65
    %p67 = scmp.ne.s32.totalorder %s59, %s62
    %p68 = scmp.eq.s32.totalorder %s9, 0
    %p69 = por %p67, %p68
    %p70 = scmp.ne.s32.totalorder %s59, %s62
    %p71 = scmp.eq.s32.totalorder %s14, 1
    %p72 = por %p70, %p71
    %p73 = scmp.ne.s32.totalorder %s62, %s63
    %p74 = scmp.eq.s32.totalorder %s14, 0
    %p75 = por %p73, %p74
    %p76 = scmp.ne.s32.totalorder %s62, %s63
    %p77 = scmp.eq.s32.totalorder %s15, 1
    %p78 = por %p76, %p77
    %p80 = scmp.ne.s32.totalorder %s63, %s79
    %p81 = scmp.eq.s32.totalorder %s15, 0
    %p82 = por %p80, %p81
    %s83 = ssub.s32 %s16, %s28
    %p84 = scmp.eq.s32.totalorder %s83, 0
    %s86 = sadd.s32 %s85, 1
    %s87 = scalar_select %p84, %s85, %s86
    %p90 = pneg %p84
    %p91 = scmp.eq.s32.totalorder %s9, 1
    %p92 = por %p90, %p91
    %p93 = scmp.ne.s32.totalorder %s85, %s88
    %p94 = scmp.eq.s32.totalorder %s9, 0
    %p95 = por %p93, %p94
    %p96 = scmp.ne.s32.totalorder %s85, %s88
    %p97 = scmp.eq.s32.totalorder %s14, 1
    %p98 = por %p96, %p97
    %p99 = scmp.ne.s32.totalorder %s88, %s89
    %p100 = scmp.eq.s32.totalorder %s14, 0
    %p101 = por %p99, %p100
    %p102 = scmp.ne.s32.totalorder %s88, %s89
    %p103 = scmp.eq.s32.totalorder %s15, 1
    %p104 = por %p102, %p103
    %p106 = scmp.ne.s32.totalorder %s89, %s105
    %p107 = scmp.eq.s32.totalorder %s15, 0
    %p108 = por %p106, %p107
    %p109 = scmp.le.s32.totalorder 1, %s9
    %p110 = scmp.lt.s32.totalorder %s9, 3
    %p111 = pnand %p109, %p110
    %p112 = pneg %p111
    // Predicated region
    $region9: #{_lambda_.33} parent=5 // pred_check
      _
    $region10: #{_lambda_.33} parent=5 // pred_check_branch
      %114 = sbr.rel (%p111) target = $region12
    $region11: #{_lambda_.33} parent=5 // pred_region
      %s115 = ssub.s32 %s9, 1
    $region12: #{_lambda_.33} parent=5 // pred_fallthru
      _
    %p116 = scmp.lt.s32.totalorder %s9, 2
    // Predicated region
    $region13: #{_lambda_.33} parent=5 // pred_check
      %p117 = pneg %p116
    $region14: #{_lambda_.33} parent=5 // pred_check_branch
      %119 = sbr.rel (%p117) target = $region16
    $region15: #{_lambda_.33} parent=5 // pred_region
      // Predicated region
      $region17: #{_lambda_.33} parent=15 // pred_check
        %p120 = pneg %p43
      $region18: #{_lambda_.33} parent=15 // pred_check_branch
        %122 = sbr.rel (%p120) target = $region20
      $region19: #{_lambda_.33} parent=15 // pred_region
        %s123 = smul.u32 8, %s17
        %p124 = scmp.lt.s32.totalorder %s16, 1
        %s125 = scalar_select %p124, %s16, 1
        %p126 = scmp.lt.s32.totalorder %s123, 7
        %s127 = scalar_select %p126, %s123, 7
        %s128 = smul.addr %s125, 8
        %s129 = sadd.s32 %s127, %s128
        %s130 = smul.addr %s129, 8
        %s131 = scalar_lea.vmem %s0, %s130
        %s132 = smul.u32 8, %s17
      $region20: #{_lambda_.33} parent=15 // pred_fallthru
        _
    $region16: #{_lambda_.33} parent=5 // pred_fallthru
      _
    %p133 = scmp.le.s32.totalorder 1, %s9
    %p134 = scmp.lt.s32.totalorder %s9, 3
    %p135 = pnand %p133, %p134
    %p136 = pneg %p135
    // Predicated region
    $region21: #{_lambda_.33} parent=5 // pred_check
      _
    $region22: #{_lambda_.33} parent=5 // pred_check_branch
      %138 = sbr.rel (%p135) target = $region24
    $region23: #{_lambda_.33} parent=5 // pred_region
      %s139 = ssub.s32 %s9, 1
      %s140 = smul.u32 8, %s19
      %p141 = scmp.lt.s32.totalorder %s18, 1
      %s142 = scalar_select %p141, %s18, 1
      %p143 = scmp.lt.s32.totalorder %s140, 7
      %s144 = scalar_select %p143, %s140, 7
      %s145 = smul.addr %s142, 8
      %s146 = sadd.s32 %s144, %s145
      %s147 = smul.addr %s146, 8
      %s148 = scalar_lea.vmem %s0, %s147
      %p149 = pneg %p49
      %p150 = pneg %p46
      %p151 = pneg %p75
      %p152 = pneg %p72
      %p153 = scmp.lt.s32.totalorder %s18, 1
      %s154 = scalar_select %p153, %s18, 1
      %s155 = scalar_lea.vmem %s1, %s154
      %p156 = pneg %p101
      %p157 = pneg %p98
      %p158 = scmp.lt.s32.totalorder %s18, 1
      %s159 = scalar_select %p158, %s18, 1
      %s160 = scalar_lea.vmem %s2, %s159
      %s161 = smul.u32 8, %s19
      %p162 = scmp.lt.s32.totalorder %s18, 1
      %s163 = scalar_select %p162, %s18, 1
      %p164 = scmp.lt.s32.totalorder %s161, 7
      %s165 = scalar_select %p164, %s161, 7
      %s166 = smul.addr %s163, 8
      %s167 = sadd.s32 %s165, %s166
      %s168 = smul.addr %s167, 8
      %s169 = scalar_lea.vmem %s0, %s168
      %s170 = smul.u32 8, %s19
      %p171 = scmp.lt.s32.totalorder %s18, 1
      %s172 = scalar_select %p171, %s18, 1
      %s173 = scalar_lea.vmem %s1, %s172
      %p174 = scmp.lt.s32.totalorder %s18, 1
      %s175 = scalar_select %p174, %s18, 1
      %s176 = scalar_lea.vmem %s2, %s175
      %p177 = scmp.eq.s32.totalorder %s19, 0
      // Predicated region
      $region25: #{_lambda_.33} parent=23 // pred_check
        %p178 = pneg %p177
      $region26: #{_lambda_.33} parent=23 // pred_check_branch
        %180 = sbr.rel (%p178) target = $region28
      $region27: #{_lambda_.33} parent=23 // pred_region
        %vm181 = vcmask 122880
        %182 = vst.msk [vmem:[#allocation2] sm:$0x1] %vm181, 0.0
        %183 = vst.msk [vmem:[#allocation3] sm:$0x1] %vm181, 0.0
      $region28: #{_lambda_.33} parent=23 // pred_fallthru
        _
      %v184 = vld [vmem:[%s169] sm:$0xff]
      %v185 = vld [vmem:[%s169 + $0x8] sm:$0xff]
      %v186 = vld [vmem:[%s169 + $0x10] sm:$0xff]
      %v187 = vld [vmem:[%s169 + $0x18] sm:$0xff]
      %v188 = vld [vmem:[%s169 + $0x20] sm:$0xff]
      %v189 = vld [vmem:[%s169 + $0x28] sm:$0xff]
      %v190 = vld [vmem:[%s169 + $0x30] sm:$0xff]
      %v191 = vld [vmem:[%s169 + $0x38] sm:$0xff]
      %v192 = vld [vmem:[#allocation2] sm:$0x1]
      %vm193 = vcmask 130048
      %v194 = vsel %vm193, %v184, 0.0
      %v195 = vsel %vm193, %v185, 0.0
      %v196 = vadd.f32 %v194, %v195
      %v197 = vsel %vm193, %v186, 0.0
      %v198 = vadd.f32 %v196, %v197
      %v199 = vsel %vm193, %v187, 0.0
      %v200 = vadd.f32 %v198, %v199
      %v201 = vsel %vm193, %v188, 0.0
      %v202 = vadd.f32 %v200, %v201
      %v203 = vsel %vm193, %v189, 0.0
      %v204 = vadd.f32 %v202, %v203
      %v205 = vsel %vm193, %v190, 0.0
      %v206 = vadd.f32 %v204, %v205
      %v207 = vsel %vm193, %v191, 0.0
      %v208 = vadd.f32 %v206, %v207
      %v209 = vrot.slane %v208, 4
      %v210 = vadd.f32 %v208, %v209
      %v211 = vrot.slane %v210, 2
      %v212 = vadd.f32 %v210, %v211
      %v213 = vrot.slane %v212, 1
      %v214 = vadd.f32 %v212, %v213
      %v215 = vadd.f32 %v192, %v214
      %vm216 = vcmask 122880
      %217 = vst.msk [vmem:[#allocation2] sm:$0x1] %vm216, %v215
      %v218 = vld [vmem:[#allocation3] sm:$0x1]
      %v219 = vmul.f32 %v184, %v184
      %v220 = vmul.f32 %v185, %v185
      %v221 = vmul.f32 %v186, %v186
      %v222 = vmul.f32 %v187, %v187
      %v223 = vmul.f32 %v188, %v188
      %v224 = vmul.f32 %v189, %v189
      %v225 = vmul.f32 %v190, %v190
      %v226 = vmul.f32 %v191, %v191
      %v227 = vsel %vm193, %v219, 0.0
      %v228 = vsel %vm193, %v220, 0.0
      %v229 = vadd.f32 %v227, %v228
      %v230 = vsel %vm193, %v221, 0.0
      %v231 = vadd.f32 %v229, %v230
      %v232 = vsel %vm193, %v222, 0.0
      %v233 = vadd.f32 %v231, %v232
      %v234 = vsel %vm193, %v223, 0.0
      %v235 = vadd.f32 %v233, %v234
      %v236 = vsel %vm193, %v224, 0.0
      %v237 = vadd.f32 %v235, %v236
      %v238 = vsel %vm193, %v225, 0.0
      %v239 = vadd.f32 %v237, %v238
      %v240 = vsel %vm193, %v226, 0.0
      %v241 = vadd.f32 %v239, %v240
      %v242 = vrot.slane %v241, 4
      %v243 = vadd.f32 %v241, %v242
      %v244 = vrot.slane %v243, 2
      %v245 = vadd.f32 %v243, %v244
      %v246 = vrot.slane %v245, 1
      %v247 = vadd.f32 %v245, %v246
      %v248 = vadd.f32 %v218, %v247
      %249 = vst.msk [vmem:[#allocation3] sm:$0x1] %vm216, %v248
      // Predicated region
      $region29: #{_lambda_.33} parent=23 // pred_check
        %p250 = pneg %p177
      $region30: #{_lambda_.33} parent=23 // pred_check_branch
        %252 = sbr.rel (%p250) target = $region32
      $region31: #{_lambda_.33} parent=23 // pred_region
        %v253 = vld [vmem:[#allocation2] sm:$0x1]
        %254 = vst.msk [vmem:[%s173] sm:$0x1] %vm216, %v253
        %v255 = vld [vmem:[#allocation3] sm:$0x1]
        %256 = vst.msk [vmem:[%s176] sm:$0x1] %vm216, %v255
      $region32: #{_lambda_.33} parent=23 // pred_fallthru
        _
      %p257 = scmp.lt.s32.totalorder %s18, 1
      %s258 = scalar_select %p257, %s18, 1
      %s259 = scalar_lea.vmem %s1, %s258
      %p260 = scmp.lt.s32.totalorder %s18, 1
      %s261 = scalar_select %p260, %s18, 1
      %s262 = scalar_lea.vmem %s2, %s261
      // Predicated region
      $region33: #{_lambda_.33} parent=23 // pred_check
        %p263 = pneg %p72
      $region34: #{_lambda_.33} parent=23 // pred_check_branch
        %265 = sbr.rel (%p263) target = $region36
      $region35: #{_lambda_.33} parent=23 // pred_region
        _
      $region36: #{_lambda_.33} parent=23 // pred_fallthru
        _
      // Predicated region
      $region37: #{_lambda_.33} parent=23 // pred_check
        %p266 = pneg %p98
      $region38: #{_lambda_.33} parent=23 // pred_check_branch
        %268 = sbr.rel (%p266) target = $region40
      $region39: #{_lambda_.33} parent=23 // pred_region
        _
      $region40: #{_lambda_.33} parent=23 // pred_fallthru
        _
    $region24: #{_lambda_.33} parent=5 // pred_fallthru
      _
    %p269 = scmp.le.s32.totalorder 2, %s9
    // Predicated region
    $region41: #{_lambda_.33} parent=5 // pred_check
      %p270 = pneg %p269
    $region42: #{_lambda_.33} parent=5 // pred_check_branch
      %272 = sbr.rel (%p270) target = $region44
    $region43: #{_lambda_.33} parent=5 // pred_region
      %s273 = ssub.s32 %s9, 2
      // Predicated region
      $region45: #{_lambda_.33} parent=43 // pred_check
        %p274 = pneg %p78
      $region46: #{_lambda_.33} parent=43 // pred_check_branch
        %276 = sbr.rel (%p274) target = $region48
      $region47: #{_lambda_.33} parent=43 // pred_region
        %p277 = scmp.lt.s32.totalorder %s20, 1
        %s278 = scalar_select %p277, %s20, 1
        %s279 = scalar_lea.vmem %s1, %s278
      $region48: #{_lambda_.33} parent=43 // pred_fallthru
        _
      // Predicated region
      $region49: #{_lambda_.33} parent=43 // pred_check
        %p280 = pneg %p104
      $region50: #{_lambda_.33} parent=43 // pred_check_branch
        %282 = sbr.rel (%p280) target = $region52
      $region51: #{_lambda_.33} parent=43 // pred_region
        %p283 = scmp.lt.s32.totalorder %s20, 1
        %s284 = scalar_select %p283, %s20, 1
        %s285 = scalar_lea.vmem %s2, %s284
      $region52: #{_lambda_.33} parent=43 // pred_fallthru
        _
    $region44: #{_lambda_.33} parent=5 // pred_fallthru
      _
  $region6: #{_lambda_.33} parent=0 // loop_footer
    %s13 = sadd.s32 1, %s9
  $region7: #{_lambda_.33} parent=0 // loop_footer_branch
    %8 = sbr.rel target = $region3
  $region8: #{_lambda_.33} parent=0 // loop_exit
    _

// kernel: _lambda_.34
$region0: #{_lambda_.34}
  #allocation0 [shape = 'u32[]', space=smem, size = 0x4, offset = 0x4, fixed_abs, tag = 'smem constant byte address 0x4 - core index']
  #allocation1 [shape = 'u32[144,128]{1,0:T(1,128)}', space=vmem, size = 0x12000, scoped, tag = 'internal scratch']
  %s0 = inlined_call_operand.vmem [shape: f32[2,64,16], index: 0, kind: input, shape index: {}]
  %s1 = inlined_call_operand.vmem [shape: f32[2,1,16], index: 1, kind: input, shape index: {}]
  %s2 = inlined_call_operand.vmem [shape: f32[2,1,16], index: 2, kind: input, shape index: {}]
  %s3 = inlined_call_operand.vmem [shape: bf16[2,64,16], index: 3, kind: output, shape index: {}]
  %s4 = sld [smem:[#allocation0]]
  $region45: #{_lambda_.34} parent=0
    _
  %s6 = ssub.s32 1, %s4
  %s7 = scalar_select 0, %s6, %s4
  loop: start=0, step=1, limit=4
  $region2: #{_lambda_.34} parent=0 // loop_pre_header
    _
  $region3: #{_lambda_.34} parent=0 // loop_header
    %s9 = sphi 0, %s13
    %p10 = scmp.ge.s32.totalorder %s9, 4
    %s16 = sphi 0, %s28
    %s17 = sphi 0, %s24
    %s18 = sphi 0, %s16
    %s19 = sphi 0, %s17
    %s20 = sphi 0, %s18
    %s21 = sphi 0, %s19
    %s33 = sphi 0, %s35
    %s36 = sphi 0, %s33
    %s37 = sphi 0, %s36
    %s53 = sphi 0, %s37
    %s59 = sphi 0, %s61
    %s62 = sphi 0, %s59
    %s63 = sphi 0, %s62
    %s79 = sphi 0, %s63
    %s85 = sphi 0, %s87
    %s88 = sphi 0, %s85
    %s89 = sphi 0, %s88
    %s105 = sphi 0, %s89
    %s113 = sphi 0, %s115
    %s116 = sphi 0, %s113
    %s117 = sphi 0, %s116
    %s133 = sphi 0, %s117
  $region4: #{_lambda_.34} parent=0 // loop_header_branch
    %12 = sbr.rel (%p10) target = $region8
  $region5: #{_lambda_.34} parent=0 // loop_body
    %s14 = ssub.s32 %s9, 1
    %s15 = ssub.s32 %s9, 2
    %s22 = sadd.s32 1, %s17
    %p23 = scmp.ge.s32.totalorder %s22, 1
    %s24 = scalar_select %p23, 0, %s22
    %s25 = sadd.s32 1, %s16
    %s26 = scalar_select %p23, %s25, %s16
    %p27 = scmp.ge.s32.totalorder %s26, 2
    %s28 = scalar_select %p27, 0, %s26
    %s29 = ssub.s32 %s16, %s28
    %s30 = ssub.s32 %s17, %s24
    %s31 = sor.u32 %s29, %s30
    %p32 = scmp.eq.s32.totalorder %s31, 0
    %s34 = sadd.s32 %s33, 1
    %s35 = scalar_select %p32, %s33, %s34
    %p38 = pneg %p32
    %p39 = scmp.eq.s32.totalorder %s9, 1
    %p40 = por %p38, %p39
    %p41 = scmp.ne.s32.totalorder %s33, %s36
    %p42 = scmp.eq.s32.totalorder %s9, 0
    %p43 = por %p41, %p42
    %p44 = scmp.ne.s32.totalorder %s33, %s36
    %p45 = scmp.eq.s32.totalorder %s14, 1
    %p46 = por %p44, %p45
    %p47 = scmp.ne.s32.totalorder %s36, %s37
    %p48 = scmp.eq.s32.totalorder %s14, 0
    %p49 = por %p47, %p48
    %p50 = scmp.ne.s32.totalorder %s36, %s37
    %p51 = scmp.eq.s32.totalorder %s15, 1
    %p52 = por %p50, %p51
    %p54 = scmp.ne.s32.totalorder %s37, %s53
    %p55 = scmp.eq.s32.totalorder %s15, 0
    %p56 = por %p54, %p55
    %s57 = ssub.s32 %s16, %s28
    %p58 = scmp.eq.s32.totalorder %s57, 0
    %s60 = sadd.s32 %s59, 1
    %s61 = scalar_select %p58, %s59, %s60
    %p64 = pneg %p58
    %p65 = scmp.eq.s32.totalorder %s9, 1
    %p66 = por %p64, %p65
    %p67 = scmp.ne.s32.totalorder %s59, %s62
    %p68 = scmp.eq.s32.totalorder %s9, 0
    %p69 = por %p67, %p68
    %p70 = scmp.ne.s32.totalorder %s59, %s62
    %p71 = scmp.eq.s32.totalorder %s14, 1
    %p72 = por %p70, %p71
    %p73 = scmp.ne.s32.totalorder %s62, %s63
    %p74 = scmp.eq.s32.totalorder %s14, 0
    %p75 = por %p73, %p74
    %p76 = scmp.ne.s32.totalorder %s62, %s63
    %p77 = scmp.eq.s32.totalorder %s15, 1
    %p78 = por %p76, %p77
    %p80 = scmp.ne.s32.totalorder %s63, %s79
    %p81 = scmp.eq.s32.totalorder %s15, 0
    %p82 = por %p80, %p81
    %s83 = ssub.s32 %s16, %s28
    %p84 = scmp.eq.s32.totalorder %s83, 0
    %s86 = sadd.s32 %s85, 1
    %s87 = scalar_select %p84, %s85, %s86
    %p90 = pneg %p84
    %p91 = scmp.eq.s32.totalorder %s9, 1
    %p92 = por %p90, %p91
    %p93 = scmp.ne.s32.totalorder %s85, %s88
    %p94 = scmp.eq.s32.totalorder %s9, 0
    %p95 = por %p93, %p94
    %p96 = scmp.ne.s32.totalorder %s85, %s88
    %p97 = scmp.eq.s32.totalorder %s14, 1
    %p98 = por %p96, %p97
    %p99 = scmp.ne.s32.totalorder %s88, %s89
    %p100 = scmp.eq.s32.totalorder %s14, 0
    %p101 = por %p99, %p100
    %p102 = scmp.ne.s32.totalorder %s88, %s89
    %p103 = scmp.eq.s32.totalorder %s15, 1
    %p104 = por %p102, %p103
    %p106 = scmp.ne.s32.totalorder %s89, %s105
    %p107 = scmp.eq.s32.totalorder %s15, 0
    %p108 = por %p106, %p107
    %s109 = ssub.s32 %s16, %s28
    %s110 = ssub.s32 %s17, %s24
    %s111 = sor.u32 %s109, %s110
    %p112 = scmp.eq.s32.totalorder %s111, 0
    %s114 = sadd.s32 %s113, 1
    %s115 = scalar_select %p112, %s113, %s114
    %p118 = pneg %p112
    %p119 = scmp.eq.s32.totalorder %s9, 1
    %p120 = por %p118, %p119
    %p121 = scmp.ne.s32.totalorder %s113, %s116
    %p122 = scmp.eq.s32.totalorder %s9, 0
    %p123 = por %p121, %p122
    %p124 = scmp.ne.s32.totalorder %s113, %s116
    %p125 = scmp.eq.s32.totalorder %s14, 1
    %p126 = por %p124, %p125
    %p127 = scmp.ne.s32.totalorder %s116, %s117
    %p128 = scmp.eq.s32.totalorder %s14, 0
    %p129 = por %p127, %p128
    %p130 = scmp.ne.s32.totalorder %s116, %s117
    %p131 = scmp.eq.s32.totalorder %s15, 1
    %p132 = por %p130, %p131
    %p134 = scmp.ne.s32.totalorder %s117, %s133
    %p135 = scmp.eq.s32.totalorder %s15, 0
    %p136 = por %p134, %p135
    %p137 = scmp.le.s32.totalorder 1, %s9
    %p138 = scmp.lt.s32.totalorder %s9, 3
    %p139 = pnand %p137, %p138
    %p140 = pneg %p139
    // Predicated region
    $region9: #{_lambda_.34} parent=5 // pred_check
      _
    $region10: #{_lambda_.34} parent=5 // pred_check_branch
      %142 = sbr.rel (%p139) target = $region12
    $region11: #{_lambda_.34} parent=5 // pred_region
      %s143 = ssub.s32 %s9, 1
    $region12: #{_lambda_.34} parent=5 // pred_fallthru
      _
    %p144 = scmp.lt.s32.totalorder %s9, 2
    // Predicated region
    $region13: #{_lambda_.34} parent=5 // pred_check
      %p145 = pneg %p144
    $region14: #{_lambda_.34} parent=5 // pred_check_branch
      %147 = sbr.rel (%p145) target = $region16
    $region15: #{_lambda_.34} parent=5 // pred_region
      // Predicated region
      $region17: #{_lambda_.34} parent=15 // pred_check
        %p148 = pneg %p43
      $region18: #{_lambda_.34} parent=15 // pred_check_branch
        %150 = sbr.rel (%p148) target = $region20
      $region19: #{_lambda_.34} parent=15 // pred_region
        %s151 = smul.u32 8, %s17
        %p152 = scmp.lt.s32.totalorder %s16, 1
        %s153 = scalar_select %p152, %s16, 1
        %p154 = scmp.lt.s32.totalorder %s151, 7
        %s155 = scalar_select %p154, %s151, 7
        %s156 = smul.addr %s153, 8
        %s157 = sadd.s32 %s155, %s156
        %s158 = smul.addr %s157, 8
        %s159 = scalar_lea.vmem %s0, %s158
        %s160 = smul.u32 8, %s17
      $region20: #{_lambda_.34} parent=15 // pred_fallthru
        _
      // Predicated region
      $region21: #{_lambda_.34} parent=15 // pred_check
        %p161 = pneg %p69
      $region22: #{_lambda_.34} parent=15 // pred_check_branch
        %163 = sbr.rel (%p161) target = $region24
      $region23: #{_lambda_.34} parent=15 // pred_region
        %p164 = scmp.lt.s32.totalorder %s16, 1
        %s165 = scalar_select %p164, %s16, 1
        %s166 = scalar_lea.vmem %s1, %s165
      $region24: #{_lambda_.34} parent=15 // pred_fallthru
        _
      // Predicated region
      $region25: #{_lambda_.34} parent=15 // pred_check
        %p167 = pneg %p95
      $region26: #{_lambda_.34} parent=15 // pred_check_branch
        %169 = sbr.rel (%p167) target = $region28
      $region27: #{_lambda_.34} parent=15 // pred_region
        %p170 = scmp.lt.s32.totalorder %s16, 1
        %s171 = scalar_select %p170, %s16, 1
        %s172 = scalar_lea.vmem %s2, %s171
      $region28: #{_lambda_.34} parent=15 // pred_fallthru
        _
    $region16: #{_lambda_.34} parent=5 // pred_fallthru
      _
    %p173 = scmp.le.s32.totalorder 1, %s9
    %p174 = scmp.lt.s32.totalorder %s9, 3
    %p175 = pnand %p173, %p174
    %p176 = pneg %p175
    // Predicated region
    $region29: #{_lambda_.34} parent=5 // pred_check
      _
    $region30: #{_lambda_.34} parent=5 // pred_check_branch
      %178 = sbr.rel (%p175) target = $region32
    $region31: #{_lambda_.34} parent=5 // pred_region
      %s179 = ssub.s32 %s9, 1
      %s180 = smul.u32 8, %s19
      %p181 = scmp.lt.s32.totalorder %s18, 1
      %s182 = scalar_select %p181, %s18, 1
      %p183 = scmp.lt.s32.totalorder %s180, 7
      %s184 = scalar_select %p183, %s180, 7
      %s185 = smul.addr %s182, 8
      %s186 = sadd.s32 %s184, %s185
      %s187 = smul.addr %s186, 8
      %s188 = scalar_lea.vmem %s0, %s187
      %p189 = pneg %p49
      %p190 = pneg %p46
      %p191 = scmp.lt.s32.totalorder %s18, 1
      %s192 = scalar_select %p191, %s18, 1
      %s193 = scalar_lea.vmem %s1, %s192
      %p194 = pneg %p75
      %p195 = pneg %p72
      %p196 = scmp.lt.s32.totalorder %s18, 1
      %s197 = scalar_select %p196, %s18, 1
      %s198 = scalar_lea.vmem %s2, %s197
      %p199 = pneg %p101
      %p200 = pneg %p98
      %p201 = pneg %p129
      %p202 = pneg %p126
      %s203 = smul.u32 8, %s19
      %p204 = scmp.lt.s32.totalorder %s18, 1
      %s205 = scalar_select %p204, %s18, 1
      %p206 = scmp.lt.s32.totalorder %s203, 7
      %s207 = scalar_select %p206, %s203, 7
      %s208 = smul.addr %s205, 8
      %s209 = sadd.s32 %s207, %s208
      %s210 = smul.addr %s209, 4
      %s211 = scalar_lea.vmem %s3, %s210
      %s212 = smul.u32 8, %s19
      %p213 = scmp.lt.s32.totalorder %s18, 1
      %s214 = scalar_select %p213, %s18, 1
      %p215 = scmp.lt.s32.totalorder %s212, 7
      %s216 = scalar_select %p215, %s212, 7
      %s217 = smul.addr %s214, 8
      %s218 = sadd.s32 %s216, %s217
      %s219 = smul.addr %s218, 8
      %s220 = scalar_lea.vmem %s0, %s219
      %s221 = smul.u32 8, %s19
      %p222 = scmp.lt.s32.totalorder %s18, 1
      %s223 = scalar_select %p222, %s18, 1
      %s224 = scalar_lea.vmem %s1, %s223
      %p225 = scmp.lt.s32.totalorder %s18, 1
      %s226 = scalar_select %p225, %s18, 1
      %s227 = scalar_lea.vmem %s2, %s226
      %s228 = smul.u32 8, %s19
      %p229 = scmp.lt.s32.totalorder %s18, 1
      %s230 = scalar_select %p229, %s18, 1
      %p231 = scmp.lt.s32.totalorder %s228, 7
      %s232 = scalar_select %p231, %s228, 7
      %s233 = smul.addr %s230, 8
      %s234 = sadd.s32 %s232, %s233
      %s235 = smul.addr %s234, 4
      %s236 = scalar_lea.vmem %s3, %s235
      %s237 = smul.u32 8, %s19
      %v238 = vld [vmem:[%s220] sm:$0xff]
      %v239 = vld [vmem:[%s220 + $0x8] sm:$0xff]
      %v240 = vld [vmem:[%s220 + $0x10] sm:$0xff]
      %v241 = vld [vmem:[%s220 + $0x18] sm:$0xff]
      %v242 = vld [vmem:[%s220 + $0x20] sm:$0xff]
      %v243 = vld [vmem:[%s220 + $0x28] sm:$0xff]
      %v244 = vld [vmem:[%s220 + $0x30] sm:$0xff]
      %v245 = vld [vmem:[%s220 + $0x38] sm:$0xff]
      %v246 = vld [vmem:[%s224] sm:$0x1]
      %v248 = vlaneseq
      %v249 = vshrl.u32 %v248, 7
      %v250 = vsub.s32 0, %v249
      %v251 = vrot.slane %v246, %v250
      %v253 = vmul.f32 %v238, %v251
      %v254 = vmul.f32 %v239, %v251
      %v255 = vmul.f32 %v240, %v251
      %v256 = vmul.f32 %v241, %v251
      %v257 = vmul.f32 %v242, %v251
      %v258 = vmul.f32 %v243, %v251
      %v259 = vmul.f32 %v244, %v251
      %v260 = vmul.f32 %v245, %v251
      %v261 = vld [vmem:[%s227] sm:$0x1]
      %v263 = vlaneseq
      %v264 = vshrl.u32 %v263, 7
      %v265 = vsub.s32 0, %v264
      %v266 = vrot.slane %v261, %v265
      %v268 = vadd.f32 %v253, %v266
      %v269 = vadd.f32 %v254, %v266
      %v270 = vadd.f32 %v255, %v266
      %v271 = vadd.f32 %v256, %v266
      %v272 = vadd.f32 %v257, %v266
      %v273 = vadd.f32 %v258, %v266
      %v274 = vadd.f32 %v259, %v266
      %v275 = vadd.f32 %v260, %v266
      %v276 = vxor.u32 %v268, 2147483648
      %v277 = vxor.u32 %v269, 2147483648
      %v278 = vxor.u32 %v270, 2147483648
      %v279 = vxor.u32 %v271, 2147483648
      %v280 = vxor.u32 %v272, 2147483648
      %v281 = vxor.u32 %v273, 2147483648
      %v282 = vxor.u32 %v274, 2147483648
      %v283 = vxor.u32 %v275, 2147483648
      %v284 = vmul.f32 %v276, 1.442695
      %v285 = vpow.pop %v284
      %v286 = vmul.f32 %v277, 1.442695
      %v287 = vpow.pop %v286
      %v288 = vmul.f32 %v278, 1.442695
      %v289 = vpow.pop %v288
      %v290 = vmul.f32 %v279, 1.442695
      %v291 = vpow.pop %v290
      %v292 = vmul.f32 %v280, 1.442695
      %v293 = vpow.pop %v292
      %v294 = vmul.f32 %v281, 1.442695
      %v295 = vpow.pop %v294
      %v296 = vmul.f32 %v282, 1.442695
      %v297 = vpow.pop %v296
      %v298 = vmul.f32 %v283, 1.442695
      %v299 = vpow.pop %v298
      %v300 = vadd.f32 %v285, 1.0
      %v301 = vadd.f32 %v287, 1.0
      %v302 = vadd.f32 %v289, 1.0
      %v303 = vadd.f32 %v291, 1.0
      %v304 = vadd.f32 %v293, 1.0
      %v305 = vadd.f32 %v295, 1.0
      %v306 = vadd.f32 %v297, 1.0
      %v307 = vadd.f32 %v299, 1.0
      %v308 = vrcp.pop %v300
      %v309 = vmul.f32 1.0, %v308
      %v310 = vrcp.pop %v301
      %v311 = vmul.f32 1.0, %v310
      %v312 = vrcp.pop %v302
      %v313 = vmul.f32 1.0, %v312
      %v314 = vrcp.pop %v303
      %v315 = vmul.f32 1.0, %v314
      %v316 = vrcp.pop %v304
      %v317 = vmul.f32 1.0, %v316
      %v318 = vrcp.pop %v305
      %v319 = vmul.f32 1.0, %v318
      %v320 = vrcp.pop %v306
      %v321 = vmul.f32 1.0, %v320
      %v322 = vrcp.pop %v307
      %v323 = vmul.f32 1.0, %v322
      %v324 = vmul.f32 %v268, %v309
      %v325 = vmul.f32 %v269, %v311
      %v326 = vmul.f32 %v270, %v313
      %v327 = vmul.f32 %v271, %v315
      %v328 = vmul.f32 %v272, %v317
      %v329 = vmul.f32 %v273, %v319
      %v330 = vmul.f32 %v274, %v321
      %v331 = vmul.f32 %v275, %v323
      %v332 = vpack.c.bf16 %v325, %v324
      %v333 = vpack.c.bf16 %v327, %v326
      %v334 = vpack.c.bf16 %v329, %v328
      %v335 = vpack.c.bf16 %v331, %v330
      %v340 = vunpack.c.l.b16 %v332
      %v341 = vunpack.c.h.b16 %v332
      %v342 = vunpack.c.l.b16 %v333
      %v343 = vunpack.c.h.b16 %v333
      %v344 = vunpack.c.l.b16 %v334
      %v345 = vunpack.c.h.b16 %v334
      %v346 = vunpack.c.l.b16 %v335
      %v347 = vunpack.c.h.b16 %v335
      %v348 = vpack.c.b16 %v340, %v340
      %v349 = vpack.c.b16 %v341, %v341
      %v350 = vpack.c.b16 %v342, %v342
      %v351 = vpack.c.b16 %v343, %v343
      %v352 = vpack.c.b16 %v344, %v344
      %v353 = vpack.c.b16 %v345, %v345
      %v354 = vpack.c.b16 %v346, %v346
      %v355 = vpack.c.b16 %v347, %v347
      %vm364 = vcmask 125952
      %365 = vst.msk [vmem:[%s236] sm:$0xf] %vm364, %v348
      %366 = vst.msk [vmem:[%s236 + $0x4] sm:$0xf] %vm364, %v349
      %367 = vst.msk [vmem:[%s236 + $0x8] sm:$0xf] %vm364, %v350
      %368 = vst.msk [vmem:[%s236 + $0xc] sm:$0xf] %vm364, %v351
      %369 = vst.msk [vmem:[%s236 + $0x10] sm:$0xf] %vm364, %v352
      %370 = vst.msk [vmem:[%s236 + $0x14] sm:$0xf] %vm364, %v353
      %371 = vst.msk [vmem:[%s236 + $0x18] sm:$0xf] %vm364, %v354
      %372 = vst.msk [vmem:[%s236 + $0x1c] sm:$0xf] %vm364, %v355
      %s373 = smul.u32 8, %s19
      %p374 = scmp.lt.s32.totalorder %s18, 1
      %s375 = scalar_select %p374, %s18, 1
      %p376 = scmp.lt.s32.totalorder %s373, 7
      %s377 = scalar_select %p376, %s373, 7
      %s378 = smul.addr %s375, 8
      %s379 = sadd.s32 %s377, %s378
      %s380 = smul.addr %s379, 4
      %s381 = scalar_lea.vmem %s3, %s380
      // Predicated region
      $region33: #{_lambda_.34} parent=31 // pred_check
        %p382 = pneg %p126
      $region34: #{_lambda_.34} parent=31 // pred_check_branch
        %384 = sbr.rel (%p382) target = $region36
      $region35: #{_lambda_.34} parent=31 // pred_region
        %s385 = smul.u32 8, %s19
      $region36: #{_lambda_.34} parent=31 // pred_fallthru
        _
    $region32: #{_lambda_.34} parent=5 // pred_fallthru
      _
    %p386 = scmp.le.s32.totalorder 2, %s9
    // Predicated region
    $region37: #{_lambda_.34} parent=5 // pred_check
      %p387 = pneg %p386
    $region38: #{_lambda_.34} parent=5 // pred_check_branch
      %389 = sbr.rel (%p387) target = $region40
    $region39: #{_lambda_.34} parent=5 // pred_region
      %s390 = ssub.s32 %s9, 2
      // Predicated region
      $region41: #{_lambda_.34} parent=39 // pred_check
        %p391 = pneg %p132
      $region42: #{_lambda_.34} parent=39 // pred_check_branch
        %393 = sbr.rel (%p391) target = $region44
      $region43: #{_lambda_.34} parent=39 // pred_region
        %s394 = smul.u32 8, %s21
        %p395 = scmp.lt.s32.totalorder %s20, 1
        %s396 = scalar_select %p395, %s20, 1
        %p397 = scmp.lt.s32.totalorder %s394, 7
        %s398 = scalar_select %p397, %s394, 7
        %s399 = smul.addr %s396, 8
        %s400 = sadd.s32 %s398, %s399
        %s401 = smul.addr %s400, 4
        %s402 = scalar_lea.vmem %s3, %s401
      $region44: #{_lambda_.34} parent=39 // pred_fallthru
        _
    $region40: #{_lambda_.34} parent=5 // pred_fallthru
      _
  $region6: #{_lambda_.34} parent=0 // loop_footer
    %s13 = sadd.s32 1, %s9
  $region7: #{_lambda_.34} parent=0 // loop_footer_branch
    %8 = sbr.rel target = $region3
  $region8: #{_lambda_.34} parent=0 // loop_exit
    _

// kernel: _lambda_.29
$region0: #{_lambda_.29}
  #allocation0 [shape = 'u32[]', space=smem, size = 0x4, offset = 0x4, fixed_abs, tag = 'smem constant byte address 0x4 - core index']
  #allocation1 [shape = 'u32[144,128]{1,0:T(1,128)}', space=vmem, size = 0x12000, scoped, tag = 'internal scratch']
  %s0 = inlined_call_operand.vmem [shape: bf16[2,64,8], index: 0, kind: input, shape index: {}]
  %s1 = inlined_call_operand.vmem [shape: bf16[8,128], index: 1, kind: input, shape index: {}]
  %s2 = inlined_call_operand.vmem [shape: f32[1,128], index: 2, kind: input, shape index: {}]
  %s3 = inlined_call_operand.vmem [shape: f32[2,64,128], index: 3, kind: output, shape index: {}]
  %s4 = sld [smem:[#allocation0]]
  $region45: #{_lambda_.29} parent=0
    _
  %s6 = ssub.s32 1, %s4
  %s7 = scalar_select 0, %s6, %s4
  loop: start=0, step=1, limit=4
  $region2: #{_lambda_.29} parent=0 // loop_pre_header
    _
  $region3: #{_lambda_.29} parent=0 // loop_header
    %s9 = sphi 0, %s13
    %p10 = scmp.ge.s32.totalorder %s9, 4
    %s16 = sphi 0, %s28
    %s17 = sphi 0, %s24
    %s18 = sphi 0, %s16
    %s19 = sphi 0, %s17
    %s20 = sphi 0, %s18
    %s21 = sphi 0, %s19
    %s33 = sphi 0, %s35
    %s36 = sphi 0, %s33
    %s37 = sphi 0, %s36
    %s53 = sphi 0, %s37
    %s57 = sphi 0, %s57
    %s59 = sphi 0, %s57
    %s60 = sphi 0, %s59
    %s74 = sphi 0, %s60
    %s78 = sphi 0, %s78
    %s80 = sphi 0, %s78
    %s81 = sphi 0, %s80
    %s95 = sphi 0, %s81
    %s103 = sphi 0, %s105
    %s106 = sphi 0, %s103
    %s107 = sphi 0, %s106
    %s123 = sphi 0, %s107
  $region4: #{_lambda_.29} parent=0 // loop_header_branch
    %12 = sbr.rel (%p10) target = $region8
  $region5: #{_lambda_.29} parent=0 // loop_body
    %s14 = ssub.s32 %s9, 1
    %s15 = ssub.s32 %s9, 2
    %s22 = sadd.s32 1, %s17
    %p23 = scmp.ge.s32.totalorder %s22, 1
    %s24 = scalar_select %p23, 0, %s22
    %s25 = sadd.s32 1, %s16
    %s26 = scalar_select %p23, %s25, %s16
    %p27 = scmp.ge.s32.totalorder %s26, 2
    %s28 = scalar_select %p27, 0, %s26
    %s29 = ssub.s32 %s16, %s28
    %s30 = ssub.s32 %s17, %s24
    %s31 = sor.u32 %s29, %s30
    %p32 = scmp.eq.s32.totalorder %s31, 0
    %s34 = sadd.s32 %s33, 1
    %s35 = scalar_select %p32, %s33, %s34
    %p38 = pneg %p32
    %p39 = scmp.eq.s32.totalorder %s9, 1
    %p40 = por %p38, %p39
    %p41 = scmp.ne.s32.totalorder %s33, %s36
    %p42 = scmp.eq.s32.totalorder %s9, 0
    %p43 = por %p41, %p42
    %p44 = scmp.ne.s32.totalorder %s33, %s36
    %p45 = scmp.eq.s32.totalorder %s14, 1
    %p46 = por %p44, %p45
    %p47 = scmp.ne.s32.totalorder %s36, %s37
    %p48 = scmp.eq.s32.totalorder %s14, 0
    %p49 = por %p47, %p48
    %p50 = scmp.ne.s32.totalorder %s36, %s37
    %p51 = scmp.eq.s32.totalorder %s15, 1
    %p52 = por %p50, %p51
    %p54 = scmp.ne.s32.totalorder %s37, %s53
    %p55 = scmp.eq.s32.totalorder %s15, 0
    %p56 = por %p54, %p55
    %s58 = sadd.s32 %s57, 1
    %p61 = scmp.eq.s32.totalorder %s9, 1
    %p62 = scmp.ne.s32.totalorder %s57, %s59
    %p63 = scmp.eq.s32.totalorder %s9, 0
    %p64 = por %p62, %p63
    %p65 = scmp.ne.s32.totalorder %s57, %s59
    %p66 = scmp.eq.s32.totalorder %s14, 1
    %p67 = por %p65, %p66
    %p68 = scmp.ne.s32.totalorder %s59, %s60
    %p69 = scmp.eq.s32.totalorder %s14, 0
    %p70 = por %p68, %p69
    %p71 = scmp.ne.s32.totalorder %s59, %s60
    %p72 = scmp.eq.s32.totalorder %s15, 1
    %p73 = por %p71, %p72
    %p75 = scmp.ne.s32.totalorder %s60, %s74
    %p76 = scmp.eq.s32.totalorder %s15, 0
    %p77 = por %p75, %p76
    %s79 = sadd.s32 %s78, 1
    %p82 = scmp.eq.s32.totalorder %s9, 1
    %p83 = scmp.ne.s32.totalorder %s78, %s80
    %p84 = scmp.eq.s32.totalorder %s9, 0
    %p85 = por %p83, %p84
    %p86 = scmp.ne.s32.totalorder %s78, %s80
    %p87 = scmp.eq.s32.totalorder %s14, 1
    %p88 = por %p86, %p87
    %p89 = scmp.ne.s32.totalorder %s80, %s81
    %p90 = scmp.eq.s32.totalorder %s14, 0
    %p91 = por %p89, %p90
    %p92 = scmp.ne.s32.totalorder %s80, %s81
    %p93 = scmp.eq.s32.totalorder %s15, 1
    %p94 = por %p92, %p93
    %p96 = scmp.ne.s32.totalorder %s81, %s95
    %p97 = scmp.eq.s32.totalorder %s15, 0
    %p98 = por %p96, %p97
    %s99 = ssub.s32 %s16, %s28
    %s100 = ssub.s32 %s17, %s24
    %s101 = sor.u32 %s99, %s100
    %p102 = scmp.eq.s32.totalorder %s101, 0
    %s104 = sadd.s32 %s103, 1
    %s105 = scalar_select %p102, %s103, %s104
    %p108 = pneg %p102
    %p109 = scmp.eq.s32.totalorder %s9, 1
    %p110 = por %p108, %p109
    %p111 = scmp.ne.s32.totalorder %s103, %s106
    %p112 = scmp.eq.s32.totalorder %s9, 0
    %p113 = por %p111, %p112
    %p114 = scmp.ne.s32.totalorder %s103, %s106
    %p115 = scmp.eq.s32.totalorder %s14, 1
    %p116 = por %p114, %p115
    %p117 = scmp.ne.s32.totalorder %s106, %s107
    %p118 = scmp.eq.s32.totalorder %s14, 0
    %p119 = por %p117, %p118
    %p120 = scmp.ne.s32.totalorder %s106, %s107
    %p121 = scmp.eq.s32.totalorder %s15, 1
    %p122 = por %p120, %p121
    %p124 = scmp.ne.s32.totalorder %s107, %s123
    %p125 = scmp.eq.s32.totalorder %s15, 0
    %p126 = por %p124, %p125
    %p127 = scmp.le.s32.totalorder 1, %s9
    %p128 = scmp.lt.s32.totalorder %s9, 3
    %p129 = pnand %p127, %p128
    %p130 = pneg %p129
    // Predicated region
    $region9: #{_lambda_.29} parent=5 // pred_check
      _
    $region10: #{_lambda_.29} parent=5 // pred_check_branch
      %132 = sbr.rel (%p129) target = $region12
    $region11: #{_lambda_.29} parent=5 // pred_region
      %s133 = ssub.s32 %s9, 1
      // Predicated region
      $region13: #{_lambda_.29} parent=11 // pred_check
        %p134 = pneg %p70
      $region14: #{_lambda_.29} parent=11 // pred_check_branch
        %136 = sbr.rel (%p134) target = $region16
      $region15: #{_lambda_.29} parent=11 // pred_region
        _
      $region16: #{_lambda_.29} parent=11 // pred_fallthru
        _
      // Predicated region
      $region17: #{_lambda_.29} parent=11 // pred_check
        %p137 = pneg %p91
      $region18: #{_lambda_.29} parent=11 // pred_check_branch
        %139 = sbr.rel (%p137) target = $region20
      $region19: #{_lambda_.29} parent=11 // pred_region
        _
      $region20: #{_lambda_.29} parent=11 // pred_fallthru
        _
    $region12: #{_lambda_.29} parent=5 // pred_fallthru
      _
    %p140 = scmp.lt.s32.totalorder %s9, 2
    // Predicated region
    $region21: #{_lambda_.29} parent=5 // pred_check
      %p141 = pneg %p140
    $region22: #{_lambda_.29} parent=5 // pred_check_branch
      %143 = sbr.rel (%p141) target = $region24
    $region23: #{_lambda_.29} parent=5 // pred_region
      // Predicated region
      $region25: #{_lambda_.29} parent=23 // pred_check
        %p144 = pneg %p43
      $region26: #{_lambda_.29} parent=23 // pred_check_branch
        %146 = sbr.rel (%p144) target = $region28
      $region27: #{_lambda_.29} parent=23 // pred_region
        %s147 = smul.u32 8, %s17
        %p148 = scmp.lt.s32.totalorder %s16, 1
        %s149 = scalar_select %p148, %s16, 1
        %p150 = scmp.lt.s32.totalorder %s147, 7
        %s151 = scalar_select %p150, %s147, 7
        %s152 = smul.addr %s149, 8
        %s153 = sadd.s32 %s151, %s152
        %s154 = smul.addr %s153, 4
        %s155 = scalar_lea.vmem %s0, %s154
        %s156 = smul.u32 8, %s17
      $region28: #{_lambda_.29} parent=23 // pred_fallthru
        _
    $region24: #{_lambda_.29} parent=5 // pred_fallthru
      _
    %p157 = scmp.le.s32.totalorder 1, %s9
    %p158 = scmp.lt.s32.totalorder %s9, 3
    %p159 = pnand %p157, %p158
    %p160 = pneg %p159
    // Predicated region
    $region29: #{_lambda_.29} parent=5 // pred_check
      _
    $region30: #{_lambda_.29} parent=5 // pred_check_branch
      %162 = sbr.rel (%p159) target = $region32
    $region31: #{_lambda_.29} parent=5 // pred_region
      %s163 = ssub.s32 %s9, 1
      %s164 = smul.u32 8, %s19
      %p165 = scmp.lt.s32.totalorder %s18, 1
      %s166 = scalar_select %p165, %s18, 1
      %p167 = scmp.lt.s32.totalorder %s164, 7
      %s168 = scalar_select %p167, %s164, 7
      %s169 = smul.addr %s166, 8
      %s170 = sadd.s32 %s168, %s169
      %s171 = smul.addr %s170, 4
      %s172 = scalar_lea.vmem %s0, %s171
      %p173 = pneg %p49
      %p174 = pneg %p46
      %p175 = pneg %p70
      %p176 = pneg %p67
      %p177 = pneg %p91
      %p178 = pneg %p88
      %p179 = pneg %p119
      %p180 = pneg %p116
      %s181 = smul.u32 8, %s19
      %p182 = scmp.lt.s32.totalorder %s18, 1
      %s183 = scalar_select %p182, %s18, 1
      %p184 = scmp.lt.s32.totalorder %s181, 7
      %s185 = scalar_select %p184, %s181, 7
      %s186 = smul.addr %s183, 8
      %s187 = sadd.s32 %s185, %s186
      %s188 = smul.addr %s187, 8
      %s189 = scalar_lea.vmem %s3, %s188
      %s190 = smul.u32 8, %s19
      %p191 = scmp.lt.s32.totalorder %s18, 1
      %s192 = scalar_select %p191, %s18, 1
      %p193 = scmp.lt.s32.totalorder %s190, 7
      %s194 = scalar_select %p193, %s190, 7
      %s195 = smul.addr %s192, 8
      %s196 = sadd.s32 %s194, %s195
      %s197 = smul.addr %s196, 4
      %s198 = scalar_lea.vmem %s0, %s197
      %s199 = smul.u32 8, %s19
      %s200 = smul.u32 8, %s19
      %p201 = scmp.lt.s32.totalorder %s18, 1
      %s202 = scalar_select %p201, %s18, 1
      %p203 = scmp.lt.s32.totalorder %s200, 7
      %s204 = scalar_select %p203, %s200, 7
      %s205 = smul.addr %s202, 8
      %s206 = sadd.s32 %s204, %s205
      %s207 = smul.addr %s206, 8
      %s208 = scalar_lea.vmem %s3, %s207
      %s209 = smul.u32 8, %s19
      %v211 = vld [vmem:[%s198] sm:$0xf]
      %v212 = vld [vmem:[%s198 + $0x4] sm:$0xf]
      %v213 = vld [vmem:[%s198 + $0x8] sm:$0xf]
      %v214 = vld [vmem:[%s198 + $0xc] sm:$0xf]
      %v215 = vld [vmem:[%s198 + $0x10] sm:$0xf]
      %v216 = vld [vmem:[%s198 + $0x14] sm:$0xf]
      %v217 = vld [vmem:[%s198 + $0x18] sm:$0xf]
      %v218 = vld [vmem:[%s198 + $0x1c] sm:$0xf]
      %v219 = vld [vmem:[%s1] sm:$0xf]
      %v220 = vld [vmem:[%s2] sm:$0x1]
      %v222 = vlaneseq
      %v223 = vshrl.u32 %v222, 7
      %v224 = vsub.s32 0, %v223
      %v225 = vrot.slane %v220, %v224
      %v235 = vunpack.c.l.b16 %v211
      %v236 = vunpack.c.l.b16 %v212
      %v237 = vunpack.c.l.b16 %v213
      %v238 = vunpack.c.l.b16 %v214
      %v239 = vunpack.c.l.b16 %v215
      %v240 = vunpack.c.l.b16 %v216
      %v241 = vunpack.c.l.b16 %v217
      %v242 = vunpack.c.l.b16 %v218
      %v243 = vpack.c.b16 %v236, %v235
      %v244 = vpack.c.b16 %v238, %v237
      %v245 = vpack.c.b16 %v240, %v239
      %v246 = vpack.c.b16 %v242, %v241
      %vm247 = vcmask 64512
      %v249 = vsel %vm247, %v243, 0
      %v252 = vsel %vm247, %v244, 0
      %v255 = vsel %vm247, %v245, 0
      %v258 = vsel %vm247, %v246, 0
      %vm260 = vcmask 1043456
      %v262 = vsel %vm260, %v219, 0
      %264 = vmatprep.subr.bf16.mxu0 0
      %265 = vmatpush1.bf16.msra.mxu0 %v262
      %266 = vmatprep.subr.bf16.mxu0 0
      %267 = vmatpush1.bf16.msra.mxu0 0
      %268 = vmatprep.subr.bf16.mxu0 0
      %269 = vmatpush1.bf16.msra.mxu0 0
      %270 = vmatprep.subr.bf16.mxu0 0
      %271 = vmatpush1.bf16.msra.mxu0 0
      %272 = vmatprep.subr.bf16.mxu0 0
      %273 = vmatpush1.bf16.msra.mxu0 0
      %274 = vmatprep.subr.bf16.mxu0 0
      %275 = vmatpush1.bf16.msra.mxu0 0
      %276 = vmatprep.subr.bf16.mxu0 0
      %277 = vmatpush1.bf16.msra.mxu0 0
      %278 = vmatprep.subr.bf16.mxu0 0
      %279 = vmatpush1.bf16.msra.mxu0 0
      %280 = vmatprep.subr.bf16.mxu0 0
      %281 = vmatpush1.bf16.msra.mxu0 0
      %282 = vmatprep.subr.bf16.mxu0 0
      %283 = vmatpush1.bf16.msra.mxu0 0
      %284 = vmatprep.subr.bf16.mxu0 0
      %285 = vmatpush1.bf16.msra.mxu0 0
      %286 = vmatprep.subr.bf16.mxu0 0
      %287 = vmatpush1.bf16.msra.mxu0 0
      %288 = vmatprep.subr.bf16.mxu0 0
      %289 = vmatpush1.bf16.msra.mxu0 0
      %290 = vmatprep.subr.bf16.mxu0 0
      %291 = vmatpush1.bf16.msra.mxu0 0
      %292 = vmatprep.subr.bf16.mxu0 0
      %293 = vmatpush1.bf16.msra.mxu0 0
      %294 = vmatprep.subr.bf16.mxu0 0
      %295 = vmatpush1.bf16.msra.mxu0 0
      %296 = vmatprep.mubr.bf16.mxu0 0
      %297 = vmatmul.mubr.bf16.gmra.mrb[0].mxu0 %v249
      %v298 = vpop.f32.mrb[0].mxu0
      %v299 = vadd.f32 %v225, %v298
      %v300 = vpop.f32.mrb[0].mxu0
      %v301 = vpop.f32.mrb[0].mxu0
      %v302 = vadd.f32 %v225, %v301
      %v303 = vpop.f32.mrb[0].mxu0
      %304 = vmatprep.mubr.bf16.mxu0 0
      %305 = vmatmul.mubr.bf16.gmra.mrb[0].mxu0 %v252
      %v306 = vpop.f32.mrb[0].mxu0
      %v307 = vadd.f32 %v225, %v306
      %v308 = vpop.f32.mrb[0].mxu0
      %v309 = vpop.f32.mrb[0].mxu0
      %v310 = vadd.f32 %v225, %v309
      %v311 = vpop.f32.mrb[0].mxu0
      %312 = vmatprep.mubr.bf16.mxu0 0
      %313 = vmatmul.mubr.bf16.gmra.mrb[0].mxu0 %v255
      %v314 = vpop.f32.mrb[0].mxu0
      %v315 = vadd.f32 %v225, %v314
      %v316 = vpop.f32.mrb[0].mxu0
      %v317 = vpop.f32.mrb[0].mxu0
      %v318 = vadd.f32 %v225, %v317
      %v319 = vpop.f32.mrb[0].mxu0
      %320 = vmatprep.mubr.bf16.mxu0 0
      %321 = vmatmul.mubr.bf16.gmra.mrb[0].mxu0 %v258
      %v322 = vpop.f32.mrb[0].mxu0
      %v323 = vadd.f32 %v225, %v322
      %v324 = vpop.f32.mrb[0].mxu0
      %v325 = vpop.f32.mrb[0].mxu0
      %v326 = vadd.f32 %v225, %v325
      %v327 = vpop.f32.mrb[0].mxu0
      %328 = vdwg.mxu0
      %329 = vst [vmem:[%s208] sm:$0xff] %v299
      %330 = vst [vmem:[%s208 + $0x8] sm:$0xff] %v302
      %331 = vst [vmem:[%s208 + $0x10] sm:$0xff] %v307
      %332 = vst [vmem:[%s208 + $0x18] sm:$0xff] %v310
      %333 = vst [vmem:[%s208 + $0x20] sm:$0xff] %v315
      %334 = vst [vmem:[%s208 + $0x28] sm:$0xff] %v318
      %335 = vst [vmem:[%s208 + $0x30] sm:$0xff] %v323
      %336 = vst [vmem:[%s208 + $0x38] sm:$0xff] %v326
      %s337 = smul.u32 8, %s19
      %p338 = scmp.lt.s32.totalorder %s18, 1
      %s339 = scalar_select %p338, %s18, 1
      %p340 = scmp.lt.s32.totalorder %s337, 7
      %s341 = scalar_select %p340, %s337, 7
      %s342 = smul.addr %s339, 8
      %s343 = sadd.s32 %s341, %s342
      %s344 = smul.addr %s343, 8
      %s345 = scalar_lea.vmem %s3, %s344
      // Predicated region
      $region33: #{_lambda_.29} parent=31 // pred_check
        %p346 = pneg %p116
      $region34: #{_lambda_.29} parent=31 // pred_check_branch
        %348 = sbr.rel (%p346) target = $region36
      $region35: #{_lambda_.29} parent=31 // pred_region
        %s349 = smul.u32 8, %s19
      $region36: #{_lambda_.29} parent=31 // pred_fallthru
        _
    $region32: #{_lambda_.29} parent=5 // pred_fallthru
      _
    %p350 = scmp.le.s32.totalorder 2, %s9
    // Predicated region
    $region37: #{_lambda_.29} parent=5 // pred_check
      %p351 = pneg %p350
    $region38: #{_lambda_.29} parent=5 // pred_check_branch
      %353 = sbr.rel (%p351) target = $region40
    $region39: #{_lambda_.29} parent=5 // pred_region
      %s354 = ssub.s32 %s9, 2
      // Predicated region
      $region41: #{_lambda_.29} parent=39 // pred_check
        %p355 = pneg %p122
      $region42: #{_lambda_.29} parent=39 // pred_check_branch
        %357 = sbr.rel (%p355) target = $region44
      $region43: #{_lambda_.29} parent=39 // pred_region
        %s358 = smul.u32 8, %s21
        %p359 = scmp.lt.s32.totalorder %s20, 1
        %s360 = scalar_select %p359, %s20, 1
        %p361 = scmp.lt.s32.totalorder %s358, 7
        %s362 = scalar_select %p361, %s358, 7
        %s363 = smul.addr %s360, 8
        %s364 = sadd.s32 %s362, %s363
        %s365 = smul.addr %s364, 8
        %s366 = scalar_lea.vmem %s3, %s365
      $region44: #{_lambda_.29} parent=39 // pred_fallthru
        _
    $region40: #{_lambda_.29} parent=5 // pred_fallthru
      _
  $region6: #{_lambda_.29} parent=0 // loop_footer
    %s13 = sadd.s32 1, %s9
  $region7: #{_lambda_.29} parent=0 // loop_footer_branch
    %8 = sbr.rel target = $region3
  $region8: #{_lambda_.29} parent=0 // loop_exit
    _

// kernel: _lambda_.35
$region0: #{_lambda_.35}
  #allocation0 [shape = 'u32[]', space=smem, size = 0x4, offset = 0x4, fixed_abs, tag = 'smem constant byte address 0x4 - core index']
  #allocation1 [shape = 'u32[144,128]{1,0:T(1,128)}', space=vmem, size = 0x12000, scoped, tag = 'internal scratch']
  %s0 = inlined_call_operand.vmem [shape: bf16[2,64,144], index: 0, kind: input, shape index: {}]
  %s1 = inlined_call_operand.vmem [shape: bf16[144,128], index: 1, kind: input, shape index: {}]
  %s2 = inlined_call_operand.vmem [shape: f32[1,128], index: 2, kind: input, shape index: {}]
  %s3 = inlined_call_operand.vmem [shape: f32[2,64,128], index: 3, kind: input, shape index: {}]
  %s4 = inlined_call_operand.vmem [shape: f32[2,64,128], index: 4, kind: output, shape index: {}]
  %s5 = sld [smem:[#allocation0]]
  $region49: #{_lambda_.35} parent=0
    _
  %s7 = ssub.s32 1, %s5
  %s8 = scalar_select 0, %s7, %s5
  loop: start=0, step=1, limit=4
  $region2: #{_lambda_.35} parent=0 // loop_pre_header
    _
  $region3: #{_lambda_.35} parent=0 // loop_header
    %s10 = sphi 0, %s14
    %p11 = scmp.ge.s32.totalorder %s10, 4
    %s17 = sphi 0, %s29
    %s18 = sphi 0, %s25
    %s19 = sphi 0, %s17
    %s20 = sphi 0, %s18
    %s21 = sphi 0, %s19
    %s22 = sphi 0, %s20
    %s34 = sphi 0, %s36
    %s37 = sphi 0, %s34
    %s38 = sphi 0, %s37
    %s54 = sphi 0, %s38
    %s58 = sphi 0, %s58
    %s60 = sphi 0, %s58
    %s61 = sphi 0, %s60
    %s75 = sphi 0, %s61
    %s79 = sphi 0, %s79
    %s81 = sphi 0, %s79
    %s82 = sphi 0, %s81
    %s96 = sphi 0, %s82
    %s104 = sphi 0, %s106
    %s107 = sphi 0, %s104
    %s108 = sphi 0, %s107
    %s124 = sphi 0, %s108
    %s132 = sphi 0, %s134
    %s135 = sphi 0, %s132
    %s136 = sphi 0, %s135
    %s152 = sphi 0, %s136
  $region4: #{_lambda_.35} parent=0 // loop_header_branch
    %13 = sbr.rel (%p11) target = $region8
  $region5: #{_lambda_.35} parent=0 // loop_body
    %s15 = ssub.s32 %s10, 1
    %s16 = ssub.s32 %s10, 2
    %s23 = sadd.s32 1, %s18
    %p24 = scmp.ge.s32.totalorder %s23, 1
    %s25 = scalar_select %p24, 0, %s23
    %s26 = sadd.s32 1, %s17
    %s27 = scalar_select %p24, %s26, %s17
    %p28 = scmp.ge.s32.totalorder %s27, 2
    %s29 = scalar_select %p28, 0, %s27
    %s30 = ssub.s32 %s17, %s29
    %s31 = ssub.s32 %s18, %s25
    %s32 = sor.u32 %s30, %s31
    %p33 = scmp.eq.s32.totalorder %s32, 0
    %s35 = sadd.s32 %s34, 1
    %s36 = scalar_select %p33, %s34, %s35
    %p39 = pneg %p33
    %p40 = scmp.eq.s32.totalorder %s10, 1
    %p41 = por %p39, %p40
    %p42 = scmp.ne.s32.totalorder %s34, %s37
    %p43 = scmp.eq.s32.totalorder %s10, 0
    %p44 = por %p42, %p43
    %p45 = scmp.ne.s32.totalorder %s34, %s37
    %p46 = scmp.eq.s32.totalorder %s15, 1
    %p47 = por %p45, %p46
    %p48 = scmp.ne.s32.totalorder %s37, %s38
    %p49 = scmp.eq.s32.totalorder %s15, 0
    %p50 = por %p48, %p49
    %p51 = scmp.ne.s32.totalorder %s37, %s38
    %p52 = scmp.eq.s32.totalorder %s16, 1
    %p53 = por %p51, %p52
    %p55 = scmp.ne.s32.totalorder %s38, %s54
    %p56 = scmp.eq.s32.totalorder %s16, 0
    %p57 = por %p55, %p56
    %s59 = sadd.s32 %s58, 1
    %p62 = scmp.eq.s32.totalorder %s10, 1
    %p63 = scmp.ne.s32.totalorder %s58, %s60
    %p64 = scmp.eq.s32.totalorder %s10, 0
    %p65 = por %p63, %p64
    %p66 = scmp.ne.s32.totalorder %s58, %s60
    %p67 = scmp.eq.s32.totalorder %s15, 1
    %p68 = por %p66, %p67
    %p69 = scmp.ne.s32.totalorder %s60, %s61
    %p70 = scmp.eq.s32.totalorder %s15, 0
    %p71 = por %p69, %p70
    %p72 = scmp.ne.s32.totalorder %s60, %s61
    %p73 = scmp.eq.s32.totalorder %s16, 1
    %p74 = por %p72, %p73
    %p76 = scmp.ne.s32.totalorder %s61, %s75
    %p77 = scmp.eq.s32.totalorder %s16, 0
    %p78 = por %p76, %p77
    %s80 = sadd.s32 %s79, 1
    %p83 = scmp.eq.s32.totalorder %s10, 1
    %p84 = scmp.ne.s32.totalorder %s79, %s81
    %p85 = scmp.eq.s32.totalorder %s10, 0
    %p86 = por %p84, %p85
    %p87 = scmp.ne.s32.totalorder %s79, %s81
    %p88 = scmp.eq.s32.totalorder %s15, 1
    %p89 = por %p87, %p88
    %p90 = scmp.ne.s32.totalorder %s81, %s82
    %p91 = scmp.eq.s32.totalorder %s15, 0
    %p92 = por %p90, %p91
    %p93 = scmp.ne.s32.totalorder %s81, %s82
    %p94 = scmp.eq.s32.totalorder %s16, 1
    %p95 = por %p93, %p94
    %p97 = scmp.ne.s32.totalorder %s82, %s96
    %p98 = scmp.eq.s32.totalorder %s16, 0
    %p99 = por %p97, %p98
    %s100 = ssub.s32 %s17, %s29
    %s101 = ssub.s32 %s18, %s25
    %s102 = sor.u32 %s100, %s101
    %p103 = scmp.eq.s32.totalorder %s102, 0
    %s105 = sadd.s32 %s104, 1
    %s106 = scalar_select %p103, %s104, %s105
    %p109 = pneg %p103
    %p110 = scmp.eq.s32.totalorder %s10, 1
    %p111 = por %p109, %p110
    %p112 = scmp.ne.s32.totalorder %s104, %s107
    %p113 = scmp.eq.s32.totalorder %s10, 0
    %p114 = por %p112, %p113
    %p115 = scmp.ne.s32.totalorder %s104, %s107
    %p116 = scmp.eq.s32.totalorder %s15, 1
    %p117 = por %p115, %p116
    %p118 = scmp.ne.s32.totalorder %s107, %s108
    %p119 = scmp.eq.s32.totalorder %s15, 0
    %p120 = por %p118, %p119
    %p121 = scmp.ne.s32.totalorder %s107, %s108
    %p122 = scmp.eq.s32.totalorder %s16, 1
    %p123 = por %p121, %p122
    %p125 = scmp.ne.s32.totalorder %s108, %s124
    %p126 = scmp.eq.s32.totalorder %s16, 0
    %p127 = por %p125, %p126
    %s128 = ssub.s32 %s17, %s29
    %s129 = ssub.s32 %s18, %s25
    %s130 = sor.u32 %s128, %s129
    %p131 = scmp.eq.s32.totalorder %s130, 0
    %s133 = sadd.s32 %s132, 1
    %s134 = scalar_select %p131, %s132, %s133
    %p137 = pneg %p131
    %p138 = scmp.eq.s32.totalorder %s10, 1
    %p139 = por %p137, %p138
    %p140 = scmp.ne.s32.totalorder %s132, %s135
    %p141 = scmp.eq.s32.totalorder %s10, 0
    %p142 = por %p140, %p141
    %p143 = scmp.ne.s32.totalorder %s132, %s135
    %p144 = scmp.eq.s32.totalorder %s15, 1
    %p145 = por %p143, %p144
    %p146 = scmp.ne.s32.totalorder %s135, %s136
    %p147 = scmp.eq.s32.totalorder %s15, 0
    %p148 = por %p146, %p147
    %p149 = scmp.ne.s32.totalorder %s135, %s136
    %p150 = scmp.eq.s32.totalorder %s16, 1
    %p151 = por %p149, %p150
    %p153 = scmp.ne.s32.totalorder %s136, %s152
    %p154 = scmp.eq.s32.totalorder %s16, 0
    %p155 = por %p153, %p154
    %p156 = scmp.le.s32.totalorder 1, %s10
    %p157 = scmp.lt.s32.totalorder %s10, 3
    %p158 = pnand %p156, %p157
    %p159 = pneg %p158
    // Predicated region
    $region9: #{_lambda_.35} parent=5 // pred_check
      _
    $region10: #{_lambda_.35} parent=5 // pred_check_branch
      %161 = sbr.rel (%p158) target = $region12
    $region11: #{_lambda_.35} parent=5 // pred_region
      %s162 = ssub.s32 %s10, 1
      // Predicated region
      $region13: #{_lambda_.35} parent=11 // pred_check
        %p163 = pneg %p71
      $region14: #{_lambda_.35} parent=11 // pred_check_branch
        %165 = sbr.rel (%p163) target = $region16
      $region15: #{_lambda_.35} parent=11 // pred_region
        _
      $region16: #{_lambda_.35} parent=11 // pred_fallthru
        _
      // Predicated region
      $region17: #{_lambda_.35} parent=11 // pred_check
        %p166 = pneg %p92
      $region18: #{_lambda_.35} parent=11 // pred_check_branch
        %168 = sbr.rel (%p166) target = $region20
      $region19: #{_lambda_.35} parent=11 // pred_region
        _
      $region20: #{_lambda_.35} parent=11 // pred_fallthru
        _
    $region12: #{_lambda_.35} parent=5 // pred_fallthru
      _
    %p169 = scmp.lt.s32.totalorder %s10, 2
    // Predicated region
    $region21: #{_lambda_.35} parent=5 // pred_check
      %p170 = pneg %p169
    $region22: #{_lambda_.35} parent=5 // pred_check_branch
      %172 = sbr.rel (%p170) target = $region24
    $region23: #{_lambda_.35} parent=5 // pred_region
      // Predicated region
      $region25: #{_lambda_.35} parent=23 // pred_check
        %p173 = pneg %p44
      $region26: #{_lambda_.35} parent=23 // pred_check_branch
        %175 = sbr.rel (%p173) target = $region28
      $region27: #{_lambda_.35} parent=23 // pred_region
        %s176 = smul.u32 8, %s18
        %p177 = scmp.lt.s32.totalorder %s17, 1
        %s178 = scalar_select %p177, %s17, 1
        %p179 = scmp.lt.s32.totalorder %s176, 7
        %s180 = scalar_select %p179, %s176, 7
        %s181 = smul.addr %s180, 2
        %s182 = smul.addr %s178, 16
        %s183 = sadd.s32 %s181, %s182
        %s184 = smul.addr %s183, 4
        %s185 = scalar_lea.vmem %s0, %s184
        %s186 = smul.u32 8, %s18
      $region28: #{_lambda_.35} parent=23 // pred_fallthru
        _
      // Predicated region
      $region29: #{_lambda_.35} parent=23 // pred_check
        %p187 = pneg %p114
      $region30: #{_lambda_.35} parent=23 // pred_check_branch
        %189 = sbr.rel (%p187) target = $region32
      $region31: #{_lambda_.35} parent=23 // pred_region
        %s190 = smul.u32 8, %s18
        %p191 = scmp.lt.s32.totalorder %s17, 1
        %s192 = scalar_select %p191, %s17, 1
        %p193 = scmp.lt.s32.totalorder %s190, 7
        %s194 = scalar_select %p193, %s190, 7
        %s195 = smul.addr %s192, 8
        %s196 = sadd.s32 %s194, %s195
        %s197 = smul.addr %s196, 8
        %s198 = scalar_lea.vmem %s3, %s197
        %s199 = smul.u32 8, %s18
      $region32: #{_lambda_.35} parent=23 // pred_fallthru
        _
    $region24: #{_lambda_.35} parent=5 // pred_fallthru
      _
    %p200 = scmp.le.s32.totalorder 1, %s10
    %p201 = scmp.lt.s32.totalorder %s10, 3
    %p202 = pnand %p200, %p201
    %p203 = pneg %p202
    // Predicated region
    $region33: #{_lambda_.35} parent=5 // pred_check
      _
    $region34: #{_lambda_.35} parent=5 // pred_check_branch
      %205 = sbr.rel (%p202) target = $region36
    $region35: #{_lambda_.35} parent=5 // pred_region
      %s206 = ssub.s32 %s10, 1
      %s207 = smul.u32 8, %s20
      %p208 = scmp.lt.s32.totalorder %s19, 1
      %s209 = scalar_select %p208, %s19, 1
      %p210 = scmp.lt.s32.totalorder %s207, 7
      %s211 = scalar_select %p210, %s207, 7
      %s212 = smul.addr %s211, 2
      %s213 = smul.addr %s209, 16
      %s214 = sadd.s32 %s212, %s213
      %s215 = smul.addr %s214, 4
      %s216 = scalar_lea.vmem %s0, %s215
      %p217 = pneg %p50
      %p218 = pneg %p47
      %p219 = pneg %p71
      %p220 = pneg %p68
      %p221 = pneg %p92
      %p222 = pneg %p89
      %s223 = smul.u32 8, %s20
      %p224 = scmp.lt.s32.totalorder %s19, 1
      %s225 = scalar_select %p224, %s19, 1
      %p226 = scmp.lt.s32.totalorder %s223, 7
      %s227 = scalar_select %p226, %s223, 7
      %s228 = smul.addr %s225, 8
      %s229 = sadd.s32 %s227, %s228
      %s230 = smul.addr %s229, 8
      %s231 = scalar_lea.vmem %s3, %s230
      %p232 = pneg %p120
      %p233 = pneg %p117
      %p234 = pneg %p148
      %p235 = pneg %p145
      %s236 = smul.u32 8, %s20
      %p237 = scmp.lt.s32.totalorder %s19, 1
      %s238 = scalar_select %p237, %s19, 1
      %p239 = scmp.lt.s32.totalorder %s236, 7
      %s240 = scalar_select %p239, %s236, 7
      %s241 = smul.addr %s238, 8
      %s242 = sadd.s32 %s240, %s241
      %s243 = smul.addr %s242, 8
      %s244 = scalar_lea.vmem %s4, %s243
      %s245 = smul.u32 8, %s20
      %p246 = scmp.lt.s32.totalorder %s19, 1
      %s247 = scalar_select %p246, %s19, 1
      %p248 = scmp.lt.s32.totalorder %s245, 7
      %s249 = scalar_select %p248, %s245, 7
      %s250 = smul.addr %s249, 2
      %s251 = smul.addr %s247, 16
      %s252 = sadd.s32 %s250, %s251
      %s253 = smul.addr %s252, 4
      %s254 = scalar_lea.vmem %s0, %s253
      %s255 = smul.u32 8, %s20
      %s256 = smul.u32 8, %s20
      %p257 = scmp.lt.s32.totalorder %s19, 1
      %s258 = scalar_select %p257, %s19, 1
      %p259 = scmp.lt.s32.totalorder %s256, 7
      %s260 = scalar_select %p259, %s256, 7
      %s261 = smul.addr %s258, 8
      %s262 = sadd.s32 %s260, %s261
      %s263 = smul.addr %s262, 8
      %s264 = scalar_lea.vmem %s3, %s263
      %s265 = smul.u32 8, %s20
      %s266 = smul.u32 8, %s20
      %p267 = scmp.lt.s32.totalorder %s19, 1
      %s268 = scalar_select %p267, %s19, 1
      %p269 = scmp.lt.s32.totalorder %s266, 7
      %s270 = scalar_select %p269, %s266, 7
      %s271 = smul.addr %s268, 8
      %s272 = sadd.s32 %s270, %s271
      %s273 = smul.addr %s272, 8
      %s274 = scalar_lea.vmem %s4, %s273
      %s275 = smul.u32 8, %s20
      %v277 = vld [vmem:[%s254] sm:$0xff]
      %v278 = vld [vmem:[%s254 + $0x8] sm:$0xff]
      %v279 = vld [vmem:[%s254 + $0x10] sm:$0xff]
      %v280 = vld [vmem:[%s254 + $0x18] sm:$0xff]
      %v281 = vld [vmem:[%s254 + $0x20] sm:$0xff]
      %v282 = vld [vmem:[%s254 + $0x28] sm:$0xff]
      %v283 = vld [vmem:[%s254 + $0x30] sm:$0xff]
      %v284 = vld [vmem:[%s254 + $0x38] sm:$0xff]
      %v285 = vld [vmem:[%s1] sm:$0xf]
      %v286 = vld [vmem:[%s1 + $0x4] sm:$0xf]
      %v287 = vld [vmem:[%s1 + $0x8] sm:$0xf]
      %v288 = vld [vmem:[%s1 + $0xc] sm:$0xf]
      %v289 = vld [vmem:[%s1 + $0x10] sm:$0xf]
      %v290 = vld [vmem:[%s1 + $0x14] sm:$0xf]
      %v291 = vld [vmem:[%s1 + $0x18] sm:$0xf]
      %v292 = vld [vmem:[%s1 + $0x1c] sm:$0xf]
      %v293 = vld [vmem:[%s1 + $0x20] sm:$0xf]
      %v294 = vld [vmem:[%s1 + $0x24] sm:$0xf]
      %v295 = vld [vmem:[%s1 + $0x28] sm:$0xf]
      %v296 = vld [vmem:[%s1 + $0x2c] sm:$0xf]
      %v297 = vld [vmem:[%s1 + $0x30] sm:$0xf]
      %v298 = vld [vmem:[%s1 + $0x34] sm:$0xf]
      %v299 = vld [vmem:[%s1 + $0x38] sm:$0xf]
      %v300 = vld [vmem:[%s1 + $0x3c] sm:$0xf]
      %v301 = vld [vmem:[%s1 + $0x40] sm:$0xf]
      %v302 = vld [vmem:[%s1 + $0x44] sm:$0xf]
      %v303 = vld [vmem:[%s2] sm:$0x1]
      %v305 = vlaneseq
      %v306 = vshrl.u32 %v305, 7
      %v307 = vsub.s32 0, %v306
      %v308 = vrot.slane %v303, %v307
      %v318 = vunpack.c.l.b16 %v277
      %v319 = vunpack.c.h.b16 %v277
      %v320 = vunpack.c.l.b16 %v278
      %v321 = vunpack.c.h.b16 %v278
      %v322 = vunpack.c.l.b16 %v279
      %v323 = vunpack.c.h.b16 %v279
      %v324 = vunpack.c.l.b16 %v280
      %v325 = vunpack.c.h.b16 %v280
      %v326 = vunpack.c.l.b16 %v281
      %v327 = vunpack.c.h.b16 %v281
      %v328 = vunpack.c.l.b16 %v282
      %v329 = vunpack.c.h.b16 %v282
      %v330 = vunpack.c.l.b16 %v283
      %v331 = vunpack.c.h.b16 %v283
      %v332 = vunpack.c.l.b16 %v284
      %v333 = vunpack.c.h.b16 %v284
      %v334 = vpack.c.b16 %v320, %v318
      %v335 = vpack.c.b16 %v321, %v319
      %v336 = vpack.c.b16 %v324, %v322
      %v337 = vpack.c.b16 %v325, %v323
      %v338 = vpack.c.b16 %v328, %v326
      %v339 = vpack.c.b16 %v329, %v327
      %v340 = vpack.c.b16 %v332, %v330
      %v341 = vpack.c.b16 %v333, %v331
      %v364 = vunpack.c.l.b16 %v285
      %v365 = vunpack.c.l.b16 %v286
      %v366 = vunpack.c.l.b16 %v287
      %v367 = vunpack.c.l.b16 %v288
      %v368 = vunpack.c.l.b16 %v289
      %v369 = vunpack.c.l.b16 %v290
      %v370 = vunpack.c.l.b16 %v291
      %v371 = vunpack.c.l.b16 %v292
      %v372 = vunpack.c.l.b16 %v293
      %v373 = vunpack.c.l.b16 %v294
      %v374 = vunpack.c.l.b16 %v295
      %v375 = vunpack.c.l.b16 %v296
      %v376 = vunpack.c.l.b16 %v297
      %v377 = vunpack.c.l.b16 %v298
      %v378 = vunpack.c.l.b16 %v299
      %v379 = vunpack.c.l.b16 %v300
      %v380 = vunpack.c.l.b16 %v301
      %v381 = vunpack.c.l.b16 %v302
      %v382 = vpack.c.b16 %v365, %v364
      %v383 = vpack.c.b16 %v367, %v366
      %v384 = vpack.c.b16 %v369, %v368
      %v385 = vpack.c.b16 %v371, %v370
      %v386 = vpack.c.b16 %v373, %v372
      %v387 = vpack.c.b16 %v375, %v374
      %v388 = vpack.c.b16 %v377, %v376
      %v389 = vpack.c.b16 %v379, %v378
      %v390 = vpack.c.b16 %v381, %v380
      %vm400 = vcmask 130048
      %v402 = vsel %vm400, %v335, 0
      %v405 = vsel %vm400, %v337, 0
      %v408 = vsel %vm400, %v339, 0
      %v411 = vsel %vm400, %v341, 0
      %413 = vmatprep.subr.bf16.mxu0 0
      %414 = vmatpush1.bf16.msra.mxu0 %v382
      %415 = vmatprep.subr.bf16.mxu0 0
      %416 = vmatpush1.bf16.msra.mxu0 %v383
      %417 = vmatprep.subr.bf16.mxu0 0
      %418 = vmatpush1.bf16.msra.mxu0 %v384
      %419 = vmatprep.subr.bf16.mxu0 0
      %420 = vmatpush1.bf16.msra.mxu0 %v385
      %421 = vmatprep.subr.bf16.mxu0 0
      %422 = vmatpush1.bf16.msra.mxu0 %v386
      %423 = vmatprep.subr.bf16.mxu0 0
      %424 = vmatpush1.bf16.msra.mxu0 %v387
      %425 = vmatprep.subr.bf16.mxu0 0
      %426 = vmatpush1.bf16.msra.mxu0 %v388
      %427 = vmatprep.subr.bf16.mxu0 0
      %428 = vmatpush1.bf16.msra.mxu0 %v389
      %429 = vmatprep.subr.bf16.mxu0 0
      %430 = vmatpush1.bf16.msra.mxu0 %v390
      %431 = vmatprep.subr.bf16.mxu0 0
      %432 = vmatpush1.bf16.msra.mxu0 0
      %433 = vmatprep.subr.bf16.mxu0 0
      %434 = vmatpush1.bf16.msra.mxu0 0
      %435 = vmatprep.subr.bf16.mxu0 0
      %436 = vmatpush1.bf16.msra.mxu0 0
      %437 = vmatprep.subr.bf16.mxu0 0
      %438 = vmatpush1.bf16.msra.mxu0 0
      %439 = vmatprep.subr.bf16.mxu0 0
      %440 = vmatpush1.bf16.msra.mxu0 0
      %441 = vmatprep.subr.bf16.mxu0 0
      %442 = vmatpush1.bf16.msra.mxu0 0
      %443 = vmatprep.subr.bf16.mxu0 0
      %444 = vmatpush1.bf16.msra.mxu0 0
      %445 = vmatprep.mubr.bf16.mxu0 %v402
      %446 = vmatmul.mubr.bf16.gmra.mrb[0].mxu0 %v334
      %v447 = vpop.f32.mrb[0].mxu0
      %v448 = vadd.f32 %v308, %v447
      %v449 = vpop.f32.mrb[0].mxu0
      %v450 = vpop.f32.mrb[0].mxu0
      %v451 = vadd.f32 %v308, %v450
      %v452 = vpop.f32.mrb[0].mxu0
      %453 = vmatprep.mubr.bf16.mxu0 %v405
      %454 = vmatmul.mubr.bf16.gmra.mrb[0].mxu0 %v336
      %v455 = vpop.f32.mrb[0].mxu0
      %v456 = vadd.f32 %v308, %v455
      %v457 = vpop.f32.mrb[0].mxu0
      %v458 = vpop.f32.mrb[0].mxu0
      %v459 = vadd.f32 %v308, %v458
      %v460 = vpop.f32.mrb[0].mxu0
      %461 = vmatprep.mubr.bf16.mxu0 %v408
      %462 = vmatmul.mubr.bf16.gmra.mrb[0].mxu0 %v338
      %v463 = vpop.f32.mrb[0].mxu0
      %v464 = vadd.f32 %v308, %v463
      %v465 = vpop.f32.mrb[0].mxu0
      %v466 = vpop.f32.mrb[0].mxu0
      %v467 = vadd.f32 %v308, %v466
      %v468 = vpop.f32.mrb[0].mxu0
      %469 = vmatprep.mubr.bf16.mxu0 %v411
      %470 = vmatmul.mubr.bf16.gmra.mrb[0].mxu0 %v340
      %v471 = vpop.f32.mrb[0].mxu0
      %v472 = vadd.f32 %v308, %v471
      %v473 = vpop.f32.mrb[0].mxu0
      %v474 = vpop.f32.mrb[0].mxu0
      %v475 = vadd.f32 %v308, %v474
      %v476 = vpop.f32.mrb[0].mxu0
      %477 = vdwg.mxu0
      %v478 = vld [vmem:[%s264] sm:$0xff]
      %v479 = vld [vmem:[%s264 + $0x8] sm:$0xff]
      %v480 = vld [vmem:[%s264 + $0x10] sm:$0xff]
      %v481 = vld [vmem:[%s264 + $0x18] sm:$0xff]
      %v482 = vld [vmem:[%s264 + $0x20] sm:$0xff]
      %v483 = vld [vmem:[%s264 + $0x28] sm:$0xff]
      %v484 = vld [vmem:[%s264 + $0x30] sm:$0xff]
      %v485 = vld [vmem:[%s264 + $0x38] sm:$0xff]
      %v486 = vadd.f32 %v448, %v478
      %v487 = vadd.f32 %v451, %v479
      %v488 = vadd.f32 %v456, %v480
      %v489 = vadd.f32 %v459, %v481
      %v490 = vadd.f32 %v464, %v482
      %v491 = vadd.f32 %v467, %v483
      %v492 = vadd.f32 %v472, %v484
      %v493 = vadd.f32 %v475, %v485
      %494 = vst [vmem:[%s274] sm:$0xff] %v486
      %495 = vst [vmem:[%s274 + $0x8] sm:$0xff] %v487
      %496 = vst [vmem:[%s274 + $0x10] sm:$0xff] %v488
      %497 = vst [vmem:[%s274 + $0x18] sm:$0xff] %v489
      %498 = vst [vmem:[%s274 + $0x20] sm:$0xff] %v490
      %499 = vst [vmem:[%s274 + $0x28] sm:$0xff] %v491
      %500 = vst [vmem:[%s274 + $0x30] sm:$0xff] %v492
      %501 = vst [vmem:[%s274 + $0x38] sm:$0xff] %v493
      %s502 = smul.u32 8, %s20
      %p503 = scmp.lt.s32.totalorder %s19, 1
      %s504 = scalar_select %p503, %s19, 1
      %p505 = scmp.lt.s32.totalorder %s502, 7
      %s506 = scalar_select %p505, %s502, 7
      %s507 = smul.addr %s504, 8
      %s508 = sadd.s32 %s506, %s507
      %s509 = smul.addr %s508, 8
      %s510 = scalar_lea.vmem %s4, %s509
      // Predicated region
      $region37: #{_lambda_.35} parent=35 // pred_check
        %p511 = pneg %p145
      $region38: #{_lambda_.35} parent=35 // pred_check_branch
        %513 = sbr.rel (%p511) target = $region40
      $region39: #{_lambda_.35} parent=35 // pred_region
        %s514 = smul.u32 8, %s20
      $region40: #{_lambda_.35} parent=35 // pred_fallthru
        _
    $region36: #{_lambda_.35} parent=5 // pred_fallthru
      _
    %p515 = scmp.le.s32.totalorder 2, %s10
    // Predicated region
    $region41: #{_lambda_.35} parent=5 // pred_check
      %p516 = pneg %p515
    $region42: #{_lambda_.35} parent=5 // pred_check_branch
      %518 = sbr.rel (%p516) target = $region44
    $region43: #{_lambda_.35} parent=5 // pred_region
      %s519 = ssub.s32 %s10, 2
      // Predicated region
      $region45: #{_lambda_.35} parent=43 // pred_check
        %p520 = pneg %p151
      $region46: #{_lambda_.35} parent=43 // pred_check_branch
        %522 = sbr.rel (%p520) target = $region48
      $region47: #{_lambda_.35} parent=43 // pred_region
        %s523 = smul.u32 8, %s22
        %p524 = scmp.lt.s32.totalorder %s21, 1
        %s525 = scalar_select %p524, %s21, 1
        %p526 = scmp.lt.s32.totalorder %s523, 7
        %s527 = scalar_select %p526, %s523, 7
        %s528 = smul.addr %s525, 8
        %s529 = sadd.s32 %s527, %s528
        %s530 = smul.addr %s529, 8
        %s531 = scalar_lea.vmem %s4, %s530
      $region48: #{_lambda_.35} parent=43 // pred_fallthru
        _
    $region44: #{_lambda_.35} parent=5 // pred_fallthru
      _
  $region6: #{_lambda_.35} parent=0 // loop_footer
    %s14 = sadd.s32 1, %s10
  $region7: #{_lambda_.35} parent=0 // loop_footer_branch
    %9 = sbr.rel target = $region3
  $region8: #{_lambda_.35} parent=0 // loop_exit
    _

// kernel: _lambda_.38
$region0: #{_lambda_.38}
  #allocation0 [shape = 'u32[]', space=smem, size = 0x4, offset = 0x4, fixed_abs, tag = 'smem constant byte address 0x4 - core index']
  #allocation1 [shape = 'u32[144,128]{1,0:T(1,128)}', space=vmem, size = 0x12000, scoped, tag = 'internal scratch']
  %s0 = inlined_call_operand.vmem [shape: bf16[2,64,144], index: 0, kind: input, shape index: {}]
  %s1 = inlined_call_operand.vmem [shape: bf16[144,128], index: 1, kind: input, shape index: {}]
  %s2 = inlined_call_operand.vmem [shape: f32[1,128], index: 2, kind: input, shape index: {}]
  %s3 = inlined_call_operand.vmem [shape: f32[2,64,128], index: 3, kind: output, shape index: {}]
  %s4 = sld [smem:[#allocation0]]
  $region45: #{_lambda_.38} parent=0
    _
  %s6 = ssub.s32 1, %s4
  %s7 = scalar_select 0, %s6, %s4
  loop: start=0, step=1, limit=4
  $region2: #{_lambda_.38} parent=0 // loop_pre_header
    _
  $region3: #{_lambda_.38} parent=0 // loop_header
    %s9 = sphi 0, %s13
    %p10 = scmp.ge.s32.totalorder %s9, 4
    %s16 = sphi 0, %s28
    %s17 = sphi 0, %s24
    %s18 = sphi 0, %s16
    %s19 = sphi 0, %s17
    %s20 = sphi 0, %s18
    %s21 = sphi 0, %s19
    %s33 = sphi 0, %s35
    %s36 = sphi 0, %s33
    %s37 = sphi 0, %s36
    %s53 = sphi 0, %s37
    %s57 = sphi 0, %s57
    %s59 = sphi 0, %s57
    %s60 = sphi 0, %s59
    %s74 = sphi 0, %s60
    %s78 = sphi 0, %s78
    %s80 = sphi 0, %s78
    %s81 = sphi 0, %s80
    %s95 = sphi 0, %s81
    %s103 = sphi 0, %s105
    %s106 = sphi 0, %s103
    %s107 = sphi 0, %s106
    %s123 = sphi 0, %s107
  $region4: #{_lambda_.38} parent=0 // loop_header_branch
    %12 = sbr.rel (%p10) target = $region8
  $region5: #{_lambda_.38} parent=0 // loop_body
    %s14 = ssub.s32 %s9, 1
    %s15 = ssub.s32 %s9, 2
    %s22 = sadd.s32 1, %s17
    %p23 = scmp.ge.s32.totalorder %s22, 1
    %s24 = scalar_select %p23, 0, %s22
    %s25 = sadd.s32 1, %s16
    %s26 = scalar_select %p23, %s25, %s16
    %p27 = scmp.ge.s32.totalorder %s26, 2
    %s28 = scalar_select %p27, 0, %s26
    %s29 = ssub.s32 %s16, %s28
    %s30 = ssub.s32 %s17, %s24
    %s31 = sor.u32 %s29, %s30
    %p32 = scmp.eq.s32.totalorder %s31, 0
    %s34 = sadd.s32 %s33, 1
    %s35 = scalar_select %p32, %s33, %s34
    %p38 = pneg %p32
    %p39 = scmp.eq.s32.totalorder %s9, 1
    %p40 = por %p38, %p39
    %p41 = scmp.ne.s32.totalorder %s33, %s36
    %p42 = scmp.eq.s32.totalorder %s9, 0
    %p43 = por %p41, %p42
    %p44 = scmp.ne.s32.totalorder %s33, %s36
    %p45 = scmp.eq.s32.totalorder %s14, 1
    %p46 = por %p44, %p45
    %p47 = scmp.ne.s32.totalorder %s36, %s37
    %p48 = scmp.eq.s32.totalorder %s14, 0
    %p49 = por %p47, %p48
    %p50 = scmp.ne.s32.totalorder %s36, %s37
    %p51 = scmp.eq.s32.totalorder %s15, 1
    %p52 = por %p50, %p51
    %p54 = scmp.ne.s32.totalorder %s37, %s53
    %p55 = scmp.eq.s32.totalorder %s15, 0
    %p56 = por %p54, %p55
    %s58 = sadd.s32 %s57, 1
    %p61 = scmp.eq.s32.totalorder %s9, 1
    %p62 = scmp.ne.s32.totalorder %s57, %s59
    %p63 = scmp.eq.s32.totalorder %s9, 0
    %p64 = por %p62, %p63
    %p65 = scmp.ne.s32.totalorder %s57, %s59
    %p66 = scmp.eq.s32.totalorder %s14, 1
    %p67 = por %p65, %p66
    %p68 = scmp.ne.s32.totalorder %s59, %s60
    %p69 = scmp.eq.s32.totalorder %s14, 0
    %p70 = por %p68, %p69
    %p71 = scmp.ne.s32.totalorder %s59, %s60
    %p72 = scmp.eq.s32.totalorder %s15, 1
    %p73 = por %p71, %p72
    %p75 = scmp.ne.s32.totalorder %s60, %s74
    %p76 = scmp.eq.s32.totalorder %s15, 0
    %p77 = por %p75, %p76
    %s79 = sadd.s32 %s78, 1
    %p82 = scmp.eq.s32.totalorder %s9, 1
    %p83 = scmp.ne.s32.totalorder %s78, %s80
    %p84 = scmp.eq.s32.totalorder %s9, 0
    %p85 = por %p83, %p84
    %p86 = scmp.ne.s32.totalorder %s78, %s80
    %p87 = scmp.eq.s32.totalorder %s14, 1
    %p88 = por %p86, %p87
    %p89 = scmp.ne.s32.totalorder %s80, %s81
    %p90 = scmp.eq.s32.totalorder %s14, 0
    %p91 = por %p89, %p90
    %p92 = scmp.ne.s32.totalorder %s80, %s81
    %p93 = scmp.eq.s32.totalorder %s15, 1
    %p94 = por %p92, %p93
    %p96 = scmp.ne.s32.totalorder %s81, %s95
    %p97 = scmp.eq.s32.totalorder %s15, 0
    %p98 = por %p96, %p97
    %s99 = ssub.s32 %s16, %s28
    %s100 = ssub.s32 %s17, %s24
    %s101 = sor.u32 %s99, %s100
    %p102 = scmp.eq.s32.totalorder %s101, 0
    %s104 = sadd.s32 %s103, 1
    %s105 = scalar_select %p102, %s103, %s104
    %p108 = pneg %p102
    %p109 = scmp.eq.s32.totalorder %s9, 1
    %p110 = por %p108, %p109
    %p111 = scmp.ne.s32.totalorder %s103, %s106
    %p112 = scmp.eq.s32.totalorder %s9, 0
    %p113 = por %p111, %p112
    %p114 = scmp.ne.s32.totalorder %s103, %s106
    %p115 = scmp.eq.s32.totalorder %s14, 1
    %p116 = por %p114, %p115
    %p117 = scmp.ne.s32.totalorder %s106, %s107
    %p118 = scmp.eq.s32.totalorder %s14, 0
    %p119 = por %p117, %p118
    %p120 = scmp.ne.s32.totalorder %s106, %s107
    %p121 = scmp.eq.s32.totalorder %s15, 1
    %p122 = por %p120, %p121
    %p124 = scmp.ne.s32.totalorder %s107, %s123
    %p125 = scmp.eq.s32.totalorder %s15, 0
    %p126 = por %p124, %p125
    %p127 = scmp.le.s32.totalorder 1, %s9
    %p128 = scmp.lt.s32.totalorder %s9, 3
    %p129 = pnand %p127, %p128
    %p130 = pneg %p129
    // Predicated region
    $region9: #{_lambda_.38} parent=5 // pred_check
      _
    $region10: #{_lambda_.38} parent=5 // pred_check_branch
      %132 = sbr.rel (%p129) target = $region12
    $region11: #{_lambda_.38} parent=5 // pred_region
      %s133 = ssub.s32 %s9, 1
      // Predicated region
      $region13: #{_lambda_.38} parent=11 // pred_check
        %p134 = pneg %p70
      $region14: #{_lambda_.38} parent=11 // pred_check_branch
        %136 = sbr.rel (%p134) target = $region16
      $region15: #{_lambda_.38} parent=11 // pred_region
        _
      $region16: #{_lambda_.38} parent=11 // pred_fallthru
        _
      // Predicated region
      $region17: #{_lambda_.38} parent=11 // pred_check
        %p137 = pneg %p91
      $region18: #{_lambda_.38} parent=11 // pred_check_branch
        %139 = sbr.rel (%p137) target = $region20
      $region19: #{_lambda_.38} parent=11 // pred_region
        _
      $region20: #{_lambda_.38} parent=11 // pred_fallthru
        _
    $region12: #{_lambda_.38} parent=5 // pred_fallthru
      _
    %p140 = scmp.lt.s32.totalorder %s9, 2
    // Predicated region
    $region21: #{_lambda_.38} parent=5 // pred_check
      %p141 = pneg %p140
    $region22: #{_lambda_.38} parent=5 // pred_check_branch
      %143 = sbr.rel (%p141) target = $region24
    $region23: #{_lambda_.38} parent=5 // pred_region
      // Predicated region
      $region25: #{_lambda_.38} parent=23 // pred_check
        %p144 = pneg %p43
      $region26: #{_lambda_.38} parent=23 // pred_check_branch
        %146 = sbr.rel (%p144) target = $region28
      $region27: #{_lambda_.38} parent=23 // pred_region
        %s147 = smul.u32 8, %s17
        %p148 = scmp.lt.s32.totalorder %s16, 1
        %s149 = scalar_select %p148, %s16, 1
        %p150 = scmp.lt.s32.totalorder %s147, 7
        %s151 = scalar_select %p150, %s147, 7
        %s152 = smul.addr %s151, 2
        %s153 = smul.addr %s149, 16
        %s154 = sadd.s32 %s152, %s153
        %s155 = smul.addr %s154, 4
        %s156 = scalar_lea.vmem %s0, %s155
        %s157 = smul.u32 8, %s17
      $region28: #{_lambda_.38} parent=23 // pred_fallthru
        _
    $region24: #{_lambda_.38} parent=5 // pred_fallthru
      _
    %p158 = scmp.le.s32.totalorder 1, %s9
    %p159 = scmp.lt.s32.totalorder %s9, 3
    %p160 = pnand %p158, %p159
    %p161 = pneg %p160
    // Predicated region
    $region29: #{_lambda_.38} parent=5 // pred_check
      _
    $region30: #{_lambda_.38} parent=5 // pred_check_branch
      %163 = sbr.rel (%p160) target = $region32
    $region31: #{_lambda_.38} parent=5 // pred_region
      %s164 = ssub.s32 %s9, 1
      %s165 = smul.u32 8, %s19
      %p166 = scmp.lt.s32.totalorder %s18, 1
      %s167 = scalar_select %p166, %s18, 1
      %p168 = scmp.lt.s32.totalorder %s165, 7
      %s169 = scalar_select %p168, %s165, 7
      %s170 = smul.addr %s169, 2
      %s171 = smul.addr %s167, 16
      %s172 = sadd.s32 %s170, %s171
      %s173 = smul.addr %s172, 4
      %s174 = scalar_lea.vmem %s0, %s173
      %p175 = pneg %p49
      %p176 = pneg %p46
      %p177 = pneg %p70
      %p178 = pneg %p67
      %p179 = pneg %p91
      %p180 = pneg %p88
      %p181 = pneg %p119
      %p182 = pneg %p116
      %s183 = smul.u32 8, %s19
      %p184 = scmp.lt.s32.totalorder %s18, 1
      %s185 = scalar_select %p184, %s18, 1
      %p186 = scmp.lt.s32.totalorder %s183, 7
      %s187 = scalar_select %p186, %s183, 7
      %s188 = smul.addr %s185, 8
      %s189 = sadd.s32 %s187, %s188
      %s190 = smul.addr %s189, 8
      %s191 = scalar_lea.vmem %s3, %s190
      %s192 = smul.u32 8, %s19
      %p193 = scmp.lt.s32.totalorder %s18, 1
      %s194 = scalar_select %p193, %s18, 1
      %p195 = scmp.lt.s32.totalorder %s192, 7
      %s196 = scalar_select %p195, %s192, 7
      %s197 = smul.addr %s196, 2
      %s198 = smul.addr %s194, 16
      %s199 = sadd.s32 %s197, %s198
      %s200 = smul.addr %s199, 4
      %s201 = scalar_lea.vmem %s0, %s200
      %s202 = smul.u32 8, %s19
      %s203 = smul.u32 8, %s19
      %p204 = scmp.lt.s32.totalorder %s18, 1
      %s205 = scalar_select %p204, %s18, 1
      %p206 = scmp.lt.s32.totalorder %s203, 7
      %s207 = scalar_select %p206, %s203, 7
      %s208 = smul.addr %s205, 8
      %s209 = sadd.s32 %s207, %s208
      %s210 = smul.addr %s209, 8
      %s211 = scalar_lea.vmem %s3, %s210
      %s212 = smul.u32 8, %s19
      %v214 = vld [vmem:[%s201] sm:$0xff]
      %v215 = vld [vmem:[%s201 + $0x8] sm:$0xff]
      %v216 = vld [vmem:[%s201 + $0x10] sm:$0xff]
      %v217 = vld [vmem:[%s201 + $0x18] sm:$0xff]
      %v218 = vld [vmem:[%s201 + $0x20] sm:$0xff]
      %v219 = vld [vmem:[%s201 + $0x28] sm:$0xff]
      %v220 = vld [vmem:[%s201 + $0x30] sm:$0xff]
      %v221 = vld [vmem:[%s201 + $0x38] sm:$0xff]
      %v222 = vld [vmem:[%s1] sm:$0xf]
      %v223 = vld [vmem:[%s1 + $0x4] sm:$0xf]
      %v224 = vld [vmem:[%s1 + $0x8] sm:$0xf]
      %v225 = vld [vmem:[%s1 + $0xc] sm:$0xf]
      %v226 = vld [vmem:[%s1 + $0x10] sm:$0xf]
      %v227 = vld [vmem:[%s1 + $0x14] sm:$0xf]
      %v228 = vld [vmem:[%s1 + $0x18] sm:$0xf]
      %v229 = vld [vmem:[%s1 + $0x1c] sm:$0xf]
      %v230 = vld [vmem:[%s1 + $0x20] sm:$0xf]
      %v231 = vld [vmem:[%s1 + $0x24] sm:$0xf]
      %v232 = vld [vmem:[%s1 + $0x28] sm:$0xf]
      %v233 = vld [vmem:[%s1 + $0x2c] sm:$0xf]
      %v234 = vld [vmem:[%s1 + $0x30] sm:$0xf]
      %v235 = vld [vmem:[%s1 + $0x34] sm:$0xf]
      %v236 = vld [vmem:[%s1 + $0x38] sm:$0xf]
      %v237 = vld [vmem:[%s1 + $0x3c] sm:$0xf]
      %v238 = vld [vmem:[%s1 + $0x40] sm:$0xf]
      %v239 = vld [vmem:[%s1 + $0x44] sm:$0xf]
      %v240 = vld [vmem:[%s2] sm:$0x1]
      %v242 = vlaneseq
      %v243 = vshrl.u32 %v242, 7
      %v244 = vsub.s32 0, %v243
      %v245 = vrot.slane %v240, %v244
      %v255 = vunpack.c.l.b16 %v214
      %v256 = vunpack.c.h.b16 %v214
      %v257 = vunpack.c.l.b16 %v215
      %v258 = vunpack.c.h.b16 %v215
      %v259 = vunpack.c.l.b16 %v216
      %v260 = vunpack.c.h.b16 %v216
      %v261 = vunpack.c.l.b16 %v217
      %v262 = vunpack.c.h.b16 %v217
      %v263 = vunpack.c.l.b16 %v218
      %v264 = vunpack.c.h.b16 %v218
      %v265 = vunpack.c.l.b16 %v219
      %v266 = vunpack.c.h.b16 %v219
      %v267 = vunpack.c.l.b16 %v220
      %v268 = vunpack.c.h.b16 %v220
      %v269 = vunpack.c.l.b16 %v221
      %v270 = vunpack.c.h.b16 %v221
      %v271 = vpack.c.b16 %v257, %v255
      %v272 = vpack.c.b16 %v258, %v256
      %v273 = vpack.c.b16 %v261, %v259
      %v274 = vpack.c.b16 %v262, %v260
      %v275 = vpack.c.b16 %v265, %v263
      %v276 = vpack.c.b16 %v266, %v264
      %v277 = vpack.c.b16 %v269, %v267
      %v278 = vpack.c.b16 %v270, %v268
      %v301 = vunpack.c.l.b16 %v222
      %v302 = vunpack.c.l.b16 %v223
      %v303 = vunpack.c.l.b16 %v224
      %v304 = vunpack.c.l.b16 %v225
      %v305 = vunpack.c.l.b16 %v226
      %v306 = vunpack.c.l.b16 %v227
      %v307 = vunpack.c.l.b16 %v228
      %v308 = vunpack.c.l.b16 %v229
      %v309 = vunpack.c.l.b16 %v230
      %v310 = vunpack.c.l.b16 %v231
      %v311 = vunpack.c.l.b16 %v232
      %v312 = vunpack.c.l.b16 %v233
      %v313 = vunpack.c.l.b16 %v234
      %v314 = vunpack.c.l.b16 %v235
      %v315 = vunpack.c.l.b16 %v236
      %v316 = vunpack.c.l.b16 %v237
      %v317 = vunpack.c.l.b16 %v238
      %v318 = vunpack.c.l.b16 %v239
      %v319 = vpack.c.b16 %v302, %v301
      %v320 = vpack.c.b16 %v304, %v303
      %v321 = vpack.c.b16 %v306, %v305
      %v322 = vpack.c.b16 %v308, %v307
      %v323 = vpack.c.b16 %v310, %v309
      %v324 = vpack.c.b16 %v312, %v311
      %v325 = vpack.c.b16 %v314, %v313
      %v326 = vpack.c.b16 %v316, %v315
      %v327 = vpack.c.b16 %v318, %v317
      %vm337 = vcmask 130048
      %v339 = vsel %vm337, %v272, 0
      %v342 = vsel %vm337, %v274, 0
      %v345 = vsel %vm337, %v276, 0
      %v348 = vsel %vm337, %v278, 0
      %350 = vmatprep.subr.bf16.mxu0 0
      %351 = vmatpush1.bf16.msra.mxu0 %v319
      %352 = vmatprep.subr.bf16.mxu0 0
      %353 = vmatpush1.bf16.msra.mxu0 %v320
      %354 = vmatprep.subr.bf16.mxu0 0
      %355 = vmatpush1.bf16.msra.mxu0 %v321
      %356 = vmatprep.subr.bf16.mxu0 0
      %357 = vmatpush1.bf16.msra.mxu0 %v322
      %358 = vmatprep.subr.bf16.mxu0 0
      %359 = vmatpush1.bf16.msra.mxu0 %v323
      %360 = vmatprep.subr.bf16.mxu0 0
      %361 = vmatpush1.bf16.msra.mxu0 %v324
      %362 = vmatprep.subr.bf16.mxu0 0
      %363 = vmatpush1.bf16.msra.mxu0 %v325
      %364 = vmatprep.subr.bf16.mxu0 0
      %365 = vmatpush1.bf16.msra.mxu0 %v326
      %366 = vmatprep.subr.bf16.mxu0 0
      %367 = vmatpush1.bf16.msra.mxu0 %v327
      %368 = vmatprep.subr.bf16.mxu0 0
      %369 = vmatpush1.bf16.msra.mxu0 0
      %370 = vmatprep.subr.bf16.mxu0 0
      %371 = vmatpush1.bf16.msra.mxu0 0
      %372 = vmatprep.subr.bf16.mxu0 0
      %373 = vmatpush1.bf16.msra.mxu0 0
      %374 = vmatprep.subr.bf16.mxu0 0
      %375 = vmatpush1.bf16.msra.mxu0 0
      %376 = vmatprep.subr.bf16.mxu0 0
      %377 = vmatpush1.bf16.msra.mxu0 0
      %378 = vmatprep.subr.bf16.mxu0 0
      %379 = vmatpush1.bf16.msra.mxu0 0
      %380 = vmatprep.subr.bf16.mxu0 0
      %381 = vmatpush1.bf16.msra.mxu0 0
      %382 = vmatprep.mubr.bf16.mxu0 %v339
      %383 = vmatmul.mubr.bf16.gmra.mrb[0].mxu0 %v271
      %v384 = vpop.f32.mrb[0].mxu0
      %v385 = vadd.f32 %v245, %v384
      %v386 = vpop.f32.mrb[0].mxu0
      %v387 = vpop.f32.mrb[0].mxu0
      %v388 = vadd.f32 %v245, %v387
      %v389 = vpop.f32.mrb[0].mxu0
      %390 = vmatprep.mubr.bf16.mxu0 %v342
      %391 = vmatmul.mubr.bf16.gmra.mrb[0].mxu0 %v273
      %v392 = vpop.f32.mrb[0].mxu0
      %v393 = vadd.f32 %v245, %v392
      %v394 = vpop.f32.mrb[0].mxu0
      %v395 = vpop.f32.mrb[0].mxu0
      %v396 = vadd.f32 %v245, %v395
      %v397 = vpop.f32.mrb[0].mxu0
      %398 = vmatprep.mubr.bf16.mxu0 %v345
      %399 = vmatmul.mubr.bf16.gmra.mrb[0].mxu0 %v275
      %v400 = vpop.f32.mrb[0].mxu0
      %v401 = vadd.f32 %v245, %v400
      %v402 = vpop.f32.mrb[0].mxu0
      %v403 = vpop.f32.mrb[0].mxu0
      %v404 = vadd.f32 %v245, %v403
      %v405 = vpop.f32.mrb[0].mxu0
      %406 = vmatprep.mubr.bf16.mxu0 %v348
      %407 = vmatmul.mubr.bf16.gmra.mrb[0].mxu0 %v277
      %v408 = vpop.f32.mrb[0].mxu0
      %v409 = vadd.f32 %v245, %v408
      %v410 = vpop.f32.mrb[0].mxu0
      %v411 = vpop.f32.mrb[0].mxu0
      %v412 = vadd.f32 %v245, %v411
      %v413 = vpop.f32.mrb[0].mxu0
      %414 = vdwg.mxu0
      %415 = vst [vmem:[%s211] sm:$0xff] %v385
      %416 = vst [vmem:[%s211 + $0x8] sm:$0xff] %v388
      %417 = vst [vmem:[%s211 + $0x10] sm:$0xff] %v393
      %418 = vst [vmem:[%s211 + $0x18] sm:$0xff] %v396
      %419 = vst [vmem:[%s211 + $0x20] sm:$0xff] %v401
      %420 = vst [vmem:[%s211 + $0x28] sm:$0xff] %v404
      %421 = vst [vmem:[%s211 + $0x30] sm:$0xff] %v409
      %422 = vst [vmem:[%s211 + $0x38] sm:$0xff] %v412
      %s423 = smul.u32 8, %s19
      %p424 = scmp.lt.s32.totalorder %s18, 1
      %s425 = scalar_select %p424, %s18, 1
      %p426 = scmp.lt.s32.totalorder %s423, 7
      %s427 = scalar_select %p426, %s423, 7
      %s428 = smul.addr %s425, 8
      %s429 = sadd.s32 %s427, %s428
      %s430 = smul.addr %s429, 8
      %s431 = scalar_lea.vmem %s3, %s430
      // Predicated region
      $region33: #{_lambda_.38} parent=31 // pred_check
        %p432 = pneg %p116
      $region34: #{_lambda_.38} parent=31 // pred_check_branch
        %434 = sbr.rel (%p432) target = $region36
      $region35: #{_lambda_.38} parent=31 // pred_region
        %s435 = smul.u32 8, %s19
      $region36: #{_lambda_.38} parent=31 // pred_fallthru
        _
    $region32: #{_lambda_.38} parent=5 // pred_fallthru
      _
    %p436 = scmp.le.s32.totalorder 2, %s9
    // Predicated region
    $region37: #{_lambda_.38} parent=5 // pred_check
      %p437 = pneg %p436
    $region38: #{_lambda_.38} parent=5 // pred_check_branch
      %439 = sbr.rel (%p437) target = $region40
    $region39: #{_lambda_.38} parent=5 // pred_region
      %s440 = ssub.s32 %s9, 2
      // Predicated region
      $region41: #{_lambda_.38} parent=39 // pred_check
        %p441 = pneg %p122
      $region42: #{_lambda_.38} parent=39 // pred_check_branch
        %443 = sbr.rel (%p441) target = $region44
      $region43: #{_lambda_.38} parent=39 // pred_region
        %s444 = smul.u32 8, %s21
        %p445 = scmp.lt.s32.totalorder %s20, 1
        %s446 = scalar_select %p445, %s20, 1
        %p447 = scmp.lt.s32.totalorder %s444, 7
        %s448 = scalar_select %p447, %s444, 7
        %s449 = smul.addr %s446, 8
        %s450 = sadd.s32 %s448, %s449
        %s451 = smul.addr %s450, 8
        %s452 = scalar_lea.vmem %s3, %s451
      $region44: #{_lambda_.38} parent=39 // pred_fallthru
        _
    $region40: #{_lambda_.38} parent=5 // pred_fallthru
      _
  $region6: #{_lambda_.38} parent=0 // loop_footer
    %s13 = sadd.s32 1, %s9
  $region7: #{_lambda_.38} parent=0 // loop_footer_branch
    %8 = sbr.rel target = $region3
  $region8: #{_lambda_.38} parent=0 // loop_exit
    _

</llo_original>
